<compile_context>
chip_gen: v6e
topology: v6e:2x2x1
jax: 0.10.0
libtpu: 0.0.40
codegen_flags: <defaults>
</compile_context>

<pallas_src>
import math

import jax
import jax.numpy as jnp
from jax.experimental import pallas as pl
from jax.experimental.pallas import tpu as pltpu

NUM_HEADS = 2   # d_head = D // NUM_HEADS, chosen so d_head is a multiple of 128 lanes.
LANE = 128      # sequence length is padded to a multiple of this.


# ----------------------------------------------------------------------------- shared math
def _layer_norm(x, gamma, beta, eps=1e-12):
    x = x.astype(jnp.float32)
    mean = jnp.mean(x, axis=-1, keepdims=True)
    var = jnp.mean(jnp.square(x - mean), axis=-1, keepdims=True)
    return (x - mean) * jax.lax.rsqrt(var + eps) * gamma + beta


def _gelu(x):
    # tanh approximation (EUP-friendly; identical in kernel and reference).
    return 0.5 * x * (1.0 + jnp.tanh(0.7978845608028654 * (x + 0.044715 * x * x * x)))


def _layer_forward(h, mask_bias, wqkv, bqkv, wo, bo, ln1g, ln1b,
                   w1, b1, w2, b2, ln2g, ln2b, *, approx_recip):
    """One post-LN transformer encoder layer. Pure jnp; shared by kernel & reference.

    h         : (B, S, D) f32 hidden state
    mask_bias : (B, 1, S) f32, 0 for attended keys, -1e9 for padded keys
    wqkv/wo/w1/w2 : bf16 matmul weights; biases and LN params f32
    """
    B, S, D = h.shape
    H = NUM_HEADS
    dh = D // H
    scale = 1.0 / math.sqrt(dh)

    x2 = h.reshape(B * S, D)

    # Fused QKV projection: one lane-dense bf16 matmul, f32 accumulation.
    qkv = jnp.dot(x2.astype(jnp.bfloat16), wqkv,
                  preferred_element_type=jnp.float32) + bqkv              # (B*S, 3D) f32

    def fold_heads(x):
        # (B*S, D) -> (H*B, S, dh) head-major, via 128-aligned lane slices + leading concat
        # (avoids major-dim transposes inside the kernel).
        return jnp.concatenate(
            [x[:, hh * dh:(hh + 1) * dh].astype(jnp.bfloat16).reshape(B, S, dh)
             for hh in range(H)], axis=0)

    q = fold_heads(qkv[:, 0:D])
    k = fold_heads(qkv[:, D:2 * D])
    v = fold_heads(qkv[:, 2 * D:3 * D])
    bias = jnp.concatenate([mask_bias] * H, axis=0)                       # (H*B, 1, S)

    # Scores + softmax in f32 (the -1e9 bias and max-shift do not survive bf16).
    s = jnp.einsum('bqd,bkd->bqk', q, k,
                   preferred_element_type=jnp.float32) * scale + bias     # (H*B, S, S)
    s = s - jnp.max(s, axis=-1, keepdims=True)
    e = jnp.exp(s)
    denom = jnp.sum(e, axis=-1, keepdims=True)
    if approx_recip:
        p = e * pl.reciprocal(denom, approx=True)                         # EUP slot
    else:
        p = e / denom
    ctx = jnp.einsum('bqk,bkd->bqd', p.astype(jnp.bfloat16), v,
                     preferred_element_type=jnp.float32)                  # (H*B, S, dh)
    # head-major (H*B, S, dh) -> (B*S, D)
    ctx = jnp.concatenate([ctx[hh * B:(hh + 1) * B] for hh in range(H)],
                          axis=-1).reshape(B * S, D)

    attn_out = jnp.dot(ctx.astype(jnp.bfloat16), wo,
                       preferred_element_type=jnp.float32) + bo
    h1 = _layer_norm(x2 + attn_out, ln1g, ln1b)                           # (B*S, D) f32

    ff = jnp.dot(h1.astype(jnp.bfloat16), w1,
                 preferred_element_type=jnp.float32) + b1
    ff = _gelu(ff)
    ff = jnp.dot(ff.astype(jnp.bfloat16), w2,
                 preferred_element_type=jnp.float32) + b2
    h2 = _layer_norm(h1 + ff, ln2g, ln2b)                                 # (B*S, D) f32

    return h2.reshape(B, S, D)


def _embed(input_ids, params):
    """Word + position + (token_type=0) embeddings, pre-LayerNorm."""
    S_in = input_ids.shape[1]
    word = jnp.take(params['word_emb'], input_ids, axis=0)                # (B, S_in, D)
    return (word
            + params['pos_emb'][None, :S_in, :]
            + params['type_emb'][None, None, :]).astype(jnp.float32)


def _prepare_inputs(input_ids, attention_mask, params):
    """Embedding + embedding-LayerNorm (wrapper side) and mask -> additive bias,
    with the sequence padded to a multiple of 128 lanes."""
    B, S_in = input_ids.shape
    S = ((S_in + LANE - 1) // LANE) * LANE
    h0 = _layer_norm(_embed(input_ids, params),
                     params['emb_ln_g'], params['emb_ln_b'])              # (B, S_in, D)
    h0 = jnp.pad(h0, ((0, 0), (0, S - S_in), (0, 0)))                     # (B, S, D)
    mask = jnp.pad(attention_mask.astype(jnp.float32), ((0, 0), (0, S - S_in)))
    mask_bias = ((1.0 - mask) * (-1e9))[:, None, :]                       # (B, 1, S)
    return h0, mask_bias


# ----------------------------------------------------------------------------- kernel
def transformer_encoder_kernel(h0_ref, maskb_ref,
                               wqkv_ref, bqkv_ref, wo_ref, bo_ref,
                               ln1g_ref, ln1b_ref, w1_ref, b1_ref,
                               w2_ref, b2_ref, ln2g_ref, ln2b_ref,
                               cls_ref, h_scr):
    """grid = (batch_shard, layer). Hidden state carried across layers in VMEM scratch."""
    l = pl.program_id(1)

    @pl.when(l == 0)
    def _init():
        h_scr[...] = h0_ref[...]

    h_new = _layer_forward(
        h_scr[...], maskb_ref[...],
        wqkv_ref[0], bqkv_ref[0], wo_ref[0], bo_ref[0],
        ln1g_ref[0], ln1b_ref[0],
        w1_ref[0], b1_ref[0], w2_ref[0], b2_ref[0],
        ln2g_ref[0], ln2b_ref[0],
        approx_recip=True)
    h_scr[...] = h_new

    @pl.when(l == pl.num_programs(1) - 1)
    def _finalize():
        # CLS representation = last hidden state at sequence position 0.
        cls_ref[...] = h_new[:, 0:1, :].astype(cls_ref.dtype)


def transformer_rln_forward(input_ids, attention_mask, params, *, batch_shards=1):
    """Pallas-backed equivalent of TransformerRLN.forward (encoder + CLS pooling)."""
    B, _ = input_ids.shape
    D = params['word_emb'].shape[1]
    F = params['w1'].shape[2]
    L = params['w_qkv'].shape[0]
    assert B % batch_shards == 0
    Bs = B // batch_shards

    h0, mask_bias = _prepare_inputs(input_ids, attention_mask, params)
    S = h0.shape[1]

    cls = pl.pallas_call(
        transformer_encoder_kernel,
        out_shape=jax.ShapeDtypeStruct((B, 1, D), jnp.float32),
        grid_spec=pltpu.PrefetchScalarGridSpec(
            num_scalar_prefetch=0,
            grid=(batch_shards, L),
            in_specs=[
                pl.BlockSpec((Bs, S, D), lambda s, l: (s, 0, 0)),        # h0 (post emb-LN)
                pl.BlockSpec((Bs, 1, S), lambda s, l: (s, 0, 0)),        # mask bias
                pl.BlockSpec((1, D, 3 * D), lambda s, l: (l, 0, 0)),     # W_qkv (bf16)
                pl.BlockSpec((1, 1, 3 * D), lambda s, l: (l, 0, 0)),     # b_qkv
                pl.BlockSpec((1, D, D), lambda s, l: (l, 0, 0)),         # W_o   (bf16)
                pl.BlockSpec((1, 1, D), lambda s, l: (l, 0, 0)),         # b_o
                pl.BlockSpec((1, 1, D), lambda s, l: (l, 0, 0)),         # ln1 gamma
                pl.BlockSpec((1, 1, D), lambda s, l: (l, 0, 0)),         # ln1 beta
                pl.BlockSpec((1, D, F), lambda s, l: (l, 0, 0)),         # W1    (bf16)
                pl.BlockSpec((1, 1, F), lambda s, l: (l, 0, 0)),         # b1
                pl.BlockSpec((1, F, D), lambda s, l: (l, 0, 0)),         # W2    (bf16)
                pl.BlockSpec((1, 1, D), lambda s, l: (l, 0, 0)),         # b2
                pl.BlockSpec((1, 1, D), lambda s, l: (l, 0, 0)),         # ln2 gamma
                pl.BlockSpec((1, 1, D), lambda s, l: (l, 0, 0)),         # ln2 beta
            ],
            out_specs=pl.BlockSpec((Bs, 1, D), lambda s, l: (s, 0, 0)),
            # Hidden state resident across the layer axis, per batch shard / core.
            scratch_shapes=[pltpu.VMEM((Bs, S, D), jnp.float32)],
        ),
        # batch shards are independent ("parallel" -> second TC on v7x);
        # layers are a sequential carried loop ("arbitrary").
        # NOTE: when scaling to BERT-base sizes, set vmem_limit_bytes explicitly and
        # verify 2x double-buffered bf16 weights + h_scr fit (64 MiB on v7x).
        compiler_params=pltpu.CompilerParams(
            dimension_semantics=("parallel", "arbitrary")),
    )(h0, mask_bias,
      params['w_qkv'], params['b_qkv'], params['w_o'], params['b_o'],
      params['ln1_g'], params['ln1_b'],
      params['w1'], params['b1'], params['w2'], params['b2'],
      params['ln2_g'], params['ln2_b'])
    return cls[:, 0, :]


# ----------------------------------------------------------------------------- reference
def reference_forward(input_ids, attention_mask, params):
    """Pure-JAX reference using the same shared layer math (exact softmax divide)."""
    h, mask_bias = _prepare_inputs(input_ids, attention_mask, params)
    L = params['w_qkv'].shape[0]
    for l in range(L):
        h = _layer_forward(
            h, mask_bias,
            params['w_qkv'][l], params['b_qkv'][l], params['w_o'][l], params['b_o'][l],
            params['ln1_g'][l], params['ln1_b'][l],
            params['w1'][l], params['b1'][l], params['w2'][l], params['b2'][l],
            params['ln2_g'][l], params['ln2_b'][l],
            approx_recip=False)
    return h[:, 0, :]


# ----------------------------------------------------------------------------- main
if __name__ == "__main__":
    # Small BERT-style config: B=4 examples, 16 real tokens (padded to 128 lanes),
    # D=256, FFN=512, 2 layers, vocab 64.  Per batch shard: M = 2*128 = 256 rows.
    B, S_IN, D, F, L, V = 4, 16, 256, 512, 2, 64
    assert D % NUM_HEADS == 0 and (D // NUM_HEADS) % 128 == 0

    key = jax.random.PRNGKey(0)
    keys = jax.random.split(key, 20)

    def init(k, shape, dtype=jnp.float32):
        return (0.02 * jax.random.normal(k, shape, dtype=jnp.float32)).astype(dtype)

    params = {
        'word_emb': init(keys[0], (V, D)),
        'pos_emb': init(keys[1], (S_IN, D)),
        'type_emb': init(keys[2], (D,)),
        'emb_ln_g': 1.0 + 0.05 * jax.random.normal(keys[3], (1, D), jnp.float32),
        'emb_ln_b': 0.05 * jax.random.normal(keys[4], (1, D), jnp.float32),
        # Matmul weights stored in bf16 (halves the per-layer weight DMA).
        'w_qkv': init(keys[5], (L, D, 3 * D), jnp.bfloat16),
        'b_qkv': init(keys[6], (L, 1, 3 * D)),
        'w_o': init(keys[7], (L, D, D), jnp.bfloat16),
        'b_o': init(keys[8], (L, 1, D)),
        'ln1_g': 1.0 + 0.05 * jax.random.normal(keys[9], (L, 1, D), jnp.float32),
        'ln1_b': 0.05 * jax.random.normal(keys[10], (L, 1, D), jnp.float32),
        'w1': init(keys[11], (L, D, F), jnp.bfloat16),
        'b1': init(keys[12], (L, 1, F)),
        'w2': init(keys[13], (L, F, D), jnp.bfloat16),
        'b2': init(keys[14], (L, 1, D)),
        'ln2_g': 1.0 + 0.05 * jax.random.normal(keys[15], (L, 1, D), jnp.float32),
        'ln2_b': 0.05 * jax.random.normal(keys[16], (L, 1, D), jnp.float32),
    }

    input_ids = jax.random.randint(keys[17], (B, S_IN), 0, V, dtype=jnp.int32)
    # Variable-length examples: real lengths 16, 10, 16, 7 (rest is padding).
    lengths = jnp.array([16, 10, 16, 7])
    attention_mask = (jnp.arange(S_IN)[None, :] < lengths[:, None]).astype(jnp.float32)

    cls = transformer_rln_forward(input_ids, attention_mask, params, batch_shards=2)
    cls = jax.block_until_ready(cls)

    ref = jax.block_until_ready(reference_forward(input_ids, attention_mask, params))

    assert cls.shape == (B, D)
    err = float(jnp.max(jnp.abs(cls - ref)))
    assert err < 2e-2, f"Pallas TransformerRLN mismatch vs reference: {err}"

    print("KERNEL_OK")
</pallas_src>

<mosaic_0001>
module attributes {stable_mosaic.version = 11 : i64} {
  func.func @transformer_encoder_kernel(%arg0: i32, %arg1: i32, %arg2: memref<2x128x256xf32, #tpu.memory_space<vmem>>, %arg3: memref<2x1x128xf32, #tpu.memory_space<vmem>>, %arg4: memref<1x256x768xbf16, #tpu.memory_space<vmem>>, %arg5: memref<1x1x768xf32, #tpu.memory_space<vmem>>, %arg6: memref<1x256x256xbf16, #tpu.memory_space<vmem>>, %arg7: memref<1x1x256xf32, #tpu.memory_space<vmem>>, %arg8: memref<1x1x256xf32, #tpu.memory_space<vmem>>, %arg9: memref<1x1x256xf32, #tpu.memory_space<vmem>>, %arg10: memref<1x256x512xbf16, #tpu.memory_space<vmem>>, %arg11: memref<1x1x512xf32, #tpu.memory_space<vmem>>, %arg12: memref<1x512x256xbf16, #tpu.memory_space<vmem>>, %arg13: memref<1x1x256xf32, #tpu.memory_space<vmem>>, %arg14: memref<1x1x256xf32, #tpu.memory_space<vmem>>, %arg15: memref<1x1x256xf32, #tpu.memory_space<vmem>>, %arg16: memref<2x1x256xf32, #tpu.memory_space<vmem>>, %arg17: memref<2x128x256xf32, #tpu.memory_space<vmem>>) attributes {dimension_semantics = [#tpu.dimension_semantics<parallel>, #tpu.dimension_semantics<arbitrary>], iteration_bounds = array<i64: 2, 2>, scalar_prefetch = 0 : i64, scratch_operands = 1 : i64, tpu.core_type = #tpu.core_type<tc>, window_params = [{transform_indices = @transform_0, window_bounds = array<i64: 2, 128, 256>}, {transform_indices = @transform_1, window_bounds = array<i64: 2, 1, 128>}, {transform_indices = @transform_2, window_bounds = array<i64: 1, 256, 768>}, {transform_indices = @transform_3, window_bounds = array<i64: 1, 1, 768>}, {transform_indices = @transform_4, window_bounds = array<i64: 1, 256, 256>}, {transform_indices = @transform_5, window_bounds = array<i64: 1, 1, 256>}, {transform_indices = @transform_6, window_bounds = array<i64: 1, 1, 256>}, {transform_indices = @transform_7, window_bounds = array<i64: 1, 1, 256>}, {transform_indices = @transform_8, window_bounds = array<i64: 1, 256, 512>}, {transform_indices = @transform_9, window_bounds = array<i64: 1, 1, 512>}, {transform_indices = @transform_10, window_bounds = array<i64: 1, 512, 256>}, {transform_indices = @transform_11, window_bounds = array<i64: 1, 1, 256>}, {transform_indices = @transform_12, window_bounds = array<i64: 1, 1, 256>}, {transform_indices = @transform_13, window_bounds = array<i64: 1, 1, 256>}, {transform_indices = @transform_14, window_bounds = array<i64: 2, 1, 256>}]} {
    %c0_i32 = arith.constant 0 : i32
    %0 = arith.cmpi eq, %arg1, %c0_i32 : i32
    %1 = arith.extui %0 : i1 to i32
    %c0_i32_0 = arith.constant 0 : i32
    %2 = arith.cmpi ne, %1, %c0_i32_0 : i32
    scf.if %2 {
      %c0_68 = arith.constant 0 : index
      %c0_69 = arith.constant 0 : index
      %c0_70 = arith.constant 0 : index
      %156 = vector.load %arg2[%c0_68, %c0_69, %c0_70] : memref<2x128x256xf32, #tpu.memory_space<vmem>>, vector<2x128x256xf32>
      %c0_71 = arith.constant 0 : index
      %c0_72 = arith.constant 0 : index
      %c0_73 = arith.constant 0 : index
      %157 = vector.load %arg17[%c0_71, %c0_72, %c0_73] : memref<2x128x256xf32, #tpu.memory_space<vmem>>, vector<2x128x256xf32>
      tpu.vector_store %arg17[%c0_71, %c0_72, %c0_73], %156 {strides = array<i32>} : memref<2x128x256xf32, #tpu.memory_space<vmem>>, vector<2x128x256xf32>,
    } else {
    }
    %c0 = arith.constant 0 : index
    %c0_1 = arith.constant 0 : index
    %c0_2 = arith.constant 0 : index
    %3 = vector.load %arg17[%c0, %c0_1, %c0_2] : memref<2x128x256xf32, #tpu.memory_space<vmem>>, vector<2x128x256xf32>
    %c0_3 = arith.constant 0 : index
    %c0_4 = arith.constant 0 : index
    %c0_5 = arith.constant 0 : index
    %4 = vector.load %arg3[%c0_3, %c0_4, %c0_5] : memref<2x1x128xf32, #tpu.memory_space<vmem>>, vector<2x1x128xf32>
    %c0_6 = arith.constant 0 : index
    %c0_7 = arith.constant 0 : index
    %c0_8 = arith.constant 0 : index
    %5 = vector.load %arg4[%c0_6, %c0_7, %c0_8] : memref<1x256x768xbf16, #tpu.memory_space<vmem>>, vector<1x256x768xbf16>
    %6 = vector.shape_cast %5 : vector<1x256x768xbf16> to vector<256x768xbf16>
    %c0_9 = arith.constant 0 : index
    %c0_10 = arith.constant 0 : index
    %c0_11 = arith.constant 0 : index
    %7 = vector.load %arg5[%c0_9, %c0_10, %c0_11] : memref<1x1x768xf32, #tpu.memory_space<vmem>>, vector<1x1x768xf32>
    %8 = vector.shape_cast %7 : vector<1x1x768xf32> to vector<1x768xf32>
    %c0_12 = arith.constant 0 : index
    %c0_13 = arith.constant 0 : index
    %c0_14 = arith.constant 0 : index
    %9 = vector.load %arg6[%c0_12, %c0_13, %c0_14] : memref<1x256x256xbf16, #tpu.memory_space<vmem>>, vector<1x256x256xbf16>
    %10 = vector.shape_cast %9 : vector<1x256x256xbf16> to vector<256x256xbf16>
    %c0_15 = arith.constant 0 : index
    %c0_16 = arith.constant 0 : index
    %c0_17 = arith.constant 0 : index
    %11 = vector.load %arg7[%c0_15, %c0_16, %c0_17] : memref<1x1x256xf32, #tpu.memory_space<vmem>>, vector<1x1x256xf32>
    %12 = vector.shape_cast %11 : vector<1x1x256xf32> to vector<1x256xf32>
    %c0_18 = arith.constant 0 : index
    %c0_19 = arith.constant 0 : index
    %c0_20 = arith.constant 0 : index
    %13 = vector.load %arg8[%c0_18, %c0_19, %c0_20] : memref<1x1x256xf32, #tpu.memory_space<vmem>>, vector<1x1x256xf32>
    %14 = vector.shape_cast %13 : vector<1x1x256xf32> to vector<1x256xf32>
    %c0_21 = arith.constant 0 : index
    %c0_22 = arith.constant 0 : index
    %c0_23 = arith.constant 0 : index
    %15 = vector.load %arg9[%c0_21, %c0_22, %c0_23] : memref<1x1x256xf32, #tpu.memory_space<vmem>>, vector<1x1x256xf32>
    %16 = vector.shape_cast %15 : vector<1x1x256xf32> to vector<1x256xf32>
    %c0_24 = arith.constant 0 : index
    %c0_25 = arith.constant 0 : index
    %c0_26 = arith.constant 0 : index
    %17 = vector.load %arg10[%c0_24, %c0_25, %c0_26] : memref<1x256x512xbf16, #tpu.memory_space<vmem>>, vector<1x256x512xbf16>
    %18 = vector.shape_cast %17 : vector<1x256x512xbf16> to vector<256x512xbf16>
    %c0_27 = arith.constant 0 : index
    %c0_28 = arith.constant 0 : index
    %c0_29 = arith.constant 0 : index
    %19 = vector.load %arg11[%c0_27, %c0_28, %c0_29] : memref<1x1x512xf32, #tpu.memory_space<vmem>>, vector<1x1x512xf32>
    %20 = vector.shape_cast %19 : vector<1x1x512xf32> to vector<1x512xf32>
    %c0_30 = arith.constant 0 : index
    %c0_31 = arith.constant 0 : index
    %c0_32 = arith.constant 0 : index
    %21 = vector.load %arg12[%c0_30, %c0_31, %c0_32] : memref<1x512x256xbf16, #tpu.memory_space<vmem>>, vector<1x512x256xbf16>
    %22 = vector.shape_cast %21 : vector<1x512x256xbf16> to vector<512x256xbf16>
    %c0_33 = arith.constant 0 : index
    %c0_34 = arith.constant 0 : index
    %c0_35 = arith.constant 0 : index
    %23 = vector.load %arg13[%c0_33, %c0_34, %c0_35] : memref<1x1x256xf32, #tpu.memory_space<vmem>>, vector<1x1x256xf32>
    %24 = vector.shape_cast %23 : vector<1x1x256xf32> to vector<1x256xf32>
    %c0_36 = arith.constant 0 : index
    %c0_37 = arith.constant 0 : index
    %c0_38 = arith.constant 0 : index
    %25 = vector.load %arg14[%c0_36, %c0_37, %c0_38] : memref<1x1x256xf32, #tpu.memory_space<vmem>>, vector<1x1x256xf32>
    %26 = vector.shape_cast %25 : vector<1x1x256xf32> to vector<1x256xf32>
    %c0_39 = arith.constant 0 : index
    %c0_40 = arith.constant 0 : index
    %c0_41 = arith.constant 0 : index
    %27 = vector.load %arg15[%c0_39, %c0_40, %c0_41] : memref<1x1x256xf32, #tpu.memory_space<vmem>>, vector<1x1x256xf32>
    %28 = vector.shape_cast %27 : vector<1x1x256xf32> to vector<1x256xf32>
    %29 = vector.shape_cast %3 : vector<2x128x256xf32> to vector<256x256xf32>
    %30 = arith.truncf %29 : vector<256x256xf32> to vector<256x256xbf16>
    %cst = arith.constant dense<0.000000e+00> : vector<256x768xf32>
    %31 = tpu.matmul %30, %6, %cst {dimension_numbers = #tpu.dot_dimension_numbers<[1], [0], [0], [1], [0, 0, 1, 1], [], []>} : vector<256x256xbf16>, vector<256x768xbf16>, vector<256x768xf32> -> vector<256x768xf32>
    %32 = vector.broadcast %8 : vector<1x768xf32> to vector<256x768xf32>
    %33 = arith.addf %31, %32 : vector<256x768xf32>
    %34 = vector.extract_strided_slice %33 {offsets = [0, 0], sizes = [256, 256], strides = [1, 1]} : vector<256x768xf32> to vector<256x256xf32>
    %35 = vector.extract_strided_slice %34 {offsets = [0, 0], sizes = [256, 128], strides = [1, 1]} : vector<256x256xf32> to vector<256x128xf32>
    %36 = arith.truncf %35 : vector<256x128xf32> to vector<256x128xbf16>
    %37 = vector.shape_cast %36 : vector<256x128xbf16> to vector<2x128x128xbf16>
    %38 = vector.extract_strided_slice %34 {offsets = [0, 128], sizes = [256, 128], strides = [1, 1]} : vector<256x256xf32> to vector<256x128xf32>
    %39 = arith.truncf %38 : vector<256x128xf32> to vector<256x128xbf16>
    %40 = vector.shape_cast %39 : vector<256x128xbf16> to vector<2x128x128xbf16>
    %41 = tpu.concatenate %37, %40 in 0 : vector<2x128x128xbf16>, vector<2x128x128xbf16> -> vector<4x128x128xbf16>
    %42 = vector.extract_strided_slice %33 {offsets = [0, 256], sizes = [256, 256], strides = [1, 1]} : vector<256x768xf32> to vector<256x256xf32>
    %43 = vector.extract_strided_slice %42 {offsets = [0, 0], sizes = [256, 128], strides = [1, 1]} : vector<256x256xf32> to vector<256x128xf32>
    %44 = arith.truncf %43 : vector<256x128xf32> to vector<256x128xbf16>
    %45 = vector.shape_cast %44 : vector<256x128xbf16> to vector<2x128x128xbf16>
    %46 = vector.extract_strided_slice %42 {offsets = [0, 128], sizes = [256, 128], strides = [1, 1]} : vector<256x256xf32> to vector<256x128xf32>
    %47 = arith.truncf %46 : vector<256x128xf32> to vector<256x128xbf16>
    %48 = vector.shape_cast %47 : vector<256x128xbf16> to vector<2x128x128xbf16>
    %49 = tpu.concatenate %45, %48 in 0 : vector<2x128x128xbf16>, vector<2x128x128xbf16> -> vector<4x128x128xbf16>
    %50 = vector.extract_strided_slice %33 {offsets = [0, 512], sizes = [256, 256], strides = [1, 1]} : vector<256x768xf32> to vector<256x256xf32>
    %51 = vector.extract_strided_slice %50 {offsets = [0, 0], sizes = [256, 128], strides = [1, 1]} : vector<256x256xf32> to vector<256x128xf32>
    %52 = arith.truncf %51 : vector<256x128xf32> to vector<256x128xbf16>
    %53 = vector.shape_cast %52 : vector<256x128xbf16> to vector<2x128x128xbf16>
    %54 = vector.extract_strided_slice %50 {offsets = [0, 128], sizes = [256, 128], strides = [1, 1]} : vector<256x256xf32> to vector<256x128xf32>
    %55 = arith.truncf %54 : vector<256x128xf32> to vector<256x128xbf16>
    %56 = vector.shape_cast %55 : vector<256x128xbf16> to vector<2x128x128xbf16>
    %57 = tpu.concatenate %53, %56 in 0 : vector<2x128x128xbf16>, vector<2x128x128xbf16> -> vector<4x128x128xbf16>
    %58 = tpu.concatenate %4, %4 in 0 : vector<2x1x128xf32>, vector<2x1x128xf32> -> vector<4x1x128xf32>
    "tpu.trace_start"() <{level = 10 : i32, message = "bqd,bkd->bqk"}> : () -> ()
    %cst_42 = arith.constant dense<0.000000e+00> : vector<4x128x128xf32>
    %59 = tpu.matmul %41, %49, %cst_42 {dimension_numbers = #tpu.dot_dimension_numbers<[2], [2], [1], [1], [0, 0, 0, 1, 1, 1], [0], [0]>} : vector<4x128x128xbf16>, vector<4x128x128xbf16>, vector<4x128x128xf32> -> vector<4x128x128xf32>
    "tpu.trace_stop"() : () -> ()
    %cst_43 = arith.constant 0.0883883461 : f32
    %60 = vector.broadcast %cst_43 : f32 to vector<4x128x128xf32>
    %61 = arith.mulf %59, %60 : vector<4x128x128xf32>
    %62 = vector.broadcast %58 : vector<4x1x128xf32> to vector<4x128x128xf32>
    %63 = arith.addf %61, %62 : vector<4x128x128xf32>
    %cst_44 = arith.constant dense<0xFF800000> : vector<4x128xf32>
    %64 = vector.multi_reduction <maximumf>, %63, %cst_44 [2] : vector<4x128x128xf32> to vector<4x128xf32>
    %65 = vector.shape_cast %64 : vector<4x128xf32> to vector<4x128x1xf32>
    %66 = vector.broadcast %65 : vector<4x128x1xf32> to vector<4x128x128xf32>
    %67 = arith.subf %63, %66 : vector<4x128x128xf32>
    %68 = math.exp %67 : vector<4x128x128xf32>
    %cst_45 = arith.constant dense<0.000000e+00> : vector<4x128xf32>
    %69 = vector.multi_reduction <add>, %68, %cst_45 [2] : vector<4x128x128xf32> to vector<4x128xf32>
    %70 = vector.shape_cast %69 : vector<4x128xf32> to vector<4x128x1xf32>
    %71 = tpu.reciprocal %70 {approx = true} : vector<4x128x1xf32> -> vector<4x128x1xf32>
    %72 = vector.broadcast %71 : vector<4x128x1xf32> to vector<4x128x128xf32>
    %73 = arith.mulf %68, %72 : vector<4x128x128xf32>
    %74 = arith.truncf %73 : vector<4x128x128xf32> to vector<4x128x128xbf16>
    "tpu.trace_start"() <{level = 10 : i32, message = "bqk,bkd->bqd"}> : () -> ()
    %cst_46 = arith.constant dense<0.000000e+00> : vector<4x128x128xf32>
    %75 = tpu.matmul %74, %57, %cst_46 {dimension_numbers = #tpu.dot_dimension_numbers<[2], [1], [1], [2], [0, 0, 0, 1, 1, 2], [0], [0]>} : vector<4x128x128xbf16>, vector<4x128x128xbf16>, vector<4x128x128xf32> -> vector<4x128x128xf32>
    "tpu.trace_stop"() : () -> ()
    %76 = vector.extract_strided_slice %75 {offsets = [0, 0, 0], sizes = [2, 128, 128], strides = [1, 1, 1]} : vector<4x128x128xf32> to vector<2x128x128xf32>
    %77 = vector.extract_strided_slice %75 {offsets = [2, 0, 0], sizes = [2, 128, 128], strides = [1, 1, 1]} : vector<4x128x128xf32> to vector<2x128x128xf32>
    %78 = tpu.concatenate %76, %77 in 2 : vector<2x128x128xf32>, vector<2x128x128xf32> -> vector<2x128x256xf32>
    %79 = vector.shape_cast %78 : vector<2x128x256xf32> to vector<256x256xf32>
    %80 = arith.truncf %79 : vector<256x256xf32> to vector<256x256xbf16>
    %cst_47 = arith.constant dense<0.000000e+00> : vector<256x256xf32>
    %81 = tpu.matmul %80, %10, %cst_47 {dimension_numbers = #tpu.dot_dimension_numbers<[1], [0], [0], [1], [0, 0, 1, 1], [], []>} : vector<256x256xbf16>, vector<256x256xbf16>, vector<256x256xf32> -> vector<256x256xf32>
    %82 = vector.broadcast %12 : vector<1x256xf32> to vector<256x256xf32>
    %83 = arith.addf %81, %82 : vector<256x256xf32>
    %84 = arith.addf %29, %83 : vector<256x256xf32>
    %cst_48 = arith.constant dense<0.000000e+00> : vector<256xf32>
    %85 = vector.multi_reduction <add>, %84, %cst_48 [1] : vector<256x256xf32> to vector<256xf32>
    %86 = vector.shape_cast %85 : vector<256xf32> to vector<256x1xf32>
    %cst_49 = arith.constant 2.560000e+02 : f32
    %87 = vector.broadcast %cst_49 : f32 to vector<256x1xf32>
    %88 = arith.divf %86, %87 : vector<256x1xf32>
    %89 = vector.broadcast %88 : vector<256x1xf32> to vector<256x256xf32>
    %90 = arith.subf %84, %89 : vector<256x256xf32>
    %91 = arith.mulf %90, %90 : vector<256x256xf32>
    %cst_50 = arith.constant dense<0.000000e+00> : vector<256xf32>
    %92 = vector.multi_reduction <add>, %91, %cst_50 [1] : vector<256x256xf32> to vector<256xf32>
    %93 = vector.shape_cast %92 : vector<256xf32> to vector<256x1xf32>
    %cst_51 = arith.constant 2.560000e+02 : f32
    %94 = vector.broadcast %cst_51 : f32 to vector<256x1xf32>
    %95 = arith.divf %93, %94 : vector<256x1xf32>
    %96 = vector.broadcast %88 : vector<256x1xf32> to vector<256x256xf32>
    %97 = arith.subf %84, %96 : vector<256x256xf32>
    %cst_52 = arith.constant 9.99999996E-13 : f32
    %98 = vector.broadcast %cst_52 : f32 to vector<256x1xf32>
    %99 = arith.addf %95, %98 : vector<256x1xf32>
    %100 = math.rsqrt %99 : vector<256x1xf32>
    %101 = vector.broadcast %100 : vector<256x1xf32> to vector<256x256xf32>
    %102 = arith.mulf %97, %101 : vector<256x256xf32>
    %103 = vector.broadcast %14 : vector<1x256xf32> to vector<256x256xf32>
    %104 = arith.mulf %102, %103 : vector<256x256xf32>
    %105 = vector.broadcast %16 : vector<1x256xf32> to vector<256x256xf32>
    %106 = arith.addf %104, %105 : vector<256x256xf32>
    %107 = arith.truncf %106 : vector<256x256xf32> to vector<256x256xbf16>
    %cst_53 = arith.constant dense<0.000000e+00> : vector<256x512xf32>
    %108 = tpu.matmul %107, %18, %cst_53 {dimension_numbers = #tpu.dot_dimension_numbers<[1], [0], [0], [1], [0, 0, 1, 1], [], []>} : vector<256x256xbf16>, vector<256x512xbf16>, vector<256x512xf32> -> vector<256x512xf32>
    %109 = vector.broadcast %20 : vector<1x512xf32> to vector<256x512xf32>
    %110 = arith.addf %108, %109 : vector<256x512xf32>
    %cst_54 = arith.constant 5.000000e-01 : f32
    %111 = vector.broadcast %cst_54 : f32 to vector<256x512xf32>
    %112 = arith.mulf %111, %110 : vector<256x512xf32>
    %cst_55 = arith.constant 4.471500e-02 : f32
    %113 = vector.broadcast %cst_55 : f32 to vector<256x512xf32>
    %114 = arith.mulf %113, %110 : vector<256x512xf32>
    %115 = arith.mulf %114, %110 : vector<256x512xf32>
    %116 = arith.mulf %115, %110 : vector<256x512xf32>
    %117 = arith.addf %110, %116 : vector<256x512xf32>
    %cst_56 = arith.constant 0.797884583 : f32
    %118 = vector.broadcast %cst_56 : f32 to vector<256x512xf32>
    %119 = arith.mulf %118, %117 : vector<256x512xf32>
    %120 = math.tanh %119 : vector<256x512xf32>
    %cst_57 = arith.constant 1.000000e+00 : f32
    %121 = vector.broadcast %cst_57 : f32 to vector<256x512xf32>
    %122 = arith.addf %121, %120 : vector<256x512xf32>
    %123 = arith.mulf %112, %122 : vector<256x512xf32>
    %124 = arith.truncf %123 : vector<256x512xf32> to vector<256x512xbf16>
    %cst_58 = arith.constant dense<0.000000e+00> : vector<256x256xf32>
    %125 = tpu.matmul %124, %22, %cst_58 {dimension_numbers = #tpu.dot_dimension_numbers<[1], [0], [0], [1], [0, 0, 1, 1], [], []>} : vector<256x512xbf16>, vector<512x256xbf16>, vector<256x256xf32> -> vector<256x256xf32>
    %126 = vector.broadcast %24 : vector<1x256xf32> to vector<256x256xf32>
    %127 = arith.addf %125, %126 : vector<256x256xf32>
    %128 = arith.addf %106, %127 : vector<256x256xf32>
    %cst_59 = arith.constant dense<0.000000e+00> : vector<256xf32>
    %129 = vector.multi_reduction <add>, %128, %cst_59 [1] : vector<256x256xf32> to vector<256xf32>
    %130 = vector.shape_cast %129 : vector<256xf32> to vector<256x1xf32>
    %cst_60 = arith.constant 2.560000e+02 : f32
    %131 = vector.broadcast %cst_60 : f32 to vector<256x1xf32>
    %132 = arith.divf %130, %131 : vector<256x1xf32>
    %133 = vector.broadcast %132 : vector<256x1xf32> to vector<256x256xf32>
    %134 = arith.subf %128, %133 : vector<256x256xf32>
    %135 = arith.mulf %134, %134 : vector<256x256xf32>
    %cst_61 = arith.constant dense<0.000000e+00> : vector<256xf32>
    %136 = vector.multi_reduction <add>, %135, %cst_61 [1] : vector<256x256xf32> to vector<256xf32>
    %137 = vector.shape_cast %136 : vector<256xf32> to vector<256x1xf32>
    %cst_62 = arith.constant 2.560000e+02 : f32
    %138 = vector.broadcast %cst_62 : f32 to vector<256x1xf32>
    %139 = arith.divf %137, %138 : vector<256x1xf32>
    %140 = vector.broadcast %132 : vector<256x1xf32> to vector<256x256xf32>
    %141 = arith.subf %128, %140 : vector<256x256xf32>
    %cst_63 = arith.constant 9.99999996E-13 : f32
    %142 = vector.broadcast %cst_63 : f32 to vector<256x1xf32>
    %143 = arith.addf %139, %142 : vector<256x1xf32>
    %144 = math.rsqrt %143 : vector<256x1xf32>
    %145 = vector.broadcast %144 : vector<256x1xf32> to vector<256x256xf32>
    %146 = arith.mulf %141, %145 : vector<256x256xf32>
    %147 = vector.broadcast %26 : vector<1x256xf32> to vector<256x256xf32>
    %148 = arith.mulf %146, %147 : vector<256x256xf32>
    %149 = vector.broadcast %28 : vector<1x256xf32> to vector<256x256xf32>
    %150 = arith.addf %148, %149 : vector<256x256xf32>
    %151 = vector.shape_cast %150 : vector<256x256xf32> to vector<2x128x256xf32>
    %c0_64 = arith.constant 0 : index
    %c0_65 = arith.constant 0 : index
    %c0_66 = arith.constant 0 : index
    %152 = vector.load %arg17[%c0_64, %c0_65, %c0_66] : memref<2x128x256xf32, #tpu.memory_space<vmem>>, vector<2x128x256xf32>
    tpu.vector_store %arg17[%c0_64, %c0_65, %c0_66], %151 {strides = array<i32>} : memref<2x128x256xf32, #tpu.memory_space<vmem>>, vector<2x128x256xf32>,
    %c1_i32 = arith.constant 1 : i32
    %153 = arith.cmpi eq, %arg1, %c1_i32 : i32
    %154 = arith.extui %153 : i1 to i32
    %c0_i32_67 = arith.constant 0 : i32
    %155 = arith.cmpi ne, %154, %c0_i32_67 : i32
    scf.if %155 {
      %156 = vector.extract_strided_slice %151 {offsets = [0, 0, 0], sizes = [2, 1, 256], strides = [1, 1, 1]} : vector<2x128x256xf32> to vector<2x1x256xf32>
      %c0_68 = arith.constant 0 : index
      %c0_69 = arith.constant 0 : index
      %c0_70 = arith.constant 0 : index
      %157 = vector.load %arg16[%c0_68, %c0_69, %c0_70] : memref<2x1x256xf32, #tpu.memory_space<vmem>>, vector<2x1x256xf32>
      tpu.vector_store %arg16[%c0_68, %c0_69, %c0_70], %156 {strides = array<i32>} : memref<2x1x256xf32, #tpu.memory_space<vmem>>, vector<2x1x256xf32>,
    } else {
    }
    return
  }
  func.func @transform_0(%arg0: i32, %arg1: i32) -> (i32, i32, i32) {
    %c0_i32 = arith.constant 0 : i32
    %c0_i32_0 = arith.constant 0 : i32
    %c0_i32_1 = arith.constant 0 : i32
    return %arg0, %c0_i32, %c0_i32_0 : i32, i32, i32
  }
  func.func @transform_1(%arg0: i32, %arg1: i32) -> (i32, i32, i32) {
    %c0_i32 = arith.constant 0 : i32
    %c0_i32_0 = arith.constant 0 : i32
    %c0_i32_1 = arith.constant 0 : i32
    return %arg0, %c0_i32, %c0_i32_0 : i32, i32, i32
  }
  func.func @transform_2(%arg0: i32, %arg1: i32) -> (i32, i32, i32) {
    %c0_i32 = arith.constant 0 : i32
    %c0_i32_0 = arith.constant 0 : i32
    %c0_i32_1 = arith.constant 0 : i32
    return %arg1, %c0_i32, %c0_i32_0 : i32, i32, i32
  }
  func.func @transform_3(%arg0: i32, %arg1: i32) -> (i32, i32, i32) {
    %c0_i32 = arith.constant 0 : i32
    %c0_i32_0 = arith.constant 0 : i32
    %c0_i32_1 = arith.constant 0 : i32
    return %arg1, %c0_i32, %c0_i32_0 : i32, i32, i32
  }
  func.func @transform_4(%arg0: i32, %arg1: i32) -> (i32, i32, i32) {
    %c0_i32 = arith.constant 0 : i32
    %c0_i32_0 = arith.constant 0 : i32
    %c0_i32_1 = arith.constant 0 : i32
    return %arg1, %c0_i32, %c0_i32_0 : i32, i32, i32
  }
  func.func @transform_5(%arg0: i32, %arg1: i32) -> (i32, i32, i32) {
    %c0_i32 = arith.constant 0 : i32
    %c0_i32_0 = arith.constant 0 : i32
    %c0_i32_1 = arith.constant 0 : i32
    return %arg1, %c0_i32, %c0_i32_0 : i32, i32, i32
  }
  func.func @transform_6(%arg0: i32, %arg1: i32) -> (i32, i32, i32) {
    %c0_i32 = arith.constant 0 : i32
    %c0_i32_0 = arith.constant 0 : i32
    %c0_i32_1 = arith.constant 0 : i32
    return %arg1, %c0_i32, %c0_i32_0 : i32, i32, i32
  }
  func.func @transform_7(%arg0: i32, %arg1: i32) -> (i32, i32, i32) {
    %c0_i32 = arith.constant 0 : i32
    %c0_i32_0 = arith.constant 0 : i32
    %c0_i32_1 = arith.constant 0 : i32
    return %arg1, %c0_i32, %c0_i32_0 : i32, i32, i32
  }
  func.func @transform_8(%arg0: i32, %arg1: i32) -> (i32, i32, i32) {
    %c0_i32 = arith.constant 0 : i32
    %c0_i32_0 = arith.constant 0 : i32
    %c0_i32_1 = arith.constant 0 : i32
    return %arg1, %c0_i32, %c0_i32_0 : i32, i32, i32
  }
  func.func @transform_9(%arg0: i32, %arg1: i32) -> (i32, i32, i32) {
    %c0_i32 = arith.constant 0 : i32
    %c0_i32_0 = arith.constant 0 : i32
    %c0_i32_1 = arith.constant 0 : i32
    return %arg1, %c0_i32, %c0_i32_0 : i32, i32, i32
  }
  func.func @transform_10(%arg0: i32, %arg1: i32) -> (i32, i32, i32) {
    %c0_i32 = arith.constant 0 : i32
    %c0_i32_0 = arith.constant 0 : i32
    %c0_i32_1 = arith.constant 0 : i32
    return %arg1, %c0_i32, %c0_i32_0 : i32, i32, i32
  }
  func.func @transform_11(%arg0: i32, %arg1: i32) -> (i32, i32, i32) {
    %c0_i32 = arith.constant 0 : i32
    %c0_i32_0 = arith.constant 0 : i32
    %c0_i32_1 = arith.constant 0 : i32
    return %arg1, %c0_i32, %c0_i32_0 : i32, i32, i32
  }
  func.func @transform_12(%arg0: i32, %arg1: i32) -> (i32, i32, i32) {
    %c0_i32 = arith.constant 0 : i32
    %c0_i32_0 = arith.constant 0 : i32
    %c0_i32_1 = arith.constant 0 : i32
    return %arg1, %c0_i32, %c0_i32_0 : i32, i32, i32
  }
  func.func @transform_13(%arg0: i32, %arg1: i32) -> (i32, i32, i32) {
    %c0_i32 = arith.constant 0 : i32
    %c0_i32_0 = arith.constant 0 : i32
    %c0_i32_1 = arith.constant 0 : i32
    return %arg1, %c0_i32, %c0_i32_0 : i32, i32, i32
  }
  func.func @transform_14(%arg0: i32, %arg1: i32) -> (i32, i32, i32) {
    %c0_i32 = arith.constant 0 : i32
    %c0_i32_0 = arith.constant 0 : i32
    %c0_i32_1 = arith.constant 0 : i32
    return %arg0, %c0_i32, %c0_i32_0 : i32, i32, i32
  }
}

</mosaic_0001>

<llo_original>
// kernel: tpu_custom_call.1
$region0: #{tpu_custom_call.1}
  #allocation0 [shape = 'u32[]', space=smem, size = 0x4, offset = 0x4, fixed_abs, tag = 'smem constant byte address 0x4 - core index']
  #allocation1 [shape = 'u32[144,128]{1,0:T(1,128)}', space=vmem, size = 0x12000, scoped, tag = 'internal scratch']
  #allocation2 [shape = 'f32[2,128,256]{2,1,0:T(8,128)}', space=vmem, size = 0x40000, scoped, tag = 'scratch operand']
  %s0 = inlined_call_operand.hbm [shape: f32[4,128,256], index: 0, kind: input, shape index: {}]
  %s1 = inlined_call_operand.hbm [shape: f32[4,1,128], index: 1, kind: input, shape index: {}]
  %s2 = inlined_call_operand.hbm [shape: bf16[2,256,768], index: 2, kind: input, shape index: {}]
  %s3 = inlined_call_operand.hbm [shape: f32[2,1,768], index: 3, kind: input, shape index: {}]
  %s4 = inlined_call_operand.hbm [shape: bf16[2,256,256], index: 4, kind: input, shape index: {}]
  %s5 = inlined_call_operand.vmem [shape: f32[2,1,256], index: 5, kind: input, shape index: {}]
  %s6 = inlined_call_operand.vmem [shape: f32[2,1,256], index: 6, kind: input, shape index: {}]
  %s7 = inlined_call_operand.hbm [shape: f32[2,1,256], index: 7, kind: input, shape index: {}]
  %s8 = inlined_call_operand.hbm [shape: bf16[2,256,512], index: 8, kind: input, shape index: {}]
  %s9 = inlined_call_operand.vmem [shape: f32[2,1,512], index: 9, kind: input, shape index: {}]
  %s10 = inlined_call_operand.hbm [shape: bf16[2,512,256], index: 10, kind: input, shape index: {}]
  %s11 = inlined_call_operand.vmem [shape: f32[2,1,256], index: 11, kind: input, shape index: {}]
  %s12 = inlined_call_operand.hbm [shape: f32[2,1,256], index: 12, kind: input, shape index: {}]
  %s13 = inlined_call_operand.hbm [shape: f32[2,1,256], index: 13, kind: input, shape index: {}]
  %s14 = inlined_call_operand.hbm [shape: f32[4,1,256], index: 14, kind: output, shape index: {}]
  %s15 = sld [smem:[#allocation0]]
  $region137: #{tpu_custom_call.1} parent=0
    _
  %s17 = ssub.s32 1, %s15
  %s18 = scalar_select 0, %s17, %s15
  $region1: #{tpu_custom_call.1} parent=0
    #allocation3 [shape = 'u8[524288]{0}', space=vmem, size = 0x80000, scoped, tag = 'input window, operand 0']
    #allocation4 [shape = 's32[2]{0}', space=sflag, size = 0x8, scoped, tag = 'scoped memory for tpu_custom_call.1']
    #allocation5 [shape = 's32[2]{0}', space=sflag, size = 0x8, scoped, tag = 'scoped memory for tpu_custom_call.1']
    #allocation6 [shape = 'u8[2048]{0}', space=vmem, size = 0x800, scoped, tag = 'input window, operand 1']
    #allocation7 [shape = 's32[2]{0}', space=sflag, size = 0x8, scoped, tag = 'scoped memory for tpu_custom_call.1']
    #allocation8 [shape = 'u8[786432]{0}', space=vmem, size = 0xc0000, scoped, tag = 'input window, operand 2']
    #allocation9 [shape = 'u8[6144]{0}', space=vmem, size = 0x1800, scoped, tag = 'input window, operand 3']
    #allocation10 [shape = 's32[2]{0}', space=sflag, size = 0x8, scoped, tag = 'scoped memory for tpu_custom_call.1']
    #allocation11 [shape = 'u8[262144]{0}', space=vmem, size = 0x40000, scoped, tag = 'input window, operand 4']
    #allocation12 [shape = 'u8[2048]{0}', space=vmem, size = 0x800, scoped, tag = 'input window, operand 7']
    #allocation13 [shape = 's32[2]{0}', space=sflag, size = 0x8, scoped, tag = 'scoped memory for tpu_custom_call.1']
    #allocation14 [shape = 'u8[524288]{0}', space=vmem, size = 0x80000, scoped, tag = 'input window, operand 8']
    #allocation15 [shape = 'u8[524288]{0}', space=vmem, size = 0x80000, scoped, tag = 'input window, operand 10']
    #allocation16 [shape = 's32[2]{0}', space=sflag, size = 0x8, scoped, tag = 'scoped memory for tpu_custom_call.1']
    #allocation17 [shape = 'u8[2048]{0}', space=vmem, size = 0x800, scoped, tag = 'input window, operand 12']
    #allocation18 [shape = 'u8[2048]{0}', space=vmem, size = 0x800, scoped, tag = 'input window, operand 13']
    #allocation19 [shape = 's32[2]{0}', space=sflag, size = 0x8, scoped, tag = 'scoped memory for tpu_custom_call.1']
    #allocation20 [shape = 'u8[4096]{0}', space=vmem, size = 0x1000, scoped, tag = 'output window, operand 0']
    %19 = vsyncpa [#allocation4], 0
    %s20 = scalar_lea.sflag [#allocation4], 1
    %21 = vsyncpa %s20, 0
    %22 = vsyncpa [#allocation7], 0
    %s23 = scalar_lea.sflag [#allocation7], 1
    %24 = vsyncpa %s23, 0
    %25 = vsyncpa [#allocation10], 0
    %s26 = scalar_lea.sflag [#allocation10], 1
    %27 = vsyncpa %s26, 0
    %28 = vsyncpa [#allocation13], 0
    %s29 = scalar_lea.sflag [#allocation13], 1
    %30 = vsyncpa %s29, 0
    %31 = vsyncpa [#allocation16], 0
    %s32 = scalar_lea.sflag [#allocation16], 1
    %33 = vsyncpa %s32, 0
    %34 = vsyncpa [#allocation19], 0
    %s35 = scalar_lea.sflag [#allocation19], 1
    %36 = vsyncpa %s35, 0
    %37 = vsyncpa [#allocation5], 0
    %s38 = scalar_lea.sflag [#allocation5], 1
    %39 = vsyncpa %s38, 0
    loop: start=0, step=1, limit=6
    $region2: #{tpu_custom_call.1} parent=1 // loop_pre_header
      _
    $region3: #{tpu_custom_call.1} parent=1 // loop_header
      %s41 = sphi 0, %s45
      %p42 = scmp.ge.s32.totalorder %s41, 6
      %s48 = sphi 0, %s60
      %s49 = sphi 0, %s56
      %s50 = sphi 0, %s48
      %s51 = sphi 0, %s49
      %s52 = sphi 0, %s50
      %s53 = sphi 0, %s51
      %s63 = sphi 0, %s65
      %s66 = sphi 0, %s63
      %s67 = sphi 0, %s66
      %s83 = sphi 0, %s67
      %s89 = sphi 0, %s91
      %s92 = sphi 0, %s89
      %s93 = sphi 0, %s92
      %s109 = sphi 0, %s93
      %s115 = sphi 0, %s117
      %s118 = sphi 0, %s115
      %s119 = sphi 0, %s118
      %s135 = sphi 0, %s119
      %s141 = sphi 0, %s143
      %s144 = sphi 0, %s141
      %s145 = sphi 0, %s144
      %s161 = sphi 0, %s145
      %s167 = sphi 0, %s169
      %s170 = sphi 0, %s167
      %s171 = sphi 0, %s170
      %s187 = sphi 0, %s171
      %s193 = sphi 0, %s195
      %s196 = sphi 0, %s193
      %s197 = sphi 0, %s196
      %s213 = sphi 0, %s197
      %s219 = sphi 0, %s221
      %s222 = sphi 0, %s219
      %s223 = sphi 0, %s222
      %s239 = sphi 0, %s223
      %s245 = sphi 0, %s247
      %s248 = sphi 0, %s245
      %s249 = sphi 0, %s248
      %s265 = sphi 0, %s249
      %s271 = sphi 0, %s273
      %s274 = sphi 0, %s271
      %s275 = sphi 0, %s274
      %s291 = sphi 0, %s275
      %s297 = sphi 0, %s299
      %s300 = sphi 0, %s297
      %s301 = sphi 0, %s300
      %s317 = sphi 0, %s301
      %s323 = sphi 0, %s325
      %s326 = sphi 0, %s323
      %s327 = sphi 0, %s326
      %s343 = sphi 0, %s327
      %s349 = sphi 0, %s351
      %s352 = sphi 0, %s349
      %s353 = sphi 0, %s352
      %s369 = sphi 0, %s353
      %s375 = sphi 0, %s377
      %s378 = sphi 0, %s375
      %s379 = sphi 0, %s378
      %s395 = sphi 0, %s379
      %s401 = sphi 0, %s403
      %s404 = sphi 0, %s401
      %s405 = sphi 0, %s404
      %s421 = sphi 0, %s405
      %s427 = sphi 0, %s429
      %s430 = sphi 0, %s427
      %s431 = sphi 0, %s430
      %s447 = sphi 0, %s431
    $region4: #{tpu_custom_call.1} parent=1 // loop_header_branch
      %44 = sbr.rel (%p42) target = $region8
    $region5: #{tpu_custom_call.1} parent=1 // loop_body
      %s46 = ssub.s32 %s41, 1
      %s47 = ssub.s32 %s41, 2
      %s54 = sadd.s32 1, %s49
      %p55 = scmp.ge.s32.totalorder %s54, 2
      %s56 = scalar_select %p55, 0, %s54
      %s57 = sadd.s32 1, %s48
      %s58 = scalar_select %p55, %s57, %s48
      %p59 = scmp.ge.s32.totalorder %s58, 2
      %s60 = scalar_select %p59, 0, %s58
      %s61 = ssub.s32 %s48, %s60
      %p62 = scmp.eq.s32.totalorder %s61, 0
      %s64 = sadd.s32 %s63, 1
      %s65 = scalar_select %p62, %s63, %s64
      %p68 = pneg %p62
      %p69 = scmp.eq.s32.totalorder %s41, 3
      %p70 = por %p68, %p69
      %p71 = scmp.ne.s32.totalorder %s63, %s66
      %p72 = scmp.eq.s32.totalorder %s41, 0
      %p73 = por %p71, %p72
      %p74 = scmp.ne.s32.totalorder %s63, %s66
      %p75 = scmp.eq.s32.totalorder %s46, 3
      %p76 = por %p74, %p75
      %p77 = scmp.ne.s32.totalorder %s66, %s67
      %p78 = scmp.eq.s32.totalorder %s46, 0
      %p79 = por %p77, %p78
      %p80 = scmp.ne.s32.totalorder %s66, %s67
      %p81 = scmp.eq.s32.totalorder %s47, 3
      %p82 = por %p80, %p81
      %p84 = scmp.ne.s32.totalorder %s67, %s83
      %p85 = scmp.eq.s32.totalorder %s47, 0
      %p86 = por %p84, %p85
      %s87 = ssub.s32 %s48, %s60
      %p88 = scmp.eq.s32.totalorder %s87, 0
      %s90 = sadd.s32 %s89, 1
      %s91 = scalar_select %p88, %s89, %s90
      %p94 = pneg %p88
      %p95 = scmp.eq.s32.totalorder %s41, 3
      %p96 = por %p94, %p95
      %p97 = scmp.ne.s32.totalorder %s89, %s92
      %p98 = scmp.eq.s32.totalorder %s41, 0
      %p99 = por %p97, %p98
      %p100 = scmp.ne.s32.totalorder %s89, %s92
      %p101 = scmp.eq.s32.totalorder %s46, 3
      %p102 = por %p100, %p101
      %p103 = scmp.ne.s32.totalorder %s92, %s93
      %p104 = scmp.eq.s32.totalorder %s46, 0
      %p105 = por %p103, %p104
      %p106 = scmp.ne.s32.totalorder %s92, %s93
      %p107 = scmp.eq.s32.totalorder %s47, 3
      %p108 = por %p106, %p107
      %p110 = scmp.ne.s32.totalorder %s93, %s109
      %p111 = scmp.eq.s32.totalorder %s47, 0
      %p112 = por %p110, %p111
      %s113 = ssub.s32 %s49, %s56
      %p114 = scmp.eq.s32.totalorder %s113, 0
      %s116 = sadd.s32 %s115, 1
      %s117 = scalar_select %p114, %s115, %s116
      %p120 = pneg %p114
      %p121 = scmp.eq.s32.totalorder %s41, 3
      %p122 = por %p120, %p121
      %p123 = scmp.ne.s32.totalorder %s115, %s118
      %p124 = scmp.eq.s32.totalorder %s41, 0
      %p125 = por %p123, %p124
      %p126 = scmp.ne.s32.totalorder %s115, %s118
      %p127 = scmp.eq.s32.totalorder %s46, 3
      %p128 = por %p126, %p127
      %p129 = scmp.ne.s32.totalorder %s118, %s119
      %p130 = scmp.eq.s32.totalorder %s46, 0
      %p131 = por %p129, %p130
      %p132 = scmp.ne.s32.totalorder %s118, %s119
      %p133 = scmp.eq.s32.totalorder %s47, 3
      %p134 = por %p132, %p133
      %p136 = scmp.ne.s32.totalorder %s119, %s135
      %p137 = scmp.eq.s32.totalorder %s47, 0
      %p138 = por %p136, %p137
      %s139 = ssub.s32 %s49, %s56
      %p140 = scmp.eq.s32.totalorder %s139, 0
      %s142 = sadd.s32 %s141, 1
      %s143 = scalar_select %p140, %s141, %s142
      %p146 = pneg %p140
      %p147 = scmp.eq.s32.totalorder %s41, 3
      %p148 = por %p146, %p147
      %p149 = scmp.ne.s32.totalorder %s141, %s144
      %p150 = scmp.eq.s32.totalorder %s41, 0
      %p151 = por %p149, %p150
      %p152 = scmp.ne.s32.totalorder %s141, %s144
      %p153 = scmp.eq.s32.totalorder %s46, 3
      %p154 = por %p152, %p153
      %p155 = scmp.ne.s32.totalorder %s144, %s145
      %p156 = scmp.eq.s32.totalorder %s46, 0
      %p157 = por %p155, %p156
      %p158 = scmp.ne.s32.totalorder %s144, %s145
      %p159 = scmp.eq.s32.totalorder %s47, 3
      %p160 = por %p158, %p159
      %p162 = scmp.ne.s32.totalorder %s145, %s161
      %p163 = scmp.eq.s32.totalorder %s47, 0
      %p164 = por %p162, %p163
      %s165 = ssub.s32 %s49, %s56
      %p166 = scmp.eq.s32.totalorder %s165, 0
      %s168 = sadd.s32 %s167, 1
      %s169 = scalar_select %p166, %s167, %s168
      %p172 = pneg %p166
      %p173 = scmp.eq.s32.totalorder %s41, 3
      %p174 = por %p172, %p173
      %p175 = scmp.ne.s32.totalorder %s167, %s170
      %p176 = scmp.eq.s32.totalorder %s41, 0
      %p177 = por %p175, %p176
      %p178 = scmp.ne.s32.totalorder %s167, %s170
      %p179 = scmp.eq.s32.totalorder %s46, 3
      %p180 = por %p178, %p179
      %p181 = scmp.ne.s32.totalorder %s170, %s171
      %p182 = scmp.eq.s32.totalorder %s46, 0
      %p183 = por %p181, %p182
      %p184 = scmp.ne.s32.totalorder %s170, %s171
      %p185 = scmp.eq.s32.totalorder %s47, 3
      %p186 = por %p184, %p185
      %p188 = scmp.ne.s32.totalorder %s171, %s187
      %p189 = scmp.eq.s32.totalorder %s47, 0
      %p190 = por %p188, %p189
      %s191 = ssub.s32 %s49, %s56
      %p192 = scmp.eq.s32.totalorder %s191, 0
      %s194 = sadd.s32 %s193, 1
      %s195 = scalar_select %p192, %s193, %s194
      %p198 = pneg %p192
      %p199 = scmp.eq.s32.totalorder %s41, 3
      %p200 = por %p198, %p199
      %p201 = scmp.ne.s32.totalorder %s193, %s196
      %p202 = scmp.eq.s32.totalorder %s41, 0
      %p203 = por %p201, %p202
      %p204 = scmp.ne.s32.totalorder %s193, %s196
      %p205 = scmp.eq.s32.totalorder %s46, 3
      %p206 = por %p204, %p205
      %p207 = scmp.ne.s32.totalorder %s196, %s197
      %p208 = scmp.eq.s32.totalorder %s46, 0
      %p209 = por %p207, %p208
      %p210 = scmp.ne.s32.totalorder %s196, %s197
      %p211 = scmp.eq.s32.totalorder %s47, 3
      %p212 = por %p210, %p211
      %p214 = scmp.ne.s32.totalorder %s197, %s213
      %p215 = scmp.eq.s32.totalorder %s47, 0
      %p216 = por %p214, %p215
      %s217 = ssub.s32 %s49, %s56
      %p218 = scmp.eq.s32.totalorder %s217, 0
      %s220 = sadd.s32 %s219, 1
      %s221 = scalar_select %p218, %s219, %s220
      %p224 = pneg %p218
      %p225 = scmp.eq.s32.totalorder %s41, 3
      %p226 = por %p224, %p225
      %p227 = scmp.ne.s32.totalorder %s219, %s222
      %p228 = scmp.eq.s32.totalorder %s41, 0
      %p229 = por %p227, %p228
      %p230 = scmp.ne.s32.totalorder %s219, %s222
      %p231 = scmp.eq.s32.totalorder %s46, 3
      %p232 = por %p230, %p231
      %p233 = scmp.ne.s32.totalorder %s222, %s223
      %p234 = scmp.eq.s32.totalorder %s46, 0
      %p235 = por %p233, %p234
      %p236 = scmp.ne.s32.totalorder %s222, %s223
      %p237 = scmp.eq.s32.totalorder %s47, 3
      %p238 = por %p236, %p237
      %p240 = scmp.ne.s32.totalorder %s223, %s239
      %p241 = scmp.eq.s32.totalorder %s47, 0
      %p242 = por %p240, %p241
      %s243 = ssub.s32 %s49, %s56
      %p244 = scmp.eq.s32.totalorder %s243, 0
      %s246 = sadd.s32 %s245, 1
      %s247 = scalar_select %p244, %s245, %s246
      %p250 = pneg %p244
      %p251 = scmp.eq.s32.totalorder %s41, 3
      %p252 = por %p250, %p251
      %p253 = scmp.ne.s32.totalorder %s245, %s248
      %p254 = scmp.eq.s32.totalorder %s41, 0
      %p255 = por %p253, %p254
      %p256 = scmp.ne.s32.totalorder %s245, %s248
      %p257 = scmp.eq.s32.totalorder %s46, 3
      %p258 = por %p256, %p257
      %p259 = scmp.ne.s32.totalorder %s248, %s249
      %p260 = scmp.eq.s32.totalorder %s46, 0
      %p261 = por %p259, %p260
      %p262 = scmp.ne.s32.totalorder %s248, %s249
      %p263 = scmp.eq.s32.totalorder %s47, 3
      %p264 = por %p262, %p263
      %p266 = scmp.ne.s32.totalorder %s249, %s265
      %p267 = scmp.eq.s32.totalorder %s47, 0
      %p268 = por %p266, %p267
      %s269 = ssub.s32 %s49, %s56
      %p270 = scmp.eq.s32.totalorder %s269, 0
      %s272 = sadd.s32 %s271, 1
      %s273 = scalar_select %p270, %s271, %s272
      %p276 = pneg %p270
      %p277 = scmp.eq.s32.totalorder %s41, 3
      %p278 = por %p276, %p277
      %p279 = scmp.ne.s32.totalorder %s271, %s274
      %p280 = scmp.eq.s32.totalorder %s41, 0
      %p281 = por %p279, %p280
      %p282 = scmp.ne.s32.totalorder %s271, %s274
      %p283 = scmp.eq.s32.totalorder %s46, 3
      %p284 = por %p282, %p283
      %p285 = scmp.ne.s32.totalorder %s274, %s275
      %p286 = scmp.eq.s32.totalorder %s46, 0
      %p287 = por %p285, %p286
      %p288 = scmp.ne.s32.totalorder %s274, %s275
      %p289 = scmp.eq.s32.totalorder %s47, 3
      %p290 = por %p288, %p289
      %p292 = scmp.ne.s32.totalorder %s275, %s291
      %p293 = scmp.eq.s32.totalorder %s47, 0
      %p294 = por %p292, %p293
      %s295 = ssub.s32 %s49, %s56
      %p296 = scmp.eq.s32.totalorder %s295, 0
      %s298 = sadd.s32 %s297, 1
      %s299 = scalar_select %p296, %s297, %s298
      %p302 = pneg %p296
      %p303 = scmp.eq.s32.totalorder %s41, 3
      %p304 = por %p302, %p303
      %p305 = scmp.ne.s32.totalorder %s297, %s300
      %p306 = scmp.eq.s32.totalorder %s41, 0
      %p307 = por %p305, %p306
      %p308 = scmp.ne.s32.totalorder %s297, %s300
      %p309 = scmp.eq.s32.totalorder %s46, 3
      %p310 = por %p308, %p309
      %p311 = scmp.ne.s32.totalorder %s300, %s301
      %p312 = scmp.eq.s32.totalorder %s46, 0
      %p313 = por %p311, %p312
      %p314 = scmp.ne.s32.totalorder %s300, %s301
      %p315 = scmp.eq.s32.totalorder %s47, 3
      %p316 = por %p314, %p315
      %p318 = scmp.ne.s32.totalorder %s301, %s317
      %p319 = scmp.eq.s32.totalorder %s47, 0
      %p320 = por %p318, %p319
      %s321 = ssub.s32 %s49, %s56
      %p322 = scmp.eq.s32.totalorder %s321, 0
      %s324 = sadd.s32 %s323, 1
      %s325 = scalar_select %p322, %s323, %s324
      %p328 = pneg %p322
      %p329 = scmp.eq.s32.totalorder %s41, 3
      %p330 = por %p328, %p329
      %p331 = scmp.ne.s32.totalorder %s323, %s326
      %p332 = scmp.eq.s32.totalorder %s41, 0
      %p333 = por %p331, %p332
      %p334 = scmp.ne.s32.totalorder %s323, %s326
      %p335 = scmp.eq.s32.totalorder %s46, 3
      %p336 = por %p334, %p335
      %p337 = scmp.ne.s32.totalorder %s326, %s327
      %p338 = scmp.eq.s32.totalorder %s46, 0
      %p339 = por %p337, %p338
      %p340 = scmp.ne.s32.totalorder %s326, %s327
      %p341 = scmp.eq.s32.totalorder %s47, 3
      %p342 = por %p340, %p341
      %p344 = scmp.ne.s32.totalorder %s327, %s343
      %p345 = scmp.eq.s32.totalorder %s47, 0
      %p346 = por %p344, %p345
      %s347 = ssub.s32 %s49, %s56
      %p348 = scmp.eq.s32.totalorder %s347, 0
      %s350 = sadd.s32 %s349, 1
      %s351 = scalar_select %p348, %s349, %s350
      %p354 = pneg %p348
      %p355 = scmp.eq.s32.totalorder %s41, 3
      %p356 = por %p354, %p355
      %p357 = scmp.ne.s32.totalorder %s349, %s352
      %p358 = scmp.eq.s32.totalorder %s41, 0
      %p359 = por %p357, %p358
      %p360 = scmp.ne.s32.totalorder %s349, %s352
      %p361 = scmp.eq.s32.totalorder %s46, 3
      %p362 = por %p360, %p361
      %p363 = scmp.ne.s32.totalorder %s352, %s353
      %p364 = scmp.eq.s32.totalorder %s46, 0
      %p365 = por %p363, %p364
      %p366 = scmp.ne.s32.totalorder %s352, %s353
      %p367 = scmp.eq.s32.totalorder %s47, 3
      %p368 = por %p366, %p367
      %p370 = scmp.ne.s32.totalorder %s353, %s369
      %p371 = scmp.eq.s32.totalorder %s47, 0
      %p372 = por %p370, %p371
      %s373 = ssub.s32 %s49, %s56
      %p374 = scmp.eq.s32.totalorder %s373, 0
      %s376 = sadd.s32 %s375, 1
      %s377 = scalar_select %p374, %s375, %s376
      %p380 = pneg %p374
      %p381 = scmp.eq.s32.totalorder %s41, 3
      %p382 = por %p380, %p381
      %p383 = scmp.ne.s32.totalorder %s375, %s378
      %p384 = scmp.eq.s32.totalorder %s41, 0
      %p385 = por %p383, %p384
      %p386 = scmp.ne.s32.totalorder %s375, %s378
      %p387 = scmp.eq.s32.totalorder %s46, 3
      %p388 = por %p386, %p387
      %p389 = scmp.ne.s32.totalorder %s378, %s379
      %p390 = scmp.eq.s32.totalorder %s46, 0
      %p391 = por %p389, %p390
      %p392 = scmp.ne.s32.totalorder %s378, %s379
      %p393 = scmp.eq.s32.totalorder %s47, 3
      %p394 = por %p392, %p393
      %p396 = scmp.ne.s32.totalorder %s379, %s395
      %p397 = scmp.eq.s32.totalorder %s47, 0
      %p398 = por %p396, %p397
      %s399 = ssub.s32 %s49, %s56
      %p400 = scmp.eq.s32.totalorder %s399, 0
      %s402 = sadd.s32 %s401, 1
      %s403 = scalar_select %p400, %s401, %s402
      %p406 = pneg %p400
      %p407 = scmp.eq.s32.totalorder %s41, 3
      %p408 = por %p406, %p407
      %p409 = scmp.ne.s32.totalorder %s401, %s404
      %p410 = scmp.eq.s32.totalorder %s41, 0
      %p411 = por %p409, %p410
      %p412 = scmp.ne.s32.totalorder %s401, %s404
      %p413 = scmp.eq.s32.totalorder %s46, 3
      %p414 = por %p412, %p413
      %p415 = scmp.ne.s32.totalorder %s404, %s405
      %p416 = scmp.eq.s32.totalorder %s46, 0
      %p417 = por %p415, %p416
      %p418 = scmp.ne.s32.totalorder %s404, %s405
      %p419 = scmp.eq.s32.totalorder %s47, 3
      %p420 = por %p418, %p419
      %p422 = scmp.ne.s32.totalorder %s405, %s421
      %p423 = scmp.eq.s32.totalorder %s47, 0
      %p424 = por %p422, %p423
      %s425 = ssub.s32 %s48, %s60
      %p426 = scmp.eq.s32.totalorder %s425, 0
      %s428 = sadd.s32 %s427, 1
      %s429 = scalar_select %p426, %s427, %s428
      %p432 = pneg %p426
      %p433 = scmp.eq.s32.totalorder %s41, 3
      %p434 = por %p432, %p433
      %p435 = scmp.ne.s32.totalorder %s427, %s430
      %p436 = scmp.eq.s32.totalorder %s41, 0
      %p437 = por %p435, %p436
      %p438 = scmp.ne.s32.totalorder %s427, %s430
      %p439 = scmp.eq.s32.totalorder %s46, 3
      %p440 = por %p438, %p439
      %p441 = scmp.ne.s32.totalorder %s430, %s431
      %p442 = scmp.eq.s32.totalorder %s46, 0
      %p443 = por %p441, %p442
      %p444 = scmp.ne.s32.totalorder %s430, %s431
      %p445 = scmp.eq.s32.totalorder %s47, 3
      %p446 = por %p444, %p445
      %p448 = scmp.ne.s32.totalorder %s431, %s447
      %p449 = scmp.eq.s32.totalorder %s47, 0
      %p450 = por %p448, %p449
      %p451 = scmp.le.s32.totalorder 1, %s41
      %p452 = scmp.lt.s32.totalorder %s41, 5
      %p453 = pnand %p451, %p452
      %p454 = pneg %p453
      // Predicated region
      $region9: #{tpu_custom_call.1} parent=5 // pred_check
        _
      $region10: #{tpu_custom_call.1} parent=5 // pred_check_branch
        %456 = sbr.rel (%p453) target = $region12
      $region11: #{tpu_custom_call.1} parent=5 // pred_region
        %s457 = ssub.s32 %s41, 1
      $region12: #{tpu_custom_call.1} parent=5 // pred_fallthru
        _
      %p458 = scmp.lt.s32.totalorder %s41, 4
      // Predicated region
      $region13: #{tpu_custom_call.1} parent=5 // pred_check
        %p459 = pneg %p458
      $region14: #{tpu_custom_call.1} parent=5 // pred_check_branch
        %461 = sbr.rel (%p459) target = $region16
      $region15: #{tpu_custom_call.1} parent=5 // pred_region
        // Predicated region
        $region17: #{tpu_custom_call.1} parent=15 // pred_check
          %p462 = pneg %p73
        $region18: #{tpu_custom_call.1} parent=15 // pred_check_branch
          %464 = sbr.rel (%p462) target = $region20
        $region19: #{tpu_custom_call.1} parent=15 // pred_region
          %s465 = sand.u32 %s63, 1
          %s466 = scalar_lea.sflag [#allocation4], %s465
          %s467 = sand.u32 %s63, 1
          %s468 = smul.addr %s467, 512
          %s469 = scalar_lea.vmem [#allocation3], %s468
          %s470 = smul.u32 2, %s48
          %s472 = ssub.s32 8192, 8192
          %473 = vsyncadd %s466, %s472
          %s474 = smul.addr %s470, 32
          %s475 = smul.addr %s474, 128
          %s476 = scalar_lea.hbm %s0, %s475
          %s477 = sshll.u32 %s469, 4
          %s478 = int_to_ptr.vmem [resolvable:$true] %s477
          %483 = dma.hbm_to_vmem [thread:$0]  %s476, 8192, %s478, %s466, 256, 256, 16
        $region20: #{tpu_custom_call.1} parent=15 // pred_fallthru
          _
        // Predicated region
        $region21: #{tpu_custom_call.1} parent=15 // pred_check
          %p484 = pneg %p99
        $region22: #{tpu_custom_call.1} parent=15 // pred_check_branch
          %486 = sbr.rel (%p484) target = $region24
        $region23: #{tpu_custom_call.1} parent=15 // pred_region
          %s487 = sand.u32 %s41, 1
          %s488 = scalar_lea.sflag [#allocation7], %s487
          %s489 = sand.u32 %s89, 1
          %s490 = smul.addr %s489, 2
          %s491 = scalar_lea.vmem [#allocation6], %s490
          %s492 = smul.u32 2, %s48
          %s494 = ssub.s32 32, 32
          %495 = vsyncadd %s488, %s494
          %s496 = smul.addr %s492, 16
          %s497 = scalar_lea.hbm %s1, %s496
          %s498 = sshll.u32 %s491, 4
          %s499 = int_to_ptr.vmem [resolvable:$true] %s498
          %504 = dma.hbm_to_vmem [thread:$0]  %s497, 32, %s499, %s488, 16, 16, 1
        $region24: #{tpu_custom_call.1} parent=15 // pred_fallthru
          _
        // Predicated region
        $region25: #{tpu_custom_call.1} parent=15 // pred_check
          %p505 = pneg %p125
        $region26: #{tpu_custom_call.1} parent=15 // pred_check_branch
          %507 = sbr.rel (%p505) target = $region28
        $region27: #{tpu_custom_call.1} parent=15 // pred_region
          %s508 = sand.u32 %s41, 1
          %s509 = scalar_lea.sflag [#allocation7], %s508
          %s510 = sand.u32 %s115, 1
          %s511 = smul.addr %s510, 768
          %s512 = scalar_lea.vmem [#allocation8], %s511
          %s514 = ssub.s32 12288, 12288
          %515 = vsyncadd %s509, %s514
          %s516 = smul.addr %s49, 192
          %s517 = smul.addr %s516, 64
          %s518 = scalar_lea.hbm %s2, %s517
          %s519 = sshll.u32 %s512, 4
          %s520 = int_to_ptr.vmem [resolvable:$true] %s519
          %525 = dma.hbm_to_vmem [thread:$0]  %s518, 12288, %s520, %s509, 384, 384, 24
        $region28: #{tpu_custom_call.1} parent=15 // pred_fallthru
          _
        // Predicated region
        $region29: #{tpu_custom_call.1} parent=15 // pred_check
          %p526 = pneg %p151
        $region30: #{tpu_custom_call.1} parent=15 // pred_check_branch
          %528 = sbr.rel (%p526) target = $region32
        $region31: #{tpu_custom_call.1} parent=15 // pred_region
          %s529 = sand.u32 %s41, 1
          %s530 = scalar_lea.sflag [#allocation10], %s529
          %s531 = sand.u32 %s141, 1
          %s532 = smul.addr %s531, 6
          %s533 = scalar_lea.vmem [#allocation9], %s532
          %s535 = ssub.s32 96, 96
          %536 = vsyncadd %s530, %s535
          %s537 = smul.addr %s49, 6
          %s538 = smul.addr %s537, 16
          %s539 = scalar_lea.hbm %s3, %s538
          %s541 = sshll.u32 %s533, 4
          %s542 = int_to_ptr.vmem [resolvable:$true] %s541
          %544 = dma.hbm_to_vmem [thread:$0]  %s539, 96, %s542, %s530
        $region32: #{tpu_custom_call.1} parent=15 // pred_fallthru
          _
        // Predicated region
        $region33: #{tpu_custom_call.1} parent=15 // pred_check
          %p545 = pneg %p177
        $region34: #{tpu_custom_call.1} parent=15 // pred_check_branch
          %547 = sbr.rel (%p545) target = $region36
        $region35: #{tpu_custom_call.1} parent=15 // pred_region
          %s548 = sand.u32 %s41, 1
          %s549 = scalar_lea.sflag [#allocation10], %s548
          %s550 = sand.u32 %s167, 1
          %s551 = smul.addr %s550, 256
          %s552 = scalar_lea.vmem [#allocation11], %s551
          %s554 = ssub.s32 4096, 4096
          %555 = vsyncadd %s549, %s554
          %s556 = smul.addr %s49, 64
          %s557 = smul.addr %s556, 64
          %s558 = scalar_lea.hbm %s4, %s557
          %s559 = sshll.u32 %s552, 4
          %s560 = int_to_ptr.vmem [resolvable:$true] %s559
          %565 = dma.hbm_to_vmem [thread:$0]  %s558, 4096, %s560, %s549, 128, 128, 8
        $region36: #{tpu_custom_call.1} parent=15 // pred_fallthru
          _
        // Predicated region
        $region37: #{tpu_custom_call.1} parent=15 // pred_check
          %p566 = pneg %p203
        $region38: #{tpu_custom_call.1} parent=15 // pred_check_branch
          %568 = sbr.rel (%p566) target = $region40
        $region39: #{tpu_custom_call.1} parent=15 // pred_region
          %p569 = scmp.lt.s32.totalorder %s49, 1
          %s570 = scalar_select %p569, %s49, 1
          %s571 = smul.addr %s570, 2
          %s572 = scalar_lea.vmem %s5, %s571
        $region40: #{tpu_custom_call.1} parent=15 // pred_fallthru
          _
        // Predicated region
        $region41: #{tpu_custom_call.1} parent=15 // pred_check
          %p573 = pneg %p229
        $region42: #{tpu_custom_call.1} parent=15 // pred_check_branch
          %575 = sbr.rel (%p573) target = $region44
        $region43: #{tpu_custom_call.1} parent=15 // pred_region
          %p576 = scmp.lt.s32.totalorder %s49, 1
          %s577 = scalar_select %p576, %s49, 1
          %s578 = smul.addr %s577, 2
          %s579 = scalar_lea.vmem %s6, %s578
        $region44: #{tpu_custom_call.1} parent=15 // pred_fallthru
          _
        // Predicated region
        $region45: #{tpu_custom_call.1} parent=15 // pred_check
          %p580 = pneg %p255
        $region46: #{tpu_custom_call.1} parent=15 // pred_check_branch
          %582 = sbr.rel (%p580) target = $region48
        $region47: #{tpu_custom_call.1} parent=15 // pred_region
          %s583 = sand.u32 %s41, 1
          %s584 = scalar_lea.sflag [#allocation13], %s583
          %s585 = sand.u32 %s245, 1
          %s586 = smul.addr %s585, 2
          %s587 = scalar_lea.vmem [#allocation12], %s586
          %s589 = ssub.s32 32, 32
          %590 = vsyncadd %s584, %s589
          %s591 = smul.addr %s49, 2
          %s592 = smul.addr %s591, 16
          %s593 = scalar_lea.hbm %s7, %s592
          %s595 = sshll.u32 %s587, 4
          %s596 = int_to_ptr.vmem [resolvable:$true] %s595
          %598 = dma.hbm_to_vmem [thread:$0]  %s593, 32, %s596, %s584
        $region48: #{tpu_custom_call.1} parent=15 // pred_fallthru
          _
        // Predicated region
        $region49: #{tpu_custom_call.1} parent=15 // pred_check
          %p599 = pneg %p281
        $region50: #{tpu_custom_call.1} parent=15 // pred_check_branch
          %601 = sbr.rel (%p599) target = $region52
        $region51: #{tpu_custom_call.1} parent=15 // pred_region
          %s602 = sand.u32 %s41, 1
          %s603 = scalar_lea.sflag [#allocation13], %s602
          %s604 = sand.u32 %s271, 1
          %s605 = smul.addr %s604, 512
          %s606 = scalar_lea.vmem [#allocation14], %s605
          %s608 = ssub.s32 8192, 8192
          %609 = vsyncadd %s603, %s608
          %s610 = smul.addr %s49, 128
          %s611 = smul.addr %s610, 64
          %s612 = scalar_lea.hbm %s8, %s611
          %s613 = sshll.u32 %s606, 4
          %s614 = int_to_ptr.vmem [resolvable:$true] %s613
          %619 = dma.hbm_to_vmem [thread:$0]  %s612, 8192, %s614, %s603, 256, 256, 16
        $region52: #{tpu_custom_call.1} parent=15 // pred_fallthru
          _
        // Predicated region
        $region53: #{tpu_custom_call.1} parent=15 // pred_check
          %p620 = pneg %p307
        $region54: #{tpu_custom_call.1} parent=15 // pred_check_branch
          %622 = sbr.rel (%p620) target = $region56
        $region55: #{tpu_custom_call.1} parent=15 // pred_region
          %p623 = scmp.lt.s32.totalorder %s49, 1
          %s624 = scalar_select %p623, %s49, 1
          %s625 = smul.addr %s624, 4
          %s626 = scalar_lea.vmem %s9, %s625
        $region56: #{tpu_custom_call.1} parent=15 // pred_fallthru
          _
        // Predicated region
        $region57: #{tpu_custom_call.1} parent=15 // pred_check
          %p627 = pneg %p333
        $region58: #{tpu_custom_call.1} parent=15 // pred_check_branch
          %629 = sbr.rel (%p627) target = $region60
        $region59: #{tpu_custom_call.1} parent=15 // pred_region
          %s630 = sand.u32 %s41, 1
          %s631 = scalar_lea.sflag [#allocation16], %s630
          %s632 = sand.u32 %s323, 1
          %s633 = smul.addr %s632, 512
          %s634 = scalar_lea.vmem [#allocation15], %s633
          %s636 = ssub.s32 8192, 8192
          %637 = vsyncadd %s631, %s636
          %s638 = smul.addr %s49, 128
          %s639 = smul.addr %s638, 64
          %s640 = scalar_lea.hbm %s10, %s639
          %s641 = sshll.u32 %s634, 4
          %s642 = int_to_ptr.vmem [resolvable:$true] %s641
          %647 = dma.hbm_to_vmem [thread:$0]  %s640, 8192, %s642, %s631, 128, 128, 8
        $region60: #{tpu_custom_call.1} parent=15 // pred_fallthru
          _
        // Predicated region
        $region61: #{tpu_custom_call.1} parent=15 // pred_check
          %p648 = pneg %p359
        $region62: #{tpu_custom_call.1} parent=15 // pred_check_branch
          %650 = sbr.rel (%p648) target = $region64
        $region63: #{tpu_custom_call.1} parent=15 // pred_region
          %p651 = scmp.lt.s32.totalorder %s49, 1
          %s652 = scalar_select %p651, %s49, 1
          %s653 = smul.addr %s652, 2
          %s654 = scalar_lea.vmem %s11, %s653
        $region64: #{tpu_custom_call.1} parent=15 // pred_fallthru
          _
        // Predicated region
        $region65: #{tpu_custom_call.1} parent=15 // pred_check
          %p655 = pneg %p385
        $region66: #{tpu_custom_call.1} parent=15 // pred_check_branch
          %657 = sbr.rel (%p655) target = $region68
        $region67: #{tpu_custom_call.1} parent=15 // pred_region
          %s658 = sand.u32 %s41, 1
          %s659 = scalar_lea.sflag [#allocation16], %s658
          %s660 = sand.u32 %s375, 1
          %s661 = smul.addr %s660, 2
          %s662 = scalar_lea.vmem [#allocation17], %s661
          %s664 = ssub.s32 32, 32
          %665 = vsyncadd %s659, %s664
          %s666 = smul.addr %s49, 2
          %s667 = smul.addr %s666, 16
          %s668 = scalar_lea.hbm %s12, %s667
          %s670 = sshll.u32 %s662, 4
          %s671 = int_to_ptr.vmem [resolvable:$true] %s670
          %673 = dma.hbm_to_vmem [thread:$0]  %s668, 32, %s671, %s659
        $region68: #{tpu_custom_call.1} parent=15 // pred_fallthru
          _
        // Predicated region
        $region69: #{tpu_custom_call.1} parent=15 // pred_check
          %p674 = pneg %p411
        $region70: #{tpu_custom_call.1} parent=15 // pred_check_branch
          %676 = sbr.rel (%p674) target = $region72
        $region71: #{tpu_custom_call.1} parent=15 // pred_region
          %s677 = sand.u32 %s401, 1
          %s678 = scalar_lea.sflag [#allocation19], %s677
          %s679 = sand.u32 %s401, 1
          %s680 = smul.addr %s679, 2
          %s681 = scalar_lea.vmem [#allocation18], %s680
          %s683 = ssub.s32 32, 32
          %684 = vsyncadd %s678, %s683
          %s685 = smul.addr %s49, 2
          %s686 = smul.addr %s685, 16
          %s687 = scalar_lea.hbm %s13, %s686
          %s689 = sshll.u32 %s681, 4
          %s690 = int_to_ptr.vmem [resolvable:$true] %s689
          %692 = dma.hbm_to_vmem [thread:$0]  %s687, 32, %s690, %s678
        $region72: #{tpu_custom_call.1} parent=15 // pred_fallthru
          _
      $region16: #{tpu_custom_call.1} parent=5 // pred_fallthru
        _
      %p693 = scmp.le.s32.totalorder 1, %s41
      %p694 = scmp.lt.s32.totalorder %s41, 5
      %p695 = pnand %p693, %p694
      %p696 = pneg %p695
      // Predicated region
      $region73: #{tpu_custom_call.1} parent=5 // pred_check
        _
      $region74: #{tpu_custom_call.1} parent=5 // pred_check_branch
        %698 = sbr.rel (%p695) target = $region76
      $region75: #{tpu_custom_call.1} parent=5 // pred_region
        %s699 = ssub.s32 %s41, 1
        %s700 = sand.u32 %s66, 1
        %s701 = scalar_lea.sflag [#allocation4], %s700
        %s702 = sand.u32 %s66, 1
        %s703 = smul.addr %s702, 512
        %s704 = scalar_lea.vmem [#allocation3], %s703
        // Predicated region
        $region77: #{tpu_custom_call.1} parent=75 // pred_check
          %p705 = pneg %p79
        $region78: #{tpu_custom_call.1} parent=75 // pred_check_branch
          %707 = sbr.rel (%p705) target = $region80
        $region79: #{tpu_custom_call.1} parent=75 // pred_region
          %708 = dma.done %s701, 8192
        $region80: #{tpu_custom_call.1} parent=75 // pred_fallthru
          _
        %s709 = sand.u32 %s46, 1
        %s710 = scalar_lea.sflag [#allocation7], %s709
        %s711 = sand.u32 %s92, 1
        %s712 = smul.addr %s711, 2
        %s713 = scalar_lea.vmem [#allocation6], %s712
        // Predicated region
        $region81: #{tpu_custom_call.1} parent=75 // pred_check
          %p714 = pneg %p105
        $region82: #{tpu_custom_call.1} parent=75 // pred_check_branch
          %716 = sbr.rel (%p714) target = $region84
        $region83: #{tpu_custom_call.1} parent=75 // pred_region
          %717 = dma.done %s710, 32
        $region84: #{tpu_custom_call.1} parent=75 // pred_fallthru
          _
        %s718 = sand.u32 %s46, 1
        %s719 = scalar_lea.sflag [#allocation7], %s718
        %s720 = sand.u32 %s118, 1
        %s721 = smul.addr %s720, 768
        %s722 = scalar_lea.vmem [#allocation8], %s721
        // Predicated region
        $region85: #{tpu_custom_call.1} parent=75 // pred_check
          %p723 = pneg %p131
        $region86: #{tpu_custom_call.1} parent=75 // pred_check_branch
          %725 = sbr.rel (%p723) target = $region88
        $region87: #{tpu_custom_call.1} parent=75 // pred_region
          %726 = dma.done %s719, 12288
        $region88: #{tpu_custom_call.1} parent=75 // pred_fallthru
          _
        %s727 = sand.u32 %s46, 1
        %s728 = scalar_lea.sflag [#allocation10], %s727
        %s729 = sand.u32 %s144, 1
        %s730 = smul.addr %s729, 6
        %s731 = scalar_lea.vmem [#allocation9], %s730
        // Predicated region
        $region89: #{tpu_custom_call.1} parent=75 // pred_check
          %p732 = pneg %p157
        $region90: #{tpu_custom_call.1} parent=75 // pred_check_branch
          %734 = sbr.rel (%p732) target = $region92
        $region91: #{tpu_custom_call.1} parent=75 // pred_region
          %735 = dma.done %s728, 96
        $region92: #{tpu_custom_call.1} parent=75 // pred_fallthru
          _
        %s736 = sand.u32 %s46, 1
        %s737 = scalar_lea.sflag [#allocation10], %s736
        %s738 = sand.u32 %s170, 1
        %s739 = smul.addr %s738, 256
        %s740 = scalar_lea.vmem [#allocation11], %s739
        // Predicated region
        $region93: #{tpu_custom_call.1} parent=75 // pred_check
          %p741 = pneg %p183
        $region94: #{tpu_custom_call.1} parent=75 // pred_check_branch
          %743 = sbr.rel (%p741) target = $region96
        $region95: #{tpu_custom_call.1} parent=75 // pred_region
          %744 = dma.done %s737, 4096
        $region96: #{tpu_custom_call.1} parent=75 // pred_fallthru
          _
        %s745 = sand.u32 %s46, 1
        %s746 = scalar_lea.sflag [#allocation13], %s745
        %s747 = sand.u32 %s248, 1
        %s748 = smul.addr %s747, 2
        %s749 = scalar_lea.vmem [#allocation12], %s748
        // Predicated region
        $region97: #{tpu_custom_call.1} parent=75 // pred_check
          %p750 = pneg %p261
        $region98: #{tpu_custom_call.1} parent=75 // pred_check_branch
          %752 = sbr.rel (%p750) target = $region100
        $region99: #{tpu_custom_call.1} parent=75 // pred_region
          %753 = dma.done %s746, 32
        $region100: #{tpu_custom_call.1} parent=75 // pred_fallthru
          _
        %s754 = sand.u32 %s46, 1
        %s755 = scalar_lea.sflag [#allocation13], %s754
        %s756 = sand.u32 %s274, 1
        %s757 = smul.addr %s756, 512
        %s758 = scalar_lea.vmem [#allocation14], %s757
        // Predicated region
        $region101: #{tpu_custom_call.1} parent=75 // pred_check
          %p759 = pneg %p287
        $region102: #{tpu_custom_call.1} parent=75 // pred_check_branch
          %761 = sbr.rel (%p759) target = $region104
        $region103: #{tpu_custom_call.1} parent=75 // pred_region
          %762 = dma.done %s755, 8192
        $region104: #{tpu_custom_call.1} parent=75 // pred_fallthru
          _
        %s763 = sand.u32 %s46, 1
        %s764 = scalar_lea.sflag [#allocation16], %s763
        %s765 = sand.u32 %s326, 1
        %s766 = smul.addr %s765, 512
        %s767 = scalar_lea.vmem [#allocation15], %s766
        // Predicated region
        $region105: #{tpu_custom_call.1} parent=75 // pred_check
          %p768 = pneg %p339
        $region106: #{tpu_custom_call.1} parent=75 // pred_check_branch
          %770 = sbr.rel (%p768) target = $region108
        $region107: #{tpu_custom_call.1} parent=75 // pred_region
          %771 = dma.done %s764, 8192
        $region108: #{tpu_custom_call.1} parent=75 // pred_fallthru
          _
        %s772 = sand.u32 %s46, 1
        %s773 = scalar_lea.sflag [#allocation16], %s772
        %s774 = sand.u32 %s378, 1
        %s775 = smul.addr %s774, 2
        %s776 = scalar_lea.vmem [#allocation17], %s775
        // Predicated region
        $region109: #{tpu_custom_call.1} parent=75 // pred_check
          %p777 = pneg %p391
        $region110: #{tpu_custom_call.1} parent=75 // pred_check_branch
          %779 = sbr.rel (%p777) target = $region112
        $region111: #{tpu_custom_call.1} parent=75 // pred_region
          %780 = dma.done %s773, 32
        $region112: #{tpu_custom_call.1} parent=75 // pred_fallthru
          _
        %s781 = sand.u32 %s404, 1
        %s782 = scalar_lea.sflag [#allocation19], %s781
        %s783 = sand.u32 %s404, 1
        %s784 = smul.addr %s783, 2
        %s785 = scalar_lea.vmem [#allocation18], %s784
        // Predicated region
        $region113: #{tpu_custom_call.1} parent=75 // pred_check
          %p786 = pneg %p417
        $region114: #{tpu_custom_call.1} parent=75 // pred_check_branch
          %788 = sbr.rel (%p786) target = $region116
        $region115: #{tpu_custom_call.1} parent=75 // pred_region
          %789 = dma.done %s782, 32
        $region116: #{tpu_custom_call.1} parent=75 // pred_fallthru
          _
        %s790 = sand.u32 %s66, 1
        %s791 = scalar_lea.sflag [#allocation4], %s790
        %s792 = sand.u32 %s66, 1
        %s793 = smul.addr %s792, 512
        %s794 = scalar_lea.vmem [#allocation3], %s793
        %p795 = pneg %p79
        %p796 = pneg %p76
        %s797 = sand.u32 %s46, 1
        %s798 = scalar_lea.sflag [#allocation7], %s797
        %s799 = sand.u32 %s92, 1
        %s800 = smul.addr %s799, 2
        %s801 = scalar_lea.vmem [#allocation6], %s800
        %p802 = pneg %p105
        %p803 = pneg %p102
        %s804 = sand.u32 %s46, 1
        %s805 = scalar_lea.sflag [#allocation7], %s804
        %s806 = sand.u32 %s118, 1
        %s807 = smul.addr %s806, 768
        %s808 = scalar_lea.vmem [#allocation8], %s807
        %p809 = pneg %p131
        %p810 = pneg %p128
        %s811 = sand.u32 %s46, 1
        %s812 = scalar_lea.sflag [#allocation10], %s811
        %s813 = sand.u32 %s144, 1
        %s814 = smul.addr %s813, 6
        %s815 = scalar_lea.vmem [#allocation9], %s814
        %p816 = pneg %p157
        %p817 = pneg %p154
        %s818 = sand.u32 %s46, 1
        %s819 = scalar_lea.sflag [#allocation10], %s818
        %s820 = sand.u32 %s170, 1
        %s821 = smul.addr %s820, 256
        %s822 = scalar_lea.vmem [#allocation11], %s821
        %p823 = pneg %p183
        %p824 = pneg %p180
        %p825 = scmp.lt.s32.totalorder %s51, 1
        %s826 = scalar_select %p825, %s51, 1
        %s827 = smul.addr %s826, 2
        %s828 = scalar_lea.vmem %s5, %s827
        %p829 = pneg %p209
        %p830 = pneg %p206
        %p831 = scmp.lt.s32.totalorder %s51, 1
        %s832 = scalar_select %p831, %s51, 1
        %s833 = smul.addr %s832, 2
        %s834 = scalar_lea.vmem %s6, %s833
        %p835 = pneg %p235
        %p836 = pneg %p232
        %s837 = sand.u32 %s46, 1
        %s838 = scalar_lea.sflag [#allocation13], %s837
        %s839 = sand.u32 %s248, 1
        %s840 = smul.addr %s839, 2
        %s841 = scalar_lea.vmem [#allocation12], %s840
        %p842 = pneg %p261
        %p843 = pneg %p258
        %s844 = sand.u32 %s46, 1
        %s845 = scalar_lea.sflag [#allocation13], %s844
        %s846 = sand.u32 %s274, 1
        %s847 = smul.addr %s846, 512
        %s848 = scalar_lea.vmem [#allocation14], %s847
        %p849 = pneg %p287
        %p850 = pneg %p284
        %p851 = scmp.lt.s32.totalorder %s51, 1
        %s852 = scalar_select %p851, %s51, 1
        %s853 = smul.addr %s852, 4
        %s854 = scalar_lea.vmem %s9, %s853
        %p855 = pneg %p313
        %p856 = pneg %p310
        %s857 = sand.u32 %s46, 1
        %s858 = scalar_lea.sflag [#allocation16], %s857
        %s859 = sand.u32 %s326, 1
        %s860 = smul.addr %s859, 512
        %s861 = scalar_lea.vmem [#allocation15], %s860
        %p862 = pneg %p339
        %p863 = pneg %p336
        %p864 = scmp.lt.s32.totalorder %s51, 1
        %s865 = scalar_select %p864, %s51, 1
        %s866 = smul.addr %s865, 2
        %s867 = scalar_lea.vmem %s11, %s866
        %p868 = pneg %p365
        %p869 = pneg %p362
        %s870 = sand.u32 %s46, 1
        %s871 = scalar_lea.sflag [#allocation16], %s870
        %s872 = sand.u32 %s378, 1
        %s873 = smul.addr %s872, 2
        %s874 = scalar_lea.vmem [#allocation17], %s873
        %p875 = pneg %p391
        %p876 = pneg %p388
        %s877 = sand.u32 %s404, 1
        %s878 = scalar_lea.sflag [#allocation19], %s877
        %s879 = sand.u32 %s404, 1
        %s880 = smul.addr %s879, 2
        %s881 = scalar_lea.vmem [#allocation18], %s880
        %p882 = pneg %p417
        %p883 = pneg %p414
        %p884 = pneg %p443
        %p885 = pneg %p440
        %s886 = sand.u32 %s430, 1
        %s887 = scalar_lea.sflag [#allocation5], %s886
        %s888 = sand.u32 %s430, 1
        %s889 = smul.addr %s888, 4
        %s890 = scalar_lea.vmem [#allocation20], %s889
        %s891 = smul.u32 2, %s50
        %s892 = smul.u32 2, %s50
        %p893 = scmp.lt.s32.totalorder %s51, 1
        %s894 = scalar_select %p893, %s51, 1
        %s895 = smul.addr %s894, 2
        %s896 = scalar_lea.vmem %s5, %s895
        %p897 = scmp.lt.s32.totalorder %s51, 1
        %s898 = scalar_select %p897, %s51, 1
        %s899 = smul.addr %s898, 2
        %s900 = scalar_lea.vmem %s6, %s899
        %p901 = scmp.lt.s32.totalorder %s51, 1
        %s902 = scalar_select %p901, %s51, 1
        %s903 = smul.addr %s902, 4
        %s904 = scalar_lea.vmem %s9, %s903
        %p905 = scmp.lt.s32.totalorder %s51, 1
        %s906 = scalar_select %p905, %s51, 1
        %s907 = smul.addr %s906, 2
        %s908 = scalar_lea.vmem %s11, %s907
        %s909 = smul.u32 2, %s50
        %p911 = scmp.eq.s32.totalorder %s51, 0
        // Predicated region
        $region117: #{tpu_custom_call.1} parent=75 // pred_check
          %p912 = pneg %p911
        $region118: #{tpu_custom_call.1} parent=75 // pred_check_branch
          %914 = sbr.rel (%p912) target = $region120
        $region119: #{tpu_custom_call.1} parent=75 // pred_region
          %v915 = vld [vmem:[%s704] sm:$0xff]
          %v916 = vld [vmem:[%s704 + $0x8] sm:$0xff]
          %v917 = vld [vmem:[%s704 + $0x10] sm:$0xff]
          %v918 = vld [vmem:[%s704 + $0x18] sm:$0xff]
          %v919 = vld [vmem:[%s704 + $0x20] sm:$0xff]
          %v920 = vld [vmem:[%s704 + $0x28] sm:$0xff]
          %v921 = vld [vmem:[%s704 + $0x30] sm:$0xff]
          %v922 = vld [vmem:[%s704 + $0x38] sm:$0xff]
          %v923 = vld [vmem:[%s704 + $0x40] sm:$0xff]
          %v924 = vld [vmem:[%s704 + $0x48] sm:$0xff]
          %v925 = vld [vmem:[%s704 + $0x50] sm:$0xff]
          %v926 = vld [vmem:[%s704 + $0x58] sm:$0xff]
          %v927 = vld [vmem:[%s704 + $0x60] sm:$0xff]
          %v928 = vld [vmem:[%s704 + $0x68] sm:$0xff]
          %v929 = vld [vmem:[%s704 + $0x70] sm:$0xff]
          %v930 = vld [vmem:[%s704 + $0x78] sm:$0xff]
          %v931 = vld [vmem:[%s704 + $0x80] sm:$0xff]
          %v932 = vld [vmem:[%s704 + $0x88] sm:$0xff]
          %v933 = vld [vmem:[%s704 + $0x90] sm:$0xff]
          %v934 = vld [vmem:[%s704 + $0x98] sm:$0xff]
          %v935 = vld [vmem:[%s704 + $0xa0] sm:$0xff]
          %v936 = vld [vmem:[%s704 + $0xa8] sm:$0xff]
          %v937 = vld [vmem:[%s704 + $0xb0] sm:$0xff]
          %v938 = vld [vmem:[%s704 + $0xb8] sm:$0xff]
          %v939 = vld [vmem:[%s704 + $0xc0] sm:$0xff]
          %v940 = vld [vmem:[%s704 + $0xc8] sm:$0xff]
          %v941 = vld [vmem:[%s704 + $0xd0] sm:$0xff]
          %v942 = vld [vmem:[%s704 + $0xd8] sm:$0xff]
          %v943 = vld [vmem:[%s704 + $0xe0] sm:$0xff]
          %v944 = vld [vmem:[%s704 + $0xe8] sm:$0xff]
          %v945 = vld [vmem:[%s704 + $0xf0] sm:$0xff]
          %v946 = vld [vmem:[%s704 + $0xf8] sm:$0xff]
          %v947 = vld [vmem:[%s704 + $0x100] sm:$0xff]
          %v948 = vld [vmem:[%s704 + $0x108] sm:$0xff]
          %v949 = vld [vmem:[%s704 + $0x110] sm:$0xff]
          %v950 = vld [vmem:[%s704 + $0x118] sm:$0xff]
          %v951 = vld [vmem:[%s704 + $0x120] sm:$0xff]
          %v952 = vld [vmem:[%s704 + $0x128] sm:$0xff]
          %v953 = vld [vmem:[%s704 + $0x130] sm:$0xff]
          %v954 = vld [vmem:[%s704 + $0x138] sm:$0xff]
          %v955 = vld [vmem:[%s704 + $0x140] sm:$0xff]
          %v956 = vld [vmem:[%s704 + $0x148] sm:$0xff]
          %v957 = vld [vmem:[%s704 + $0x150] sm:$0xff]
          %v958 = vld [vmem:[%s704 + $0x158] sm:$0xff]
          %v959 = vld [vmem:[%s704 + $0x160] sm:$0xff]
          %v960 = vld [vmem:[%s704 + $0x168] sm:$0xff]
          %v961 = vld [vmem:[%s704 + $0x170] sm:$0xff]
          %v962 = vld [vmem:[%s704 + $0x178] sm:$0xff]
          %v963 = vld [vmem:[%s704 + $0x180] sm:$0xff]
          %v964 = vld [vmem:[%s704 + $0x188] sm:$0xff]
          %v965 = vld [vmem:[%s704 + $0x190] sm:$0xff]
          %v966 = vld [vmem:[%s704 + $0x198] sm:$0xff]
          %v967 = vld [vmem:[%s704 + $0x1a0] sm:$0xff]
          %v968 = vld [vmem:[%s704 + $0x1a8] sm:$0xff]
          %v969 = vld [vmem:[%s704 + $0x1b0] sm:$0xff]
          %v970 = vld [vmem:[%s704 + $0x1b8] sm:$0xff]
          %v971 = vld [vmem:[%s704 + $0x1c0] sm:$0xff]
          %v972 = vld [vmem:[%s704 + $0x1c8] sm:$0xff]
          %v973 = vld [vmem:[%s704 + $0x1d0] sm:$0xff]
          %v974 = vld [vmem:[%s704 + $0x1d8] sm:$0xff]
          %v975 = vld [vmem:[%s704 + $0x1e0] sm:$0xff]
          %v976 = vld [vmem:[%s704 + $0x1e8] sm:$0xff]
          %v977 = vld [vmem:[%s704 + $0x1f0] sm:$0xff]
          %v978 = vld [vmem:[%s704 + $0x1f8] sm:$0xff]
          %979 = vst [vmem:[#allocation2] sm:$0xff] %v915
          %980 = vst [vmem:[#allocation2 + $0x8] sm:$0xff] %v916
          %981 = vst [vmem:[#allocation2 + $0x10] sm:$0xff] %v917
          %982 = vst [vmem:[#allocation2 + $0x18] sm:$0xff] %v918
          %983 = vst [vmem:[#allocation2 + $0x20] sm:$0xff] %v919
          %984 = vst [vmem:[#allocation2 + $0x28] sm:$0xff] %v920
          %985 = vst [vmem:[#allocation2 + $0x30] sm:$0xff] %v921
          %986 = vst [vmem:[#allocation2 + $0x38] sm:$0xff] %v922
          %987 = vst [vmem:[#allocation2 + $0x40] sm:$0xff] %v923
          %988 = vst [vmem:[#allocation2 + $0x48] sm:$0xff] %v924
          %989 = vst [vmem:[#allocation2 + $0x50] sm:$0xff] %v925
          %990 = vst [vmem:[#allocation2 + $0x58] sm:$0xff] %v926
          %991 = vst [vmem:[#allocation2 + $0x60] sm:$0xff] %v927
          %992 = vst [vmem:[#allocation2 + $0x68] sm:$0xff] %v928
          %993 = vst [vmem:[#allocation2 + $0x70] sm:$0xff] %v929
          %994 = vst [vmem:[#allocation2 + $0x78] sm:$0xff] %v930
          %995 = vst [vmem:[#allocation2 + $0x80] sm:$0xff] %v931
          %996 = vst [vmem:[#allocation2 + $0x88] sm:$0xff] %v932
          %997 = vst [vmem:[#allocation2 + $0x90] sm:$0xff] %v933
          %998 = vst [vmem:[#allocation2 + $0x98] sm:$0xff] %v934
          %999 = vst [vmem:[#allocation2 + $0xa0] sm:$0xff] %v935
          %1000 = vst [vmem:[#allocation2 + $0xa8] sm:$0xff] %v936
          %1001 = vst [vmem:[#allocation2 + $0xb0] sm:$0xff] %v937
          %1002 = vst [vmem:[#allocation2 + $0xb8] sm:$0xff] %v938
          %1003 = vst [vmem:[#allocation2 + $0xc0] sm:$0xff] %v939
          %1004 = vst [vmem:[#allocation2 + $0xc8] sm:$0xff] %v940
          %1005 = vst [vmem:[#allocation2 + $0xd0] sm:$0xff] %v941
          %1006 = vst [vmem:[#allocation2 + $0xd8] sm:$0xff] %v942
          %1007 = vst [vmem:[#allocation2 + $0xe0] sm:$0xff] %v943
          %1008 = vst [vmem:[#allocation2 + $0xe8] sm:$0xff] %v944
          %1009 = vst [vmem:[#allocation2 + $0xf0] sm:$0xff] %v945
          %1010 = vst [vmem:[#allocation2 + $0xf8] sm:$0xff] %v946
          %1011 = vst [vmem:[#allocation2 + $0x100] sm:$0xff] %v947
          %1012 = vst [vmem:[#allocation2 + $0x108] sm:$0xff] %v948
          %1013 = vst [vmem:[#allocation2 + $0x110] sm:$0xff] %v949
          %1014 = vst [vmem:[#allocation2 + $0x118] sm:$0xff] %v950
          %1015 = vst [vmem:[#allocation2 + $0x120] sm:$0xff] %v951
          %1016 = vst [vmem:[#allocation2 + $0x128] sm:$0xff] %v952
          %1017 = vst [vmem:[#allocation2 + $0x130] sm:$0xff] %v953
          %1018 = vst [vmem:[#allocation2 + $0x138] sm:$0xff] %v954
          %1019 = vst [vmem:[#allocation2 + $0x140] sm:$0xff] %v955
          %1020 = vst [vmem:[#allocation2 + $0x148] sm:$0xff] %v956
          %1021 = vst [vmem:[#allocation2 + $0x150] sm:$0xff] %v957
          %1022 = vst [vmem:[#allocation2 + $0x158] sm:$0xff] %v958
          %1023 = vst [vmem:[#allocation2 + $0x160] sm:$0xff] %v959
          %1024 = vst [vmem:[#allocation2 + $0x168] sm:$0xff] %v960
          %1025 = vst [vmem:[#allocation2 + $0x170] sm:$0xff] %v961
          %1026 = vst [vmem:[#allocation2 + $0x178] sm:$0xff] %v962
          %1027 = vst [vmem:[#allocation2 + $0x180] sm:$0xff] %v963
          %1028 = vst [vmem:[#allocation2 + $0x188] sm:$0xff] %v964
          %1029 = vst [vmem:[#allocation2 + $0x190] sm:$0xff] %v965
          %1030 = vst [vmem:[#allocation2 + $0x198] sm:$0xff] %v966
          %1031 = vst [vmem:[#allocation2 + $0x1a0] sm:$0xff] %v967
          %1032 = vst [vmem:[#allocation2 + $0x1a8] sm:$0xff] %v968
          %1033 = vst [vmem:[#allocation2 + $0x1b0] sm:$0xff] %v969
          %1034 = vst [vmem:[#allocation2 + $0x1b8] sm:$0xff] %v970
          %1035 = vst [vmem:[#allocation2 + $0x1c0] sm:$0xff] %v971
          %1036 = vst [vmem:[#allocation2 + $0x1c8] sm:$0xff] %v972
          %1037 = vst [vmem:[#allocation2 + $0x1d0] sm:$0xff] %v973
          %1038 = vst [vmem:[#allocation2 + $0x1d8] sm:$0xff] %v974
          %1039 = vst [vmem:[#allocation2 + $0x1e0] sm:$0xff] %v975
          %1040 = vst [vmem:[#allocation2 + $0x1e8] sm:$0xff] %v976
          %1041 = vst [vmem:[#allocation2 + $0x1f0] sm:$0xff] %v977
          %1042 = vst [vmem:[#allocation2 + $0x1f8] sm:$0xff] %v978
        $region120: #{tpu_custom_call.1} parent=75 // pred_fallthru
          _
        %v1043 = vld [vmem:[#allocation2] sm:$0xff]
        %v1044 = vld [vmem:[#allocation2 + $0x8] sm:$0xff]
        %v1045 = vld [vmem:[#allocation2 + $0x10] sm:$0xff]
        %v1046 = vld [vmem:[#allocation2 + $0x18] sm:$0xff]
        %v1047 = vld [vmem:[#allocation2 + $0x20] sm:$0xff]
        %v1048 = vld [vmem:[#allocation2 + $0x28] sm:$0xff]
        %v1049 = vld [vmem:[#allocation2 + $0x30] sm:$0xff]
        %v1050 = vld [vmem:[#allocation2 + $0x38] sm:$0xff]
        %v1051 = vld [vmem:[#allocation2 + $0x40] sm:$0xff]
        %v1052 = vld [vmem:[#allocation2 + $0x48] sm:$0xff]
        %v1053 = vld [vmem:[#allocation2 + $0x50] sm:$0xff]
        %v1054 = vld [vmem:[#allocation2 + $0x58] sm:$0xff]
        %v1055 = vld [vmem:[#allocation2 + $0x60] sm:$0xff]
        %v1056 = vld [vmem:[#allocation2 + $0x68] sm:$0xff]
        %v1057 = vld [vmem:[#allocation2 + $0x70] sm:$0xff]
        %v1058 = vld [vmem:[#allocation2 + $0x78] sm:$0xff]
        %v1059 = vld [vmem:[#allocation2 + $0x80] sm:$0xff]
        %v1060 = vld [vmem:[#allocation2 + $0x88] sm:$0xff]
        %v1061 = vld [vmem:[#allocation2 + $0x90] sm:$0xff]
        %v1062 = vld [vmem:[#allocation2 + $0x98] sm:$0xff]
        %v1063 = vld [vmem:[#allocation2 + $0xa0] sm:$0xff]
        %v1064 = vld [vmem:[#allocation2 + $0xa8] sm:$0xff]
        %v1065 = vld [vmem:[#allocation2 + $0xb0] sm:$0xff]
        %v1066 = vld [vmem:[#allocation2 + $0xb8] sm:$0xff]
        %v1067 = vld [vmem:[#allocation2 + $0xc0] sm:$0xff]
        %v1068 = vld [vmem:[#allocation2 + $0xc8] sm:$0xff]
        %v1069 = vld [vmem:[#allocation2 + $0xd0] sm:$0xff]
        %v1070 = vld [vmem:[#allocation2 + $0xd8] sm:$0xff]
        %v1071 = vld [vmem:[#allocation2 + $0xe0] sm:$0xff]
        %v1072 = vld [vmem:[#allocation2 + $0xe8] sm:$0xff]
        %v1073 = vld [vmem:[#allocation2 + $0xf0] sm:$0xff]
        %v1074 = vld [vmem:[#allocation2 + $0xf8] sm:$0xff]
        %v1075 = vld [vmem:[#allocation2 + $0x100] sm:$0xff]
        %v1076 = vld [vmem:[#allocation2 + $0x108] sm:$0xff]
        %v1077 = vld [vmem:[#allocation2 + $0x110] sm:$0xff]
        %v1078 = vld [vmem:[#allocation2 + $0x118] sm:$0xff]
        %v1079 = vld [vmem:[#allocation2 + $0x120] sm:$0xff]
        %v1080 = vld [vmem:[#allocation2 + $0x128] sm:$0xff]
        %v1081 = vld [vmem:[#allocation2 + $0x130] sm:$0xff]
        %v1082 = vld [vmem:[#allocation2 + $0x138] sm:$0xff]
        %v1083 = vld [vmem:[#allocation2 + $0x140] sm:$0xff]
        %v1084 = vld [vmem:[#allocation2 + $0x148] sm:$0xff]
        %v1085 = vld [vmem:[#allocation2 + $0x150] sm:$0xff]
        %v1086 = vld [vmem:[#allocation2 + $0x158] sm:$0xff]
        %v1087 = vld [vmem:[#allocation2 + $0x160] sm:$0xff]
        %v1088 = vld [vmem:[#allocation2 + $0x168] sm:$0xff]
        %v1089 = vld [vmem:[#allocation2 + $0x170] sm:$0xff]
        %v1090 = vld [vmem:[#allocation2 + $0x178] sm:$0xff]
        %v1091 = vld [vmem:[#allocation2 + $0x180] sm:$0xff]
        %v1092 = vld [vmem:[#allocation2 + $0x188] sm:$0xff]
        %v1093 = vld [vmem:[#allocation2 + $0x190] sm:$0xff]
        %v1094 = vld [vmem:[#allocation2 + $0x198] sm:$0xff]
        %v1095 = vld [vmem:[#allocation2 + $0x1a0] sm:$0xff]
        %v1096 = vld [vmem:[#allocation2 + $0x1a8] sm:$0xff]
        %v1097 = vld [vmem:[#allocation2 + $0x1b0] sm:$0xff]
        %v1098 = vld [vmem:[#allocation2 + $0x1b8] sm:$0xff]
        %v1099 = vld [vmem:[#allocation2 + $0x1c0] sm:$0xff]
        %v1100 = vld [vmem:[#allocation2 + $0x1c8] sm:$0xff]
        %v1101 = vld [vmem:[#allocation2 + $0x1d0] sm:$0xff]
        %v1102 = vld [vmem:[#allocation2 + $0x1d8] sm:$0xff]
        %v1103 = vld [vmem:[#allocation2 + $0x1e0] sm:$0xff]
        %v1104 = vld [vmem:[#allocation2 + $0x1e8] sm:$0xff]
        %v1105 = vld [vmem:[#allocation2 + $0x1f0] sm:$0xff]
        %v1106 = vld [vmem:[#allocation2 + $0x1f8] sm:$0xff]
        %v1107 = vld [vmem:[%s713] sm:$0x1]
        %v1108 = vld [vmem:[%s713 + $0x1] sm:$0x1]
        %v1109 = vld [vmem:[%s722] sm:$0xff]
        %v1110 = vld [vmem:[%s722 + $0x8] sm:$0xff]
        %v1111 = vld [vmem:[%s722 + $0x10] sm:$0xff]
        %v1112 = vld [vmem:[%s722 + $0x18] sm:$0xff]
        %v1113 = vld [vmem:[%s722 + $0x20] sm:$0xff]
        %v1114 = vld [vmem:[%s722 + $0x28] sm:$0xff]
        %v1115 = vld [vmem:[%s722 + $0x30] sm:$0xff]
        %v1116 = vld [vmem:[%s722 + $0x38] sm:$0xff]
        %v1117 = vld [vmem:[%s722 + $0x40] sm:$0xff]
        %v1118 = vld [vmem:[%s722 + $0x48] sm:$0xff]
        %v1119 = vld [vmem:[%s722 + $0x50] sm:$0xff]
        %v1120 = vld [vmem:[%s722 + $0x58] sm:$0xff]
        %v1121 = vld [vmem:[%s722 + $0x60] sm:$0xff]
        %v1122 = vld [vmem:[%s722 + $0x68] sm:$0xff]
        %v1123 = vld [vmem:[%s722 + $0x70] sm:$0xff]
        %v1124 = vld [vmem:[%s722 + $0x78] sm:$0xff]
        %v1125 = vld [vmem:[%s722 + $0x80] sm:$0xff]
        %v1126 = vld [vmem:[%s722 + $0x88] sm:$0xff]
        %v1127 = vld [vmem:[%s722 + $0x90] sm:$0xff]
        %v1128 = vld [vmem:[%s722 + $0x98] sm:$0xff]
        %v1129 = vld [vmem:[%s722 + $0xa0] sm:$0xff]
        %v1130 = vld [vmem:[%s722 + $0xa8] sm:$0xff]
        %v1131 = vld [vmem:[%s722 + $0xb0] sm:$0xff]
        %v1132 = vld [vmem:[%s722 + $0xb8] sm:$0xff]
        %v1133 = vld [vmem:[%s722 + $0xc0] sm:$0xff]
        %v1134 = vld [vmem:[%s722 + $0xc8] sm:$0xff]
        %v1135 = vld [vmem:[%s722 + $0xd0] sm:$0xff]
        %v1136 = vld [vmem:[%s722 + $0xd8] sm:$0xff]
        %v1137 = vld [vmem:[%s722 + $0xe0] sm:$0xff]
        %v1138 = vld [vmem:[%s722 + $0xe8] sm:$0xff]
        %v1139 = vld [vmem:[%s722 + $0xf0] sm:$0xff]
        %v1140 = vld [vmem:[%s722 + $0xf8] sm:$0xff]
        %v1141 = vld [vmem:[%s722 + $0x100] sm:$0xff]
        %v1142 = vld [vmem:[%s722 + $0x108] sm:$0xff]
        %v1143 = vld [vmem:[%s722 + $0x110] sm:$0xff]
        %v1144 = vld [vmem:[%s722 + $0x118] sm:$0xff]
        %v1145 = vld [vmem:[%s722 + $0x120] sm:$0xff]
        %v1146 = vld [vmem:[%s722 + $0x128] sm:$0xff]
        %v1147 = vld [vmem:[%s722 + $0x130] sm:$0xff]
        %v1148 = vld [vmem:[%s722 + $0x138] sm:$0xff]
        %v1149 = vld [vmem:[%s722 + $0x140] sm:$0xff]
        %v1150 = vld [vmem:[%s722 + $0x148] sm:$0xff]
        %v1151 = vld [vmem:[%s722 + $0x150] sm:$0xff]
        %v1152 = vld [vmem:[%s722 + $0x158] sm:$0xff]
        %v1153 = vld [vmem:[%s722 + $0x160] sm:$0xff]
        %v1154 = vld [vmem:[%s722 + $0x168] sm:$0xff]
        %v1155 = vld [vmem:[%s722 + $0x170] sm:$0xff]
        %v1156 = vld [vmem:[%s722 + $0x178] sm:$0xff]
        %v1157 = vld [vmem:[%s722 + $0x180] sm:$0xff]
        %v1158 = vld [vmem:[%s722 + $0x188] sm:$0xff]
        %v1159 = vld [vmem:[%s722 + $0x190] sm:$0xff]
        %v1160 = vld [vmem:[%s722 + $0x198] sm:$0xff]
        %v1161 = vld [vmem:[%s722 + $0x1a0] sm:$0xff]
        %v1162 = vld [vmem:[%s722 + $0x1a8] sm:$0xff]
        %v1163 = vld [vmem:[%s722 + $0x1b0] sm:$0xff]
        %v1164 = vld [vmem:[%s722 + $0x1b8] sm:$0xff]
        %v1165 = vld [vmem:[%s722 + $0x1c0] sm:$0xff]
        %v1166 = vld [vmem:[%s722 + $0x1c8] sm:$0xff]
        %v1167 = vld [vmem:[%s722 + $0x1d0] sm:$0xff]
        %v1168 = vld [vmem:[%s722 + $0x1d8] sm:$0xff]
        %v1169 = vld [vmem:[%s722 + $0x1e0] sm:$0xff]
        %v1170 = vld [vmem:[%s722 + $0x1e8] sm:$0xff]
        %v1171 = vld [vmem:[%s722 + $0x1f0] sm:$0xff]
        %v1172 = vld [vmem:[%s722 + $0x1f8] sm:$0xff]
        %v1173 = vld [vmem:[%s722 + $0x200] sm:$0xff]
        %v1174 = vld [vmem:[%s722 + $0x208] sm:$0xff]
        %v1175 = vld [vmem:[%s722 + $0x210] sm:$0xff]
        %v1176 = vld [vmem:[%s722 + $0x218] sm:$0xff]
        %v1177 = vld [vmem:[%s722 + $0x220] sm:$0xff]
        %v1178 = vld [vmem:[%s722 + $0x228] sm:$0xff]
        %v1179 = vld [vmem:[%s722 + $0x230] sm:$0xff]
        %v1180 = vld [vmem:[%s722 + $0x238] sm:$0xff]
        %v1181 = vld [vmem:[%s722 + $0x240] sm:$0xff]
        %v1182 = vld [vmem:[%s722 + $0x248] sm:$0xff]
        %v1183 = vld [vmem:[%s722 + $0x250] sm:$0xff]
        %v1184 = vld [vmem:[%s722 + $0x258] sm:$0xff]
        %v1185 = vld [vmem:[%s722 + $0x260] sm:$0xff]
        %v1186 = vld [vmem:[%s722 + $0x268] sm:$0xff]
        %v1187 = vld [vmem:[%s722 + $0x270] sm:$0xff]
        %v1188 = vld [vmem:[%s722 + $0x278] sm:$0xff]
        %v1189 = vld [vmem:[%s722 + $0x280] sm:$0xff]
        %v1190 = vld [vmem:[%s722 + $0x288] sm:$0xff]
        %v1191 = vld [vmem:[%s722 + $0x290] sm:$0xff]
        %v1192 = vld [vmem:[%s722 + $0x298] sm:$0xff]
        %v1193 = vld [vmem:[%s722 + $0x2a0] sm:$0xff]
        %v1194 = vld [vmem:[%s722 + $0x2a8] sm:$0xff]
        %v1195 = vld [vmem:[%s722 + $0x2b0] sm:$0xff]
        %v1196 = vld [vmem:[%s722 + $0x2b8] sm:$0xff]
        %v1197 = vld [vmem:[%s722 + $0x2c0] sm:$0xff]
        %v1198 = vld [vmem:[%s722 + $0x2c8] sm:$0xff]
        %v1199 = vld [vmem:[%s722 + $0x2d0] sm:$0xff]
        %v1200 = vld [vmem:[%s722 + $0x2d8] sm:$0xff]
        %v1201 = vld [vmem:[%s722 + $0x2e0] sm:$0xff]
        %v1202 = vld [vmem:[%s722 + $0x2e8] sm:$0xff]
        %v1203 = vld [vmem:[%s722 + $0x2f0] sm:$0xff]
        %v1204 = vld [vmem:[%s722 + $0x2f8] sm:$0xff]
        %v1205 = vld [vmem:[%s731] sm:$0x3f]
        %v1206 = vld [vmem:[%s740] sm:$0xff]
        %v1207 = vld [vmem:[%s740 + $0x8] sm:$0xff]
        %v1208 = vld [vmem:[%s740 + $0x10] sm:$0xff]
        %v1209 = vld [vmem:[%s740 + $0x18] sm:$0xff]
        %v1210 = vld [vmem:[%s740 + $0x20] sm:$0xff]
        %v1211 = vld [vmem:[%s740 + $0x28] sm:$0xff]
        %v1212 = vld [vmem:[%s740 + $0x30] sm:$0xff]
        %v1213 = vld [vmem:[%s740 + $0x38] sm:$0xff]
        %v1214 = vld [vmem:[%s740 + $0x40] sm:$0xff]
        %v1215 = vld [vmem:[%s740 + $0x48] sm:$0xff]
        %v1216 = vld [vmem:[%s740 + $0x50] sm:$0xff]
        %v1217 = vld [vmem:[%s740 + $0x58] sm:$0xff]
        %v1218 = vld [vmem:[%s740 + $0x60] sm:$0xff]
        %v1219 = vld [vmem:[%s740 + $0x68] sm:$0xff]
        %v1220 = vld [vmem:[%s740 + $0x70] sm:$0xff]
        %v1221 = vld [vmem:[%s740 + $0x78] sm:$0xff]
        %v1222 = vld [vmem:[%s740 + $0x80] sm:$0xff]
        %v1223 = vld [vmem:[%s740 + $0x88] sm:$0xff]
        %v1224 = vld [vmem:[%s740 + $0x90] sm:$0xff]
        %v1225 = vld [vmem:[%s740 + $0x98] sm:$0xff]
        %v1226 = vld [vmem:[%s740 + $0xa0] sm:$0xff]
        %v1227 = vld [vmem:[%s740 + $0xa8] sm:$0xff]
        %v1228 = vld [vmem:[%s740 + $0xb0] sm:$0xff]
        %v1229 = vld [vmem:[%s740 + $0xb8] sm:$0xff]
        %v1230 = vld [vmem:[%s740 + $0xc0] sm:$0xff]
        %v1231 = vld [vmem:[%s740 + $0xc8] sm:$0xff]
        %v1232 = vld [vmem:[%s740 + $0xd0] sm:$0xff]
        %v1233 = vld [vmem:[%s740 + $0xd8] sm:$0xff]
        %v1234 = vld [vmem:[%s740 + $0xe0] sm:$0xff]
        %v1235 = vld [vmem:[%s740 + $0xe8] sm:$0xff]
        %v1236 = vld [vmem:[%s740 + $0xf0] sm:$0xff]
        %v1237 = vld [vmem:[%s740 + $0xf8] sm:$0xff]
        %v1238 = vld [vmem:[%s896] sm:$0x3]
        %v1239 = vld [vmem:[%s900] sm:$0x3]
        %v1240 = vld [vmem:[%s749] sm:$0x3]
        %v1241 = vld [vmem:[%s758] sm:$0xff]
        %v1242 = vld [vmem:[%s758 + $0x8] sm:$0xff]
        %v1243 = vld [vmem:[%s758 + $0x10] sm:$0xff]
        %v1244 = vld [vmem:[%s758 + $0x18] sm:$0xff]
        %v1245 = vld [vmem:[%s758 + $0x20] sm:$0xff]
        %v1246 = vld [vmem:[%s758 + $0x28] sm:$0xff]
        %v1247 = vld [vmem:[%s758 + $0x30] sm:$0xff]
        %v1248 = vld [vmem:[%s758 + $0x38] sm:$0xff]
        %v1249 = vld [vmem:[%s758 + $0x40] sm:$0xff]
        %v1250 = vld [vmem:[%s758 + $0x48] sm:$0xff]
        %v1251 = vld [vmem:[%s758 + $0x50] sm:$0xff]
        %v1252 = vld [vmem:[%s758 + $0x58] sm:$0xff]
        %v1253 = vld [vmem:[%s758 + $0x60] sm:$0xff]
        %v1254 = vld [vmem:[%s758 + $0x68] sm:$0xff]
        %v1255 = vld [vmem:[%s758 + $0x70] sm:$0xff]
        %v1256 = vld [vmem:[%s758 + $0x78] sm:$0xff]
        %v1257 = vld [vmem:[%s758 + $0x80] sm:$0xff]
        %v1258 = vld [vmem:[%s758 + $0x88] sm:$0xff]
        %v1259 = vld [vmem:[%s758 + $0x90] sm:$0xff]
        %v1260 = vld [vmem:[%s758 + $0x98] sm:$0xff]
        %v1261 = vld [vmem:[%s758 + $0xa0] sm:$0xff]
        %v1262 = vld [vmem:[%s758 + $0xa8] sm:$0xff]
        %v1263 = vld [vmem:[%s758 + $0xb0] sm:$0xff]
        %v1264 = vld [vmem:[%s758 + $0xb8] sm:$0xff]
        %v1265 = vld [vmem:[%s758 + $0xc0] sm:$0xff]
        %v1266 = vld [vmem:[%s758 + $0xc8] sm:$0xff]
        %v1267 = vld [vmem:[%s758 + $0xd0] sm:$0xff]
        %v1268 = vld [vmem:[%s758 + $0xd8] sm:$0xff]
        %v1269 = vld [vmem:[%s758 + $0xe0] sm:$0xff]
        %v1270 = vld [vmem:[%s758 + $0xe8] sm:$0xff]
        %v1271 = vld [vmem:[%s758 + $0xf0] sm:$0xff]
        %v1272 = vld [vmem:[%s758 + $0xf8] sm:$0xff]
        %v1273 = vld [vmem:[%s758 + $0x100] sm:$0xff]
        %v1274 = vld [vmem:[%s758 + $0x108] sm:$0xff]
        %v1275 = vld [vmem:[%s758 + $0x110] sm:$0xff]
        %v1276 = vld [vmem:[%s758 + $0x118] sm:$0xff]
        %v1277 = vld [vmem:[%s758 + $0x120] sm:$0xff]
        %v1278 = vld [vmem:[%s758 + $0x128] sm:$0xff]
        %v1279 = vld [vmem:[%s758 + $0x130] sm:$0xff]
        %v1280 = vld [vmem:[%s758 + $0x138] sm:$0xff]
        %v1281 = vld [vmem:[%s758 + $0x140] sm:$0xff]
        %v1282 = vld [vmem:[%s758 + $0x148] sm:$0xff]
        %v1283 = vld [vmem:[%s758 + $0x150] sm:$0xff]
        %v1284 = vld [vmem:[%s758 + $0x158] sm:$0xff]
        %v1285 = vld [vmem:[%s758 + $0x160] sm:$0xff]
        %v1286 = vld [vmem:[%s758 + $0x168] sm:$0xff]
        %v1287 = vld [vmem:[%s758 + $0x170] sm:$0xff]
        %v1288 = vld [vmem:[%s758 + $0x178] sm:$0xff]
        %v1289 = vld [vmem:[%s758 + $0x180] sm:$0xff]
        %v1290 = vld [vmem:[%s758 + $0x188] sm:$0xff]
        %v1291 = vld [vmem:[%s758 + $0x190] sm:$0xff]
        %v1292 = vld [vmem:[%s758 + $0x198] sm:$0xff]
        %v1293 = vld [vmem:[%s758 + $0x1a0] sm:$0xff]
        %v1294 = vld [vmem:[%s758 + $0x1a8] sm:$0xff]
        %v1295 = vld [vmem:[%s758 + $0x1b0] sm:$0xff]
        %v1296 = vld [vmem:[%s758 + $0x1b8] sm:$0xff]
        %v1297 = vld [vmem:[%s758 + $0x1c0] sm:$0xff]
        %v1298 = vld [vmem:[%s758 + $0x1c8] sm:$0xff]
        %v1299 = vld [vmem:[%s758 + $0x1d0] sm:$0xff]
        %v1300 = vld [vmem:[%s758 + $0x1d8] sm:$0xff]
        %v1301 = vld [vmem:[%s758 + $0x1e0] sm:$0xff]
        %v1302 = vld [vmem:[%s758 + $0x1e8] sm:$0xff]
        %v1303 = vld [vmem:[%s758 + $0x1f0] sm:$0xff]
        %v1304 = vld [vmem:[%s758 + $0x1f8] sm:$0xff]
        %v1305 = vld [vmem:[%s904] sm:$0xf]
        %v1306 = vld [vmem:[%s767] sm:$0xff]
        %v1307 = vld [vmem:[%s767 + $0x8] sm:$0xff]
        %v1308 = vld [vmem:[%s767 + $0x10] sm:$0xff]
        %v1309 = vld [vmem:[%s767 + $0x18] sm:$0xff]
        %v1310 = vld [vmem:[%s767 + $0x20] sm:$0xff]
        %v1311 = vld [vmem:[%s767 + $0x28] sm:$0xff]
        %v1312 = vld [vmem:[%s767 + $0x30] sm:$0xff]
        %v1313 = vld [vmem:[%s767 + $0x38] sm:$0xff]
        %v1314 = vld [vmem:[%s767 + $0x40] sm:$0xff]
        %v1315 = vld [vmem:[%s767 + $0x48] sm:$0xff]
        %v1316 = vld [vmem:[%s767 + $0x50] sm:$0xff]
        %v1317 = vld [vmem:[%s767 + $0x58] sm:$0xff]
        %v1318 = vld [vmem:[%s767 + $0x60] sm:$0xff]
        %v1319 = vld [vmem:[%s767 + $0x68] sm:$0xff]
        %v1320 = vld [vmem:[%s767 + $0x70] sm:$0xff]
        %v1321 = vld [vmem:[%s767 + $0x78] sm:$0xff]
        %v1322 = vld [vmem:[%s767 + $0x80] sm:$0xff]
        %v1323 = vld [vmem:[%s767 + $0x88] sm:$0xff]
        %v1324 = vld [vmem:[%s767 + $0x90] sm:$0xff]
        %v1325 = vld [vmem:[%s767 + $0x98] sm:$0xff]
        %v1326 = vld [vmem:[%s767 + $0xa0] sm:$0xff]
        %v1327 = vld [vmem:[%s767 + $0xa8] sm:$0xff]
        %v1328 = vld [vmem:[%s767 + $0xb0] sm:$0xff]
        %v1329 = vld [vmem:[%s767 + $0xb8] sm:$0xff]
        %v1330 = vld [vmem:[%s767 + $0xc0] sm:$0xff]
        %v1331 = vld [vmem:[%s767 + $0xc8] sm:$0xff]
        %v1332 = vld [vmem:[%s767 + $0xd0] sm:$0xff]
        %v1333 = vld [vmem:[%s767 + $0xd8] sm:$0xff]
        %v1334 = vld [vmem:[%s767 + $0xe0] sm:$0xff]
        %v1335 = vld [vmem:[%s767 + $0xe8] sm:$0xff]
        %v1336 = vld [vmem:[%s767 + $0xf0] sm:$0xff]
        %v1337 = vld [vmem:[%s767 + $0xf8] sm:$0xff]
        %v1338 = vld [vmem:[%s767 + $0x100] sm:$0xff]
        %v1339 = vld [vmem:[%s767 + $0x108] sm:$0xff]
        %v1340 = vld [vmem:[%s767 + $0x110] sm:$0xff]
        %v1341 = vld [vmem:[%s767 + $0x118] sm:$0xff]
        %v1342 = vld [vmem:[%s767 + $0x120] sm:$0xff]
        %v1343 = vld [vmem:[%s767 + $0x128] sm:$0xff]
        %v1344 = vld [vmem:[%s767 + $0x130] sm:$0xff]
        %v1345 = vld [vmem:[%s767 + $0x138] sm:$0xff]
        %v1346 = vld [vmem:[%s767 + $0x140] sm:$0xff]
        %v1347 = vld [vmem:[%s767 + $0x148] sm:$0xff]
        %v1348 = vld [vmem:[%s767 + $0x150] sm:$0xff]
        %v1349 = vld [vmem:[%s767 + $0x158] sm:$0xff]
        %v1350 = vld [vmem:[%s767 + $0x160] sm:$0xff]
        %v1351 = vld [vmem:[%s767 + $0x168] sm:$0xff]
        %v1352 = vld [vmem:[%s767 + $0x170] sm:$0xff]
        %v1353 = vld [vmem:[%s767 + $0x178] sm:$0xff]
        %v1354 = vld [vmem:[%s767 + $0x180] sm:$0xff]
        %v1355 = vld [vmem:[%s767 + $0x188] sm:$0xff]
        %v1356 = vld [vmem:[%s767 + $0x190] sm:$0xff]
        %v1357 = vld [vmem:[%s767 + $0x198] sm:$0xff]
        %v1358 = vld [vmem:[%s767 + $0x1a0] sm:$0xff]
        %v1359 = vld [vmem:[%s767 + $0x1a8] sm:$0xff]
        %v1360 = vld [vmem:[%s767 + $0x1b0] sm:$0xff]
        %v1361 = vld [vmem:[%s767 + $0x1b8] sm:$0xff]
        %v1362 = vld [vmem:[%s767 + $0x1c0] sm:$0xff]
        %v1363 = vld [vmem:[%s767 + $0x1c8] sm:$0xff]
        %v1364 = vld [vmem:[%s767 + $0x1d0] sm:$0xff]
        %v1365 = vld [vmem:[%s767 + $0x1d8] sm:$0xff]
        %v1366 = vld [vmem:[%s767 + $0x1e0] sm:$0xff]
        %v1367 = vld [vmem:[%s767 + $0x1e8] sm:$0xff]
        %v1368 = vld [vmem:[%s767 + $0x1f0] sm:$0xff]
        %v1369 = vld [vmem:[%s767 + $0x1f8] sm:$0xff]
        %v1370 = vld [vmem:[%s908] sm:$0x3]
        %v1371 = vld [vmem:[%s776] sm:$0x3]
        %v1372 = vld [vmem:[%s785] sm:$0x3]
        %v1373 = vpack.c.bf16 %v1045, %v1043
        %v1374 = vpack.c.bf16 %v1046, %v1044
        %v1375 = vpack.c.bf16 %v1049, %v1047
        %v1376 = vpack.c.bf16 %v1050, %v1048
        %v1377 = vpack.c.bf16 %v1053, %v1051
        %v1378 = vpack.c.bf16 %v1054, %v1052
        %v1379 = vpack.c.bf16 %v1057, %v1055
        %v1380 = vpack.c.bf16 %v1058, %v1056
        %v1381 = vpack.c.bf16 %v1061, %v1059
        %v1382 = vpack.c.bf16 %v1062, %v1060
        %v1383 = vpack.c.bf16 %v1065, %v1063
        %v1384 = vpack.c.bf16 %v1066, %v1064
        %v1385 = vpack.c.bf16 %v1069, %v1067
        %v1386 = vpack.c.bf16 %v1070, %v1068
        %v1387 = vpack.c.bf16 %v1073, %v1071
        %v1388 = vpack.c.bf16 %v1074, %v1072
        %v1389 = vpack.c.bf16 %v1077, %v1075
        %v1390 = vpack.c.bf16 %v1078, %v1076
        %v1391 = vpack.c.bf16 %v1081, %v1079
        %v1392 = vpack.c.bf16 %v1082, %v1080
        %v1393 = vpack.c.bf16 %v1085, %v1083
        %v1394 = vpack.c.bf16 %v1086, %v1084
        %v1395 = vpack.c.bf16 %v1089, %v1087
        %v1396 = vpack.c.bf16 %v1090, %v1088
        %v1397 = vpack.c.bf16 %v1093, %v1091
        %v1398 = vpack.c.bf16 %v1094, %v1092
        %v1399 = vpack.c.bf16 %v1097, %v1095
        %v1400 = vpack.c.bf16 %v1098, %v1096
        %v1401 = vpack.c.bf16 %v1101, %v1099
        %v1402 = vpack.c.bf16 %v1102, %v1100
        %v1403 = vpack.c.bf16 %v1105, %v1103
        %v1404 = vpack.c.bf16 %v1106, %v1104
        %v1406 = vlaneseq
        %v1407 = vshrl.u32 %v1406, 7
        %v1408 = vsub.s32 0, %v1407
        %v1409 = vrot.slane %v1205, %v1408
        %v1410 = vlaneseq
        %v1411 = vshrl.u32 %v1410, 7
        %v1412 = vsub.s32 1, %v1411
        %v1413 = vrot.slane %v1205, %v1412
        %v1414 = vlaneseq
        %v1415 = vshrl.u32 %v1414, 7
        %v1416 = vsub.s32 2, %v1415
        %v1417 = vrot.slane %v1205, %v1416
        %v1418 = vlaneseq
        %v1419 = vshrl.u32 %v1418, 7
        %v1420 = vsub.s32 3, %v1419
        %v1421 = vrot.slane %v1205, %v1420
        %v1422 = vlaneseq
        %v1423 = vshrl.u32 %v1422, 7
        %v1424 = vsub.s32 4, %v1423
        %v1425 = vrot.slane %v1205, %v1424
        %v1426 = vlaneseq
        %v1427 = vshrl.u32 %v1426, 7
        %v1428 = vsub.s32 5, %v1427
        %v1429 = vrot.slane %v1205, %v1428
        %v1532 = vunpack.c.l.b16 %v1109
        %v1533 = vunpack.c.h.b16 %v1109
        %v1534 = vunpack.c.l.b16 %v1110
        %v1535 = vunpack.c.h.b16 %v1110
        %v1536 = vunpack.c.l.b16 %v1111
        %v1537 = vunpack.c.h.b16 %v1111
        %v1538 = vunpack.c.l.b16 %v1112
        %v1539 = vunpack.c.h.b16 %v1112
        %v1540 = vunpack.c.l.b16 %v1113
        %v1541 = vunpack.c.h.b16 %v1113
        %v1542 = vunpack.c.l.b16 %v1114
        %v1543 = vunpack.c.h.b16 %v1114
        %v1544 = vunpack.c.l.b16 %v1115
        %v1545 = vunpack.c.h.b16 %v1115
        %v1546 = vunpack.c.l.b16 %v1116
        %v1547 = vunpack.c.h.b16 %v1116
        %v1548 = vunpack.c.l.b16 %v1117
        %v1549 = vunpack.c.h.b16 %v1117
        %v1550 = vunpack.c.l.b16 %v1118
        %v1551 = vunpack.c.h.b16 %v1118
        %v1552 = vunpack.c.l.b16 %v1119
        %v1553 = vunpack.c.h.b16 %v1119
        %v1554 = vunpack.c.l.b16 %v1120
        %v1555 = vunpack.c.h.b16 %v1120
        %v1556 = vunpack.c.l.b16 %v1121
        %v1557 = vunpack.c.h.b16 %v1121
        %v1558 = vunpack.c.l.b16 %v1122
        %v1559 = vunpack.c.h.b16 %v1122
        %v1560 = vunpack.c.l.b16 %v1123
        %v1561 = vunpack.c.h.b16 %v1123
        %v1562 = vunpack.c.l.b16 %v1124
        %v1563 = vunpack.c.h.b16 %v1124
        %v1564 = vunpack.c.l.b16 %v1125
        %v1565 = vunpack.c.h.b16 %v1125
        %v1566 = vunpack.c.l.b16 %v1126
        %v1567 = vunpack.c.h.b16 %v1126
        %v1568 = vunpack.c.l.b16 %v1127
        %v1569 = vunpack.c.h.b16 %v1127
        %v1570 = vunpack.c.l.b16 %v1128
        %v1571 = vunpack.c.h.b16 %v1128
        %v1572 = vunpack.c.l.b16 %v1129
        %v1573 = vunpack.c.h.b16 %v1129
        %v1574 = vunpack.c.l.b16 %v1130
        %v1575 = vunpack.c.h.b16 %v1130
        %v1576 = vunpack.c.l.b16 %v1131
        %v1577 = vunpack.c.h.b16 %v1131
        %v1578 = vunpack.c.l.b16 %v1132
        %v1579 = vunpack.c.h.b16 %v1132
        %v1580 = vunpack.c.l.b16 %v1133
        %v1581 = vunpack.c.h.b16 %v1133
        %v1582 = vunpack.c.l.b16 %v1134
        %v1583 = vunpack.c.h.b16 %v1134
        %v1584 = vunpack.c.l.b16 %v1135
        %v1585 = vunpack.c.h.b16 %v1135
        %v1586 = vunpack.c.l.b16 %v1136
        %v1587 = vunpack.c.h.b16 %v1136
        %v1588 = vunpack.c.l.b16 %v1137
        %v1589 = vunpack.c.h.b16 %v1137
        %v1590 = vunpack.c.l.b16 %v1138
        %v1591 = vunpack.c.h.b16 %v1138
        %v1592 = vunpack.c.l.b16 %v1139
        %v1593 = vunpack.c.h.b16 %v1139
        %v1594 = vunpack.c.l.b16 %v1140
        %v1595 = vunpack.c.h.b16 %v1140
        %v1596 = vunpack.c.l.b16 %v1141
        %v1597 = vunpack.c.h.b16 %v1141
        %v1598 = vunpack.c.l.b16 %v1142
        %v1599 = vunpack.c.h.b16 %v1142
        %v1600 = vunpack.c.l.b16 %v1143
        %v1601 = vunpack.c.h.b16 %v1143
        %v1602 = vunpack.c.l.b16 %v1144
        %v1603 = vunpack.c.h.b16 %v1144
        %v1604 = vunpack.c.l.b16 %v1145
        %v1605 = vunpack.c.h.b16 %v1145
        %v1606 = vunpack.c.l.b16 %v1146
        %v1607 = vunpack.c.h.b16 %v1146
        %v1608 = vunpack.c.l.b16 %v1147
        %v1609 = vunpack.c.h.b16 %v1147
        %v1610 = vunpack.c.l.b16 %v1148
        %v1611 = vunpack.c.h.b16 %v1148
        %v1612 = vunpack.c.l.b16 %v1149
        %v1613 = vunpack.c.h.b16 %v1149
        %v1614 = vunpack.c.l.b16 %v1150
        %v1615 = vunpack.c.h.b16 %v1150
        %v1616 = vunpack.c.l.b16 %v1151
        %v1617 = vunpack.c.h.b16 %v1151
        %v1618 = vunpack.c.l.b16 %v1152
        %v1619 = vunpack.c.h.b16 %v1152
        %v1620 = vunpack.c.l.b16 %v1153
        %v1621 = vunpack.c.h.b16 %v1153
        %v1622 = vunpack.c.l.b16 %v1154
        %v1623 = vunpack.c.h.b16 %v1154
        %v1624 = vunpack.c.l.b16 %v1155
        %v1625 = vunpack.c.h.b16 %v1155
        %v1626 = vunpack.c.l.b16 %v1156
        %v1627 = vunpack.c.h.b16 %v1156
        %v1628 = vunpack.c.l.b16 %v1157
        %v1629 = vunpack.c.h.b16 %v1157
        %v1630 = vunpack.c.l.b16 %v1158
        %v1631 = vunpack.c.h.b16 %v1158
        %v1632 = vunpack.c.l.b16 %v1159
        %v1633 = vunpack.c.h.b16 %v1159
        %v1634 = vunpack.c.l.b16 %v1160
        %v1635 = vunpack.c.h.b16 %v1160
        %v1636 = vunpack.c.l.b16 %v1161
        %v1637 = vunpack.c.h.b16 %v1161
        %v1638 = vunpack.c.l.b16 %v1162
        %v1639 = vunpack.c.h.b16 %v1162
        %v1640 = vunpack.c.l.b16 %v1163
        %v1641 = vunpack.c.h.b16 %v1163
        %v1642 = vunpack.c.l.b16 %v1164
        %v1643 = vunpack.c.h.b16 %v1164
        %v1644 = vunpack.c.l.b16 %v1165
        %v1645 = vunpack.c.h.b16 %v1165
        %v1646 = vunpack.c.l.b16 %v1166
        %v1647 = vunpack.c.h.b16 %v1166
        %v1648 = vunpack.c.l.b16 %v1167
        %v1649 = vunpack.c.h.b16 %v1167
        %v1650 = vunpack.c.l.b16 %v1168
        %v1651 = vunpack.c.h.b16 %v1168
        %v1652 = vunpack.c.l.b16 %v1169
        %v1653 = vunpack.c.h.b16 %v1169
        %v1654 = vunpack.c.l.b16 %v1170
        %v1655 = vunpack.c.h.b16 %v1170
        %v1656 = vunpack.c.l.b16 %v1171
        %v1657 = vunpack.c.h.b16 %v1171
        %v1658 = vunpack.c.l.b16 %v1172
        %v1659 = vunpack.c.h.b16 %v1172
        %v1660 = vunpack.c.l.b16 %v1173
        %v1661 = vunpack.c.h.b16 %v1173
        %v1662 = vunpack.c.l.b16 %v1174
        %v1663 = vunpack.c.h.b16 %v1174
        %v1664 = vunpack.c.l.b16 %v1175
        %v1665 = vunpack.c.h.b16 %v1175
        %v1666 = vunpack.c.l.b16 %v1176
        %v1667 = vunpack.c.h.b16 %v1176
        %v1668 = vunpack.c.l.b16 %v1177
        %v1669 = vunpack.c.h.b16 %v1177
        %v1670 = vunpack.c.l.b16 %v1178
        %v1671 = vunpack.c.h.b16 %v1178
        %v1672 = vunpack.c.l.b16 %v1179
        %v1673 = vunpack.c.h.b16 %v1179
        %v1674 = vunpack.c.l.b16 %v1180
        %v1675 = vunpack.c.h.b16 %v1180
        %v1676 = vunpack.c.l.b16 %v1181
        %v1677 = vunpack.c.h.b16 %v1181
        %v1678 = vunpack.c.l.b16 %v1182
        %v1679 = vunpack.c.h.b16 %v1182
        %v1680 = vunpack.c.l.b16 %v1183
        %v1681 = vunpack.c.h.b16 %v1183
        %v1682 = vunpack.c.l.b16 %v1184
        %v1683 = vunpack.c.h.b16 %v1184
        %v1684 = vunpack.c.l.b16 %v1185
        %v1685 = vunpack.c.h.b16 %v1185
        %v1686 = vunpack.c.l.b16 %v1186
        %v1687 = vunpack.c.h.b16 %v1186
        %v1688 = vunpack.c.l.b16 %v1187
        %v1689 = vunpack.c.h.b16 %v1187
        %v1690 = vunpack.c.l.b16 %v1188
        %v1691 = vunpack.c.h.b16 %v1188
        %v1692 = vunpack.c.l.b16 %v1189
        %v1693 = vunpack.c.h.b16 %v1189
        %v1694 = vunpack.c.l.b16 %v1190
        %v1695 = vunpack.c.h.b16 %v1190
        %v1696 = vunpack.c.l.b16 %v1191
        %v1697 = vunpack.c.h.b16 %v1191
        %v1698 = vunpack.c.l.b16 %v1192
        %v1699 = vunpack.c.h.b16 %v1192
        %v1700 = vunpack.c.l.b16 %v1193
        %v1701 = vunpack.c.h.b16 %v1193
        %v1702 = vunpack.c.l.b16 %v1194
        %v1703 = vunpack.c.h.b16 %v1194
        %v1704 = vunpack.c.l.b16 %v1195
        %v1705 = vunpack.c.h.b16 %v1195
        %v1706 = vunpack.c.l.b16 %v1196
        %v1707 = vunpack.c.h.b16 %v1196
        %v1708 = vunpack.c.l.b16 %v1197
        %v1709 = vunpack.c.h.b16 %v1197
        %v1710 = vunpack.c.l.b16 %v1198
        %v1711 = vunpack.c.h.b16 %v1198
        %v1712 = vunpack.c.l.b16 %v1199
        %v1713 = vunpack.c.h.b16 %v1199
        %v1714 = vunpack.c.l.b16 %v1200
        %v1715 = vunpack.c.h.b16 %v1200
        %v1716 = vunpack.c.l.b16 %v1201
        %v1717 = vunpack.c.h.b16 %v1201
        %v1718 = vunpack.c.l.b16 %v1202
        %v1719 = vunpack.c.h.b16 %v1202
        %v1720 = vunpack.c.l.b16 %v1203
        %v1721 = vunpack.c.h.b16 %v1203
        %v1722 = vunpack.c.l.b16 %v1204
        %v1723 = vunpack.c.h.b16 %v1204
        %v1724 = vpack.c.b16 %v1538, %v1532
        %v1725 = vpack.c.b16 %v1539, %v1533
        %v1726 = vpack.c.b16 %v1540, %v1534
        %v1727 = vpack.c.b16 %v1541, %v1535
        %v1728 = vpack.c.b16 %v1542, %v1536
        %v1729 = vpack.c.b16 %v1543, %v1537
        %v1730 = vpack.c.b16 %v1550, %v1544
        %v1731 = vpack.c.b16 %v1551, %v1545
        %v1732 = vpack.c.b16 %v1552, %v1546
        %v1733 = vpack.c.b16 %v1553, %v1547
        %v1734 = vpack.c.b16 %v1554, %v1548
        %v1735 = vpack.c.b16 %v1555, %v1549
        %v1736 = vpack.c.b16 %v1562, %v1556
        %v1737 = vpack.c.b16 %v1563, %v1557
        %v1738 = vpack.c.b16 %v1564, %v1558
        %v1739 = vpack.c.b16 %v1565, %v1559
        %v1740 = vpack.c.b16 %v1566, %v1560
        %v1741 = vpack.c.b16 %v1567, %v1561
        %v1742 = vpack.c.b16 %v1574, %v1568
        %v1743 = vpack.c.b16 %v1575, %v1569
        %v1744 = vpack.c.b16 %v1576, %v1570
        %v1745 = vpack.c.b16 %v1577, %v1571
        %v1746 = vpack.c.b16 %v1578, %v1572
        %v1747 = vpack.c.b16 %v1579, %v1573
        %v1748 = vpack.c.b16 %v1586, %v1580
        %v1749 = vpack.c.b16 %v1587, %v1581
        %v1750 = vpack.c.b16 %v1588, %v1582
        %v1751 = vpack.c.b16 %v1589, %v1583
        %v1752 = vpack.c.b16 %v1590, %v1584
        %v1753 = vpack.c.b16 %v1591, %v1585
        %v1754 = vpack.c.b16 %v1598, %v1592
        %v1755 = vpack.c.b16 %v1599, %v1593
        %v1756 = vpack.c.b16 %v1600, %v1594
        %v1757 = vpack.c.b16 %v1601, %v1595
        %v1758 = vpack.c.b16 %v1602, %v1596
        %v1759 = vpack.c.b16 %v1603, %v1597
        %v1760 = vpack.c.b16 %v1610, %v1604
        %v1761 = vpack.c.b16 %v1611, %v1605
        %v1762 = vpack.c.b16 %v1612, %v1606
        %v1763 = vpack.c.b16 %v1613, %v1607
        %v1764 = vpack.c.b16 %v1614, %v1608
        %v1765 = vpack.c.b16 %v1615, %v1609
        %v1766 = vpack.c.b16 %v1622, %v1616
        %v1767 = vpack.c.b16 %v1623, %v1617
        %v1768 = vpack.c.b16 %v1624, %v1618
        %v1769 = vpack.c.b16 %v1625, %v1619
        %v1770 = vpack.c.b16 %v1626, %v1620
        %v1771 = vpack.c.b16 %v1627, %v1621
        %v1772 = vpack.c.b16 %v1634, %v1628
        %v1773 = vpack.c.b16 %v1635, %v1629
        %v1774 = vpack.c.b16 %v1636, %v1630
        %v1775 = vpack.c.b16 %v1637, %v1631
        %v1776 = vpack.c.b16 %v1638, %v1632
        %v1777 = vpack.c.b16 %v1639, %v1633
        %v1778 = vpack.c.b16 %v1646, %v1640
        %v1779 = vpack.c.b16 %v1647, %v1641
        %v1780 = vpack.c.b16 %v1648, %v1642
        %v1781 = vpack.c.b16 %v1649, %v1643
        %v1782 = vpack.c.b16 %v1650, %v1644
        %v1783 = vpack.c.b16 %v1651, %v1645
        %v1784 = vpack.c.b16 %v1658, %v1652
        %v1785 = vpack.c.b16 %v1659, %v1653
        %v1786 = vpack.c.b16 %v1660, %v1654
        %v1787 = vpack.c.b16 %v1661, %v1655
        %v1788 = vpack.c.b16 %v1662, %v1656
        %v1789 = vpack.c.b16 %v1663, %v1657
        %v1790 = vpack.c.b16 %v1670, %v1664
        %v1791 = vpack.c.b16 %v1671, %v1665
        %v1792 = vpack.c.b16 %v1672, %v1666
        %v1793 = vpack.c.b16 %v1673, %v1667
        %v1794 = vpack.c.b16 %v1674, %v1668
        %v1795 = vpack.c.b16 %v1675, %v1669
        %v1796 = vpack.c.b16 %v1682, %v1676
        %v1797 = vpack.c.b16 %v1683, %v1677
        %v1798 = vpack.c.b16 %v1684, %v1678
        %v1799 = vpack.c.b16 %v1685, %v1679
        %v1800 = vpack.c.b16 %v1686, %v1680
        %v1801 = vpack.c.b16 %v1687, %v1681
        %v1802 = vpack.c.b16 %v1694, %v1688
        %v1803 = vpack.c.b16 %v1695, %v1689
        %v1804 = vpack.c.b16 %v1696, %v1690
        %v1805 = vpack.c.b16 %v1697, %v1691
        %v1806 = vpack.c.b16 %v1698, %v1692
        %v1807 = vpack.c.b16 %v1699, %v1693
        %v1808 = vpack.c.b16 %v1706, %v1700
        %v1809 = vpack.c.b16 %v1707, %v1701
        %v1810 = vpack.c.b16 %v1708, %v1702
        %v1811 = vpack.c.b16 %v1709, %v1703
        %v1812 = vpack.c.b16 %v1710, %v1704
        %v1813 = vpack.c.b16 %v1711, %v1705
        %v1814 = vpack.c.b16 %v1718, %v1712
        %v1815 = vpack.c.b16 %v1719, %v1713
        %v1816 = vpack.c.b16 %v1720, %v1714
        %v1817 = vpack.c.b16 %v1721, %v1715
        %v1818 = vpack.c.b16 %v1722, %v1716
        %v1819 = vpack.c.b16 %v1723, %v1717
        %1916 = vmatprep.subr.bf16.mxu0 %v1767
        %1917 = vmatpush1.bf16.msra.mxu0 %v1766
        %1918 = vmatprep.subr.bf16.mxu0 %v1761
        %1919 = vmatpush1.bf16.msra.mxu0 %v1760
        %1920 = vmatprep.subr.bf16.mxu0 %v1755
        %1921 = vmatpush1.bf16.msra.mxu0 %v1754
        %1922 = vmatprep.subr.bf16.mxu0 %v1749
        %1923 = vmatpush1.bf16.msra.mxu0 %v1748
        %1924 = vmatprep.subr.bf16.mxu0 %v1743
        %1925 = vmatpush1.bf16.msra.mxu0 %v1742
        %1926 = vmatprep.subr.bf16.mxu0 %v1737
        %1927 = vmatpush1.bf16.msra.mxu0 %v1736
        %1928 = vmatprep.subr.bf16.mxu0 %v1731
        %1929 = vmatpush1.bf16.msra.mxu0 %v1730
        %1930 = vmatprep.subr.bf16.mxu0 %v1725
        %1931 = vmatpush1.bf16.msra.mxu0 %v1724
        %1932 = vmatprep.subr.bf16.mxu0 %v1815
        %1933 = vmatpush2.bf16.msra.mxu0 %v1814
        %1934 = vmatprep.subr.bf16.mxu0 %v1809
        %1935 = vmatpush2.bf16.msra.mxu0 %v1808
        %1936 = vmatprep.subr.bf16.mxu0 %v1803
        %1937 = vmatpush2.bf16.msra.mxu0 %v1802
        %1938 = vmatprep.subr.bf16.mxu0 %v1797
        %1939 = vmatpush2.bf16.msra.mxu0 %v1796
        %1940 = vmatprep.subr.bf16.mxu0 %v1791
        %1941 = vmatpush2.bf16.msra.mxu0 %v1790
        %1942 = vmatprep.subr.bf16.mxu0 %v1785
        %1943 = vmatpush2.bf16.msra.mxu0 %v1784
        %1944 = vmatprep.subr.bf16.mxu0 %v1779
        %1945 = vmatpush2.bf16.msra.mxu0 %v1778
        %1946 = vmatprep.subr.bf16.mxu0 %v1773
        %1947 = vmatpush2.bf16.msra.mxu0 %v1772
        %1948 = vmatprep.mubr.bf16.mxu0 %v1374
        %1949 = vmatmul.mubr.bf16.gmra.mxu0 %v1373
        %v1950 = vpop.f32.mrf.mxu0
        %v1951 = vadd.f32 %v1409, %v1950
        %v1952 = vpop.f32.mrf.mxu0
        %v1953 = vadd.f32 %v1413, %v1952
        %v1954 = vpop.f32.mrf.mxu0
        %v1955 = vadd.f32 %v1409, %v1954
        %v1956 = vpop.f32.mrf.mxu0
        %v1957 = vadd.f32 %v1413, %v1956
        %1958 = vmatprep.mubr.bf16.mxu0 %v1376
        %1959 = vmatmul.mubr.bf16.gmra.mxu0 %v1375
        %v1960 = vpop.f32.mrf.mxu0
        %v1961 = vadd.f32 %v1409, %v1960
        %v1962 = vpop.f32.mrf.mxu0
        %v1963 = vadd.f32 %v1413, %v1962
        %v1964 = vpop.f32.mrf.mxu0
        %v1965 = vadd.f32 %v1409, %v1964
        %v1966 = vpop.f32.mrf.mxu0
        %v1967 = vadd.f32 %v1413, %v1966
        %1968 = vmatprep.mubr.bf16.mxu0 %v1378
        %1969 = vmatmul.mubr.bf16.gmra.mxu0 %v1377
        %v1970 = vpop.f32.mrf.mxu0
        %v1971 = vadd.f32 %v1409, %v1970
        %v1972 = vpop.f32.mrf.mxu0
        %v1973 = vadd.f32 %v1413, %v1972
        %v1974 = vpop.f32.mrf.mxu0
        %v1975 = vadd.f32 %v1409, %v1974
        %v1976 = vpop.f32.mrf.mxu0
        %v1977 = vadd.f32 %v1413, %v1976
        %1978 = vmatprep.mubr.bf16.mxu0 %v1380
        %1979 = vmatmul.mubr.bf16.gmra.mxu0 %v1379
        %v1980 = vpop.f32.mrf.mxu0
        %v1981 = vadd.f32 %v1409, %v1980
        %v1982 = vpop.f32.mrf.mxu0
        %v1983 = vadd.f32 %v1413, %v1982
        %v1984 = vpop.f32.mrf.mxu0
        %v1985 = vadd.f32 %v1409, %v1984
        %v1986 = vpop.f32.mrf.mxu0
        %v1987 = vadd.f32 %v1413, %v1986
        %1988 = vmatprep.mubr.bf16.mxu0 %v1382
        %1989 = vmatmul.mubr.bf16.gmra.mxu0 %v1381
        %v1990 = vpop.f32.mrf.mxu0
        %v1991 = vadd.f32 %v1409, %v1990
        %v1992 = vpop.f32.mrf.mxu0
        %v1993 = vadd.f32 %v1413, %v1992
        %v1994 = vpop.f32.mrf.mxu0
        %v1995 = vadd.f32 %v1409, %v1994
        %v1996 = vpop.f32.mrf.mxu0
        %v1997 = vadd.f32 %v1413, %v1996
        %1998 = vmatprep.mubr.bf16.mxu0 %v1384
        %1999 = vmatmul.mubr.bf16.gmra.mxu0 %v1383
        %v2000 = vpop.f32.mrf.mxu0
        %v2001 = vadd.f32 %v1409, %v2000
        %v2002 = vpop.f32.mrf.mxu0
        %v2003 = vadd.f32 %v1413, %v2002
        %v2004 = vpop.f32.mrf.mxu0
        %v2005 = vadd.f32 %v1409, %v2004
        %v2006 = vpop.f32.mrf.mxu0
        %v2007 = vadd.f32 %v1413, %v2006
        %2008 = vmatprep.mubr.bf16.mxu0 %v1386
        %2009 = vmatmul.mubr.bf16.gmra.mxu0 %v1385
        %v2010 = vpop.f32.mrf.mxu0
        %v2011 = vadd.f32 %v1409, %v2010
        %v2012 = vpop.f32.mrf.mxu0
        %v2013 = vadd.f32 %v1413, %v2012
        %v2014 = vpop.f32.mrf.mxu0
        %v2015 = vadd.f32 %v1409, %v2014
        %v2016 = vpop.f32.mrf.mxu0
        %v2017 = vadd.f32 %v1413, %v2016
        %2018 = vmatprep.mubr.bf16.mxu0 %v1388
        %2019 = vmatmul.mubr.bf16.gmra.mxu0 %v1387
        %v2020 = vpop.f32.mrf.mxu0
        %v2021 = vadd.f32 %v1409, %v2020
        %v2022 = vpop.f32.mrf.mxu0
        %v2023 = vadd.f32 %v1413, %v2022
        %v2024 = vpop.f32.mrf.mxu0
        %v2025 = vadd.f32 %v1409, %v2024
        %v2026 = vpop.f32.mrf.mxu0
        %v2027 = vadd.f32 %v1413, %v2026
        %2028 = vmatprep.mubr.bf16.mxu0 %v1390
        %2029 = vmatmul.mubr.bf16.gmra.mxu0 %v1389
        %v2030 = vpop.f32.mrf.mxu0
        %v2031 = vadd.f32 %v1409, %v2030
        %v2032 = vpop.f32.mrf.mxu0
        %v2033 = vadd.f32 %v1413, %v2032
        %v2034 = vpop.f32.mrf.mxu0
        %v2035 = vadd.f32 %v1409, %v2034
        %v2036 = vpop.f32.mrf.mxu0
        %v2037 = vadd.f32 %v1413, %v2036
        %2038 = vmatprep.mubr.bf16.mxu0 %v1392
        %2039 = vmatmul.mubr.bf16.gmra.mxu0 %v1391
        %v2040 = vpop.f32.mrf.mxu0
        %v2041 = vadd.f32 %v1409, %v2040
        %v2042 = vpop.f32.mrf.mxu0
        %v2043 = vadd.f32 %v1413, %v2042
        %v2044 = vpop.f32.mrf.mxu0
        %v2045 = vadd.f32 %v1409, %v2044
        %v2046 = vpop.f32.mrf.mxu0
        %v2047 = vadd.f32 %v1413, %v2046
        %2048 = vmatprep.mubr.bf16.mxu0 %v1394
        %2049 = vmatmul.mubr.bf16.gmra.mxu0 %v1393
        %v2050 = vpop.f32.mrf.mxu0
        %v2051 = vadd.f32 %v1409, %v2050
        %v2052 = vpop.f32.mrf.mxu0
        %v2053 = vadd.f32 %v1413, %v2052
        %v2054 = vpop.f32.mrf.mxu0
        %v2055 = vadd.f32 %v1409, %v2054
        %v2056 = vpop.f32.mrf.mxu0
        %v2057 = vadd.f32 %v1413, %v2056
        %2058 = vmatprep.mubr.bf16.mxu0 %v1396
        %2059 = vmatmul.mubr.bf16.gmra.mxu0 %v1395
        %v2060 = vpop.f32.mrf.mxu0
        %v2061 = vadd.f32 %v1409, %v2060
        %v2062 = vpop.f32.mrf.mxu0
        %v2063 = vadd.f32 %v1413, %v2062
        %v2064 = vpop.f32.mrf.mxu0
        %v2065 = vadd.f32 %v1409, %v2064
        %v2066 = vpop.f32.mrf.mxu0
        %v2067 = vadd.f32 %v1413, %v2066
        %2068 = vmatprep.mubr.bf16.mxu0 %v1398
        %2069 = vmatmul.mubr.bf16.gmra.mxu0 %v1397
        %v2070 = vpop.f32.mrf.mxu0
        %v2071 = vadd.f32 %v1409, %v2070
        %v2072 = vpop.f32.mrf.mxu0
        %v2073 = vadd.f32 %v1413, %v2072
        %v2074 = vpop.f32.mrf.mxu0
        %v2075 = vadd.f32 %v1409, %v2074
        %v2076 = vpop.f32.mrf.mxu0
        %v2077 = vadd.f32 %v1413, %v2076
        %2078 = vmatprep.mubr.bf16.mxu0 %v1400
        %2079 = vmatmul.mubr.bf16.gmra.mxu0 %v1399
        %v2080 = vpop.f32.mrf.mxu0
        %v2081 = vadd.f32 %v1409, %v2080
        %v2082 = vpop.f32.mrf.mxu0
        %v2083 = vadd.f32 %v1413, %v2082
        %v2084 = vpop.f32.mrf.mxu0
        %v2085 = vadd.f32 %v1409, %v2084
        %v2086 = vpop.f32.mrf.mxu0
        %v2087 = vadd.f32 %v1413, %v2086
        %2088 = vmatprep.mubr.bf16.mxu0 %v1402
        %2089 = vmatmul.mubr.bf16.gmra.mxu0 %v1401
        %v2090 = vpop.f32.mrf.mxu0
        %v2091 = vadd.f32 %v1409, %v2090
        %v2092 = vpop.f32.mrf.mxu0
        %v2093 = vadd.f32 %v1413, %v2092
        %v2094 = vpop.f32.mrf.mxu0
        %v2095 = vadd.f32 %v1409, %v2094
        %v2096 = vpop.f32.mrf.mxu0
        %v2097 = vadd.f32 %v1413, %v2096
        %2098 = vmatprep.mubr.bf16.mxu0 %v1404
        %2099 = vmatmul.mubr.bf16.gmra.mxu0 %v1403
        %v2100 = vpop.f32.mrf.mxu0
        %v2101 = vadd.f32 %v1409, %v2100
        %v2102 = vpop.f32.mrf.mxu0
        %v2103 = vadd.f32 %v1413, %v2102
        %v2104 = vpop.f32.mrf.mxu0
        %v2105 = vadd.f32 %v1409, %v2104
        %v2106 = vpop.f32.mrf.mxu0
        %v2107 = vadd.f32 %v1413, %v2106
        %2108 = vdwg.mxu0
        %2109 = vmatprep.subr.bf16.mxu0 %v1769
        %2110 = vmatpush1.bf16.msra.mxu0 %v1768
        %2111 = vmatprep.subr.bf16.mxu0 %v1763
        %2112 = vmatpush1.bf16.msra.mxu0 %v1762
        %2113 = vmatprep.subr.bf16.mxu0 %v1757
        %2114 = vmatpush1.bf16.msra.mxu0 %v1756
        %2115 = vmatprep.subr.bf16.mxu0 %v1751
        %2116 = vmatpush1.bf16.msra.mxu0 %v1750
        %2117 = vmatprep.subr.bf16.mxu0 %v1745
        %2118 = vmatpush1.bf16.msra.mxu0 %v1744
        %2119 = vmatprep.subr.bf16.mxu0 %v1739
        %2120 = vmatpush1.bf16.msra.mxu0 %v1738
        %2121 = vmatprep.subr.bf16.mxu0 %v1733
        %2122 = vmatpush1.bf16.msra.mxu0 %v1732
        %2123 = vmatprep.subr.bf16.mxu0 %v1727
        %2124 = vmatpush1.bf16.msra.mxu0 %v1726
        %2125 = vmatprep.subr.bf16.mxu0 %v1817
        %2126 = vmatpush2.bf16.msra.mxu0 %v1816
        %2127 = vmatprep.subr.bf16.mxu0 %v1811
        %2128 = vmatpush2.bf16.msra.mxu0 %v1810
        %2129 = vmatprep.subr.bf16.mxu0 %v1805
        %2130 = vmatpush2.bf16.msra.mxu0 %v1804
        %2131 = vmatprep.subr.bf16.mxu0 %v1799
        %2132 = vmatpush2.bf16.msra.mxu0 %v1798
        %2133 = vmatprep.subr.bf16.mxu0 %v1793
        %2134 = vmatpush2.bf16.msra.mxu0 %v1792
        %2135 = vmatprep.subr.bf16.mxu0 %v1787
        %2136 = vmatpush2.bf16.msra.mxu0 %v1786
        %2137 = vmatprep.subr.bf16.mxu0 %v1781
        %2138 = vmatpush2.bf16.msra.mxu0 %v1780
        %2139 = vmatprep.subr.bf16.mxu0 %v1775
        %2140 = vmatpush2.bf16.msra.mxu0 %v1774
        %2141 = vmatprep.mubr.bf16.mxu0 %v1374
        %2142 = vmatmul.mubr.bf16.gmra.mxu0 %v1373
        %v2143 = vpop.f32.mrf.mxu0
        %v2144 = vadd.f32 %v1417, %v2143
        %v2145 = vpop.f32.mrf.mxu0
        %v2146 = vadd.f32 %v1421, %v2145
        %v2147 = vpop.f32.mrf.mxu0
        %v2148 = vadd.f32 %v1417, %v2147
        %v2149 = vpop.f32.mrf.mxu0
        %v2150 = vadd.f32 %v1421, %v2149
        %2151 = vmatprep.mubr.bf16.mxu0 %v1376
        %2152 = vmatmul.mubr.bf16.gmra.mxu0 %v1375
        %v2153 = vpop.f32.mrf.mxu0
        %v2154 = vadd.f32 %v1417, %v2153
        %v2155 = vpop.f32.mrf.mxu0
        %v2156 = vadd.f32 %v1421, %v2155
        %v2157 = vpop.f32.mrf.mxu0
        %v2158 = vadd.f32 %v1417, %v2157
        %v2159 = vpop.f32.mrf.mxu0
        %v2160 = vadd.f32 %v1421, %v2159
        %2161 = vmatprep.mubr.bf16.mxu0 %v1378
        %2162 = vmatmul.mubr.bf16.gmra.mxu0 %v1377
        %v2163 = vpop.f32.mrf.mxu0
        %v2164 = vadd.f32 %v1417, %v2163
        %v2165 = vpop.f32.mrf.mxu0
        %v2166 = vadd.f32 %v1421, %v2165
        %v2167 = vpop.f32.mrf.mxu0
        %v2168 = vadd.f32 %v1417, %v2167
        %v2169 = vpop.f32.mrf.mxu0
        %v2170 = vadd.f32 %v1421, %v2169
        %2171 = vmatprep.mubr.bf16.mxu0 %v1380
        %2172 = vmatmul.mubr.bf16.gmra.mxu0 %v1379
        %v2173 = vpop.f32.mrf.mxu0
        %v2174 = vadd.f32 %v1417, %v2173
        %v2175 = vpop.f32.mrf.mxu0
        %v2176 = vadd.f32 %v1421, %v2175
        %v2177 = vpop.f32.mrf.mxu0
        %v2178 = vadd.f32 %v1417, %v2177
        %v2179 = vpop.f32.mrf.mxu0
        %v2180 = vadd.f32 %v1421, %v2179
        %2181 = vmatprep.mubr.bf16.mxu0 %v1382
        %2182 = vmatmul.mubr.bf16.gmra.mxu0 %v1381
        %v2183 = vpop.f32.mrf.mxu0
        %v2184 = vadd.f32 %v1417, %v2183
        %v2185 = vpop.f32.mrf.mxu0
        %v2186 = vadd.f32 %v1421, %v2185
        %v2187 = vpop.f32.mrf.mxu0
        %v2188 = vadd.f32 %v1417, %v2187
        %v2189 = vpop.f32.mrf.mxu0
        %v2190 = vadd.f32 %v1421, %v2189
        %2191 = vmatprep.mubr.bf16.mxu0 %v1384
        %2192 = vmatmul.mubr.bf16.gmra.mxu0 %v1383
        %v2193 = vpop.f32.mrf.mxu0
        %v2194 = vadd.f32 %v1417, %v2193
        %v2195 = vpop.f32.mrf.mxu0
        %v2196 = vadd.f32 %v1421, %v2195
        %v2197 = vpop.f32.mrf.mxu0
        %v2198 = vadd.f32 %v1417, %v2197
        %v2199 = vpop.f32.mrf.mxu0
        %v2200 = vadd.f32 %v1421, %v2199
        %2201 = vmatprep.mubr.bf16.mxu0 %v1386
        %2202 = vmatmul.mubr.bf16.gmra.mxu0 %v1385
        %v2203 = vpop.f32.mrf.mxu0
        %v2204 = vadd.f32 %v1417, %v2203
        %v2205 = vpop.f32.mrf.mxu0
        %v2206 = vadd.f32 %v1421, %v2205
        %v2207 = vpop.f32.mrf.mxu0
        %v2208 = vadd.f32 %v1417, %v2207
        %v2209 = vpop.f32.mrf.mxu0
        %v2210 = vadd.f32 %v1421, %v2209
        %2211 = vmatprep.mubr.bf16.mxu0 %v1388
        %2212 = vmatmul.mubr.bf16.gmra.mxu0 %v1387
        %v2213 = vpop.f32.mrf.mxu0
        %v2214 = vadd.f32 %v1417, %v2213
        %v2215 = vpop.f32.mrf.mxu0
        %v2216 = vadd.f32 %v1421, %v2215
        %v2217 = vpop.f32.mrf.mxu0
        %v2218 = vadd.f32 %v1417, %v2217
        %v2219 = vpop.f32.mrf.mxu0
        %v2220 = vadd.f32 %v1421, %v2219
        %2221 = vmatprep.mubr.bf16.mxu0 %v1390
        %2222 = vmatmul.mubr.bf16.gmra.mxu0 %v1389
        %v2223 = vpop.f32.mrf.mxu0
        %v2224 = vadd.f32 %v1417, %v2223
        %v2225 = vpop.f32.mrf.mxu0
        %v2226 = vadd.f32 %v1421, %v2225
        %v2227 = vpop.f32.mrf.mxu0
        %v2228 = vadd.f32 %v1417, %v2227
        %v2229 = vpop.f32.mrf.mxu0
        %v2230 = vadd.f32 %v1421, %v2229
        %2231 = vmatprep.mubr.bf16.mxu0 %v1392
        %2232 = vmatmul.mubr.bf16.gmra.mxu0 %v1391
        %v2233 = vpop.f32.mrf.mxu0
        %v2234 = vadd.f32 %v1417, %v2233
        %v2235 = vpop.f32.mrf.mxu0
        %v2236 = vadd.f32 %v1421, %v2235
        %v2237 = vpop.f32.mrf.mxu0
        %v2238 = vadd.f32 %v1417, %v2237
        %v2239 = vpop.f32.mrf.mxu0
        %v2240 = vadd.f32 %v1421, %v2239
        %2241 = vmatprep.mubr.bf16.mxu0 %v1394
        %2242 = vmatmul.mubr.bf16.gmra.mxu0 %v1393
        %v2243 = vpop.f32.mrf.mxu0
        %v2244 = vadd.f32 %v1417, %v2243
        %v2245 = vpop.f32.mrf.mxu0
        %v2246 = vadd.f32 %v1421, %v2245
        %v2247 = vpop.f32.mrf.mxu0
        %v2248 = vadd.f32 %v1417, %v2247
        %v2249 = vpop.f32.mrf.mxu0
        %v2250 = vadd.f32 %v1421, %v2249
        %2251 = vmatprep.mubr.bf16.mxu0 %v1396
        %2252 = vmatmul.mubr.bf16.gmra.mxu0 %v1395
        %v2253 = vpop.f32.mrf.mxu0
        %v2254 = vadd.f32 %v1417, %v2253
        %v2255 = vpop.f32.mrf.mxu0
        %v2256 = vadd.f32 %v1421, %v2255
        %v2257 = vpop.f32.mrf.mxu0
        %v2258 = vadd.f32 %v1417, %v2257
        %v2259 = vpop.f32.mrf.mxu0
        %v2260 = vadd.f32 %v1421, %v2259
        %2261 = vmatprep.mubr.bf16.mxu0 %v1398
        %2262 = vmatmul.mubr.bf16.gmra.mxu0 %v1397
        %v2263 = vpop.f32.mrf.mxu0
        %v2264 = vadd.f32 %v1417, %v2263
        %v2265 = vpop.f32.mrf.mxu0
        %v2266 = vadd.f32 %v1421, %v2265
        %v2267 = vpop.f32.mrf.mxu0
        %v2268 = vadd.f32 %v1417, %v2267
        %v2269 = vpop.f32.mrf.mxu0
        %v2270 = vadd.f32 %v1421, %v2269
        %2271 = vmatprep.mubr.bf16.mxu0 %v1400
        %2272 = vmatmul.mubr.bf16.gmra.mxu0 %v1399
        %v2273 = vpop.f32.mrf.mxu0
        %v2274 = vadd.f32 %v1417, %v2273
        %v2275 = vpop.f32.mrf.mxu0
        %v2276 = vadd.f32 %v1421, %v2275
        %v2277 = vpop.f32.mrf.mxu0
        %v2278 = vadd.f32 %v1417, %v2277
        %v2279 = vpop.f32.mrf.mxu0
        %v2280 = vadd.f32 %v1421, %v2279
        %2281 = vmatprep.mubr.bf16.mxu0 %v1402
        %2282 = vmatmul.mubr.bf16.gmra.mxu0 %v1401
        %v2283 = vpop.f32.mrf.mxu0
        %v2284 = vadd.f32 %v1417, %v2283
        %v2285 = vpop.f32.mrf.mxu0
        %v2286 = vadd.f32 %v1421, %v2285
        %v2287 = vpop.f32.mrf.mxu0
        %v2288 = vadd.f32 %v1417, %v2287
        %v2289 = vpop.f32.mrf.mxu0
        %v2290 = vadd.f32 %v1421, %v2289
        %2291 = vmatprep.mubr.bf16.mxu0 %v1404
        %2292 = vmatmul.mubr.bf16.gmra.mxu0 %v1403
        %v2293 = vpop.f32.mrf.mxu0
        %v2294 = vadd.f32 %v1417, %v2293
        %v2295 = vpop.f32.mrf.mxu0
        %v2296 = vadd.f32 %v1421, %v2295
        %v2297 = vpop.f32.mrf.mxu0
        %v2298 = vadd.f32 %v1417, %v2297
        %v2299 = vpop.f32.mrf.mxu0
        %v2300 = vadd.f32 %v1421, %v2299
        %2301 = vdwg.mxu0
        %2302 = vmatprep.subr.bf16.mxu0 %v1771
        %2303 = vmatpush1.bf16.msra.mxu0 %v1770
        %2304 = vmatprep.subr.bf16.mxu0 %v1765
        %2305 = vmatpush1.bf16.msra.mxu0 %v1764
        %2306 = vmatprep.subr.bf16.mxu0 %v1759
        %2307 = vmatpush1.bf16.msra.mxu0 %v1758
        %2308 = vmatprep.subr.bf16.mxu0 %v1753
        %2309 = vmatpush1.bf16.msra.mxu0 %v1752
        %2310 = vmatprep.subr.bf16.mxu0 %v1747
        %2311 = vmatpush1.bf16.msra.mxu0 %v1746
        %2312 = vmatprep.subr.bf16.mxu0 %v1741
        %2313 = vmatpush1.bf16.msra.mxu0 %v1740
        %2314 = vmatprep.subr.bf16.mxu0 %v1735
        %2315 = vmatpush1.bf16.msra.mxu0 %v1734
        %2316 = vmatprep.subr.bf16.mxu0 %v1729
        %2317 = vmatpush1.bf16.msra.mxu0 %v1728
        %2318 = vmatprep.subr.bf16.mxu0 %v1819
        %2319 = vmatpush2.bf16.msra.mxu0 %v1818
        %2320 = vmatprep.subr.bf16.mxu0 %v1813
        %2321 = vmatpush2.bf16.msra.mxu0 %v1812
        %2322 = vmatprep.subr.bf16.mxu0 %v1807
        %2323 = vmatpush2.bf16.msra.mxu0 %v1806
        %2324 = vmatprep.subr.bf16.mxu0 %v1801
        %2325 = vmatpush2.bf16.msra.mxu0 %v1800
        %2326 = vmatprep.subr.bf16.mxu0 %v1795
        %2327 = vmatpush2.bf16.msra.mxu0 %v1794
        %2328 = vmatprep.subr.bf16.mxu0 %v1789
        %2329 = vmatpush2.bf16.msra.mxu0 %v1788
        %2330 = vmatprep.subr.bf16.mxu0 %v1783
        %2331 = vmatpush2.bf16.msra.mxu0 %v1782
        %2332 = vmatprep.subr.bf16.mxu0 %v1777
        %2333 = vmatpush2.bf16.msra.mxu0 %v1776
        %2334 = vmatprep.mubr.bf16.mxu0 %v1374
        %2335 = vmatmul.mubr.bf16.gmra.mxu0 %v1373
        %v2336 = vpop.f32.mrf.mxu0
        %v2337 = vadd.f32 %v1425, %v2336
        %v2338 = vpop.f32.mrf.mxu0
        %v2339 = vadd.f32 %v1429, %v2338
        %v2340 = vpop.f32.mrf.mxu0
        %v2341 = vadd.f32 %v1425, %v2340
        %v2342 = vpop.f32.mrf.mxu0
        %v2343 = vadd.f32 %v1429, %v2342
        %2344 = vmatprep.mubr.bf16.mxu0 %v1376
        %2345 = vmatmul.mubr.bf16.gmra.mxu0 %v1375
        %v2346 = vpop.f32.mrf.mxu0
        %v2347 = vadd.f32 %v1425, %v2346
        %v2348 = vpop.f32.mrf.mxu0
        %v2349 = vadd.f32 %v1429, %v2348
        %v2350 = vpop.f32.mrf.mxu0
        %v2351 = vadd.f32 %v1425, %v2350
        %v2352 = vpop.f32.mrf.mxu0
        %v2353 = vadd.f32 %v1429, %v2352
        %2354 = vmatprep.mubr.bf16.mxu0 %v1378
        %2355 = vmatmul.mubr.bf16.gmra.mxu0 %v1377
        %v2356 = vpop.f32.mrf.mxu0
        %v2357 = vadd.f32 %v1425, %v2356
        %v2358 = vpop.f32.mrf.mxu0
        %v2359 = vadd.f32 %v1429, %v2358
        %v2360 = vpop.f32.mrf.mxu0
        %v2361 = vadd.f32 %v1425, %v2360
        %v2362 = vpop.f32.mrf.mxu0
        %v2363 = vadd.f32 %v1429, %v2362
        %2364 = vmatprep.mubr.bf16.mxu0 %v1380
        %2365 = vmatmul.mubr.bf16.gmra.mxu0 %v1379
        %v2366 = vpop.f32.mrf.mxu0
        %v2367 = vadd.f32 %v1425, %v2366
        %v2368 = vpop.f32.mrf.mxu0
        %v2369 = vadd.f32 %v1429, %v2368
        %v2370 = vpop.f32.mrf.mxu0
        %v2371 = vadd.f32 %v1425, %v2370
        %v2372 = vpop.f32.mrf.mxu0
        %v2373 = vadd.f32 %v1429, %v2372
        %2374 = vmatprep.mubr.bf16.mxu0 %v1382
        %2375 = vmatmul.mubr.bf16.gmra.mxu0 %v1381
        %v2376 = vpop.f32.mrf.mxu0
        %v2377 = vadd.f32 %v1425, %v2376
        %v2378 = vpop.f32.mrf.mxu0
        %v2379 = vadd.f32 %v1429, %v2378
        %v2380 = vpop.f32.mrf.mxu0
        %v2381 = vadd.f32 %v1425, %v2380
        %v2382 = vpop.f32.mrf.mxu0
        %v2383 = vadd.f32 %v1429, %v2382
        %2384 = vmatprep.mubr.bf16.mxu0 %v1384
        %2385 = vmatmul.mubr.bf16.gmra.mxu0 %v1383
        %v2386 = vpop.f32.mrf.mxu0
        %v2387 = vadd.f32 %v1425, %v2386
        %v2388 = vpop.f32.mrf.mxu0
        %v2389 = vadd.f32 %v1429, %v2388
        %v2390 = vpop.f32.mrf.mxu0
        %v2391 = vadd.f32 %v1425, %v2390
        %v2392 = vpop.f32.mrf.mxu0
        %v2393 = vadd.f32 %v1429, %v2392
        %2394 = vmatprep.mubr.bf16.mxu0 %v1386
        %2395 = vmatmul.mubr.bf16.gmra.mxu0 %v1385
        %v2396 = vpop.f32.mrf.mxu0
        %v2397 = vadd.f32 %v1425, %v2396
        %v2398 = vpop.f32.mrf.mxu0
        %v2399 = vadd.f32 %v1429, %v2398
        %v2400 = vpop.f32.mrf.mxu0
        %v2401 = vadd.f32 %v1425, %v2400
        %v2402 = vpop.f32.mrf.mxu0
        %v2403 = vadd.f32 %v1429, %v2402
        %2404 = vmatprep.mubr.bf16.mxu0 %v1388
        %2405 = vmatmul.mubr.bf16.gmra.mxu0 %v1387
        %v2406 = vpop.f32.mrf.mxu0
        %v2407 = vadd.f32 %v1425, %v2406
        %v2408 = vpop.f32.mrf.mxu0
        %v2409 = vadd.f32 %v1429, %v2408
        %v2410 = vpop.f32.mrf.mxu0
        %v2411 = vadd.f32 %v1425, %v2410
        %v2412 = vpop.f32.mrf.mxu0
        %v2413 = vadd.f32 %v1429, %v2412
        %2414 = vmatprep.mubr.bf16.mxu0 %v1390
        %2415 = vmatmul.mubr.bf16.gmra.mxu0 %v1389
        %v2416 = vpop.f32.mrf.mxu0
        %v2417 = vadd.f32 %v1425, %v2416
        %v2418 = vpop.f32.mrf.mxu0
        %v2419 = vadd.f32 %v1429, %v2418
        %v2420 = vpop.f32.mrf.mxu0
        %v2421 = vadd.f32 %v1425, %v2420
        %v2422 = vpop.f32.mrf.mxu0
        %v2423 = vadd.f32 %v1429, %v2422
        %2424 = vmatprep.mubr.bf16.mxu0 %v1392
        %2425 = vmatmul.mubr.bf16.gmra.mxu0 %v1391
        %v2426 = vpop.f32.mrf.mxu0
        %v2427 = vadd.f32 %v1425, %v2426
        %v2428 = vpop.f32.mrf.mxu0
        %v2429 = vadd.f32 %v1429, %v2428
        %v2430 = vpop.f32.mrf.mxu0
        %v2431 = vadd.f32 %v1425, %v2430
        %v2432 = vpop.f32.mrf.mxu0
        %v2433 = vadd.f32 %v1429, %v2432
        %2434 = vmatprep.mubr.bf16.mxu0 %v1394
        %2435 = vmatmul.mubr.bf16.gmra.mxu0 %v1393
        %v2436 = vpop.f32.mrf.mxu0
        %v2437 = vadd.f32 %v1425, %v2436
        %v2438 = vpop.f32.mrf.mxu0
        %v2439 = vadd.f32 %v1429, %v2438
        %v2440 = vpop.f32.mrf.mxu0
        %v2441 = vadd.f32 %v1425, %v2440
        %v2442 = vpop.f32.mrf.mxu0
        %v2443 = vadd.f32 %v1429, %v2442
        %2444 = vmatprep.mubr.bf16.mxu0 %v1396
        %2445 = vmatmul.mubr.bf16.gmra.mxu0 %v1395
        %v2446 = vpop.f32.mrf.mxu0
        %v2447 = vadd.f32 %v1425, %v2446
        %v2448 = vpop.f32.mrf.mxu0
        %v2449 = vadd.f32 %v1429, %v2448
        %v2450 = vpop.f32.mrf.mxu0
        %v2451 = vadd.f32 %v1425, %v2450
        %v2452 = vpop.f32.mrf.mxu0
        %v2453 = vadd.f32 %v1429, %v2452
        %2454 = vmatprep.mubr.bf16.mxu0 %v1398
        %2455 = vmatmul.mubr.bf16.gmra.mxu0 %v1397
        %v2456 = vpop.f32.mrf.mxu0
        %v2457 = vadd.f32 %v1425, %v2456
        %v2458 = vpop.f32.mrf.mxu0
        %v2459 = vadd.f32 %v1429, %v2458
        %v2460 = vpop.f32.mrf.mxu0
        %v2461 = vadd.f32 %v1425, %v2460
        %v2462 = vpop.f32.mrf.mxu0
        %v2463 = vadd.f32 %v1429, %v2462
        %2464 = vmatprep.mubr.bf16.mxu0 %v1400
        %2465 = vmatmul.mubr.bf16.gmra.mxu0 %v1399
        %v2466 = vpop.f32.mrf.mxu0
        %v2467 = vadd.f32 %v1425, %v2466
        %v2468 = vpop.f32.mrf.mxu0
        %v2469 = vadd.f32 %v1429, %v2468
        %v2470 = vpop.f32.mrf.mxu0
        %v2471 = vadd.f32 %v1425, %v2470
        %v2472 = vpop.f32.mrf.mxu0
        %v2473 = vadd.f32 %v1429, %v2472
        %2474 = vmatprep.mubr.bf16.mxu0 %v1402
        %2475 = vmatmul.mubr.bf16.gmra.mxu0 %v1401
        %v2476 = vpop.f32.mrf.mxu0
        %v2477 = vadd.f32 %v1425, %v2476
        %v2478 = vpop.f32.mrf.mxu0
        %v2479 = vadd.f32 %v1429, %v2478
        %v2480 = vpop.f32.mrf.mxu0
        %v2481 = vadd.f32 %v1425, %v2480
        %v2482 = vpop.f32.mrf.mxu0
        %v2483 = vadd.f32 %v1429, %v2482
        %2484 = vmatprep.mubr.bf16.mxu0 %v1404
        %2485 = vmatmul.mubr.bf16.gmra.mxu0 %v1403
        %v2486 = vpop.f32.mrf.mxu0
        %v2487 = vadd.f32 %v1425, %v2486
        %v2488 = vpop.f32.mrf.mxu0
        %v2489 = vadd.f32 %v1429, %v2488
        %v2490 = vpop.f32.mrf.mxu0
        %v2491 = vadd.f32 %v1425, %v2490
        %v2492 = vpop.f32.mrf.mxu0
        %v2493 = vadd.f32 %v1429, %v2492
        %2494 = vdwg.mxu0
        %v2495 = vpack.c.bf16 %v1955, %v1951
        %v2496 = vpack.c.bf16 %v1965, %v1961
        %v2497 = vpack.c.bf16 %v1975, %v1971
        %v2498 = vpack.c.bf16 %v1985, %v1981
        %v2499 = vpack.c.bf16 %v1995, %v1991
        %v2500 = vpack.c.bf16 %v2005, %v2001
        %v2501 = vpack.c.bf16 %v2015, %v2011
        %v2502 = vpack.c.bf16 %v2025, %v2021
        %v2503 = vpack.c.bf16 %v2035, %v2031
        %v2504 = vpack.c.bf16 %v2045, %v2041
        %v2505 = vpack.c.bf16 %v2055, %v2051
        %v2506 = vpack.c.bf16 %v2065, %v2061
        %v2507 = vpack.c.bf16 %v2075, %v2071
        %v2508 = vpack.c.bf16 %v2085, %v2081
        %v2509 = vpack.c.bf16 %v2095, %v2091
        %v2510 = vpack.c.bf16 %v2105, %v2101
        %v2511 = vpack.c.bf16 %v1957, %v1953
        %v2512 = vpack.c.bf16 %v1967, %v1963
        %v2513 = vpack.c.bf16 %v1977, %v1973
        %v2514 = vpack.c.bf16 %v1987, %v1983
        %v2515 = vpack.c.bf16 %v1997, %v1993
        %v2516 = vpack.c.bf16 %v2007, %v2003
        %v2517 = vpack.c.bf16 %v2017, %v2013
        %v2518 = vpack.c.bf16 %v2027, %v2023
        %v2519 = vpack.c.bf16 %v2037, %v2033
        %v2520 = vpack.c.bf16 %v2047, %v2043
        %v2521 = vpack.c.bf16 %v2057, %v2053
        %v2522 = vpack.c.bf16 %v2067, %v2063
        %v2523 = vpack.c.bf16 %v2077, %v2073
        %v2524 = vpack.c.bf16 %v2087, %v2083
        %v2525 = vpack.c.bf16 %v2097, %v2093
        %v2526 = vpack.c.bf16 %v2107, %v2103
        %v2527 = vpack.c.bf16 %v2148, %v2144
        %v2528 = vpack.c.bf16 %v2158, %v2154
        %v2529 = vpack.c.bf16 %v2168, %v2164
        %v2530 = vpack.c.bf16 %v2178, %v2174
        %v2531 = vpack.c.bf16 %v2188, %v2184
        %v2532 = vpack.c.bf16 %v2198, %v2194
        %v2533 = vpack.c.bf16 %v2208, %v2204
        %v2534 = vpack.c.bf16 %v2218, %v2214
        %v2535 = vpack.c.bf16 %v2228, %v2224
        %v2536 = vpack.c.bf16 %v2238, %v2234
        %v2537 = vpack.c.bf16 %v2248, %v2244
        %v2538 = vpack.c.bf16 %v2258, %v2254
        %v2539 = vpack.c.bf16 %v2268, %v2264
        %v2540 = vpack.c.bf16 %v2278, %v2274
        %v2541 = vpack.c.bf16 %v2288, %v2284
        %v2542 = vpack.c.bf16 %v2298, %v2294
        %v2543 = vpack.c.bf16 %v2150, %v2146
        %v2544 = vpack.c.bf16 %v2160, %v2156
        %v2545 = vpack.c.bf16 %v2170, %v2166
        %v2546 = vpack.c.bf16 %v2180, %v2176
        %v2547 = vpack.c.bf16 %v2190, %v2186
        %v2548 = vpack.c.bf16 %v2200, %v2196
        %v2549 = vpack.c.bf16 %v2210, %v2206
        %v2550 = vpack.c.bf16 %v2220, %v2216
        %v2551 = vpack.c.bf16 %v2230, %v2226
        %v2552 = vpack.c.bf16 %v2240, %v2236
        %v2553 = vpack.c.bf16 %v2250, %v2246
        %v2554 = vpack.c.bf16 %v2260, %v2256
        %v2555 = vpack.c.bf16 %v2270, %v2266
        %v2556 = vpack.c.bf16 %v2280, %v2276
        %v2557 = vpack.c.bf16 %v2290, %v2286
        %v2558 = vpack.c.bf16 %v2300, %v2296
        %v2559 = vpack.c.bf16 %v2341, %v2337
        %v2560 = vpack.c.bf16 %v2351, %v2347
        %v2561 = vpack.c.bf16 %v2361, %v2357
        %v2562 = vpack.c.bf16 %v2371, %v2367
        %v2563 = vpack.c.bf16 %v2381, %v2377
        %v2564 = vpack.c.bf16 %v2391, %v2387
        %v2565 = vpack.c.bf16 %v2401, %v2397
        %v2566 = vpack.c.bf16 %v2411, %v2407
        %v2567 = vpack.c.bf16 %v2421, %v2417
        %v2568 = vpack.c.bf16 %v2431, %v2427
        %v2569 = vpack.c.bf16 %v2441, %v2437
        %v2570 = vpack.c.bf16 %v2451, %v2447
        %v2571 = vpack.c.bf16 %v2461, %v2457
        %v2572 = vpack.c.bf16 %v2471, %v2467
        %v2573 = vpack.c.bf16 %v2481, %v2477
        %v2574 = vpack.c.bf16 %v2491, %v2487
        %v2575 = vpack.c.bf16 %v2343, %v2339
        %v2576 = vpack.c.bf16 %v2353, %v2349
        %v2577 = vpack.c.bf16 %v2363, %v2359
        %v2578 = vpack.c.bf16 %v2373, %v2369
        %v2579 = vpack.c.bf16 %v2383, %v2379
        %v2580 = vpack.c.bf16 %v2393, %v2389
        %v2581 = vpack.c.bf16 %v2403, %v2399
        %v2582 = vpack.c.bf16 %v2413, %v2409
        %v2583 = vpack.c.bf16 %v2423, %v2419
        %v2584 = vpack.c.bf16 %v2433, %v2429
        %v2585 = vpack.c.bf16 %v2443, %v2439
        %v2586 = vpack.c.bf16 %v2453, %v2449
        %v2587 = vpack.c.bf16 %v2463, %v2459
        %v2588 = vpack.c.bf16 %v2473, %v2469
        %v2589 = vpack.c.bf16 %v2483, %v2479
        %v2590 = vpack.c.bf16 %v2493, %v2489
        %2591 = vmatprep.subr.bf16.mxu0 0
        %2592 = vmatpush1.bf16.xpose.msra.mxu0 %v2534
        %2593 = vmatprep.subr.bf16.mxu0 0
        %2594 = vmatpush1.bf16.xpose.msra.mxu0 %v2533
        %2595 = vmatprep.subr.bf16.mxu0 0
        %2596 = vmatpush1.bf16.xpose.msra.mxu0 %v2532
        %2597 = vmatprep.subr.bf16.mxu0 0
        %2598 = vmatpush1.bf16.xpose.msra.mxu0 %v2531
        %2599 = vmatprep.subr.bf16.mxu0 0
        %2600 = vmatpush1.bf16.xpose.msra.mxu0 %v2530
        %2601 = vmatprep.subr.bf16.mxu0 0
        %2602 = vmatpush1.bf16.xpose.msra.mxu0 %v2529
        %2603 = vmatprep.subr.bf16.mxu0 0
        %2604 = vmatpush1.bf16.xpose.msra.mxu0 %v2528
        %2605 = vmatprep.subr.bf16.mxu0 0
        %2606 = vmatpush1.bf16.xpose.msra.mxu0 %v2527
        %2607 = vmatprep.subr.bf16.mxu0 0
        %2608 = vmatpush2.bf16.xpose.msra.mxu0 0
        %2609 = vmatprep.subr.bf16.mxu0 0
        %2610 = vmatpush2.bf16.xpose.msra.mxu0 0
        %2611 = vmatprep.subr.bf16.mxu0 0
        %2612 = vmatpush2.bf16.xpose.msra.mxu0 0
        %2613 = vmatprep.subr.bf16.mxu0 0
        %2614 = vmatpush2.bf16.xpose.msra.mxu0 0
        %2615 = vmatprep.subr.bf16.mxu0 0
        %2616 = vmatpush2.bf16.xpose.msra.mxu0 0
        %2617 = vmatprep.subr.bf16.mxu0 0
        %2618 = vmatpush2.bf16.xpose.msra.mxu0 0
        %2619 = vmatprep.subr.bf16.mxu0 0
        %2620 = vmatpush2.bf16.xpose.msra.mxu0 0
        %2621 = vmatprep.subr.bf16.mxu0 0
        %2622 = vmatpush2.bf16.xpose.msra.mxu0 0
        %2623 = vmatprep.mubr.bf16.mxu0 0
        %2624 = vmatmul.mubr.bf16.gmra.mxu0 %v2495
        %v2625 = vpop.f32.mrf.mxu0
        %v2626 = vadd.f32 0.0, %v2625
        %v2627 = vpop.f32.mrf.mxu0
        %v2628 = vpop.f32.mrf.mxu0
        %v2629 = vadd.f32 0.0, %v2628
        %v2630 = vpop.f32.mrf.mxu0
        %2631 = vmatprep.mubr.bf16.mxu0 0
        %2632 = vmatmul.mubr.bf16.gmra.mxu0 %v2496
        %v2633 = vpop.f32.mrf.mxu0
        %v2634 = vadd.f32 0.0, %v2633
        %v2635 = vpop.f32.mrf.mxu0
        %v2636 = vpop.f32.mrf.mxu0
        %v2637 = vadd.f32 0.0, %v2636
        %v2638 = vpop.f32.mrf.mxu0
        %2639 = vmatprep.mubr.bf16.mxu0 0
        %2640 = vmatmul.mubr.bf16.gmra.mxu0 %v2497
        %v2641 = vpop.f32.mrf.mxu0
        %v2642 = vadd.f32 0.0, %v2641
        %v2643 = vpop.f32.mrf.mxu0
        %v2644 = vpop.f32.mrf.mxu0
        %v2645 = vadd.f32 0.0, %v2644
        %v2646 = vpop.f32.mrf.mxu0
        %2647 = vmatprep.mubr.bf16.mxu0 0
        %2648 = vmatmul.mubr.bf16.gmra.mxu0 %v2498
        %v2649 = vpop.f32.mrf.mxu0
        %v2650 = vadd.f32 0.0, %v2649
        %v2651 = vpop.f32.mrf.mxu0
        %v2652 = vpop.f32.mrf.mxu0
        %v2653 = vadd.f32 0.0, %v2652
        %v2654 = vpop.f32.mrf.mxu0
        %2655 = vmatprep.mubr.bf16.mxu0 0
        %2656 = vmatmul.mubr.bf16.gmra.mxu0 %v2499
        %v2657 = vpop.f32.mrf.mxu0
        %v2658 = vadd.f32 0.0, %v2657
        %v2659 = vpop.f32.mrf.mxu0
        %v2660 = vpop.f32.mrf.mxu0
        %v2661 = vadd.f32 0.0, %v2660
        %v2662 = vpop.f32.mrf.mxu0
        %2663 = vmatprep.mubr.bf16.mxu0 0
        %2664 = vmatmul.mubr.bf16.gmra.mxu0 %v2500
        %v2665 = vpop.f32.mrf.mxu0
        %v2666 = vadd.f32 0.0, %v2665
        %v2667 = vpop.f32.mrf.mxu0
        %v2668 = vpop.f32.mrf.mxu0
        %v2669 = vadd.f32 0.0, %v2668
        %v2670 = vpop.f32.mrf.mxu0
        %2671 = vmatprep.mubr.bf16.mxu0 0
        %2672 = vmatmul.mubr.bf16.gmra.mxu0 %v2501
        %v2673 = vpop.f32.mrf.mxu0
        %v2674 = vadd.f32 0.0, %v2673
        %v2675 = vpop.f32.mrf.mxu0
        %v2676 = vpop.f32.mrf.mxu0
        %v2677 = vadd.f32 0.0, %v2676
        %v2678 = vpop.f32.mrf.mxu0
        %2679 = vmatprep.mubr.bf16.mxu0 0
        %2680 = vmatmul.mubr.bf16.gmra.mxu0 %v2502
        %v2681 = vpop.f32.mrf.mxu0
        %v2682 = vadd.f32 0.0, %v2681
        %v2683 = vpop.f32.mrf.mxu0
        %v2684 = vpop.f32.mrf.mxu0
        %v2685 = vadd.f32 0.0, %v2684
        %v2686 = vpop.f32.mrf.mxu0
        %2687 = vdwg.mxu0
        %2688 = vmatprep.subr.bf16.mxu0 0
        %2689 = vmatpush1.bf16.xpose.msra.mxu0 %v2542
        %2690 = vmatprep.subr.bf16.mxu0 0
        %2691 = vmatpush1.bf16.xpose.msra.mxu0 %v2541
        %2692 = vmatprep.subr.bf16.mxu0 0
        %2693 = vmatpush1.bf16.xpose.msra.mxu0 %v2540
        %2694 = vmatprep.subr.bf16.mxu0 0
        %2695 = vmatpush1.bf16.xpose.msra.mxu0 %v2539
        %2696 = vmatprep.subr.bf16.mxu0 0
        %2697 = vmatpush1.bf16.xpose.msra.mxu0 %v2538
        %2698 = vmatprep.subr.bf16.mxu0 0
        %2699 = vmatpush1.bf16.xpose.msra.mxu0 %v2537
        %2700 = vmatprep.subr.bf16.mxu0 0
        %2701 = vmatpush1.bf16.xpose.msra.mxu0 %v2536
        %2702 = vmatprep.subr.bf16.mxu0 0
        %2703 = vmatpush1.bf16.xpose.msra.mxu0 %v2535
        %2704 = vmatprep.subr.bf16.mxu0 0
        %2705 = vmatpush2.bf16.xpose.msra.mxu0 0
        %2706 = vmatprep.subr.bf16.mxu0 0
        %2707 = vmatpush2.bf16.xpose.msra.mxu0 0
        %2708 = vmatprep.subr.bf16.mxu0 0
        %2709 = vmatpush2.bf16.xpose.msra.mxu0 0
        %2710 = vmatprep.subr.bf16.mxu0 0
        %2711 = vmatpush2.bf16.xpose.msra.mxu0 0
        %2712 = vmatprep.subr.bf16.mxu0 0
        %2713 = vmatpush2.bf16.xpose.msra.mxu0 0
        %2714 = vmatprep.subr.bf16.mxu0 0
        %2715 = vmatpush2.bf16.xpose.msra.mxu0 0
        %2716 = vmatprep.subr.bf16.mxu0 0
        %2717 = vmatpush2.bf16.xpose.msra.mxu0 0
        %2718 = vmatprep.subr.bf16.mxu0 0
        %2719 = vmatpush2.bf16.xpose.msra.mxu0 0
        %2720 = vmatprep.mubr.bf16.mxu0 0
        %2721 = vmatmul.mubr.bf16.gmra.mxu0 %v2503
        %v2722 = vpop.f32.mrf.mxu0
        %v2723 = vadd.f32 0.0, %v2722
        %v2724 = vpop.f32.mrf.mxu0
        %v2725 = vpop.f32.mrf.mxu0
        %v2726 = vadd.f32 0.0, %v2725
        %v2727 = vpop.f32.mrf.mxu0
        %2728 = vmatprep.mubr.bf16.mxu0 0
        %2729 = vmatmul.mubr.bf16.gmra.mxu0 %v2504
        %v2730 = vpop.f32.mrf.mxu0
        %v2731 = vadd.f32 0.0, %v2730
        %v2732 = vpop.f32.mrf.mxu0
        %v2733 = vpop.f32.mrf.mxu0
        %v2734 = vadd.f32 0.0, %v2733
        %v2735 = vpop.f32.mrf.mxu0
        %2736 = vmatprep.mubr.bf16.mxu0 0
        %2737 = vmatmul.mubr.bf16.gmra.mxu0 %v2505
        %v2738 = vpop.f32.mrf.mxu0
        %v2739 = vadd.f32 0.0, %v2738
        %v2740 = vpop.f32.mrf.mxu0
        %v2741 = vpop.f32.mrf.mxu0
        %v2742 = vadd.f32 0.0, %v2741
        %v2743 = vpop.f32.mrf.mxu0
        %2744 = vmatprep.mubr.bf16.mxu0 0
        %2745 = vmatmul.mubr.bf16.gmra.mxu0 %v2506
        %v2746 = vpop.f32.mrf.mxu0
        %v2747 = vadd.f32 0.0, %v2746
        %v2748 = vpop.f32.mrf.mxu0
        %v2749 = vpop.f32.mrf.mxu0
        %v2750 = vadd.f32 0.0, %v2749
        %v2751 = vpop.f32.mrf.mxu0
        %2752 = vmatprep.mubr.bf16.mxu0 0
        %2753 = vmatmul.mubr.bf16.gmra.mxu0 %v2507
        %v2754 = vpop.f32.mrf.mxu0
        %v2755 = vadd.f32 0.0, %v2754
        %v2756 = vpop.f32.mrf.mxu0
        %v2757 = vpop.f32.mrf.mxu0
        %v2758 = vadd.f32 0.0, %v2757
        %v2759 = vpop.f32.mrf.mxu0
        %2760 = vmatprep.mubr.bf16.mxu0 0
        %2761 = vmatmul.mubr.bf16.gmra.mxu0 %v2508
        %v2762 = vpop.f32.mrf.mxu0
        %v2763 = vadd.f32 0.0, %v2762
        %v2764 = vpop.f32.mrf.mxu0
        %v2765 = vpop.f32.mrf.mxu0
        %v2766 = vadd.f32 0.0, %v2765
        %v2767 = vpop.f32.mrf.mxu0
        %2768 = vmatprep.mubr.bf16.mxu0 0
        %2769 = vmatmul.mubr.bf16.gmra.mxu0 %v2509
        %v2770 = vpop.f32.mrf.mxu0
        %v2771 = vadd.f32 0.0, %v2770
        %v2772 = vpop.f32.mrf.mxu0
        %v2773 = vpop.f32.mrf.mxu0
        %v2774 = vadd.f32 0.0, %v2773
        %v2775 = vpop.f32.mrf.mxu0
        %2776 = vmatprep.mubr.bf16.mxu0 0
        %2777 = vmatmul.mubr.bf16.gmra.mxu0 %v2510
        %v2778 = vpop.f32.mrf.mxu0
        %v2779 = vadd.f32 0.0, %v2778
        %v2780 = vpop.f32.mrf.mxu0
        %v2781 = vpop.f32.mrf.mxu0
        %v2782 = vadd.f32 0.0, %v2781
        %v2783 = vpop.f32.mrf.mxu0
        %2784 = vdwg.mxu0
        %2785 = vmatprep.subr.bf16.mxu0 0
        %2786 = vmatpush1.bf16.xpose.msra.mxu0 %v2550
        %2787 = vmatprep.subr.bf16.mxu0 0
        %2788 = vmatpush1.bf16.xpose.msra.mxu0 %v2549
        %2789 = vmatprep.subr.bf16.mxu0 0
        %2790 = vmatpush1.bf16.xpose.msra.mxu0 %v2548
        %2791 = vmatprep.subr.bf16.mxu0 0
        %2792 = vmatpush1.bf16.xpose.msra.mxu0 %v2547
        %2793 = vmatprep.subr.bf16.mxu0 0
        %2794 = vmatpush1.bf16.xpose.msra.mxu0 %v2546
        %2795 = vmatprep.subr.bf16.mxu0 0
        %2796 = vmatpush1.bf16.xpose.msra.mxu0 %v2545
        %2797 = vmatprep.subr.bf16.mxu0 0
        %2798 = vmatpush1.bf16.xpose.msra.mxu0 %v2544
        %2799 = vmatprep.subr.bf16.mxu0 0
        %2800 = vmatpush1.bf16.xpose.msra.mxu0 %v2543
        %2801 = vmatprep.subr.bf16.mxu0 0
        %2802 = vmatpush2.bf16.xpose.msra.mxu0 0
        %2803 = vmatprep.subr.bf16.mxu0 0
        %2804 = vmatpush2.bf16.xpose.msra.mxu0 0
        %2805 = vmatprep.subr.bf16.mxu0 0
        %2806 = vmatpush2.bf16.xpose.msra.mxu0 0
        %2807 = vmatprep.subr.bf16.mxu0 0
        %2808 = vmatpush2.bf16.xpose.msra.mxu0 0
        %2809 = vmatprep.subr.bf16.mxu0 0
        %2810 = vmatpush2.bf16.xpose.msra.mxu0 0
        %2811 = vmatprep.subr.bf16.mxu0 0
        %2812 = vmatpush2.bf16.xpose.msra.mxu0 0
        %2813 = vmatprep.subr.bf16.mxu0 0
        %2814 = vmatpush2.bf16.xpose.msra.mxu0 0
        %2815 = vmatprep.subr.bf16.mxu0 0
        %2816 = vmatpush2.bf16.xpose.msra.mxu0 0
        %2817 = vmatprep.mubr.bf16.mxu0 0
        %2818 = vmatmul.mubr.bf16.gmra.mxu0 %v2511
        %v2819 = vpop.f32.mrf.mxu0
        %v2820 = vadd.f32 0.0, %v2819
        %v2821 = vpop.f32.mrf.mxu0
        %v2822 = vpop.f32.mrf.mxu0
        %v2823 = vadd.f32 0.0, %v2822
        %v2824 = vpop.f32.mrf.mxu0
        %2825 = vmatprep.mubr.bf16.mxu0 0
        %2826 = vmatmul.mubr.bf16.gmra.mxu0 %v2512
        %v2827 = vpop.f32.mrf.mxu0
        %v2828 = vadd.f32 0.0, %v2827
        %v2829 = vpop.f32.mrf.mxu0
        %v2830 = vpop.f32.mrf.mxu0
        %v2831 = vadd.f32 0.0, %v2830
        %v2832 = vpop.f32.mrf.mxu0
        %2833 = vmatprep.mubr.bf16.mxu0 0
        %2834 = vmatmul.mubr.bf16.gmra.mxu0 %v2513
        %v2835 = vpop.f32.mrf.mxu0
        %v2836 = vadd.f32 0.0, %v2835
        %v2837 = vpop.f32.mrf.mxu0
        %v2838 = vpop.f32.mrf.mxu0
        %v2839 = vadd.f32 0.0, %v2838
        %v2840 = vpop.f32.mrf.mxu0
        %2841 = vmatprep.mubr.bf16.mxu0 0
        %2842 = vmatmul.mubr.bf16.gmra.mxu0 %v2514
        %v2843 = vpop.f32.mrf.mxu0
        %v2844 = vadd.f32 0.0, %v2843
        %v2845 = vpop.f32.mrf.mxu0
        %v2846 = vpop.f32.mrf.mxu0
        %v2847 = vadd.f32 0.0, %v2846
        %v2848 = vpop.f32.mrf.mxu0
        %2849 = vmatprep.mubr.bf16.mxu0 0
        %2850 = vmatmul.mubr.bf16.gmra.mxu0 %v2515
        %v2851 = vpop.f32.mrf.mxu0
        %v2852 = vadd.f32 0.0, %v2851
        %v2853 = vpop.f32.mrf.mxu0
        %v2854 = vpop.f32.mrf.mxu0
        %v2855 = vadd.f32 0.0, %v2854
        %v2856 = vpop.f32.mrf.mxu0
        %2857 = vmatprep.mubr.bf16.mxu0 0
        %2858 = vmatmul.mubr.bf16.gmra.mxu0 %v2516
        %v2859 = vpop.f32.mrf.mxu0
        %v2860 = vadd.f32 0.0, %v2859
        %v2861 = vpop.f32.mrf.mxu0
        %v2862 = vpop.f32.mrf.mxu0
        %v2863 = vadd.f32 0.0, %v2862
        %v2864 = vpop.f32.mrf.mxu0
        %2865 = vmatprep.mubr.bf16.mxu0 0
        %2866 = vmatmul.mubr.bf16.gmra.mxu0 %v2517
        %v2867 = vpop.f32.mrf.mxu0
        %v2868 = vadd.f32 0.0, %v2867
        %v2869 = vpop.f32.mrf.mxu0
        %v2870 = vpop.f32.mrf.mxu0
        %v2871 = vadd.f32 0.0, %v2870
        %v2872 = vpop.f32.mrf.mxu0
        %2873 = vmatprep.mubr.bf16.mxu0 0
        %2874 = vmatmul.mubr.bf16.gmra.mxu0 %v2518
        %v2875 = vpop.f32.mrf.mxu0
        %v2876 = vadd.f32 0.0, %v2875
        %v2877 = vpop.f32.mrf.mxu0
        %v2878 = vpop.f32.mrf.mxu0
        %v2879 = vadd.f32 0.0, %v2878
        %v2880 = vpop.f32.mrf.mxu0
        %2881 = vdwg.mxu0
        %2882 = vmatprep.subr.bf16.mxu0 0
        %2883 = vmatpush1.bf16.xpose.msra.mxu0 %v2558
        %2884 = vmatprep.subr.bf16.mxu0 0
        %2885 = vmatpush1.bf16.xpose.msra.mxu0 %v2557
        %2886 = vmatprep.subr.bf16.mxu0 0
        %2887 = vmatpush1.bf16.xpose.msra.mxu0 %v2556
        %2888 = vmatprep.subr.bf16.mxu0 0
        %2889 = vmatpush1.bf16.xpose.msra.mxu0 %v2555
        %2890 = vmatprep.subr.bf16.mxu0 0
        %2891 = vmatpush1.bf16.xpose.msra.mxu0 %v2554
        %2892 = vmatprep.subr.bf16.mxu0 0
        %2893 = vmatpush1.bf16.xpose.msra.mxu0 %v2553
        %2894 = vmatprep.subr.bf16.mxu0 0
        %2895 = vmatpush1.bf16.xpose.msra.mxu0 %v2552
        %2896 = vmatprep.subr.bf16.mxu0 0
        %2897 = vmatpush1.bf16.xpose.msra.mxu0 %v2551
        %2898 = vmatprep.subr.bf16.mxu0 0
        %2899 = vmatpush2.bf16.xpose.msra.mxu0 0
        %2900 = vmatprep.subr.bf16.mxu0 0
        %2901 = vmatpush2.bf16.xpose.msra.mxu0 0
        %2902 = vmatprep.subr.bf16.mxu0 0
        %2903 = vmatpush2.bf16.xpose.msra.mxu0 0
        %2904 = vmatprep.subr.bf16.mxu0 0
        %2905 = vmatpush2.bf16.xpose.msra.mxu0 0
        %2906 = vmatprep.subr.bf16.mxu0 0
        %2907 = vmatpush2.bf16.xpose.msra.mxu0 0
        %2908 = vmatprep.subr.bf16.mxu0 0
        %2909 = vmatpush2.bf16.xpose.msra.mxu0 0
        %2910 = vmatprep.subr.bf16.mxu0 0
        %2911 = vmatpush2.bf16.xpose.msra.mxu0 0
        %2912 = vmatprep.subr.bf16.mxu0 0
        %2913 = vmatpush2.bf16.xpose.msra.mxu0 0
        %2914 = vmatprep.mubr.bf16.mxu0 0
        %2915 = vmatmul.mubr.bf16.gmra.mxu0 %v2519
        %v2916 = vpop.f32.mrf.mxu0
        %v2917 = vadd.f32 0.0, %v2916
        %v2918 = vpop.f32.mrf.mxu0
        %v2919 = vpop.f32.mrf.mxu0
        %v2920 = vadd.f32 0.0, %v2919
        %v2921 = vpop.f32.mrf.mxu0
        %2922 = vmatprep.mubr.bf16.mxu0 0
        %2923 = vmatmul.mubr.bf16.gmra.mxu0 %v2520
        %v2924 = vpop.f32.mrf.mxu0
        %v2925 = vadd.f32 0.0, %v2924
        %v2926 = vpop.f32.mrf.mxu0
        %v2927 = vpop.f32.mrf.mxu0
        %v2928 = vadd.f32 0.0, %v2927
        %v2929 = vpop.f32.mrf.mxu0
        %2930 = vmatprep.mubr.bf16.mxu0 0
        %2931 = vmatmul.mubr.bf16.gmra.mxu0 %v2521
        %v2932 = vpop.f32.mrf.mxu0
        %v2933 = vadd.f32 0.0, %v2932
        %v2934 = vpop.f32.mrf.mxu0
        %v2935 = vpop.f32.mrf.mxu0
        %v2936 = vadd.f32 0.0, %v2935
        %v2937 = vpop.f32.mrf.mxu0
        %2938 = vmatprep.mubr.bf16.mxu0 0
        %2939 = vmatmul.mubr.bf16.gmra.mxu0 %v2522
        %v2940 = vpop.f32.mrf.mxu0
        %v2941 = vadd.f32 0.0, %v2940
        %v2942 = vpop.f32.mrf.mxu0
        %v2943 = vpop.f32.mrf.mxu0
        %v2944 = vadd.f32 0.0, %v2943
        %v2945 = vpop.f32.mrf.mxu0
        %2946 = vmatprep.mubr.bf16.mxu0 0
        %2947 = vmatmul.mubr.bf16.gmra.mxu0 %v2523
        %v2948 = vpop.f32.mrf.mxu0
        %v2949 = vadd.f32 0.0, %v2948
        %v2950 = vpop.f32.mrf.mxu0
        %v2951 = vpop.f32.mrf.mxu0
        %v2952 = vadd.f32 0.0, %v2951
        %v2953 = vpop.f32.mrf.mxu0
        %2954 = vmatprep.mubr.bf16.mxu0 0
        %2955 = vmatmul.mubr.bf16.gmra.mxu0 %v2524
        %v2956 = vpop.f32.mrf.mxu0
        %v2957 = vadd.f32 0.0, %v2956
        %v2958 = vpop.f32.mrf.mxu0
        %v2959 = vpop.f32.mrf.mxu0
        %v2960 = vadd.f32 0.0, %v2959
        %v2961 = vpop.f32.mrf.mxu0
        %2962 = vmatprep.mubr.bf16.mxu0 0
        %2963 = vmatmul.mubr.bf16.gmra.mxu0 %v2525
        %v2964 = vpop.f32.mrf.mxu0
        %v2965 = vadd.f32 0.0, %v2964
        %v2966 = vpop.f32.mrf.mxu0
        %v2967 = vpop.f32.mrf.mxu0
        %v2968 = vadd.f32 0.0, %v2967
        %v2969 = vpop.f32.mrf.mxu0
        %2970 = vmatprep.mubr.bf16.mxu0 0
        %2971 = vmatmul.mubr.bf16.gmra.mxu0 %v2526
        %v2972 = vpop.f32.mrf.mxu0
        %v2973 = vadd.f32 0.0, %v2972
        %v2974 = vpop.f32.mrf.mxu0
        %v2975 = vpop.f32.mrf.mxu0
        %v2976 = vadd.f32 0.0, %v2975
        %v2977 = vpop.f32.mrf.mxu0
        %2978 = vdwg.mxu0
        %v2979 = vmul.f32 %v2626, 0.088388346
        %v2980 = vmul.f32 %v2629, 0.088388346
        %v2981 = vmul.f32 %v2634, 0.088388346
        %v2982 = vmul.f32 %v2637, 0.088388346
        %v2983 = vmul.f32 %v2642, 0.088388346
        %v2984 = vmul.f32 %v2645, 0.088388346
        %v2985 = vmul.f32 %v2650, 0.088388346
        %v2986 = vmul.f32 %v2653, 0.088388346
        %v2987 = vmul.f32 %v2658, 0.088388346
        %v2988 = vmul.f32 %v2661, 0.088388346
        %v2989 = vmul.f32 %v2666, 0.088388346
        %v2990 = vmul.f32 %v2669, 0.088388346
        %v2991 = vmul.f32 %v2674, 0.088388346
        %v2992 = vmul.f32 %v2677, 0.088388346
        %v2993 = vmul.f32 %v2682, 0.088388346
        %v2994 = vmul.f32 %v2685, 0.088388346
        %v2995 = vmul.f32 %v2723, 0.088388346
        %v2996 = vmul.f32 %v2726, 0.088388346
        %v2997 = vmul.f32 %v2731, 0.088388346
        %v2998 = vmul.f32 %v2734, 0.088388346
        %v2999 = vmul.f32 %v2739, 0.088388346
        %v3000 = vmul.f32 %v2742, 0.088388346
        %v3001 = vmul.f32 %v2747, 0.088388346
        %v3002 = vmul.f32 %v2750, 0.088388346
        %v3003 = vmul.f32 %v2755, 0.088388346
        %v3004 = vmul.f32 %v2758, 0.088388346
        %v3005 = vmul.f32 %v2763, 0.088388346
        %v3006 = vmul.f32 %v2766, 0.088388346
        %v3007 = vmul.f32 %v2771, 0.088388346
        %v3008 = vmul.f32 %v2774, 0.088388346
        %v3009 = vmul.f32 %v2779, 0.088388346
        %v3010 = vmul.f32 %v2782, 0.088388346
        %v3011 = vmul.f32 %v2820, 0.088388346
        %v3012 = vmul.f32 %v2823, 0.088388346
        %v3013 = vmul.f32 %v2828, 0.088388346
        %v3014 = vmul.f32 %v2831, 0.088388346
        %v3015 = vmul.f32 %v2836, 0.088388346
        %v3016 = vmul.f32 %v2839, 0.088388346
        %v3017 = vmul.f32 %v2844, 0.088388346
        %v3018 = vmul.f32 %v2847, 0.088388346
        %v3019 = vmul.f32 %v2852, 0.088388346
        %v3020 = vmul.f32 %v2855, 0.088388346
        %v3021 = vmul.f32 %v2860, 0.088388346
        %v3022 = vmul.f32 %v2863, 0.088388346
        %v3023 = vmul.f32 %v2868, 0.088388346
        %v3024 = vmul.f32 %v2871, 0.088388346
        %v3025 = vmul.f32 %v2876, 0.088388346
        %v3026 = vmul.f32 %v2879, 0.088388346
        %v3027 = vmul.f32 %v2917, 0.088388346
        %v3028 = vmul.f32 %v2920, 0.088388346
        %v3029 = vmul.f32 %v2925, 0.088388346
        %v3030 = vmul.f32 %v2928, 0.088388346
        %v3031 = vmul.f32 %v2933, 0.088388346
        %v3032 = vmul.f32 %v2936, 0.088388346
        %v3033 = vmul.f32 %v2941, 0.088388346
        %v3034 = vmul.f32 %v2944, 0.088388346
        %v3035 = vmul.f32 %v2949, 0.088388346
        %v3036 = vmul.f32 %v2952, 0.088388346
        %v3037 = vmul.f32 %v2957, 0.088388346
        %v3038 = vmul.f32 %v2960, 0.088388346
        %v3039 = vmul.f32 %v2965, 0.088388346
        %v3040 = vmul.f32 %v2968, 0.088388346
        %v3041 = vmul.f32 %v2973, 0.088388346
        %v3042 = vmul.f32 %v2976, 0.088388346
        %v3045 = vlaneseq
        %v3046 = vshrl.u32 %v3045, 7
        %v3047 = vsub.s32 0, %v3046
        %v3048 = vrot.slane %v1107, %v3047
        %v3049 = vlaneseq
        %v3050 = vshrl.u32 %v3049, 7
        %v3051 = vsub.s32 0, %v3050
        %v3052 = vrot.slane %v1108, %v3051
        %v3055 = vadd.f32 %v2979, %v3048
        %v3056 = vadd.f32 %v2980, %v3048
        %v3057 = vadd.f32 %v2981, %v3048
        %v3058 = vadd.f32 %v2982, %v3048
        %v3059 = vadd.f32 %v2983, %v3048
        %v3060 = vadd.f32 %v2984, %v3048
        %v3061 = vadd.f32 %v2985, %v3048
        %v3062 = vadd.f32 %v2986, %v3048
        %v3063 = vadd.f32 %v2987, %v3048
        %v3064 = vadd.f32 %v2988, %v3048
        %v3065 = vadd.f32 %v2989, %v3048
        %v3066 = vadd.f32 %v2990, %v3048
        %v3067 = vadd.f32 %v2991, %v3048
        %v3068 = vadd.f32 %v2992, %v3048
        %v3069 = vadd.f32 %v2993, %v3048
        %v3070 = vadd.f32 %v2994, %v3048
        %v3071 = vadd.f32 %v2995, %v3052
        %v3072 = vadd.f32 %v2996, %v3052
        %v3073 = vadd.f32 %v2997, %v3052
        %v3074 = vadd.f32 %v2998, %v3052
        %v3075 = vadd.f32 %v2999, %v3052
        %v3076 = vadd.f32 %v3000, %v3052
        %v3077 = vadd.f32 %v3001, %v3052
        %v3078 = vadd.f32 %v3002, %v3052
        %v3079 = vadd.f32 %v3003, %v3052
        %v3080 = vadd.f32 %v3004, %v3052
        %v3081 = vadd.f32 %v3005, %v3052
        %v3082 = vadd.f32 %v3006, %v3052
        %v3083 = vadd.f32 %v3007, %v3052
        %v3084 = vadd.f32 %v3008, %v3052
        %v3085 = vadd.f32 %v3009, %v3052
        %v3086 = vadd.f32 %v3010, %v3052
        %v3087 = vadd.f32 %v3011, %v3048
        %v3088 = vadd.f32 %v3012, %v3048
        %v3089 = vadd.f32 %v3013, %v3048
        %v3090 = vadd.f32 %v3014, %v3048
        %v3091 = vadd.f32 %v3015, %v3048
        %v3092 = vadd.f32 %v3016, %v3048
        %v3093 = vadd.f32 %v3017, %v3048
        %v3094 = vadd.f32 %v3018, %v3048
        %v3095 = vadd.f32 %v3019, %v3048
        %v3096 = vadd.f32 %v3020, %v3048
        %v3097 = vadd.f32 %v3021, %v3048
        %v3098 = vadd.f32 %v3022, %v3048
        %v3099 = vadd.f32 %v3023, %v3048
        %v3100 = vadd.f32 %v3024, %v3048
        %v3101 = vadd.f32 %v3025, %v3048
        %v3102 = vadd.f32 %v3026, %v3048
        %v3103 = vadd.f32 %v3027, %v3052
        %v3104 = vadd.f32 %v3028, %v3052
        %v3105 = vadd.f32 %v3029, %v3052
        %v3106 = vadd.f32 %v3030, %v3052
        %v3107 = vadd.f32 %v3031, %v3052
        %v3108 = vadd.f32 %v3032, %v3052
        %v3109 = vadd.f32 %v3033, %v3052
        %v3110 = vadd.f32 %v3034, %v3052
        %v3111 = vadd.f32 %v3035, %v3052
        %v3112 = vadd.f32 %v3036, %v3052
        %v3113 = vadd.f32 %v3037, %v3052
        %v3114 = vadd.f32 %v3038, %v3052
        %v3115 = vadd.f32 %v3039, %v3052
        %v3116 = vadd.f32 %v3040, %v3052
        %v3117 = vadd.f32 %v3041, %v3052
        %v3118 = vadd.f32 %v3042, %v3052
        %3119 = vmax.xlane.f32.xlu0 %v3055
        %v3120 = vpop.xlane.xlu0 %3119
        %3121 = vmax.xlane.f32.xlu0 %v3056
        %v3122 = vpop.xlane.xlu0 %3121
        %3123 = vmax.xlane.f32.xlu0 %v3057
        %v3124 = vpop.xlane.xlu0 %3123
        %3125 = vmax.xlane.f32.xlu0 %v3058
        %v3126 = vpop.xlane.xlu0 %3125
        %3127 = vmax.xlane.f32.xlu0 %v3059
        %v3128 = vpop.xlane.xlu0 %3127
        %3129 = vmax.xlane.f32.xlu0 %v3060
        %v3130 = vpop.xlane.xlu0 %3129
        %3131 = vmax.xlane.f32.xlu0 %v3061
        %v3132 = vpop.xlane.xlu0 %3131
        %3133 = vmax.xlane.f32.xlu0 %v3062
        %v3134 = vpop.xlane.xlu0 %3133
        %3135 = vmax.xlane.f32.xlu0 %v3063
        %v3136 = vpop.xlane.xlu0 %3135
        %3137 = vmax.xlane.f32.xlu0 %v3064
        %v3138 = vpop.xlane.xlu0 %3137
        %3139 = vmax.xlane.f32.xlu0 %v3065
        %v3140 = vpop.xlane.xlu0 %3139
        %3141 = vmax.xlane.f32.xlu0 %v3066
        %v3142 = vpop.xlane.xlu0 %3141
        %3143 = vmax.xlane.f32.xlu0 %v3067
        %v3144 = vpop.xlane.xlu0 %3143
        %3145 = vmax.xlane.f32.xlu0 %v3068
        %v3146 = vpop.xlane.xlu0 %3145
        %3147 = vmax.xlane.f32.xlu0 %v3069
        %v3148 = vpop.xlane.xlu0 %3147
        %3149 = vmax.xlane.f32.xlu0 %v3070
        %v3150 = vpop.xlane.xlu0 %3149
        %3151 = vmax.xlane.f32.xlu0 %v3071
        %v3152 = vpop.xlane.xlu0 %3151
        %3153 = vmax.xlane.f32.xlu0 %v3072
        %v3154 = vpop.xlane.xlu0 %3153
        %3155 = vmax.xlane.f32.xlu0 %v3073
        %v3156 = vpop.xlane.xlu0 %3155
        %3157 = vmax.xlane.f32.xlu0 %v3074
        %v3158 = vpop.xlane.xlu0 %3157
        %3159 = vmax.xlane.f32.xlu0 %v3075
        %v3160 = vpop.xlane.xlu0 %3159
        %3161 = vmax.xlane.f32.xlu0 %v3076
        %v3162 = vpop.xlane.xlu0 %3161
        %3163 = vmax.xlane.f32.xlu0 %v3077
        %v3164 = vpop.xlane.xlu0 %3163
        %3165 = vmax.xlane.f32.xlu0 %v3078
        %v3166 = vpop.xlane.xlu0 %3165
        %3167 = vmax.xlane.f32.xlu0 %v3079
        %v3168 = vpop.xlane.xlu0 %3167
        %3169 = vmax.xlane.f32.xlu0 %v3080
        %v3170 = vpop.xlane.xlu0 %3169
        %3171 = vmax.xlane.f32.xlu0 %v3081
        %v3172 = vpop.xlane.xlu0 %3171
        %3173 = vmax.xlane.f32.xlu0 %v3082
        %v3174 = vpop.xlane.xlu0 %3173
        %3175 = vmax.xlane.f32.xlu0 %v3083
        %v3176 = vpop.xlane.xlu0 %3175
        %3177 = vmax.xlane.f32.xlu0 %v3084
        %v3178 = vpop.xlane.xlu0 %3177
        %3179 = vmax.xlane.f32.xlu0 %v3085
        %v3180 = vpop.xlane.xlu0 %3179
        %3181 = vmax.xlane.f32.xlu0 %v3086
        %v3182 = vpop.xlane.xlu0 %3181
        %3183 = vmax.xlane.f32.xlu0 %v3087
        %v3184 = vpop.xlane.xlu0 %3183
        %3185 = vmax.xlane.f32.xlu0 %v3088
        %v3186 = vpop.xlane.xlu0 %3185
        %3187 = vmax.xlane.f32.xlu0 %v3089
        %v3188 = vpop.xlane.xlu0 %3187
        %3189 = vmax.xlane.f32.xlu0 %v3090
        %v3190 = vpop.xlane.xlu0 %3189
        %3191 = vmax.xlane.f32.xlu0 %v3091
        %v3192 = vpop.xlane.xlu0 %3191
        %3193 = vmax.xlane.f32.xlu0 %v3092
        %v3194 = vpop.xlane.xlu0 %3193
        %3195 = vmax.xlane.f32.xlu0 %v3093
        %v3196 = vpop.xlane.xlu0 %3195
        %3197 = vmax.xlane.f32.xlu0 %v3094
        %v3198 = vpop.xlane.xlu0 %3197
        %3199 = vmax.xlane.f32.xlu0 %v3095
        %v3200 = vpop.xlane.xlu0 %3199
        %3201 = vmax.xlane.f32.xlu0 %v3096
        %v3202 = vpop.xlane.xlu0 %3201
        %3203 = vmax.xlane.f32.xlu0 %v3097
        %v3204 = vpop.xlane.xlu0 %3203
        %3205 = vmax.xlane.f32.xlu0 %v3098
        %v3206 = vpop.xlane.xlu0 %3205
        %3207 = vmax.xlane.f32.xlu0 %v3099
        %v3208 = vpop.xlane.xlu0 %3207
        %3209 = vmax.xlane.f32.xlu0 %v3100
        %v3210 = vpop.xlane.xlu0 %3209
        %3211 = vmax.xlane.f32.xlu0 %v3101
        %v3212 = vpop.xlane.xlu0 %3211
        %3213 = vmax.xlane.f32.xlu0 %v3102
        %v3214 = vpop.xlane.xlu0 %3213
        %3215 = vmax.xlane.f32.xlu0 %v3103
        %v3216 = vpop.xlane.xlu0 %3215
        %3217 = vmax.xlane.f32.xlu0 %v3104
        %v3218 = vpop.xlane.xlu0 %3217
        %3219 = vmax.xlane.f32.xlu0 %v3105
        %v3220 = vpop.xlane.xlu0 %3219
        %3221 = vmax.xlane.f32.xlu0 %v3106
        %v3222 = vpop.xlane.xlu0 %3221
        %3223 = vmax.xlane.f32.xlu0 %v3107
        %v3224 = vpop.xlane.xlu0 %3223
        %3225 = vmax.xlane.f32.xlu0 %v3108
        %v3226 = vpop.xlane.xlu0 %3225
        %3227 = vmax.xlane.f32.xlu0 %v3109
        %v3228 = vpop.xlane.xlu0 %3227
        %3229 = vmax.xlane.f32.xlu0 %v3110
        %v3230 = vpop.xlane.xlu0 %3229
        %3231 = vmax.xlane.f32.xlu0 %v3111
        %v3232 = vpop.xlane.xlu0 %3231
        %3233 = vmax.xlane.f32.xlu0 %v3112
        %v3234 = vpop.xlane.xlu0 %3233
        %3235 = vmax.xlane.f32.xlu0 %v3113
        %v3236 = vpop.xlane.xlu0 %3235
        %3237 = vmax.xlane.f32.xlu0 %v3114
        %v3238 = vpop.xlane.xlu0 %3237
        %3239 = vmax.xlane.f32.xlu0 %v3115
        %v3240 = vpop.xlane.xlu0 %3239
        %3241 = vmax.xlane.f32.xlu0 %v3116
        %v3242 = vpop.xlane.xlu0 %3241
        %3243 = vmax.xlane.f32.xlu0 %v3117
        %v3244 = vpop.xlane.xlu0 %3243
        %3245 = vmax.xlane.f32.xlu0 %v3118
        %v3246 = vpop.xlane.xlu0 %3245
        %v3247 = vsub.f32 %v3055, %v3120
        %v3248 = vsub.f32 %v3056, %v3122
        %v3249 = vsub.f32 %v3057, %v3124
        %v3250 = vsub.f32 %v3058, %v3126
        %v3251 = vsub.f32 %v3059, %v3128
        %v3252 = vsub.f32 %v3060, %v3130
        %v3253 = vsub.f32 %v3061, %v3132
        %v3254 = vsub.f32 %v3062, %v3134
        %v3255 = vsub.f32 %v3063, %v3136
        %v3256 = vsub.f32 %v3064, %v3138
        %v3257 = vsub.f32 %v3065, %v3140
        %v3258 = vsub.f32 %v3066, %v3142
        %v3259 = vsub.f32 %v3067, %v3144
        %v3260 = vsub.f32 %v3068, %v3146
        %v3261 = vsub.f32 %v3069, %v3148
        %v3262 = vsub.f32 %v3070, %v3150
        %v3263 = vsub.f32 %v3071, %v3152
        %v3264 = vsub.f32 %v3072, %v3154
        %v3265 = vsub.f32 %v3073, %v3156
        %v3266 = vsub.f32 %v3074, %v3158
        %v3267 = vsub.f32 %v3075, %v3160
        %v3268 = vsub.f32 %v3076, %v3162
        %v3269 = vsub.f32 %v3077, %v3164
        %v3270 = vsub.f32 %v3078, %v3166
        %v3271 = vsub.f32 %v3079, %v3168
        %v3272 = vsub.f32 %v3080, %v3170
        %v3273 = vsub.f32 %v3081, %v3172
        %v3274 = vsub.f32 %v3082, %v3174
        %v3275 = vsub.f32 %v3083, %v3176
        %v3276 = vsub.f32 %v3084, %v3178
        %v3277 = vsub.f32 %v3085, %v3180
        %v3278 = vsub.f32 %v3086, %v3182
        %v3279 = vsub.f32 %v3087, %v3184
        %v3280 = vsub.f32 %v3088, %v3186
        %v3281 = vsub.f32 %v3089, %v3188
        %v3282 = vsub.f32 %v3090, %v3190
        %v3283 = vsub.f32 %v3091, %v3192
        %v3284 = vsub.f32 %v3092, %v3194
        %v3285 = vsub.f32 %v3093, %v3196
        %v3286 = vsub.f32 %v3094, %v3198
        %v3287 = vsub.f32 %v3095, %v3200
        %v3288 = vsub.f32 %v3096, %v3202
        %v3289 = vsub.f32 %v3097, %v3204
        %v3290 = vsub.f32 %v3098, %v3206
        %v3291 = vsub.f32 %v3099, %v3208
        %v3292 = vsub.f32 %v3100, %v3210
        %v3293 = vsub.f32 %v3101, %v3212
        %v3294 = vsub.f32 %v3102, %v3214
        %v3295 = vsub.f32 %v3103, %v3216
        %v3296 = vsub.f32 %v3104, %v3218
        %v3297 = vsub.f32 %v3105, %v3220
        %v3298 = vsub.f32 %v3106, %v3222
        %v3299 = vsub.f32 %v3107, %v3224
        %v3300 = vsub.f32 %v3108, %v3226
        %v3301 = vsub.f32 %v3109, %v3228
        %v3302 = vsub.f32 %v3110, %v3230
        %v3303 = vsub.f32 %v3111, %v3232
        %v3304 = vsub.f32 %v3112, %v3234
        %v3305 = vsub.f32 %v3113, %v3236
        %v3306 = vsub.f32 %v3114, %v3238
        %v3307 = vsub.f32 %v3115, %v3240
        %v3308 = vsub.f32 %v3116, %v3242
        %v3309 = vsub.f32 %v3117, %v3244
        %v3310 = vsub.f32 %v3118, %v3246
        %v3311 = vmul.f32 %v3247, 1.442695
        %v3312 = vpow.pop %v3311
        %v3313 = vmul.f32 %v3248, 1.442695
        %v3314 = vpow.pop %v3313
        %v3315 = vmul.f32 %v3249, 1.442695
        %v3316 = vpow.pop %v3315
        %v3317 = vmul.f32 %v3250, 1.442695
        %v3318 = vpow.pop %v3317
        %v3319 = vmul.f32 %v3251, 1.442695
        %v3320 = vpow.pop %v3319
        %v3321 = vmul.f32 %v3252, 1.442695
        %v3322 = vpow.pop %v3321
        %v3323 = vmul.f32 %v3253, 1.442695
        %v3324 = vpow.pop %v3323
        %v3325 = vmul.f32 %v3254, 1.442695
        %v3326 = vpow.pop %v3325
        %v3327 = vmul.f32 %v3255, 1.442695
        %v3328 = vpow.pop %v3327
        %v3329 = vmul.f32 %v3256, 1.442695
        %v3330 = vpow.pop %v3329
        %v3331 = vmul.f32 %v3257, 1.442695
        %v3332 = vpow.pop %v3331
        %v3333 = vmul.f32 %v3258, 1.442695
        %v3334 = vpow.pop %v3333
        %v3335 = vmul.f32 %v3259, 1.442695
        %v3336 = vpow.pop %v3335
        %v3337 = vmul.f32 %v3260, 1.442695
        %v3338 = vpow.pop %v3337
        %v3339 = vmul.f32 %v3261, 1.442695
        %v3340 = vpow.pop %v3339
        %v3341 = vmul.f32 %v3262, 1.442695
        %v3342 = vpow.pop %v3341
        %v3343 = vmul.f32 %v3263, 1.442695
        %v3344 = vpow.pop %v3343
        %v3345 = vmul.f32 %v3264, 1.442695
        %v3346 = vpow.pop %v3345
        %v3347 = vmul.f32 %v3265, 1.442695
        %v3348 = vpow.pop %v3347
        %v3349 = vmul.f32 %v3266, 1.442695
        %v3350 = vpow.pop %v3349
        %v3351 = vmul.f32 %v3267, 1.442695
        %v3352 = vpow.pop %v3351
        %v3353 = vmul.f32 %v3268, 1.442695
        %v3354 = vpow.pop %v3353
        %v3355 = vmul.f32 %v3269, 1.442695
        %v3356 = vpow.pop %v3355
        %v3357 = vmul.f32 %v3270, 1.442695
        %v3358 = vpow.pop %v3357
        %v3359 = vmul.f32 %v3271, 1.442695
        %v3360 = vpow.pop %v3359
        %v3361 = vmul.f32 %v3272, 1.442695
        %v3362 = vpow.pop %v3361
        %v3363 = vmul.f32 %v3273, 1.442695
        %v3364 = vpow.pop %v3363
        %v3365 = vmul.f32 %v3274, 1.442695
        %v3366 = vpow.pop %v3365
        %v3367 = vmul.f32 %v3275, 1.442695
        %v3368 = vpow.pop %v3367
        %v3369 = vmul.f32 %v3276, 1.442695
        %v3370 = vpow.pop %v3369
        %v3371 = vmul.f32 %v3277, 1.442695
        %v3372 = vpow.pop %v3371
        %v3373 = vmul.f32 %v3278, 1.442695
        %v3374 = vpow.pop %v3373
        %v3375 = vmul.f32 %v3279, 1.442695
        %v3376 = vpow.pop %v3375
        %v3377 = vmul.f32 %v3280, 1.442695
        %v3378 = vpow.pop %v3377
        %v3379 = vmul.f32 %v3281, 1.442695
        %v3380 = vpow.pop %v3379
        %v3381 = vmul.f32 %v3282, 1.442695
        %v3382 = vpow.pop %v3381
        %v3383 = vmul.f32 %v3283, 1.442695
        %v3384 = vpow.pop %v3383
        %v3385 = vmul.f32 %v3284, 1.442695
        %v3386 = vpow.pop %v3385
        %v3387 = vmul.f32 %v3285, 1.442695
        %v3388 = vpow.pop %v3387
        %v3389 = vmul.f32 %v3286, 1.442695
        %v3390 = vpow.pop %v3389
        %v3391 = vmul.f32 %v3287, 1.442695
        %v3392 = vpow.pop %v3391
        %v3393 = vmul.f32 %v3288, 1.442695
        %v3394 = vpow.pop %v3393
        %v3395 = vmul.f32 %v3289, 1.442695
        %v3396 = vpow.pop %v3395
        %v3397 = vmul.f32 %v3290, 1.442695
        %v3398 = vpow.pop %v3397
        %v3399 = vmul.f32 %v3291, 1.442695
        %v3400 = vpow.pop %v3399
        %v3401 = vmul.f32 %v3292, 1.442695
        %v3402 = vpow.pop %v3401
        %v3403 = vmul.f32 %v3293, 1.442695
        %v3404 = vpow.pop %v3403
        %v3405 = vmul.f32 %v3294, 1.442695
        %v3406 = vpow.pop %v3405
        %v3407 = vmul.f32 %v3295, 1.442695
        %v3408 = vpow.pop %v3407
        %v3409 = vmul.f32 %v3296, 1.442695
        %v3410 = vpow.pop %v3409
        %v3411 = vmul.f32 %v3297, 1.442695
        %v3412 = vpow.pop %v3411
        %v3413 = vmul.f32 %v3298, 1.442695
        %v3414 = vpow.pop %v3413
        %v3415 = vmul.f32 %v3299, 1.442695
        %v3416 = vpow.pop %v3415
        %v3417 = vmul.f32 %v3300, 1.442695
        %v3418 = vpow.pop %v3417
        %v3419 = vmul.f32 %v3301, 1.442695
        %v3420 = vpow.pop %v3419
        %v3421 = vmul.f32 %v3302, 1.442695
        %v3422 = vpow.pop %v3421
        %v3423 = vmul.f32 %v3303, 1.442695
        %v3424 = vpow.pop %v3423
        %v3425 = vmul.f32 %v3304, 1.442695
        %v3426 = vpow.pop %v3425
        %v3427 = vmul.f32 %v3305, 1.442695
        %v3428 = vpow.pop %v3427
        %v3429 = vmul.f32 %v3306, 1.442695
        %v3430 = vpow.pop %v3429
        %v3431 = vmul.f32 %v3307, 1.442695
        %v3432 = vpow.pop %v3431
        %v3433 = vmul.f32 %v3308, 1.442695
        %v3434 = vpow.pop %v3433
        %v3435 = vmul.f32 %v3309, 1.442695
        %v3436 = vpow.pop %v3435
        %v3437 = vmul.f32 %v3310, 1.442695
        %v3438 = vpow.pop %v3437
        %3439 = vadd.xlane.f32.xlu0 %v3312
        %v3440 = vpop.xlane.xlu0 %3439
        %3441 = vadd.xlane.f32.xlu0 %v3314
        %v3442 = vpop.xlane.xlu0 %3441
        %3443 = vadd.xlane.f32.xlu0 %v3316
        %v3444 = vpop.xlane.xlu0 %3443
        %3445 = vadd.xlane.f32.xlu0 %v3318
        %v3446 = vpop.xlane.xlu0 %3445
        %3447 = vadd.xlane.f32.xlu0 %v3320
        %v3448 = vpop.xlane.xlu0 %3447
        %3449 = vadd.xlane.f32.xlu0 %v3322
        %v3450 = vpop.xlane.xlu0 %3449
        %3451 = vadd.xlane.f32.xlu0 %v3324
        %v3452 = vpop.xlane.xlu0 %3451
        %3453 = vadd.xlane.f32.xlu0 %v3326
        %v3454 = vpop.xlane.xlu0 %3453
        %3455 = vadd.xlane.f32.xlu0 %v3328
        %v3456 = vpop.xlane.xlu0 %3455
        %3457 = vadd.xlane.f32.xlu0 %v3330
        %v3458 = vpop.xlane.xlu0 %3457
        %3459 = vadd.xlane.f32.xlu0 %v3332
        %v3460 = vpop.xlane.xlu0 %3459
        %3461 = vadd.xlane.f32.xlu0 %v3334
        %v3462 = vpop.xlane.xlu0 %3461
        %3463 = vadd.xlane.f32.xlu0 %v3336
        %v3464 = vpop.xlane.xlu0 %3463
        %3465 = vadd.xlane.f32.xlu0 %v3338
        %v3466 = vpop.xlane.xlu0 %3465
        %3467 = vadd.xlane.f32.xlu0 %v3340
        %v3468 = vpop.xlane.xlu0 %3467
        %3469 = vadd.xlane.f32.xlu0 %v3342
        %v3470 = vpop.xlane.xlu0 %3469
        %3471 = vadd.xlane.f32.xlu0 %v3344
        %v3472 = vpop.xlane.xlu0 %3471
        %3473 = vadd.xlane.f32.xlu0 %v3346
        %v3474 = vpop.xlane.xlu0 %3473
        %3475 = vadd.xlane.f32.xlu0 %v3348
        %v3476 = vpop.xlane.xlu0 %3475
        %3477 = vadd.xlane.f32.xlu0 %v3350
        %v3478 = vpop.xlane.xlu0 %3477
        %3479 = vadd.xlane.f32.xlu0 %v3352
        %v3480 = vpop.xlane.xlu0 %3479
        %3481 = vadd.xlane.f32.xlu0 %v3354
        %v3482 = vpop.xlane.xlu0 %3481
        %3483 = vadd.xlane.f32.xlu0 %v3356
        %v3484 = vpop.xlane.xlu0 %3483
        %3485 = vadd.xlane.f32.xlu0 %v3358
        %v3486 = vpop.xlane.xlu0 %3485
        %3487 = vadd.xlane.f32.xlu0 %v3360
        %v3488 = vpop.xlane.xlu0 %3487
        %3489 = vadd.xlane.f32.xlu0 %v3362
        %v3490 = vpop.xlane.xlu0 %3489
        %3491 = vadd.xlane.f32.xlu0 %v3364
        %v3492 = vpop.xlane.xlu0 %3491
        %3493 = vadd.xlane.f32.xlu0 %v3366
        %v3494 = vpop.xlane.xlu0 %3493
        %3495 = vadd.xlane.f32.xlu0 %v3368
        %v3496 = vpop.xlane.xlu0 %3495
        %3497 = vadd.xlane.f32.xlu0 %v3370
        %v3498 = vpop.xlane.xlu0 %3497
        %3499 = vadd.xlane.f32.xlu0 %v3372
        %v3500 = vpop.xlane.xlu0 %3499
        %3501 = vadd.xlane.f32.xlu0 %v3374
        %v3502 = vpop.xlane.xlu0 %3501
        %3503 = vadd.xlane.f32.xlu0 %v3376
        %v3504 = vpop.xlane.xlu0 %3503
        %3505 = vadd.xlane.f32.xlu0 %v3378
        %v3506 = vpop.xlane.xlu0 %3505
        %3507 = vadd.xlane.f32.xlu0 %v3380
        %v3508 = vpop.xlane.xlu0 %3507
        %3509 = vadd.xlane.f32.xlu0 %v3382
        %v3510 = vpop.xlane.xlu0 %3509
        %3511 = vadd.xlane.f32.xlu0 %v3384
        %v3512 = vpop.xlane.xlu0 %3511
        %3513 = vadd.xlane.f32.xlu0 %v3386
        %v3514 = vpop.xlane.xlu0 %3513
        %3515 = vadd.xlane.f32.xlu0 %v3388
        %v3516 = vpop.xlane.xlu0 %3515
        %3517 = vadd.xlane.f32.xlu0 %v3390
        %v3518 = vpop.xlane.xlu0 %3517
        %3519 = vadd.xlane.f32.xlu0 %v3392
        %v3520 = vpop.xlane.xlu0 %3519
        %3521 = vadd.xlane.f32.xlu0 %v3394
        %v3522 = vpop.xlane.xlu0 %3521
        %3523 = vadd.xlane.f32.xlu0 %v3396
        %v3524 = vpop.xlane.xlu0 %3523
        %3525 = vadd.xlane.f32.xlu0 %v3398
        %v3526 = vpop.xlane.xlu0 %3525
        %3527 = vadd.xlane.f32.xlu0 %v3400
        %v3528 = vpop.xlane.xlu0 %3527
        %3529 = vadd.xlane.f32.xlu0 %v3402
        %v3530 = vpop.xlane.xlu0 %3529
        %3531 = vadd.xlane.f32.xlu0 %v3404
        %v3532 = vpop.xlane.xlu0 %3531
        %3533 = vadd.xlane.f32.xlu0 %v3406
        %v3534 = vpop.xlane.xlu0 %3533
        %3535 = vadd.xlane.f32.xlu0 %v3408
        %v3536 = vpop.xlane.xlu0 %3535
        %3537 = vadd.xlane.f32.xlu0 %v3410
        %v3538 = vpop.xlane.xlu0 %3537
        %3539 = vadd.xlane.f32.xlu0 %v3412
        %v3540 = vpop.xlane.xlu0 %3539
        %3541 = vadd.xlane.f32.xlu0 %v3414
        %v3542 = vpop.xlane.xlu0 %3541
        %3543 = vadd.xlane.f32.xlu0 %v3416
        %v3544 = vpop.xlane.xlu0 %3543
        %3545 = vadd.xlane.f32.xlu0 %v3418
        %v3546 = vpop.xlane.xlu0 %3545
        %3547 = vadd.xlane.f32.xlu0 %v3420
        %v3548 = vpop.xlane.xlu0 %3547
        %3549 = vadd.xlane.f32.xlu0 %v3422
        %v3550 = vpop.xlane.xlu0 %3549
        %3551 = vadd.xlane.f32.xlu0 %v3424
        %v3552 = vpop.xlane.xlu0 %3551
        %3553 = vadd.xlane.f32.xlu0 %v3426
        %v3554 = vpop.xlane.xlu0 %3553
        %3555 = vadd.xlane.f32.xlu0 %v3428
        %v3556 = vpop.xlane.xlu0 %3555
        %3557 = vadd.xlane.f32.xlu0 %v3430
        %v3558 = vpop.xlane.xlu0 %3557
        %3559 = vadd.xlane.f32.xlu0 %v3432
        %v3560 = vpop.xlane.xlu0 %3559
        %3561 = vadd.xlane.f32.xlu0 %v3434
        %v3562 = vpop.xlane.xlu0 %3561
        %3563 = vadd.xlane.f32.xlu0 %v3436
        %v3564 = vpop.xlane.xlu0 %3563
        %3565 = vadd.xlane.f32.xlu0 %v3438
        %v3566 = vpop.xlane.xlu0 %3565
        %v3567 = vrcp.pop %v3440
        %v3568 = vrcp.pop %v3442
        %v3569 = vrcp.pop %v3444
        %v3570 = vrcp.pop %v3446
        %v3571 = vrcp.pop %v3448
        %v3572 = vrcp.pop %v3450
        %v3573 = vrcp.pop %v3452
        %v3574 = vrcp.pop %v3454
        %v3575 = vrcp.pop %v3456
        %v3576 = vrcp.pop %v3458
        %v3577 = vrcp.pop %v3460
        %v3578 = vrcp.pop %v3462
        %v3579 = vrcp.pop %v3464
        %v3580 = vrcp.pop %v3466
        %v3581 = vrcp.pop %v3468
        %v3582 = vrcp.pop %v3470
        %v3583 = vrcp.pop %v3472
        %v3584 = vrcp.pop %v3474
        %v3585 = vrcp.pop %v3476
        %v3586 = vrcp.pop %v3478
        %v3587 = vrcp.pop %v3480
        %v3588 = vrcp.pop %v3482
        %v3589 = vrcp.pop %v3484
        %v3590 = vrcp.pop %v3486
        %v3591 = vrcp.pop %v3488
        %v3592 = vrcp.pop %v3490
        %v3593 = vrcp.pop %v3492
        %v3594 = vrcp.pop %v3494
        %v3595 = vrcp.pop %v3496
        %v3596 = vrcp.pop %v3498
        %v3597 = vrcp.pop %v3500
        %v3598 = vrcp.pop %v3502
        %v3599 = vrcp.pop %v3504
        %v3600 = vrcp.pop %v3506
        %v3601 = vrcp.pop %v3508
        %v3602 = vrcp.pop %v3510
        %v3603 = vrcp.pop %v3512
        %v3604 = vrcp.pop %v3514
        %v3605 = vrcp.pop %v3516
        %v3606 = vrcp.pop %v3518
        %v3607 = vrcp.pop %v3520
        %v3608 = vrcp.pop %v3522
        %v3609 = vrcp.pop %v3524
        %v3610 = vrcp.pop %v3526
        %v3611 = vrcp.pop %v3528
        %v3612 = vrcp.pop %v3530
        %v3613 = vrcp.pop %v3532
        %v3614 = vrcp.pop %v3534
        %v3615 = vrcp.pop %v3536
        %v3616 = vrcp.pop %v3538
        %v3617 = vrcp.pop %v3540
        %v3618 = vrcp.pop %v3542
        %v3619 = vrcp.pop %v3544
        %v3620 = vrcp.pop %v3546
        %v3621 = vrcp.pop %v3548
        %v3622 = vrcp.pop %v3550
        %v3623 = vrcp.pop %v3552
        %v3624 = vrcp.pop %v3554
        %v3625 = vrcp.pop %v3556
        %v3626 = vrcp.pop %v3558
        %v3627 = vrcp.pop %v3560
        %v3628 = vrcp.pop %v3562
        %v3629 = vrcp.pop %v3564
        %v3630 = vrcp.pop %v3566
        %v3631 = vmul.f32 %v3312, %v3567
        %v3632 = vmul.f32 %v3314, %v3568
        %v3633 = vmul.f32 %v3316, %v3569
        %v3634 = vmul.f32 %v3318, %v3570
        %v3635 = vmul.f32 %v3320, %v3571
        %v3636 = vmul.f32 %v3322, %v3572
        %v3637 = vmul.f32 %v3324, %v3573
        %v3638 = vmul.f32 %v3326, %v3574
        %v3639 = vmul.f32 %v3328, %v3575
        %v3640 = vmul.f32 %v3330, %v3576
        %v3641 = vmul.f32 %v3332, %v3577
        %v3642 = vmul.f32 %v3334, %v3578
        %v3643 = vmul.f32 %v3336, %v3579
        %v3644 = vmul.f32 %v3338, %v3580
        %v3645 = vmul.f32 %v3340, %v3581
        %v3646 = vmul.f32 %v3342, %v3582
        %v3647 = vmul.f32 %v3344, %v3583
        %v3648 = vmul.f32 %v3346, %v3584
        %v3649 = vmul.f32 %v3348, %v3585
        %v3650 = vmul.f32 %v3350, %v3586
        %v3651 = vmul.f32 %v3352, %v3587
        %v3652 = vmul.f32 %v3354, %v3588
        %v3653 = vmul.f32 %v3356, %v3589
        %v3654 = vmul.f32 %v3358, %v3590
        %v3655 = vmul.f32 %v3360, %v3591
        %v3656 = vmul.f32 %v3362, %v3592
        %v3657 = vmul.f32 %v3364, %v3593
        %v3658 = vmul.f32 %v3366, %v3594
        %v3659 = vmul.f32 %v3368, %v3595
        %v3660 = vmul.f32 %v3370, %v3596
        %v3661 = vmul.f32 %v3372, %v3597
        %v3662 = vmul.f32 %v3374, %v3598
        %v3663 = vmul.f32 %v3376, %v3599
        %v3664 = vmul.f32 %v3378, %v3600
        %v3665 = vmul.f32 %v3380, %v3601
        %v3666 = vmul.f32 %v3382, %v3602
        %v3667 = vmul.f32 %v3384, %v3603
        %v3668 = vmul.f32 %v3386, %v3604
        %v3669 = vmul.f32 %v3388, %v3605
        %v3670 = vmul.f32 %v3390, %v3606
        %v3671 = vmul.f32 %v3392, %v3607
        %v3672 = vmul.f32 %v3394, %v3608
        %v3673 = vmul.f32 %v3396, %v3609
        %v3674 = vmul.f32 %v3398, %v3610
        %v3675 = vmul.f32 %v3400, %v3611
        %v3676 = vmul.f32 %v3402, %v3612
        %v3677 = vmul.f32 %v3404, %v3613
        %v3678 = vmul.f32 %v3406, %v3614
        %v3679 = vmul.f32 %v3408, %v3615
        %v3680 = vmul.f32 %v3410, %v3616
        %v3681 = vmul.f32 %v3412, %v3617
        %v3682 = vmul.f32 %v3414, %v3618
        %v3683 = vmul.f32 %v3416, %v3619
        %v3684 = vmul.f32 %v3418, %v3620
        %v3685 = vmul.f32 %v3420, %v3621
        %v3686 = vmul.f32 %v3422, %v3622
        %v3687 = vmul.f32 %v3424, %v3623
        %v3688 = vmul.f32 %v3426, %v3624
        %v3689 = vmul.f32 %v3428, %v3625
        %v3690 = vmul.f32 %v3430, %v3626
        %v3691 = vmul.f32 %v3432, %v3627
        %v3692 = vmul.f32 %v3434, %v3628
        %v3693 = vmul.f32 %v3436, %v3629
        %v3694 = vmul.f32 %v3438, %v3630
        %v3695 = vpack.c.bf16 %v3632, %v3631
        %v3696 = vpack.c.bf16 %v3634, %v3633
        %v3697 = vpack.c.bf16 %v3636, %v3635
        %v3698 = vpack.c.bf16 %v3638, %v3637
        %v3699 = vpack.c.bf16 %v3640, %v3639
        %v3700 = vpack.c.bf16 %v3642, %v3641
        %v3701 = vpack.c.bf16 %v3644, %v3643
        %v3702 = vpack.c.bf16 %v3646, %v3645
        %v3703 = vpack.c.bf16 %v3648, %v3647
        %v3704 = vpack.c.bf16 %v3650, %v3649
        %v3705 = vpack.c.bf16 %v3652, %v3651
        %v3706 = vpack.c.bf16 %v3654, %v3653
        %v3707 = vpack.c.bf16 %v3656, %v3655
        %v3708 = vpack.c.bf16 %v3658, %v3657
        %v3709 = vpack.c.bf16 %v3660, %v3659
        %v3710 = vpack.c.bf16 %v3662, %v3661
        %v3711 = vpack.c.bf16 %v3664, %v3663
        %v3712 = vpack.c.bf16 %v3666, %v3665
        %v3713 = vpack.c.bf16 %v3668, %v3667
        %v3714 = vpack.c.bf16 %v3670, %v3669
        %v3715 = vpack.c.bf16 %v3672, %v3671
        %v3716 = vpack.c.bf16 %v3674, %v3673
        %v3717 = vpack.c.bf16 %v3676, %v3675
        %v3718 = vpack.c.bf16 %v3678, %v3677
        %v3719 = vpack.c.bf16 %v3680, %v3679
        %v3720 = vpack.c.bf16 %v3682, %v3681
        %v3721 = vpack.c.bf16 %v3684, %v3683
        %v3722 = vpack.c.bf16 %v3686, %v3685
        %v3723 = vpack.c.bf16 %v3688, %v3687
        %v3724 = vpack.c.bf16 %v3690, %v3689
        %v3725 = vpack.c.bf16 %v3692, %v3691
        %v3726 = vpack.c.bf16 %v3694, %v3693
        %3727 = vmatprep.subr.bf16.mxu0 0
        %3728 = vmatpush1.bf16.msra.mxu0 %v2566
        %3729 = vmatprep.subr.bf16.mxu0 0
        %3730 = vmatpush1.bf16.msra.mxu0 %v2565
        %3731 = vmatprep.subr.bf16.mxu0 0
        %3732 = vmatpush1.bf16.msra.mxu0 %v2564
        %3733 = vmatprep.subr.bf16.mxu0 0
        %3734 = vmatpush1.bf16.msra.mxu0 %v2563
        %3735 = vmatprep.subr.bf16.mxu0 0
        %3736 = vmatpush1.bf16.msra.mxu0 %v2562
        %3737 = vmatprep.subr.bf16.mxu0 0
        %3738 = vmatpush1.bf16.msra.mxu0 %v2561
        %3739 = vmatprep.subr.bf16.mxu0 0
        %3740 = vmatpush1.bf16.msra.mxu0 %v2560
        %3741 = vmatprep.subr.bf16.mxu0 0
        %3742 = vmatpush1.bf16.msra.mxu0 %v2559
        %3743 = vmatprep.subr.bf16.mxu0 0
        %3744 = vmatpush2.bf16.msra.mxu0 0
        %3745 = vmatprep.subr.bf16.mxu0 0
        %3746 = vmatpush2.bf16.msra.mxu0 0
        %3747 = vmatprep.subr.bf16.mxu0 0
        %3748 = vmatpush2.bf16.msra.mxu0 0
        %3749 = vmatprep.subr.bf16.mxu0 0
        %3750 = vmatpush2.bf16.msra.mxu0 0
        %3751 = vmatprep.subr.bf16.mxu0 0
        %3752 = vmatpush2.bf16.msra.mxu0 0
        %3753 = vmatprep.subr.bf16.mxu0 0
        %3754 = vmatpush2.bf16.msra.mxu0 0
        %3755 = vmatprep.subr.bf16.mxu0 0
        %3756 = vmatpush2.bf16.msra.mxu0 0
        %3757 = vmatprep.subr.bf16.mxu0 0
        %3758 = vmatpush2.bf16.msra.mxu0 0
        %3759 = vmatprep.mubr.bf16.mxu0 0
        %3760 = vmatmul.mubr.bf16.gmra.mxu0 %v3695
        %v3761 = vpop.f32.mrf.mxu0
        %v3762 = vadd.f32 0.0, %v3761
        %v3763 = vpop.f32.mrf.mxu0
        %v3764 = vpop.f32.mrf.mxu0
        %v3765 = vadd.f32 0.0, %v3764
        %v3766 = vpop.f32.mrf.mxu0
        %3767 = vmatprep.mubr.bf16.mxu0 0
        %3768 = vmatmul.mubr.bf16.gmra.mxu0 %v3696
        %v3769 = vpop.f32.mrf.mxu0
        %v3770 = vadd.f32 0.0, %v3769
        %v3771 = vpop.f32.mrf.mxu0
        %v3772 = vpop.f32.mrf.mxu0
        %v3773 = vadd.f32 0.0, %v3772
        %v3774 = vpop.f32.mrf.mxu0
        %3775 = vmatprep.mubr.bf16.mxu0 0
        %3776 = vmatmul.mubr.bf16.gmra.mxu0 %v3697
        %v3777 = vpop.f32.mrf.mxu0
        %v3778 = vadd.f32 0.0, %v3777
        %v3779 = vpop.f32.mrf.mxu0
        %v3780 = vpop.f32.mrf.mxu0
        %v3781 = vadd.f32 0.0, %v3780
        %v3782 = vpop.f32.mrf.mxu0
        %3783 = vmatprep.mubr.bf16.mxu0 0
        %3784 = vmatmul.mubr.bf16.gmra.mxu0 %v3698
        %v3785 = vpop.f32.mrf.mxu0
        %v3786 = vadd.f32 0.0, %v3785
        %v3787 = vpop.f32.mrf.mxu0
        %v3788 = vpop.f32.mrf.mxu0
        %v3789 = vadd.f32 0.0, %v3788
        %v3790 = vpop.f32.mrf.mxu0
        %3791 = vmatprep.mubr.bf16.mxu0 0
        %3792 = vmatmul.mubr.bf16.gmra.mxu0 %v3699
        %v3793 = vpop.f32.mrf.mxu0
        %v3794 = vadd.f32 0.0, %v3793
        %v3795 = vpop.f32.mrf.mxu0
        %v3796 = vpop.f32.mrf.mxu0
        %v3797 = vadd.f32 0.0, %v3796
        %v3798 = vpop.f32.mrf.mxu0
        %3799 = vmatprep.mubr.bf16.mxu0 0
        %3800 = vmatmul.mubr.bf16.gmra.mxu0 %v3700
        %v3801 = vpop.f32.mrf.mxu0
        %v3802 = vadd.f32 0.0, %v3801
        %v3803 = vpop.f32.mrf.mxu0
        %v3804 = vpop.f32.mrf.mxu0
        %v3805 = vadd.f32 0.0, %v3804
        %v3806 = vpop.f32.mrf.mxu0
        %3807 = vmatprep.mubr.bf16.mxu0 0
        %3808 = vmatmul.mubr.bf16.gmra.mxu0 %v3701
        %v3809 = vpop.f32.mrf.mxu0
        %v3810 = vadd.f32 0.0, %v3809
        %v3811 = vpop.f32.mrf.mxu0
        %v3812 = vpop.f32.mrf.mxu0
        %v3813 = vadd.f32 0.0, %v3812
        %v3814 = vpop.f32.mrf.mxu0
        %3815 = vmatprep.mubr.bf16.mxu0 0
        %3816 = vmatmul.mubr.bf16.gmra.mxu0 %v3702
        %v3817 = vpop.f32.mrf.mxu0
        %v3818 = vadd.f32 0.0, %v3817
        %v3819 = vpop.f32.mrf.mxu0
        %v3820 = vpop.f32.mrf.mxu0
        %v3821 = vadd.f32 0.0, %v3820
        %v3822 = vpop.f32.mrf.mxu0
        %3823 = vdwg.mxu0
        %3824 = vmatprep.subr.bf16.mxu0 0
        %3825 = vmatpush1.bf16.msra.mxu0 %v2574
        %3826 = vmatprep.subr.bf16.mxu0 0
        %3827 = vmatpush1.bf16.msra.mxu0 %v2573
        %3828 = vmatprep.subr.bf16.mxu0 0
        %3829 = vmatpush1.bf16.msra.mxu0 %v2572
        %3830 = vmatprep.subr.bf16.mxu0 0
        %3831 = vmatpush1.bf16.msra.mxu0 %v2571
        %3832 = vmatprep.subr.bf16.mxu0 0
        %3833 = vmatpush1.bf16.msra.mxu0 %v2570
        %3834 = vmatprep.subr.bf16.mxu0 0
        %3835 = vmatpush1.bf16.msra.mxu0 %v2569
        %3836 = vmatprep.subr.bf16.mxu0 0
        %3837 = vmatpush1.bf16.msra.mxu0 %v2568
        %3838 = vmatprep.subr.bf16.mxu0 0
        %3839 = vmatpush1.bf16.msra.mxu0 %v2567
        %3840 = vmatprep.subr.bf16.mxu0 0
        %3841 = vmatpush2.bf16.msra.mxu0 0
        %3842 = vmatprep.subr.bf16.mxu0 0
        %3843 = vmatpush2.bf16.msra.mxu0 0
        %3844 = vmatprep.subr.bf16.mxu0 0
        %3845 = vmatpush2.bf16.msra.mxu0 0
        %3846 = vmatprep.subr.bf16.mxu0 0
        %3847 = vmatpush2.bf16.msra.mxu0 0
        %3848 = vmatprep.subr.bf16.mxu0 0
        %3849 = vmatpush2.bf16.msra.mxu0 0
        %3850 = vmatprep.subr.bf16.mxu0 0
        %3851 = vmatpush2.bf16.msra.mxu0 0
        %3852 = vmatprep.subr.bf16.mxu0 0
        %3853 = vmatpush2.bf16.msra.mxu0 0
        %3854 = vmatprep.subr.bf16.mxu0 0
        %3855 = vmatpush2.bf16.msra.mxu0 0
        %3856 = vmatprep.mubr.bf16.mxu0 0
        %3857 = vmatmul.mubr.bf16.gmra.mxu0 %v3703
        %v3858 = vpop.f32.mrf.mxu0
        %v3859 = vadd.f32 0.0, %v3858
        %v3860 = vpop.f32.mrf.mxu0
        %v3861 = vpop.f32.mrf.mxu0
        %v3862 = vadd.f32 0.0, %v3861
        %v3863 = vpop.f32.mrf.mxu0
        %3864 = vmatprep.mubr.bf16.mxu0 0
        %3865 = vmatmul.mubr.bf16.gmra.mxu0 %v3704
        %v3866 = vpop.f32.mrf.mxu0
        %v3867 = vadd.f32 0.0, %v3866
        %v3868 = vpop.f32.mrf.mxu0
        %v3869 = vpop.f32.mrf.mxu0
        %v3870 = vadd.f32 0.0, %v3869
        %v3871 = vpop.f32.mrf.mxu0
        %3872 = vmatprep.mubr.bf16.mxu0 0
        %3873 = vmatmul.mubr.bf16.gmra.mxu0 %v3705
        %v3874 = vpop.f32.mrf.mxu0
        %v3875 = vadd.f32 0.0, %v3874
        %v3876 = vpop.f32.mrf.mxu0
        %v3877 = vpop.f32.mrf.mxu0
        %v3878 = vadd.f32 0.0, %v3877
        %v3879 = vpop.f32.mrf.mxu0
        %3880 = vmatprep.mubr.bf16.mxu0 0
        %3881 = vmatmul.mubr.bf16.gmra.mxu0 %v3706
        %v3882 = vpop.f32.mrf.mxu0
        %v3883 = vadd.f32 0.0, %v3882
        %v3884 = vpop.f32.mrf.mxu0
        %v3885 = vpop.f32.mrf.mxu0
        %v3886 = vadd.f32 0.0, %v3885
        %v3887 = vpop.f32.mrf.mxu0
        %3888 = vmatprep.mubr.bf16.mxu0 0
        %3889 = vmatmul.mubr.bf16.gmra.mxu0 %v3707
        %v3890 = vpop.f32.mrf.mxu0
        %v3891 = vadd.f32 0.0, %v3890
        %v3892 = vpop.f32.mrf.mxu0
        %v3893 = vpop.f32.mrf.mxu0
        %v3894 = vadd.f32 0.0, %v3893
        %v3895 = vpop.f32.mrf.mxu0
        %3896 = vmatprep.mubr.bf16.mxu0 0
        %3897 = vmatmul.mubr.bf16.gmra.mxu0 %v3708
        %v3898 = vpop.f32.mrf.mxu0
        %v3899 = vadd.f32 0.0, %v3898
        %v3900 = vpop.f32.mrf.mxu0
        %v3901 = vpop.f32.mrf.mxu0
        %v3902 = vadd.f32 0.0, %v3901
        %v3903 = vpop.f32.mrf.mxu0
        %3904 = vmatprep.mubr.bf16.mxu0 0
        %3905 = vmatmul.mubr.bf16.gmra.mxu0 %v3709
        %v3906 = vpop.f32.mrf.mxu0
        %v3907 = vadd.f32 0.0, %v3906
        %v3908 = vpop.f32.mrf.mxu0
        %v3909 = vpop.f32.mrf.mxu0
        %v3910 = vadd.f32 0.0, %v3909
        %v3911 = vpop.f32.mrf.mxu0
        %3912 = vmatprep.mubr.bf16.mxu0 0
        %3913 = vmatmul.mubr.bf16.gmra.mxu0 %v3710
        %v3914 = vpop.f32.mrf.mxu0
        %v3915 = vadd.f32 0.0, %v3914
        %v3916 = vpop.f32.mrf.mxu0
        %v3917 = vpop.f32.mrf.mxu0
        %v3918 = vadd.f32 0.0, %v3917
        %v3919 = vpop.f32.mrf.mxu0
        %3920 = vdwg.mxu0
        %3921 = vmatprep.subr.bf16.mxu0 0
        %3922 = vmatpush1.bf16.msra.mxu0 %v2582
        %3923 = vmatprep.subr.bf16.mxu0 0
        %3924 = vmatpush1.bf16.msra.mxu0 %v2581
        %3925 = vmatprep.subr.bf16.mxu0 0
        %3926 = vmatpush1.bf16.msra.mxu0 %v2580
        %3927 = vmatprep.subr.bf16.mxu0 0
        %3928 = vmatpush1.bf16.msra.mxu0 %v2579
        %3929 = vmatprep.subr.bf16.mxu0 0
        %3930 = vmatpush1.bf16.msra.mxu0 %v2578
        %3931 = vmatprep.subr.bf16.mxu0 0
        %3932 = vmatpush1.bf16.msra.mxu0 %v2577
        %3933 = vmatprep.subr.bf16.mxu0 0
        %3934 = vmatpush1.bf16.msra.mxu0 %v2576
        %3935 = vmatprep.subr.bf16.mxu0 0
        %3936 = vmatpush1.bf16.msra.mxu0 %v2575
        %3937 = vmatprep.subr.bf16.mxu0 0
        %3938 = vmatpush2.bf16.msra.mxu0 0
        %3939 = vmatprep.subr.bf16.mxu0 0
        %3940 = vmatpush2.bf16.msra.mxu0 0
        %3941 = vmatprep.subr.bf16.mxu0 0
        %3942 = vmatpush2.bf16.msra.mxu0 0
        %3943 = vmatprep.subr.bf16.mxu0 0
        %3944 = vmatpush2.bf16.msra.mxu0 0
        %3945 = vmatprep.subr.bf16.mxu0 0
        %3946 = vmatpush2.bf16.msra.mxu0 0
        %3947 = vmatprep.subr.bf16.mxu0 0
        %3948 = vmatpush2.bf16.msra.mxu0 0
        %3949 = vmatprep.subr.bf16.mxu0 0
        %3950 = vmatpush2.bf16.msra.mxu0 0
        %3951 = vmatprep.subr.bf16.mxu0 0
        %3952 = vmatpush2.bf16.msra.mxu0 0
        %3953 = vmatprep.mubr.bf16.mxu0 0
        %3954 = vmatmul.mubr.bf16.gmra.mxu0 %v3711
        %v3955 = vpop.f32.mrf.mxu0
        %v3956 = vadd.f32 0.0, %v3955
        %v3957 = vpop.f32.mrf.mxu0
        %v3958 = vpop.f32.mrf.mxu0
        %v3959 = vadd.f32 0.0, %v3958
        %v3960 = vpop.f32.mrf.mxu0
        %3961 = vmatprep.mubr.bf16.mxu0 0
        %3962 = vmatmul.mubr.bf16.gmra.mxu0 %v3712
        %v3963 = vpop.f32.mrf.mxu0
        %v3964 = vadd.f32 0.0, %v3963
        %v3965 = vpop.f32.mrf.mxu0
        %v3966 = vpop.f32.mrf.mxu0
        %v3967 = vadd.f32 0.0, %v3966
        %v3968 = vpop.f32.mrf.mxu0
        %3969 = vmatprep.mubr.bf16.mxu0 0
        %3970 = vmatmul.mubr.bf16.gmra.mxu0 %v3713
        %v3971 = vpop.f32.mrf.mxu0
        %v3972 = vadd.f32 0.0, %v3971
        %v3973 = vpop.f32.mrf.mxu0
        %v3974 = vpop.f32.mrf.mxu0
        %v3975 = vadd.f32 0.0, %v3974
        %v3976 = vpop.f32.mrf.mxu0
        %3977 = vmatprep.mubr.bf16.mxu0 0
        %3978 = vmatmul.mubr.bf16.gmra.mxu0 %v3714
        %v3979 = vpop.f32.mrf.mxu0
        %v3980 = vadd.f32 0.0, %v3979
        %v3981 = vpop.f32.mrf.mxu0
        %v3982 = vpop.f32.mrf.mxu0
        %v3983 = vadd.f32 0.0, %v3982
        %v3984 = vpop.f32.mrf.mxu0
        %3985 = vmatprep.mubr.bf16.mxu0 0
        %3986 = vmatmul.mubr.bf16.gmra.mxu0 %v3715
        %v3987 = vpop.f32.mrf.mxu0
        %v3988 = vadd.f32 0.0, %v3987
        %v3989 = vpop.f32.mrf.mxu0
        %v3990 = vpop.f32.mrf.mxu0
        %v3991 = vadd.f32 0.0, %v3990
        %v3992 = vpop.f32.mrf.mxu0
        %3993 = vmatprep.mubr.bf16.mxu0 0
        %3994 = vmatmul.mubr.bf16.gmra.mxu0 %v3716
        %v3995 = vpop.f32.mrf.mxu0
        %v3996 = vadd.f32 0.0, %v3995
        %v3997 = vpop.f32.mrf.mxu0
        %v3998 = vpop.f32.mrf.mxu0
        %v3999 = vadd.f32 0.0, %v3998
        %v4000 = vpop.f32.mrf.mxu0
        %4001 = vmatprep.mubr.bf16.mxu0 0
        %4002 = vmatmul.mubr.bf16.gmra.mxu0 %v3717
        %v4003 = vpop.f32.mrf.mxu0
        %v4004 = vadd.f32 0.0, %v4003
        %v4005 = vpop.f32.mrf.mxu0
        %v4006 = vpop.f32.mrf.mxu0
        %v4007 = vadd.f32 0.0, %v4006
        %v4008 = vpop.f32.mrf.mxu0
        %4009 = vmatprep.mubr.bf16.mxu0 0
        %4010 = vmatmul.mubr.bf16.gmra.mxu0 %v3718
        %v4011 = vpop.f32.mrf.mxu0
        %v4012 = vadd.f32 0.0, %v4011
        %v4013 = vpop.f32.mrf.mxu0
        %v4014 = vpop.f32.mrf.mxu0
        %v4015 = vadd.f32 0.0, %v4014
        %v4016 = vpop.f32.mrf.mxu0
        %4017 = vdwg.mxu0
        %4018 = vmatprep.subr.bf16.mxu0 0
        %4019 = vmatpush1.bf16.msra.mxu0 %v2590
        %4020 = vmatprep.subr.bf16.mxu0 0
        %4021 = vmatpush1.bf16.msra.mxu0 %v2589
        %4022 = vmatprep.subr.bf16.mxu0 0
        %4023 = vmatpush1.bf16.msra.mxu0 %v2588
        %4024 = vmatprep.subr.bf16.mxu0 0
        %4025 = vmatpush1.bf16.msra.mxu0 %v2587
        %4026 = vmatprep.subr.bf16.mxu0 0
        %4027 = vmatpush1.bf16.msra.mxu0 %v2586
        %4028 = vmatprep.subr.bf16.mxu0 0
        %4029 = vmatpush1.bf16.msra.mxu0 %v2585
        %4030 = vmatprep.subr.bf16.mxu0 0
        %4031 = vmatpush1.bf16.msra.mxu0 %v2584
        %4032 = vmatprep.subr.bf16.mxu0 0
        %4033 = vmatpush1.bf16.msra.mxu0 %v2583
        %4034 = vmatprep.subr.bf16.mxu0 0
        %4035 = vmatpush2.bf16.msra.mxu0 0
        %4036 = vmatprep.subr.bf16.mxu0 0
        %4037 = vmatpush2.bf16.msra.mxu0 0
        %4038 = vmatprep.subr.bf16.mxu0 0
        %4039 = vmatpush2.bf16.msra.mxu0 0
        %4040 = vmatprep.subr.bf16.mxu0 0
        %4041 = vmatpush2.bf16.msra.mxu0 0
        %4042 = vmatprep.subr.bf16.mxu0 0
        %4043 = vmatpush2.bf16.msra.mxu0 0
        %4044 = vmatprep.subr.bf16.mxu0 0
        %4045 = vmatpush2.bf16.msra.mxu0 0
        %4046 = vmatprep.subr.bf16.mxu0 0
        %4047 = vmatpush2.bf16.msra.mxu0 0
        %4048 = vmatprep.subr.bf16.mxu0 0
        %4049 = vmatpush2.bf16.msra.mxu0 0
        %4050 = vmatprep.mubr.bf16.mxu0 0
        %4051 = vmatmul.mubr.bf16.gmra.mxu0 %v3719
        %v4052 = vpop.f32.mrf.mxu0
        %v4053 = vadd.f32 0.0, %v4052
        %v4054 = vpop.f32.mrf.mxu0
        %v4055 = vpop.f32.mrf.mxu0
        %v4056 = vadd.f32 0.0, %v4055
        %v4057 = vpop.f32.mrf.mxu0
        %4058 = vmatprep.mubr.bf16.mxu0 0
        %4059 = vmatmul.mubr.bf16.gmra.mxu0 %v3720
        %v4060 = vpop.f32.mrf.mxu0
        %v4061 = vadd.f32 0.0, %v4060
        %v4062 = vpop.f32.mrf.mxu0
        %v4063 = vpop.f32.mrf.mxu0
        %v4064 = vadd.f32 0.0, %v4063
        %v4065 = vpop.f32.mrf.mxu0
        %4066 = vmatprep.mubr.bf16.mxu0 0
        %4067 = vmatmul.mubr.bf16.gmra.mxu0 %v3721
        %v4068 = vpop.f32.mrf.mxu0
        %v4069 = vadd.f32 0.0, %v4068
        %v4070 = vpop.f32.mrf.mxu0
        %v4071 = vpop.f32.mrf.mxu0
        %v4072 = vadd.f32 0.0, %v4071
        %v4073 = vpop.f32.mrf.mxu0
        %4074 = vmatprep.mubr.bf16.mxu0 0
        %4075 = vmatmul.mubr.bf16.gmra.mxu0 %v3722
        %v4076 = vpop.f32.mrf.mxu0
        %v4077 = vadd.f32 0.0, %v4076
        %v4078 = vpop.f32.mrf.mxu0
        %v4079 = vpop.f32.mrf.mxu0
        %v4080 = vadd.f32 0.0, %v4079
        %v4081 = vpop.f32.mrf.mxu0
        %4082 = vmatprep.mubr.bf16.mxu0 0
        %4083 = vmatmul.mubr.bf16.gmra.mxu0 %v3723
        %v4084 = vpop.f32.mrf.mxu0
        %v4085 = vadd.f32 0.0, %v4084
        %v4086 = vpop.f32.mrf.mxu0
        %v4087 = vpop.f32.mrf.mxu0
        %v4088 = vadd.f32 0.0, %v4087
        %v4089 = vpop.f32.mrf.mxu0
        %4090 = vmatprep.mubr.bf16.mxu0 0
        %4091 = vmatmul.mubr.bf16.gmra.mxu0 %v3724
        %v4092 = vpop.f32.mrf.mxu0
        %v4093 = vadd.f32 0.0, %v4092
        %v4094 = vpop.f32.mrf.mxu0
        %v4095 = vpop.f32.mrf.mxu0
        %v4096 = vadd.f32 0.0, %v4095
        %v4097 = vpop.f32.mrf.mxu0
        %4098 = vmatprep.mubr.bf16.mxu0 0
        %4099 = vmatmul.mubr.bf16.gmra.mxu0 %v3725
        %v4100 = vpop.f32.mrf.mxu0
        %v4101 = vadd.f32 0.0, %v4100
        %v4102 = vpop.f32.mrf.mxu0
        %v4103 = vpop.f32.mrf.mxu0
        %v4104 = vadd.f32 0.0, %v4103
        %v4105 = vpop.f32.mrf.mxu0
        %4106 = vmatprep.mubr.bf16.mxu0 0
        %4107 = vmatmul.mubr.bf16.gmra.mxu0 %v3726
        %v4108 = vpop.f32.mrf.mxu0
        %v4109 = vadd.f32 0.0, %v4108
        %v4110 = vpop.f32.mrf.mxu0
        %v4111 = vpop.f32.mrf.mxu0
        %v4112 = vadd.f32 0.0, %v4111
        %v4113 = vpop.f32.mrf.mxu0
        %4114 = vdwg.mxu0
        %v4115 = vpack.c.bf16 %v3765, %v3762
        %v4116 = vpack.c.bf16 %v3959, %v3956
        %v4117 = vpack.c.bf16 %v3773, %v3770
        %v4118 = vpack.c.bf16 %v3967, %v3964
        %v4119 = vpack.c.bf16 %v3781, %v3778
        %v4120 = vpack.c.bf16 %v3975, %v3972
        %v4121 = vpack.c.bf16 %v3789, %v3786
        %v4122 = vpack.c.bf16 %v3983, %v3980
        %v4123 = vpack.c.bf16 %v3797, %v3794
        %v4124 = vpack.c.bf16 %v3991, %v3988
        %v4125 = vpack.c.bf16 %v3805, %v3802
        %v4126 = vpack.c.bf16 %v3999, %v3996
        %v4127 = vpack.c.bf16 %v3813, %v3810
        %v4128 = vpack.c.bf16 %v4007, %v4004
        %v4129 = vpack.c.bf16 %v3821, %v3818
        %v4130 = vpack.c.bf16 %v4015, %v4012
        %v4131 = vpack.c.bf16 %v3862, %v3859
        %v4132 = vpack.c.bf16 %v4056, %v4053
        %v4133 = vpack.c.bf16 %v3870, %v3867
        %v4134 = vpack.c.bf16 %v4064, %v4061
        %v4135 = vpack.c.bf16 %v3878, %v3875
        %v4136 = vpack.c.bf16 %v4072, %v4069
        %v4137 = vpack.c.bf16 %v3886, %v3883
        %v4138 = vpack.c.bf16 %v4080, %v4077
        %v4139 = vpack.c.bf16 %v3894, %v3891
        %v4140 = vpack.c.bf16 %v4088, %v4085
        %v4141 = vpack.c.bf16 %v3902, %v3899
        %v4142 = vpack.c.bf16 %v4096, %v4093
        %v4143 = vpack.c.bf16 %v3910, %v3907
        %v4144 = vpack.c.bf16 %v4104, %v4101
        %v4145 = vpack.c.bf16 %v3918, %v3915
        %v4146 = vpack.c.bf16 %v4112, %v4109
        %v4148 = vlaneseq
        %v4149 = vshrl.u32 %v4148, 7
        %v4150 = vsub.s32 0, %v4149
        %v4151 = vrot.slane %v1238, %v4150
        %v4152 = vlaneseq
        %v4153 = vshrl.u32 %v4152, 7
        %v4154 = vsub.s32 1, %v4153
        %v4155 = vrot.slane %v1238, %v4154
        %v4190 = vunpack.c.l.b16 %v1206
        %v4191 = vunpack.c.h.b16 %v1206
        %v4192 = vunpack.c.l.b16 %v1207
        %v4193 = vunpack.c.h.b16 %v1207
        %v4194 = vunpack.c.l.b16 %v1208
        %v4195 = vunpack.c.h.b16 %v1208
        %v4196 = vunpack.c.l.b16 %v1209
        %v4197 = vunpack.c.h.b16 %v1209
        %v4198 = vunpack.c.l.b16 %v1210
        %v4199 = vunpack.c.h.b16 %v1210
        %v4200 = vunpack.c.l.b16 %v1211
        %v4201 = vunpack.c.h.b16 %v1211
        %v4202 = vunpack.c.l.b16 %v1212
        %v4203 = vunpack.c.h.b16 %v1212
        %v4204 = vunpack.c.l.b16 %v1213
        %v4205 = vunpack.c.h.b16 %v1213
        %v4206 = vunpack.c.l.b16 %v1214
        %v4207 = vunpack.c.h.b16 %v1214
        %v4208 = vunpack.c.l.b16 %v1215
        %v4209 = vunpack.c.h.b16 %v1215
        %v4210 = vunpack.c.l.b16 %v1216
        %v4211 = vunpack.c.h.b16 %v1216
        %v4212 = vunpack.c.l.b16 %v1217
        %v4213 = vunpack.c.h.b16 %v1217
        %v4214 = vunpack.c.l.b16 %v1218
        %v4215 = vunpack.c.h.b16 %v1218
        %v4216 = vunpack.c.l.b16 %v1219
        %v4217 = vunpack.c.h.b16 %v1219
        %v4218 = vunpack.c.l.b16 %v1220
        %v4219 = vunpack.c.h.b16 %v1220
        %v4220 = vunpack.c.l.b16 %v1221
        %v4221 = vunpack.c.h.b16 %v1221
        %v4222 = vunpack.c.l.b16 %v1222
        %v4223 = vunpack.c.h.b16 %v1222
        %v4224 = vunpack.c.l.b16 %v1223
        %v4225 = vunpack.c.h.b16 %v1223
        %v4226 = vunpack.c.l.b16 %v1224
        %v4227 = vunpack.c.h.b16 %v1224
        %v4228 = vunpack.c.l.b16 %v1225
        %v4229 = vunpack.c.h.b16 %v1225
        %v4230 = vunpack.c.l.b16 %v1226
        %v4231 = vunpack.c.h.b16 %v1226
        %v4232 = vunpack.c.l.b16 %v1227
        %v4233 = vunpack.c.h.b16 %v1227
        %v4234 = vunpack.c.l.b16 %v1228
        %v4235 = vunpack.c.h.b16 %v1228
        %v4236 = vunpack.c.l.b16 %v1229
        %v4237 = vunpack.c.h.b16 %v1229
        %v4238 = vunpack.c.l.b16 %v1230
        %v4239 = vunpack.c.h.b16 %v1230
        %v4240 = vunpack.c.l.b16 %v1231
        %v4241 = vunpack.c.h.b16 %v1231
        %v4242 = vunpack.c.l.b16 %v1232
        %v4243 = vunpack.c.h.b16 %v1232
        %v4244 = vunpack.c.l.b16 %v1233
        %v4245 = vunpack.c.h.b16 %v1233
        %v4246 = vunpack.c.l.b16 %v1234
        %v4247 = vunpack.c.h.b16 %v1234
        %v4248 = vunpack.c.l.b16 %v1235
        %v4249 = vunpack.c.h.b16 %v1235
        %v4250 = vunpack.c.l.b16 %v1236
        %v4251 = vunpack.c.h.b16 %v1236
        %v4252 = vunpack.c.l.b16 %v1237
        %v4253 = vunpack.c.h.b16 %v1237
        %v4254 = vpack.c.b16 %v4192, %v4190
        %v4255 = vpack.c.b16 %v4193, %v4191
        %v4256 = vpack.c.b16 %v4196, %v4194
        %v4257 = vpack.c.b16 %v4197, %v4195
        %v4258 = vpack.c.b16 %v4200, %v4198
        %v4259 = vpack.c.b16 %v4201, %v4199
        %v4260 = vpack.c.b16 %v4204, %v4202
        %v4261 = vpack.c.b16 %v4205, %v4203
        %v4262 = vpack.c.b16 %v4208, %v4206
        %v4263 = vpack.c.b16 %v4209, %v4207
        %v4264 = vpack.c.b16 %v4212, %v4210
        %v4265 = vpack.c.b16 %v4213, %v4211
        %v4266 = vpack.c.b16 %v4216, %v4214
        %v4267 = vpack.c.b16 %v4217, %v4215
        %v4268 = vpack.c.b16 %v4220, %v4218
        %v4269 = vpack.c.b16 %v4221, %v4219
        %v4270 = vpack.c.b16 %v4224, %v4222
        %v4271 = vpack.c.b16 %v4225, %v4223
        %v4272 = vpack.c.b16 %v4228, %v4226
        %v4273 = vpack.c.b16 %v4229, %v4227
        %v4274 = vpack.c.b16 %v4232, %v4230
        %v4275 = vpack.c.b16 %v4233, %v4231
        %v4276 = vpack.c.b16 %v4236, %v4234
        %v4277 = vpack.c.b16 %v4237, %v4235
        %v4278 = vpack.c.b16 %v4240, %v4238
        %v4279 = vpack.c.b16 %v4241, %v4239
        %v4280 = vpack.c.b16 %v4244, %v4242
        %v4281 = vpack.c.b16 %v4245, %v4243
        %v4282 = vpack.c.b16 %v4248, %v4246
        %v4283 = vpack.c.b16 %v4249, %v4247
        %v4284 = vpack.c.b16 %v4252, %v4250
        %v4285 = vpack.c.b16 %v4253, %v4251
        %4318 = vmatprep.subr.bf16.mxu0 %v4269
        %4319 = vmatpush1.bf16.msra.mxu0 %v4268
        %4320 = vmatprep.subr.bf16.mxu0 %v4267
        %4321 = vmatpush1.bf16.msra.mxu0 %v4266
        %4322 = vmatprep.subr.bf16.mxu0 %v4265
        %4323 = vmatpush1.bf16.msra.mxu0 %v4264
        %4324 = vmatprep.subr.bf16.mxu0 %v4263
        %4325 = vmatpush1.bf16.msra.mxu0 %v4262
        %4326 = vmatprep.subr.bf16.mxu0 %v4261
        %4327 = vmatpush1.bf16.msra.mxu0 %v4260
        %4328 = vmatprep.subr.bf16.mxu0 %v4259
        %4329 = vmatpush1.bf16.msra.mxu0 %v4258
        %4330 = vmatprep.subr.bf16.mxu0 %v4257
        %4331 = vmatpush1.bf16.msra.mxu0 %v4256
        %4332 = vmatprep.subr.bf16.mxu0 %v4255
        %4333 = vmatpush1.bf16.msra.mxu0 %v4254
        %4334 = vmatprep.subr.bf16.mxu0 %v4285
        %4335 = vmatpush2.bf16.msra.mxu0 %v4284
        %4336 = vmatprep.subr.bf16.mxu0 %v4283
        %4337 = vmatpush2.bf16.msra.mxu0 %v4282
        %4338 = vmatprep.subr.bf16.mxu0 %v4281
        %4339 = vmatpush2.bf16.msra.mxu0 %v4280
        %4340 = vmatprep.subr.bf16.mxu0 %v4279
        %4341 = vmatpush2.bf16.msra.mxu0 %v4278
        %4342 = vmatprep.subr.bf16.mxu0 %v4277
        %4343 = vmatpush2.bf16.msra.mxu0 %v4276
        %4344 = vmatprep.subr.bf16.mxu0 %v4275
        %4345 = vmatpush2.bf16.msra.mxu0 %v4274
        %4346 = vmatprep.subr.bf16.mxu0 %v4273
        %4347 = vmatpush2.bf16.msra.mxu0 %v4272
        %4348 = vmatprep.subr.bf16.mxu0 %v4271
        %4349 = vmatpush2.bf16.msra.mxu0 %v4270
        %4350 = vmatprep.mubr.bf16.mxu0 %v4116
        %4351 = vmatmul.mubr.bf16.gmra.mxu0 %v4115
        %v4352 = vpop.f32.mrf.mxu0
        %v4353 = vadd.f32 %v4151, %v4352
        %v4354 = vpop.f32.mrf.mxu0
        %v4355 = vadd.f32 %v4155, %v4354
        %v4356 = vpop.f32.mrf.mxu0
        %v4357 = vadd.f32 %v4151, %v4356
        %v4358 = vpop.f32.mrf.mxu0
        %v4359 = vadd.f32 %v4155, %v4358
        %4360 = vmatprep.mubr.bf16.mxu0 %v4118
        %4361 = vmatmul.mubr.bf16.gmra.mxu0 %v4117
        %v4362 = vpop.f32.mrf.mxu0
        %v4363 = vadd.f32 %v4151, %v4362
        %v4364 = vpop.f32.mrf.mxu0
        %v4365 = vadd.f32 %v4155, %v4364
        %v4366 = vpop.f32.mrf.mxu0
        %v4367 = vadd.f32 %v4151, %v4366
        %v4368 = vpop.f32.mrf.mxu0
        %v4369 = vadd.f32 %v4155, %v4368
        %4370 = vmatprep.mubr.bf16.mxu0 %v4120
        %4371 = vmatmul.mubr.bf16.gmra.mxu0 %v4119
        %v4372 = vpop.f32.mrf.mxu0
        %v4373 = vadd.f32 %v4151, %v4372
        %v4374 = vpop.f32.mrf.mxu0
        %v4375 = vadd.f32 %v4155, %v4374
        %v4376 = vpop.f32.mrf.mxu0
        %v4377 = vadd.f32 %v4151, %v4376
        %v4378 = vpop.f32.mrf.mxu0
        %v4379 = vadd.f32 %v4155, %v4378
        %4380 = vmatprep.mubr.bf16.mxu0 %v4122
        %4381 = vmatmul.mubr.bf16.gmra.mxu0 %v4121
        %v4382 = vpop.f32.mrf.mxu0
        %v4383 = vadd.f32 %v4151, %v4382
        %v4384 = vpop.f32.mrf.mxu0
        %v4385 = vadd.f32 %v4155, %v4384
        %v4386 = vpop.f32.mrf.mxu0
        %v4387 = vadd.f32 %v4151, %v4386
        %v4388 = vpop.f32.mrf.mxu0
        %v4389 = vadd.f32 %v4155, %v4388
        %4390 = vmatprep.mubr.bf16.mxu0 %v4124
        %4391 = vmatmul.mubr.bf16.gmra.mxu0 %v4123
        %v4392 = vpop.f32.mrf.mxu0
        %v4393 = vadd.f32 %v4151, %v4392
        %v4394 = vpop.f32.mrf.mxu0
        %v4395 = vadd.f32 %v4155, %v4394
        %v4396 = vpop.f32.mrf.mxu0
        %v4397 = vadd.f32 %v4151, %v4396
        %v4398 = vpop.f32.mrf.mxu0
        %v4399 = vadd.f32 %v4155, %v4398
        %4400 = vmatprep.mubr.bf16.mxu0 %v4126
        %4401 = vmatmul.mubr.bf16.gmra.mxu0 %v4125
        %v4402 = vpop.f32.mrf.mxu0
        %v4403 = vadd.f32 %v4151, %v4402
        %v4404 = vpop.f32.mrf.mxu0
        %v4405 = vadd.f32 %v4155, %v4404
        %v4406 = vpop.f32.mrf.mxu0
        %v4407 = vadd.f32 %v4151, %v4406
        %v4408 = vpop.f32.mrf.mxu0
        %v4409 = vadd.f32 %v4155, %v4408
        %4410 = vmatprep.mubr.bf16.mxu0 %v4128
        %4411 = vmatmul.mubr.bf16.gmra.mxu0 %v4127
        %v4412 = vpop.f32.mrf.mxu0
        %v4413 = vadd.f32 %v4151, %v4412
        %v4414 = vpop.f32.mrf.mxu0
        %v4415 = vadd.f32 %v4155, %v4414
        %v4416 = vpop.f32.mrf.mxu0
        %v4417 = vadd.f32 %v4151, %v4416
        %v4418 = vpop.f32.mrf.mxu0
        %v4419 = vadd.f32 %v4155, %v4418
        %4420 = vmatprep.mubr.bf16.mxu0 %v4130
        %4421 = vmatmul.mubr.bf16.gmra.mxu0 %v4129
        %v4422 = vpop.f32.mrf.mxu0
        %v4423 = vadd.f32 %v4151, %v4422
        %v4424 = vpop.f32.mrf.mxu0
        %v4425 = vadd.f32 %v4155, %v4424
        %v4426 = vpop.f32.mrf.mxu0
        %v4427 = vadd.f32 %v4151, %v4426
        %v4428 = vpop.f32.mrf.mxu0
        %v4429 = vadd.f32 %v4155, %v4428
        %4430 = vmatprep.mubr.bf16.mxu0 %v4132
        %4431 = vmatmul.mubr.bf16.gmra.mxu0 %v4131
        %v4432 = vpop.f32.mrf.mxu0
        %v4433 = vadd.f32 %v4151, %v4432
        %v4434 = vpop.f32.mrf.mxu0
        %v4435 = vadd.f32 %v4155, %v4434
        %v4436 = vpop.f32.mrf.mxu0
        %v4437 = vadd.f32 %v4151, %v4436
        %v4438 = vpop.f32.mrf.mxu0
        %v4439 = vadd.f32 %v4155, %v4438
        %4440 = vmatprep.mubr.bf16.mxu0 %v4134
        %4441 = vmatmul.mubr.bf16.gmra.mxu0 %v4133
        %v4442 = vpop.f32.mrf.mxu0
        %v4443 = vadd.f32 %v4151, %v4442
        %v4444 = vpop.f32.mrf.mxu0
        %v4445 = vadd.f32 %v4155, %v4444
        %v4446 = vpop.f32.mrf.mxu0
        %v4447 = vadd.f32 %v4151, %v4446
        %v4448 = vpop.f32.mrf.mxu0
        %v4449 = vadd.f32 %v4155, %v4448
        %4450 = vmatprep.mubr.bf16.mxu0 %v4136
        %4451 = vmatmul.mubr.bf16.gmra.mxu0 %v4135
        %v4452 = vpop.f32.mrf.mxu0
        %v4453 = vadd.f32 %v4151, %v4452
        %v4454 = vpop.f32.mrf.mxu0
        %v4455 = vadd.f32 %v4155, %v4454
        %v4456 = vpop.f32.mrf.mxu0
        %v4457 = vadd.f32 %v4151, %v4456
        %v4458 = vpop.f32.mrf.mxu0
        %v4459 = vadd.f32 %v4155, %v4458
        %4460 = vmatprep.mubr.bf16.mxu0 %v4138
        %4461 = vmatmul.mubr.bf16.gmra.mxu0 %v4137
        %v4462 = vpop.f32.mrf.mxu0
        %v4463 = vadd.f32 %v4151, %v4462
        %v4464 = vpop.f32.mrf.mxu0
        %v4465 = vadd.f32 %v4155, %v4464
        %v4466 = vpop.f32.mrf.mxu0
        %v4467 = vadd.f32 %v4151, %v4466
        %v4468 = vpop.f32.mrf.mxu0
        %v4469 = vadd.f32 %v4155, %v4468
        %4470 = vmatprep.mubr.bf16.mxu0 %v4140
        %4471 = vmatmul.mubr.bf16.gmra.mxu0 %v4139
        %v4472 = vpop.f32.mrf.mxu0
        %v4473 = vadd.f32 %v4151, %v4472
        %v4474 = vpop.f32.mrf.mxu0
        %v4475 = vadd.f32 %v4155, %v4474
        %v4476 = vpop.f32.mrf.mxu0
        %v4477 = vadd.f32 %v4151, %v4476
        %v4478 = vpop.f32.mrf.mxu0
        %v4479 = vadd.f32 %v4155, %v4478
        %4480 = vmatprep.mubr.bf16.mxu0 %v4142
        %4481 = vmatmul.mubr.bf16.gmra.mxu0 %v4141
        %v4482 = vpop.f32.mrf.mxu0
        %v4483 = vadd.f32 %v4151, %v4482
        %v4484 = vpop.f32.mrf.mxu0
        %v4485 = vadd.f32 %v4155, %v4484
        %v4486 = vpop.f32.mrf.mxu0
        %v4487 = vadd.f32 %v4151, %v4486
        %v4488 = vpop.f32.mrf.mxu0
        %v4489 = vadd.f32 %v4155, %v4488
        %4490 = vmatprep.mubr.bf16.mxu0 %v4144
        %4491 = vmatmul.mubr.bf16.gmra.mxu0 %v4143
        %v4492 = vpop.f32.mrf.mxu0
        %v4493 = vadd.f32 %v4151, %v4492
        %v4494 = vpop.f32.mrf.mxu0
        %v4495 = vadd.f32 %v4155, %v4494
        %v4496 = vpop.f32.mrf.mxu0
        %v4497 = vadd.f32 %v4151, %v4496
        %v4498 = vpop.f32.mrf.mxu0
        %v4499 = vadd.f32 %v4155, %v4498
        %4500 = vmatprep.mubr.bf16.mxu0 %v4146
        %4501 = vmatmul.mubr.bf16.gmra.mxu0 %v4145
        %v4502 = vpop.f32.mrf.mxu0
        %v4503 = vadd.f32 %v4151, %v4502
        %v4504 = vpop.f32.mrf.mxu0
        %v4505 = vadd.f32 %v4155, %v4504
        %v4506 = vpop.f32.mrf.mxu0
        %v4507 = vadd.f32 %v4151, %v4506
        %v4508 = vpop.f32.mrf.mxu0
        %v4509 = vadd.f32 %v4155, %v4508
        %4510 = vdwg.mxu0
        %v4511 = vadd.f32 %v1043, %v4353
        %v4512 = vadd.f32 %v1044, %v4355
        %v4513 = vadd.f32 %v1045, %v4357
        %v4514 = vadd.f32 %v1046, %v4359
        %v4515 = vadd.f32 %v1047, %v4363
        %v4516 = vadd.f32 %v1048, %v4365
        %v4517 = vadd.f32 %v1049, %v4367
        %v4518 = vadd.f32 %v1050, %v4369
        %v4519 = vadd.f32 %v1051, %v4373
        %v4520 = vadd.f32 %v1052, %v4375
        %v4521 = vadd.f32 %v1053, %v4377
        %v4522 = vadd.f32 %v1054, %v4379
        %v4523 = vadd.f32 %v1055, %v4383
        %v4524 = vadd.f32 %v1056, %v4385
        %v4525 = vadd.f32 %v1057, %v4387
        %v4526 = vadd.f32 %v1058, %v4389
        %v4527 = vadd.f32 %v1059, %v4393
        %v4528 = vadd.f32 %v1060, %v4395
        %v4529 = vadd.f32 %v1061, %v4397
        %v4530 = vadd.f32 %v1062, %v4399
        %v4531 = vadd.f32 %v1063, %v4403
        %v4532 = vadd.f32 %v1064, %v4405
        %v4533 = vadd.f32 %v1065, %v4407
        %v4534 = vadd.f32 %v1066, %v4409
        %v4535 = vadd.f32 %v1067, %v4413
        %v4536 = vadd.f32 %v1068, %v4415
        %v4537 = vadd.f32 %v1069, %v4417
        %v4538 = vadd.f32 %v1070, %v4419
        %v4539 = vadd.f32 %v1071, %v4423
        %v4540 = vadd.f32 %v1072, %v4425
        %v4541 = vadd.f32 %v1073, %v4427
        %v4542 = vadd.f32 %v1074, %v4429
        %v4543 = vadd.f32 %v1075, %v4433
        %v4544 = vadd.f32 %v1076, %v4435
        %v4545 = vadd.f32 %v1077, %v4437
        %v4546 = vadd.f32 %v1078, %v4439
        %v4547 = vadd.f32 %v1079, %v4443
        %v4548 = vadd.f32 %v1080, %v4445
        %v4549 = vadd.f32 %v1081, %v4447
        %v4550 = vadd.f32 %v1082, %v4449
        %v4551 = vadd.f32 %v1083, %v4453
        %v4552 = vadd.f32 %v1084, %v4455
        %v4553 = vadd.f32 %v1085, %v4457
        %v4554 = vadd.f32 %v1086, %v4459
        %v4555 = vadd.f32 %v1087, %v4463
        %v4556 = vadd.f32 %v1088, %v4465
        %v4557 = vadd.f32 %v1089, %v4467
        %v4558 = vadd.f32 %v1090, %v4469
        %v4559 = vadd.f32 %v1091, %v4473
        %v4560 = vadd.f32 %v1092, %v4475
        %v4561 = vadd.f32 %v1093, %v4477
        %v4562 = vadd.f32 %v1094, %v4479
        %v4563 = vadd.f32 %v1095, %v4483
        %v4564 = vadd.f32 %v1096, %v4485
        %v4565 = vadd.f32 %v1097, %v4487
        %v4566 = vadd.f32 %v1098, %v4489
        %v4567 = vadd.f32 %v1099, %v4493
        %v4568 = vadd.f32 %v1100, %v4495
        %v4569 = vadd.f32 %v1101, %v4497
        %v4570 = vadd.f32 %v1102, %v4499
        %v4571 = vadd.f32 %v1103, %v4503
        %v4572 = vadd.f32 %v1104, %v4505
        %v4573 = vadd.f32 %v1105, %v4507
        %v4574 = vadd.f32 %v1106, %v4509
        %v4575 = vadd.f32 %v4511, %v4512
        %4576 = vadd.xlane.f32.xlu0 %v4575
        %v4577 = vpop.xlane.xlu0 %4576
        %v4578 = vadd.f32 %v4513, %v4514
        %4579 = vadd.xlane.f32.xlu0 %v4578
        %v4580 = vpop.xlane.xlu0 %4579
        %v4581 = vadd.f32 %v4515, %v4516
        %4582 = vadd.xlane.f32.xlu0 %v4581
        %v4583 = vpop.xlane.xlu0 %4582
        %v4584 = vadd.f32 %v4517, %v4518
        %4585 = vadd.xlane.f32.xlu0 %v4584
        %v4586 = vpop.xlane.xlu0 %4585
        %v4587 = vadd.f32 %v4519, %v4520
        %4588 = vadd.xlane.f32.xlu0 %v4587
        %v4589 = vpop.xlane.xlu0 %4588
        %v4590 = vadd.f32 %v4521, %v4522
        %4591 = vadd.xlane.f32.xlu0 %v4590
        %v4592 = vpop.xlane.xlu0 %4591
        %v4593 = vadd.f32 %v4523, %v4524
        %4594 = vadd.xlane.f32.xlu0 %v4593
        %v4595 = vpop.xlane.xlu0 %4594
        %v4596 = vadd.f32 %v4525, %v4526
        %4597 = vadd.xlane.f32.xlu0 %v4596
        %v4598 = vpop.xlane.xlu0 %4597
        %v4599 = vadd.f32 %v4527, %v4528
        %4600 = vadd.xlane.f32.xlu0 %v4599
        %v4601 = vpop.xlane.xlu0 %4600
        %v4602 = vadd.f32 %v4529, %v4530
        %4603 = vadd.xlane.f32.xlu0 %v4602
        %v4604 = vpop.xlane.xlu0 %4603
        %v4605 = vadd.f32 %v4531, %v4532
        %4606 = vadd.xlane.f32.xlu0 %v4605
        %v4607 = vpop.xlane.xlu0 %4606
        %v4608 = vadd.f32 %v4533, %v4534
        %4609 = vadd.xlane.f32.xlu0 %v4608
        %v4610 = vpop.xlane.xlu0 %4609
        %v4611 = vadd.f32 %v4535, %v4536
        %4612 = vadd.xlane.f32.xlu0 %v4611
        %v4613 = vpop.xlane.xlu0 %4612
        %v4614 = vadd.f32 %v4537, %v4538
        %4615 = vadd.xlane.f32.xlu0 %v4614
        %v4616 = vpop.xlane.xlu0 %4615
        %v4617 = vadd.f32 %v4539, %v4540
        %4618 = vadd.xlane.f32.xlu0 %v4617
        %v4619 = vpop.xlane.xlu0 %4618
        %v4620 = vadd.f32 %v4541, %v4542
        %4621 = vadd.xlane.f32.xlu0 %v4620
        %v4622 = vpop.xlane.xlu0 %4621
        %v4623 = vadd.f32 %v4543, %v4544
        %4624 = vadd.xlane.f32.xlu0 %v4623
        %v4625 = vpop.xlane.xlu0 %4624
        %v4626 = vadd.f32 %v4545, %v4546
        %4627 = vadd.xlane.f32.xlu0 %v4626
        %v4628 = vpop.xlane.xlu0 %4627
        %v4629 = vadd.f32 %v4547, %v4548
        %4630 = vadd.xlane.f32.xlu0 %v4629
        %v4631 = vpop.xlane.xlu0 %4630
        %v4632 = vadd.f32 %v4549, %v4550
        %4633 = vadd.xlane.f32.xlu0 %v4632
        %v4634 = vpop.xlane.xlu0 %4633
        %v4635 = vadd.f32 %v4551, %v4552
        %4636 = vadd.xlane.f32.xlu0 %v4635
        %v4637 = vpop.xlane.xlu0 %4636
        %v4638 = vadd.f32 %v4553, %v4554
        %4639 = vadd.xlane.f32.xlu0 %v4638
        %v4640 = vpop.xlane.xlu0 %4639
        %v4641 = vadd.f32 %v4555, %v4556
        %4642 = vadd.xlane.f32.xlu0 %v4641
        %v4643 = vpop.xlane.xlu0 %4642
        %v4644 = vadd.f32 %v4557, %v4558
        %4645 = vadd.xlane.f32.xlu0 %v4644
        %v4646 = vpop.xlane.xlu0 %4645
        %v4647 = vadd.f32 %v4559, %v4560
        %4648 = vadd.xlane.f32.xlu0 %v4647
        %v4649 = vpop.xlane.xlu0 %4648
        %v4650 = vadd.f32 %v4561, %v4562
        %4651 = vadd.xlane.f32.xlu0 %v4650
        %v4652 = vpop.xlane.xlu0 %4651
        %v4653 = vadd.f32 %v4563, %v4564
        %4654 = vadd.xlane.f32.xlu0 %v4653
        %v4655 = vpop.xlane.xlu0 %4654
        %v4656 = vadd.f32 %v4565, %v4566
        %4657 = vadd.xlane.f32.xlu0 %v4656
        %v4658 = vpop.xlane.xlu0 %4657
        %v4659 = vadd.f32 %v4567, %v4568
        %4660 = vadd.xlane.f32.xlu0 %v4659
        %v4661 = vpop.xlane.xlu0 %4660
        %v4662 = vadd.f32 %v4569, %v4570
        %4663 = vadd.xlane.f32.xlu0 %v4662
        %v4664 = vpop.xlane.xlu0 %4663
        %v4665 = vadd.f32 %v4571, %v4572
        %4666 = vadd.xlane.f32.xlu0 %v4665
        %v4667 = vpop.xlane.xlu0 %4666
        %v4668 = vadd.f32 %v4573, %v4574
        %4669 = vadd.xlane.f32.xlu0 %v4668
        %v4670 = vpop.xlane.xlu0 %4669
        %v4671 = vrcp.pop 256.0
        %v4672 = vmul.f32 %v4577, %v4671
        %v4673 = vmul.f32 %v4580, %v4671
        %v4674 = vmul.f32 %v4583, %v4671
        %v4675 = vmul.f32 %v4586, %v4671
        %v4676 = vmul.f32 %v4589, %v4671
        %v4677 = vmul.f32 %v4592, %v4671
        %v4678 = vmul.f32 %v4595, %v4671
        %v4679 = vmul.f32 %v4598, %v4671
        %v4680 = vmul.f32 %v4601, %v4671
        %v4681 = vmul.f32 %v4604, %v4671
        %v4682 = vmul.f32 %v4607, %v4671
        %v4683 = vmul.f32 %v4610, %v4671
        %v4684 = vmul.f32 %v4613, %v4671
        %v4685 = vmul.f32 %v4616, %v4671
        %v4686 = vmul.f32 %v4619, %v4671
        %v4687 = vmul.f32 %v4622, %v4671
        %v4688 = vmul.f32 %v4625, %v4671
        %v4689 = vmul.f32 %v4628, %v4671
        %v4690 = vmul.f32 %v4631, %v4671
        %v4691 = vmul.f32 %v4634, %v4671
        %v4692 = vmul.f32 %v4637, %v4671
        %v4693 = vmul.f32 %v4640, %v4671
        %v4694 = vmul.f32 %v4643, %v4671
        %v4695 = vmul.f32 %v4646, %v4671
        %v4696 = vmul.f32 %v4649, %v4671
        %v4697 = vmul.f32 %v4652, %v4671
        %v4698 = vmul.f32 %v4655, %v4671
        %v4699 = vmul.f32 %v4658, %v4671
        %v4700 = vmul.f32 %v4661, %v4671
        %v4701 = vmul.f32 %v4664, %v4671
        %v4702 = vmul.f32 %v4667, %v4671
        %v4703 = vmul.f32 %v4670, %v4671
        %v4704 = vsub.f32 %v4511, %v4672
        %v4705 = vsub.f32 %v4512, %v4672
        %v4706 = vsub.f32 %v4513, %v4673
        %v4707 = vsub.f32 %v4514, %v4673
        %v4708 = vsub.f32 %v4515, %v4674
        %v4709 = vsub.f32 %v4516, %v4674
        %v4710 = vsub.f32 %v4517, %v4675
        %v4711 = vsub.f32 %v4518, %v4675
        %v4712 = vsub.f32 %v4519, %v4676
        %v4713 = vsub.f32 %v4520, %v4676
        %v4714 = vsub.f32 %v4521, %v4677
        %v4715 = vsub.f32 %v4522, %v4677
        %v4716 = vsub.f32 %v4523, %v4678
        %v4717 = vsub.f32 %v4524, %v4678
        %v4718 = vsub.f32 %v4525, %v4679
        %v4719 = vsub.f32 %v4526, %v4679
        %v4720 = vsub.f32 %v4527, %v4680
        %v4721 = vsub.f32 %v4528, %v4680
        %v4722 = vsub.f32 %v4529, %v4681
        %v4723 = vsub.f32 %v4530, %v4681
        %v4724 = vsub.f32 %v4531, %v4682
        %v4725 = vsub.f32 %v4532, %v4682
        %v4726 = vsub.f32 %v4533, %v4683
        %v4727 = vsub.f32 %v4534, %v4683
        %v4728 = vsub.f32 %v4535, %v4684
        %v4729 = vsub.f32 %v4536, %v4684
        %v4730 = vsub.f32 %v4537, %v4685
        %v4731 = vsub.f32 %v4538, %v4685
        %v4732 = vsub.f32 %v4539, %v4686
        %v4733 = vsub.f32 %v4540, %v4686
        %v4734 = vsub.f32 %v4541, %v4687
        %v4735 = vsub.f32 %v4542, %v4687
        %v4736 = vsub.f32 %v4543, %v4688
        %v4737 = vsub.f32 %v4544, %v4688
        %v4738 = vsub.f32 %v4545, %v4689
        %v4739 = vsub.f32 %v4546, %v4689
        %v4740 = vsub.f32 %v4547, %v4690
        %v4741 = vsub.f32 %v4548, %v4690
        %v4742 = vsub.f32 %v4549, %v4691
        %v4743 = vsub.f32 %v4550, %v4691
        %v4744 = vsub.f32 %v4551, %v4692
        %v4745 = vsub.f32 %v4552, %v4692
        %v4746 = vsub.f32 %v4553, %v4693
        %v4747 = vsub.f32 %v4554, %v4693
        %v4748 = vsub.f32 %v4555, %v4694
        %v4749 = vsub.f32 %v4556, %v4694
        %v4750 = vsub.f32 %v4557, %v4695
        %v4751 = vsub.f32 %v4558, %v4695
        %v4752 = vsub.f32 %v4559, %v4696
        %v4753 = vsub.f32 %v4560, %v4696
        %v4754 = vsub.f32 %v4561, %v4697
        %v4755 = vsub.f32 %v4562, %v4697
        %v4756 = vsub.f32 %v4563, %v4698
        %v4757 = vsub.f32 %v4564, %v4698
        %v4758 = vsub.f32 %v4565, %v4699
        %v4759 = vsub.f32 %v4566, %v4699
        %v4760 = vsub.f32 %v4567, %v4700
        %v4761 = vsub.f32 %v4568, %v4700
        %v4762 = vsub.f32 %v4569, %v4701
        %v4763 = vsub.f32 %v4570, %v4701
        %v4764 = vsub.f32 %v4571, %v4702
        %v4765 = vsub.f32 %v4572, %v4702
        %v4766 = vsub.f32 %v4573, %v4703
        %v4767 = vsub.f32 %v4574, %v4703
        %v4768 = vmul.f32 %v4704, %v4704
        %v4769 = vmul.f32 %v4705, %v4705
        %v4770 = vmul.f32 %v4706, %v4706
        %v4771 = vmul.f32 %v4707, %v4707
        %v4772 = vmul.f32 %v4708, %v4708
        %v4773 = vmul.f32 %v4709, %v4709
        %v4774 = vmul.f32 %v4710, %v4710
        %v4775 = vmul.f32 %v4711, %v4711
        %v4776 = vmul.f32 %v4712, %v4712
        %v4777 = vmul.f32 %v4713, %v4713
        %v4778 = vmul.f32 %v4714, %v4714
        %v4779 = vmul.f32 %v4715, %v4715
        %v4780 = vmul.f32 %v4716, %v4716
        %v4781 = vmul.f32 %v4717, %v4717
        %v4782 = vmul.f32 %v4718, %v4718
        %v4783 = vmul.f32 %v4719, %v4719
        %v4784 = vmul.f32 %v4720, %v4720
        %v4785 = vmul.f32 %v4721, %v4721
        %v4786 = vmul.f32 %v4722, %v4722
        %v4787 = vmul.f32 %v4723, %v4723
        %v4788 = vmul.f32 %v4724, %v4724
        %v4789 = vmul.f32 %v4725, %v4725
        %v4790 = vmul.f32 %v4726, %v4726
        %v4791 = vmul.f32 %v4727, %v4727
        %v4792 = vmul.f32 %v4728, %v4728
        %v4793 = vmul.f32 %v4729, %v4729
        %v4794 = vmul.f32 %v4730, %v4730
        %v4795 = vmul.f32 %v4731, %v4731
        %v4796 = vmul.f32 %v4732, %v4732
        %v4797 = vmul.f32 %v4733, %v4733
        %v4798 = vmul.f32 %v4734, %v4734
        %v4799 = vmul.f32 %v4735, %v4735
        %v4800 = vmul.f32 %v4736, %v4736
        %v4801 = vmul.f32 %v4737, %v4737
        %v4802 = vmul.f32 %v4738, %v4738
        %v4803 = vmul.f32 %v4739, %v4739
        %v4804 = vmul.f32 %v4740, %v4740
        %v4805 = vmul.f32 %v4741, %v4741
        %v4806 = vmul.f32 %v4742, %v4742
        %v4807 = vmul.f32 %v4743, %v4743
        %v4808 = vmul.f32 %v4744, %v4744
        %v4809 = vmul.f32 %v4745, %v4745
        %v4810 = vmul.f32 %v4746, %v4746
        %v4811 = vmul.f32 %v4747, %v4747
        %v4812 = vmul.f32 %v4748, %v4748
        %v4813 = vmul.f32 %v4749, %v4749
        %v4814 = vmul.f32 %v4750, %v4750
        %v4815 = vmul.f32 %v4751, %v4751
        %v4816 = vmul.f32 %v4752, %v4752
        %v4817 = vmul.f32 %v4753, %v4753
        %v4818 = vmul.f32 %v4754, %v4754
        %v4819 = vmul.f32 %v4755, %v4755
        %v4820 = vmul.f32 %v4756, %v4756
        %v4821 = vmul.f32 %v4757, %v4757
        %v4822 = vmul.f32 %v4758, %v4758
        %v4823 = vmul.f32 %v4759, %v4759
        %v4824 = vmul.f32 %v4760, %v4760
        %v4825 = vmul.f32 %v4761, %v4761
        %v4826 = vmul.f32 %v4762, %v4762
        %v4827 = vmul.f32 %v4763, %v4763
        %v4828 = vmul.f32 %v4764, %v4764
        %v4829 = vmul.f32 %v4765, %v4765
        %v4830 = vmul.f32 %v4766, %v4766
        %v4831 = vmul.f32 %v4767, %v4767
        %v4832 = vadd.f32 %v4768, %v4769
        %4833 = vadd.xlane.f32.xlu0 %v4832
        %v4834 = vpop.xlane.xlu0 %4833
        %v4835 = vadd.f32 %v4770, %v4771
        %4836 = vadd.xlane.f32.xlu0 %v4835
        %v4837 = vpop.xlane.xlu0 %4836
        %v4838 = vadd.f32 %v4772, %v4773
        %4839 = vadd.xlane.f32.xlu0 %v4838
        %v4840 = vpop.xlane.xlu0 %4839
        %v4841 = vadd.f32 %v4774, %v4775
        %4842 = vadd.xlane.f32.xlu0 %v4841
        %v4843 = vpop.xlane.xlu0 %4842
        %v4844 = vadd.f32 %v4776, %v4777
        %4845 = vadd.xlane.f32.xlu0 %v4844
        %v4846 = vpop.xlane.xlu0 %4845
        %v4847 = vadd.f32 %v4778, %v4779
        %4848 = vadd.xlane.f32.xlu0 %v4847
        %v4849 = vpop.xlane.xlu0 %4848
        %v4850 = vadd.f32 %v4780, %v4781
        %4851 = vadd.xlane.f32.xlu0 %v4850
        %v4852 = vpop.xlane.xlu0 %4851
        %v4853 = vadd.f32 %v4782, %v4783
        %4854 = vadd.xlane.f32.xlu0 %v4853
        %v4855 = vpop.xlane.xlu0 %4854
        %v4856 = vadd.f32 %v4784, %v4785
        %4857 = vadd.xlane.f32.xlu0 %v4856
        %v4858 = vpop.xlane.xlu0 %4857
        %v4859 = vadd.f32 %v4786, %v4787
        %4860 = vadd.xlane.f32.xlu0 %v4859
        %v4861 = vpop.xlane.xlu0 %4860
        %v4862 = vadd.f32 %v4788, %v4789
        %4863 = vadd.xlane.f32.xlu0 %v4862
        %v4864 = vpop.xlane.xlu0 %4863
        %v4865 = vadd.f32 %v4790, %v4791
        %4866 = vadd.xlane.f32.xlu0 %v4865
        %v4867 = vpop.xlane.xlu0 %4866
        %v4868 = vadd.f32 %v4792, %v4793
        %4869 = vadd.xlane.f32.xlu0 %v4868
        %v4870 = vpop.xlane.xlu0 %4869
        %v4871 = vadd.f32 %v4794, %v4795
        %4872 = vadd.xlane.f32.xlu0 %v4871
        %v4873 = vpop.xlane.xlu0 %4872
        %v4874 = vadd.f32 %v4796, %v4797
        %4875 = vadd.xlane.f32.xlu0 %v4874
        %v4876 = vpop.xlane.xlu0 %4875
        %v4877 = vadd.f32 %v4798, %v4799
        %4878 = vadd.xlane.f32.xlu0 %v4877
        %v4879 = vpop.xlane.xlu0 %4878
        %v4880 = vadd.f32 %v4800, %v4801
        %4881 = vadd.xlane.f32.xlu0 %v4880
        %v4882 = vpop.xlane.xlu0 %4881
        %v4883 = vadd.f32 %v4802, %v4803
        %4884 = vadd.xlane.f32.xlu0 %v4883
        %v4885 = vpop.xlane.xlu0 %4884
        %v4886 = vadd.f32 %v4804, %v4805
        %4887 = vadd.xlane.f32.xlu0 %v4886
        %v4888 = vpop.xlane.xlu0 %4887
        %v4889 = vadd.f32 %v4806, %v4807
        %4890 = vadd.xlane.f32.xlu0 %v4889
        %v4891 = vpop.xlane.xlu0 %4890
        %v4892 = vadd.f32 %v4808, %v4809
        %4893 = vadd.xlane.f32.xlu0 %v4892
        %v4894 = vpop.xlane.xlu0 %4893
        %v4895 = vadd.f32 %v4810, %v4811
        %4896 = vadd.xlane.f32.xlu0 %v4895
        %v4897 = vpop.xlane.xlu0 %4896
        %v4898 = vadd.f32 %v4812, %v4813
        %4899 = vadd.xlane.f32.xlu0 %v4898
        %v4900 = vpop.xlane.xlu0 %4899
        %v4901 = vadd.f32 %v4814, %v4815
        %4902 = vadd.xlane.f32.xlu0 %v4901
        %v4903 = vpop.xlane.xlu0 %4902
        %v4904 = vadd.f32 %v4816, %v4817
        %4905 = vadd.xlane.f32.xlu0 %v4904
        %v4906 = vpop.xlane.xlu0 %4905
        %v4907 = vadd.f32 %v4818, %v4819
        %4908 = vadd.xlane.f32.xlu0 %v4907
        %v4909 = vpop.xlane.xlu0 %4908
        %v4910 = vadd.f32 %v4820, %v4821
        %4911 = vadd.xlane.f32.xlu0 %v4910
        %v4912 = vpop.xlane.xlu0 %4911
        %v4913 = vadd.f32 %v4822, %v4823
        %4914 = vadd.xlane.f32.xlu0 %v4913
        %v4915 = vpop.xlane.xlu0 %4914
        %v4916 = vadd.f32 %v4824, %v4825
        %4917 = vadd.xlane.f32.xlu0 %v4916
        %v4918 = vpop.xlane.xlu0 %4917
        %v4919 = vadd.f32 %v4826, %v4827
        %4920 = vadd.xlane.f32.xlu0 %v4919
        %v4921 = vpop.xlane.xlu0 %4920
        %v4922 = vadd.f32 %v4828, %v4829
        %4923 = vadd.xlane.f32.xlu0 %v4922
        %v4924 = vpop.xlane.xlu0 %4923
        %v4925 = vadd.f32 %v4830, %v4831
        %4926 = vadd.xlane.f32.xlu0 %v4925
        %v4927 = vpop.xlane.xlu0 %4926
        %v4928 = vmul.f32 %v4834, %v4671
        %v4929 = vmul.f32 %v4837, %v4671
        %v4930 = vmul.f32 %v4840, %v4671
        %v4931 = vmul.f32 %v4843, %v4671
        %v4932 = vmul.f32 %v4846, %v4671
        %v4933 = vmul.f32 %v4849, %v4671
        %v4934 = vmul.f32 %v4852, %v4671
        %v4935 = vmul.f32 %v4855, %v4671
        %v4936 = vmul.f32 %v4858, %v4671
        %v4937 = vmul.f32 %v4861, %v4671
        %v4938 = vmul.f32 %v4864, %v4671
        %v4939 = vmul.f32 %v4867, %v4671
        %v4940 = vmul.f32 %v4870, %v4671
        %v4941 = vmul.f32 %v4873, %v4671
        %v4942 = vmul.f32 %v4876, %v4671
        %v4943 = vmul.f32 %v4879, %v4671
        %v4944 = vmul.f32 %v4882, %v4671
        %v4945 = vmul.f32 %v4885, %v4671
        %v4946 = vmul.f32 %v4888, %v4671
        %v4947 = vmul.f32 %v4891, %v4671
        %v4948 = vmul.f32 %v4894, %v4671
        %v4949 = vmul.f32 %v4897, %v4671
        %v4950 = vmul.f32 %v4900, %v4671
        %v4951 = vmul.f32 %v4903, %v4671
        %v4952 = vmul.f32 %v4906, %v4671
        %v4953 = vmul.f32 %v4909, %v4671
        %v4954 = vmul.f32 %v4912, %v4671
        %v4955 = vmul.f32 %v4915, %v4671
        %v4956 = vmul.f32 %v4918, %v4671
        %v4957 = vmul.f32 %v4921, %v4671
        %v4958 = vmul.f32 %v4924, %v4671
        %v4959 = vmul.f32 %v4927, %v4671
        %v4960 = vadd.f32 %v4928, 1e-12
        %v4961 = vadd.f32 %v4929, 1e-12
        %v4962 = vadd.f32 %v4930, 1e-12
        %v4963 = vadd.f32 %v4931, 1e-12
        %v4964 = vadd.f32 %v4932, 1e-12
        %v4965 = vadd.f32 %v4933, 1e-12
        %v4966 = vadd.f32 %v4934, 1e-12
        %v4967 = vadd.f32 %v4935, 1e-12
        %v4968 = vadd.f32 %v4936, 1e-12
        %v4969 = vadd.f32 %v4937, 1e-12
        %v4970 = vadd.f32 %v4938, 1e-12
        %v4971 = vadd.f32 %v4939, 1e-12
        %v4972 = vadd.f32 %v4940, 1e-12
        %v4973 = vadd.f32 %v4941, 1e-12
        %v4974 = vadd.f32 %v4942, 1e-12
        %v4975 = vadd.f32 %v4943, 1e-12
        %v4976 = vadd.f32 %v4944, 1e-12
        %v4977 = vadd.f32 %v4945, 1e-12
        %v4978 = vadd.f32 %v4946, 1e-12
        %v4979 = vadd.f32 %v4947, 1e-12
        %v4980 = vadd.f32 %v4948, 1e-12
        %v4981 = vadd.f32 %v4949, 1e-12
        %v4982 = vadd.f32 %v4950, 1e-12
        %v4983 = vadd.f32 %v4951, 1e-12
        %v4984 = vadd.f32 %v4952, 1e-12
        %v4985 = vadd.f32 %v4953, 1e-12
        %v4986 = vadd.f32 %v4954, 1e-12
        %v4987 = vadd.f32 %v4955, 1e-12
        %v4988 = vadd.f32 %v4956, 1e-12
        %v4989 = vadd.f32 %v4957, 1e-12
        %v4990 = vadd.f32 %v4958, 1e-12
        %v4991 = vadd.f32 %v4959, 1e-12
        %v4992 = vrsqrt.pop %v4960
        %v4993 = vrsqrt.pop %v4961
        %v4994 = vrsqrt.pop %v4962
        %v4995 = vrsqrt.pop %v4963
        %v4996 = vrsqrt.pop %v4964
        %v4997 = vrsqrt.pop %v4965
        %v4998 = vrsqrt.pop %v4966
        %v4999 = vrsqrt.pop %v4967
        %v5000 = vrsqrt.pop %v4968
        %v5001 = vrsqrt.pop %v4969
        %v5002 = vrsqrt.pop %v4970
        %v5003 = vrsqrt.pop %v4971
        %v5004 = vrsqrt.pop %v4972
        %v5005 = vrsqrt.pop %v4973
        %v5006 = vrsqrt.pop %v4974
        %v5007 = vrsqrt.pop %v4975
        %v5008 = vrsqrt.pop %v4976
        %v5009 = vrsqrt.pop %v4977
        %v5010 = vrsqrt.pop %v4978
        %v5011 = vrsqrt.pop %v4979
        %v5012 = vrsqrt.pop %v4980
        %v5013 = vrsqrt.pop %v4981
        %v5014 = vrsqrt.pop %v4982
        %v5015 = vrsqrt.pop %v4983
        %v5016 = vrsqrt.pop %v4984
        %v5017 = vrsqrt.pop %v4985
        %v5018 = vrsqrt.pop %v4986
        %v5019 = vrsqrt.pop %v4987
        %v5020 = vrsqrt.pop %v4988
        %v5021 = vrsqrt.pop %v4989
        %v5022 = vrsqrt.pop %v4990
        %v5023 = vrsqrt.pop %v4991
        %v5024 = vmul.f32 %v4704, %v4992
        %v5025 = vmul.f32 %v4705, %v4992
        %v5026 = vmul.f32 %v4706, %v4993
        %v5027 = vmul.f32 %v4707, %v4993
        %v5028 = vmul.f32 %v4708, %v4994
        %v5029 = vmul.f32 %v4709, %v4994
        %v5030 = vmul.f32 %v4710, %v4995
        %v5031 = vmul.f32 %v4711, %v4995
        %v5032 = vmul.f32 %v4712, %v4996
        %v5033 = vmul.f32 %v4713, %v4996
        %v5034 = vmul.f32 %v4714, %v4997
        %v5035 = vmul.f32 %v4715, %v4997
        %v5036 = vmul.f32 %v4716, %v4998
        %v5037 = vmul.f32 %v4717, %v4998
        %v5038 = vmul.f32 %v4718, %v4999
        %v5039 = vmul.f32 %v4719, %v4999
        %v5040 = vmul.f32 %v4720, %v5000
        %v5041 = vmul.f32 %v4721, %v5000
        %v5042 = vmul.f32 %v4722, %v5001
        %v5043 = vmul.f32 %v4723, %v5001
        %v5044 = vmul.f32 %v4724, %v5002
        %v5045 = vmul.f32 %v4725, %v5002
        %v5046 = vmul.f32 %v4726, %v5003
        %v5047 = vmul.f32 %v4727, %v5003
        %v5048 = vmul.f32 %v4728, %v5004
        %v5049 = vmul.f32 %v4729, %v5004
        %v5050 = vmul.f32 %v4730, %v5005
        %v5051 = vmul.f32 %v4731, %v5005
        %v5052 = vmul.f32 %v4732, %v5006
        %v5053 = vmul.f32 %v4733, %v5006
        %v5054 = vmul.f32 %v4734, %v5007
        %v5055 = vmul.f32 %v4735, %v5007
        %v5056 = vmul.f32 %v4736, %v5008
        %v5057 = vmul.f32 %v4737, %v5008
        %v5058 = vmul.f32 %v4738, %v5009
        %v5059 = vmul.f32 %v4739, %v5009
        %v5060 = vmul.f32 %v4740, %v5010
        %v5061 = vmul.f32 %v4741, %v5010
        %v5062 = vmul.f32 %v4742, %v5011
        %v5063 = vmul.f32 %v4743, %v5011
        %v5064 = vmul.f32 %v4744, %v5012
        %v5065 = vmul.f32 %v4745, %v5012
        %v5066 = vmul.f32 %v4746, %v5013
        %v5067 = vmul.f32 %v4747, %v5013
        %v5068 = vmul.f32 %v4748, %v5014
        %v5069 = vmul.f32 %v4749, %v5014
        %v5070 = vmul.f32 %v4750, %v5015
        %v5071 = vmul.f32 %v4751, %v5015
        %v5072 = vmul.f32 %v4752, %v5016
        %v5073 = vmul.f32 %v4753, %v5016
        %v5074 = vmul.f32 %v4754, %v5017
        %v5075 = vmul.f32 %v4755, %v5017
        %v5076 = vmul.f32 %v4756, %v5018
        %v5077 = vmul.f32 %v4757, %v5018
        %v5078 = vmul.f32 %v4758, %v5019
        %v5079 = vmul.f32 %v4759, %v5019
        %v5080 = vmul.f32 %v4760, %v5020
        %v5081 = vmul.f32 %v4761, %v5020
        %v5082 = vmul.f32 %v4762, %v5021
        %v5083 = vmul.f32 %v4763, %v5021
        %v5084 = vmul.f32 %v4764, %v5022
        %v5085 = vmul.f32 %v4765, %v5022
        %v5086 = vmul.f32 %v4766, %v5023
        %v5087 = vmul.f32 %v4767, %v5023
        %v5089 = vlaneseq
        %v5090 = vshrl.u32 %v5089, 7
        %v5091 = vsub.s32 0, %v5090
        %v5092 = vrot.slane %v1239, %v5091
        %v5093 = vlaneseq
        %v5094 = vshrl.u32 %v5093, 7
        %v5095 = vsub.s32 1, %v5094
        %v5096 = vrot.slane %v1239, %v5095
        %v5099 = vmul.f32 %v5024, %v5092
        %v5100 = vmul.f32 %v5025, %v5096
        %v5101 = vmul.f32 %v5026, %v5092
        %v5102 = vmul.f32 %v5027, %v5096
        %v5103 = vmul.f32 %v5028, %v5092
        %v5104 = vmul.f32 %v5029, %v5096
        %v5105 = vmul.f32 %v5030, %v5092
        %v5106 = vmul.f32 %v5031, %v5096
        %v5107 = vmul.f32 %v5032, %v5092
        %v5108 = vmul.f32 %v5033, %v5096
        %v5109 = vmul.f32 %v5034, %v5092
        %v5110 = vmul.f32 %v5035, %v5096
        %v5111 = vmul.f32 %v5036, %v5092
        %v5112 = vmul.f32 %v5037, %v5096
        %v5113 = vmul.f32 %v5038, %v5092
        %v5114 = vmul.f32 %v5039, %v5096
        %v5115 = vmul.f32 %v5040, %v5092
        %v5116 = vmul.f32 %v5041, %v5096
        %v5117 = vmul.f32 %v5042, %v5092
        %v5118 = vmul.f32 %v5043, %v5096
        %v5119 = vmul.f32 %v5044, %v5092
        %v5120 = vmul.f32 %v5045, %v5096
        %v5121 = vmul.f32 %v5046, %v5092
        %v5122 = vmul.f32 %v5047, %v5096
        %v5123 = vmul.f32 %v5048, %v5092
        %v5124 = vmul.f32 %v5049, %v5096
        %v5125 = vmul.f32 %v5050, %v5092
        %v5126 = vmul.f32 %v5051, %v5096
        %v5127 = vmul.f32 %v5052, %v5092
        %v5128 = vmul.f32 %v5053, %v5096
        %v5129 = vmul.f32 %v5054, %v5092
        %v5130 = vmul.f32 %v5055, %v5096
        %v5131 = vmul.f32 %v5056, %v5092
        %v5132 = vmul.f32 %v5057, %v5096
        %v5133 = vmul.f32 %v5058, %v5092
        %v5134 = vmul.f32 %v5059, %v5096
        %v5135 = vmul.f32 %v5060, %v5092
        %v5136 = vmul.f32 %v5061, %v5096
        %v5137 = vmul.f32 %v5062, %v5092
        %v5138 = vmul.f32 %v5063, %v5096
        %v5139 = vmul.f32 %v5064, %v5092
        %v5140 = vmul.f32 %v5065, %v5096
        %v5141 = vmul.f32 %v5066, %v5092
        %v5142 = vmul.f32 %v5067, %v5096
        %v5143 = vmul.f32 %v5068, %v5092
        %v5144 = vmul.f32 %v5069, %v5096
        %v5145 = vmul.f32 %v5070, %v5092
        %v5146 = vmul.f32 %v5071, %v5096
        %v5147 = vmul.f32 %v5072, %v5092
        %v5148 = vmul.f32 %v5073, %v5096
        %v5149 = vmul.f32 %v5074, %v5092
        %v5150 = vmul.f32 %v5075, %v5096
        %v5151 = vmul.f32 %v5076, %v5092
        %v5152 = vmul.f32 %v5077, %v5096
        %v5153 = vmul.f32 %v5078, %v5092
        %v5154 = vmul.f32 %v5079, %v5096
        %v5155 = vmul.f32 %v5080, %v5092
        %v5156 = vmul.f32 %v5081, %v5096
        %v5157 = vmul.f32 %v5082, %v5092
        %v5158 = vmul.f32 %v5083, %v5096
        %v5159 = vmul.f32 %v5084, %v5092
        %v5160 = vmul.f32 %v5085, %v5096
        %v5161 = vmul.f32 %v5086, %v5092
        %v5162 = vmul.f32 %v5087, %v5096
        %v5164 = vlaneseq
        %v5165 = vshrl.u32 %v5164, 7
        %v5166 = vsub.s32 0, %v5165
        %v5167 = vrot.slane %v1240, %v5166
        %v5168 = vlaneseq
        %v5169 = vshrl.u32 %v5168, 7
        %v5170 = vsub.s32 1, %v5169
        %v5171 = vrot.slane %v1240, %v5170
        %v5174 = vadd.f32 %v5099, %v5167
        %v5175 = vadd.f32 %v5100, %v5171
        %v5176 = vadd.f32 %v5101, %v5167
        %v5177 = vadd.f32 %v5102, %v5171
        %v5178 = vadd.f32 %v5103, %v5167
        %v5179 = vadd.f32 %v5104, %v5171
        %v5180 = vadd.f32 %v5105, %v5167
        %v5181 = vadd.f32 %v5106, %v5171
        %v5182 = vadd.f32 %v5107, %v5167
        %v5183 = vadd.f32 %v5108, %v5171
        %v5184 = vadd.f32 %v5109, %v5167
        %v5185 = vadd.f32 %v5110, %v5171
        %v5186 = vadd.f32 %v5111, %v5167
        %v5187 = vadd.f32 %v5112, %v5171
        %v5188 = vadd.f32 %v5113, %v5167
        %v5189 = vadd.f32 %v5114, %v5171
        %v5190 = vadd.f32 %v5115, %v5167
        %v5191 = vadd.f32 %v5116, %v5171
        %v5192 = vadd.f32 %v5117, %v5167
        %v5193 = vadd.f32 %v5118, %v5171
        %v5194 = vadd.f32 %v5119, %v5167
        %v5195 = vadd.f32 %v5120, %v5171
        %v5196 = vadd.f32 %v5121, %v5167
        %v5197 = vadd.f32 %v5122, %v5171
        %v5198 = vadd.f32 %v5123, %v5167
        %v5199 = vadd.f32 %v5124, %v5171
        %v5200 = vadd.f32 %v5125, %v5167
        %v5201 = vadd.f32 %v5126, %v5171
        %v5202 = vadd.f32 %v5127, %v5167
        %v5203 = vadd.f32 %v5128, %v5171
        %v5204 = vadd.f32 %v5129, %v5167
        %v5205 = vadd.f32 %v5130, %v5171
        %v5206 = vadd.f32 %v5131, %v5167
        %v5207 = vadd.f32 %v5132, %v5171
        %v5208 = vadd.f32 %v5133, %v5167
        %v5209 = vadd.f32 %v5134, %v5171
        %v5210 = vadd.f32 %v5135, %v5167
        %v5211 = vadd.f32 %v5136, %v5171
        %v5212 = vadd.f32 %v5137, %v5167
        %v5213 = vadd.f32 %v5138, %v5171
        %v5214 = vadd.f32 %v5139, %v5167
        %v5215 = vadd.f32 %v5140, %v5171
        %v5216 = vadd.f32 %v5141, %v5167
        %v5217 = vadd.f32 %v5142, %v5171
        %v5218 = vadd.f32 %v5143, %v5167
        %v5219 = vadd.f32 %v5144, %v5171
        %v5220 = vadd.f32 %v5145, %v5167
        %v5221 = vadd.f32 %v5146, %v5171
        %v5222 = vadd.f32 %v5147, %v5167
        %v5223 = vadd.f32 %v5148, %v5171
        %v5224 = vadd.f32 %v5149, %v5167
        %v5225 = vadd.f32 %v5150, %v5171
        %v5226 = vadd.f32 %v5151, %v5167
        %v5227 = vadd.f32 %v5152, %v5171
        %v5228 = vadd.f32 %v5153, %v5167
        %v5229 = vadd.f32 %v5154, %v5171
        %v5230 = vadd.f32 %v5155, %v5167
        %v5231 = vadd.f32 %v5156, %v5171
        %v5232 = vadd.f32 %v5157, %v5167
        %v5233 = vadd.f32 %v5158, %v5171
        %v5234 = vadd.f32 %v5159, %v5167
        %v5235 = vadd.f32 %v5160, %v5171
        %v5236 = vadd.f32 %v5161, %v5167
        %v5237 = vadd.f32 %v5162, %v5171
        %v5238 = vpack.c.bf16 %v5176, %v5174
        %v5239 = vpack.c.bf16 %v5177, %v5175
        %v5240 = vpack.c.bf16 %v5180, %v5178
        %v5241 = vpack.c.bf16 %v5181, %v5179
        %v5242 = vpack.c.bf16 %v5184, %v5182
        %v5243 = vpack.c.bf16 %v5185, %v5183
        %v5244 = vpack.c.bf16 %v5188, %v5186
        %v5245 = vpack.c.bf16 %v5189, %v5187
        %v5246 = vpack.c.bf16 %v5192, %v5190
        %v5247 = vpack.c.bf16 %v5193, %v5191
        %v5248 = vpack.c.bf16 %v5196, %v5194
        %v5249 = vpack.c.bf16 %v5197, %v5195
        %v5250 = vpack.c.bf16 %v5200, %v5198
        %v5251 = vpack.c.bf16 %v5201, %v5199
        %v5252 = vpack.c.bf16 %v5204, %v5202
        %v5253 = vpack.c.bf16 %v5205, %v5203
        %v5254 = vpack.c.bf16 %v5208, %v5206
        %v5255 = vpack.c.bf16 %v5209, %v5207
        %v5256 = vpack.c.bf16 %v5212, %v5210
        %v5257 = vpack.c.bf16 %v5213, %v5211
        %v5258 = vpack.c.bf16 %v5216, %v5214
        %v5259 = vpack.c.bf16 %v5217, %v5215
        %v5260 = vpack.c.bf16 %v5220, %v5218
        %v5261 = vpack.c.bf16 %v5221, %v5219
        %v5262 = vpack.c.bf16 %v5224, %v5222
        %v5263 = vpack.c.bf16 %v5225, %v5223
        %v5264 = vpack.c.bf16 %v5228, %v5226
        %v5265 = vpack.c.bf16 %v5229, %v5227
        %v5266 = vpack.c.bf16 %v5232, %v5230
        %v5267 = vpack.c.bf16 %v5233, %v5231
        %v5268 = vpack.c.bf16 %v5236, %v5234
        %v5269 = vpack.c.bf16 %v5237, %v5235
        %v5271 = vlaneseq
        %v5272 = vshrl.u32 %v5271, 7
        %v5273 = vsub.s32 0, %v5272
        %v5274 = vrot.slane %v1305, %v5273
        %v5275 = vlaneseq
        %v5276 = vshrl.u32 %v5275, 7
        %v5277 = vsub.s32 1, %v5276
        %v5278 = vrot.slane %v1305, %v5277
        %v5279 = vlaneseq
        %v5280 = vshrl.u32 %v5279, 7
        %v5281 = vsub.s32 2, %v5280
        %v5282 = vrot.slane %v1305, %v5281
        %v5283 = vlaneseq
        %v5284 = vshrl.u32 %v5283, 7
        %v5285 = vsub.s32 3, %v5284
        %v5286 = vrot.slane %v1305, %v5285
        %v5355 = vunpack.c.l.b16 %v1241
        %v5356 = vunpack.c.h.b16 %v1241
        %v5357 = vunpack.c.l.b16 %v1242
        %v5358 = vunpack.c.h.b16 %v1242
        %v5359 = vunpack.c.l.b16 %v1243
        %v5360 = vunpack.c.h.b16 %v1243
        %v5361 = vunpack.c.l.b16 %v1244
        %v5362 = vunpack.c.h.b16 %v1244
        %v5363 = vunpack.c.l.b16 %v1245
        %v5364 = vunpack.c.h.b16 %v1245
        %v5365 = vunpack.c.l.b16 %v1246
        %v5366 = vunpack.c.h.b16 %v1246
        %v5367 = vunpack.c.l.b16 %v1247
        %v5368 = vunpack.c.h.b16 %v1247
        %v5369 = vunpack.c.l.b16 %v1248
        %v5370 = vunpack.c.h.b16 %v1248
        %v5371 = vunpack.c.l.b16 %v1249
        %v5372 = vunpack.c.h.b16 %v1249
        %v5373 = vunpack.c.l.b16 %v1250
        %v5374 = vunpack.c.h.b16 %v1250
        %v5375 = vunpack.c.l.b16 %v1251
        %v5376 = vunpack.c.h.b16 %v1251
        %v5377 = vunpack.c.l.b16 %v1252
        %v5378 = vunpack.c.h.b16 %v1252
        %v5379 = vunpack.c.l.b16 %v1253
        %v5380 = vunpack.c.h.b16 %v1253
        %v5381 = vunpack.c.l.b16 %v1254
        %v5382 = vunpack.c.h.b16 %v1254
        %v5383 = vunpack.c.l.b16 %v1255
        %v5384 = vunpack.c.h.b16 %v1255
        %v5385 = vunpack.c.l.b16 %v1256
        %v5386 = vunpack.c.h.b16 %v1256
        %v5387 = vunpack.c.l.b16 %v1257
        %v5388 = vunpack.c.h.b16 %v1257
        %v5389 = vunpack.c.l.b16 %v1258
        %v5390 = vunpack.c.h.b16 %v1258
        %v5391 = vunpack.c.l.b16 %v1259
        %v5392 = vunpack.c.h.b16 %v1259
        %v5393 = vunpack.c.l.b16 %v1260
        %v5394 = vunpack.c.h.b16 %v1260
        %v5395 = vunpack.c.l.b16 %v1261
        %v5396 = vunpack.c.h.b16 %v1261
        %v5397 = vunpack.c.l.b16 %v1262
        %v5398 = vunpack.c.h.b16 %v1262
        %v5399 = vunpack.c.l.b16 %v1263
        %v5400 = vunpack.c.h.b16 %v1263
        %v5401 = vunpack.c.l.b16 %v1264
        %v5402 = vunpack.c.h.b16 %v1264
        %v5403 = vunpack.c.l.b16 %v1265
        %v5404 = vunpack.c.h.b16 %v1265
        %v5405 = vunpack.c.l.b16 %v1266
        %v5406 = vunpack.c.h.b16 %v1266
        %v5407 = vunpack.c.l.b16 %v1267
        %v5408 = vunpack.c.h.b16 %v1267
        %v5409 = vunpack.c.l.b16 %v1268
        %v5410 = vunpack.c.h.b16 %v1268
        %v5411 = vunpack.c.l.b16 %v1269
        %v5412 = vunpack.c.h.b16 %v1269
        %v5413 = vunpack.c.l.b16 %v1270
        %v5414 = vunpack.c.h.b16 %v1270
        %v5415 = vunpack.c.l.b16 %v1271
        %v5416 = vunpack.c.h.b16 %v1271
        %v5417 = vunpack.c.l.b16 %v1272
        %v5418 = vunpack.c.h.b16 %v1272
        %v5419 = vunpack.c.l.b16 %v1273
        %v5420 = vunpack.c.h.b16 %v1273
        %v5421 = vunpack.c.l.b16 %v1274
        %v5422 = vunpack.c.h.b16 %v1274
        %v5423 = vunpack.c.l.b16 %v1275
        %v5424 = vunpack.c.h.b16 %v1275
        %v5425 = vunpack.c.l.b16 %v1276
        %v5426 = vunpack.c.h.b16 %v1276
        %v5427 = vunpack.c.l.b16 %v1277
        %v5428 = vunpack.c.h.b16 %v1277
        %v5429 = vunpack.c.l.b16 %v1278
        %v5430 = vunpack.c.h.b16 %v1278
        %v5431 = vunpack.c.l.b16 %v1279
        %v5432 = vunpack.c.h.b16 %v1279
        %v5433 = vunpack.c.l.b16 %v1280
        %v5434 = vunpack.c.h.b16 %v1280
        %v5435 = vunpack.c.l.b16 %v1281
        %v5436 = vunpack.c.h.b16 %v1281
        %v5437 = vunpack.c.l.b16 %v1282
        %v5438 = vunpack.c.h.b16 %v1282
        %v5439 = vunpack.c.l.b16 %v1283
        %v5440 = vunpack.c.h.b16 %v1283
        %v5441 = vunpack.c.l.b16 %v1284
        %v5442 = vunpack.c.h.b16 %v1284
        %v5443 = vunpack.c.l.b16 %v1285
        %v5444 = vunpack.c.h.b16 %v1285
        %v5445 = vunpack.c.l.b16 %v1286
        %v5446 = vunpack.c.h.b16 %v1286
        %v5447 = vunpack.c.l.b16 %v1287
        %v5448 = vunpack.c.h.b16 %v1287
        %v5449 = vunpack.c.l.b16 %v1288
        %v5450 = vunpack.c.h.b16 %v1288
        %v5451 = vunpack.c.l.b16 %v1289
        %v5452 = vunpack.c.h.b16 %v1289
        %v5453 = vunpack.c.l.b16 %v1290
        %v5454 = vunpack.c.h.b16 %v1290
        %v5455 = vunpack.c.l.b16 %v1291
        %v5456 = vunpack.c.h.b16 %v1291
        %v5457 = vunpack.c.l.b16 %v1292
        %v5458 = vunpack.c.h.b16 %v1292
        %v5459 = vunpack.c.l.b16 %v1293
        %v5460 = vunpack.c.h.b16 %v1293
        %v5461 = vunpack.c.l.b16 %v1294
        %v5462 = vunpack.c.h.b16 %v1294
        %v5463 = vunpack.c.l.b16 %v1295
        %v5464 = vunpack.c.h.b16 %v1295
        %v5465 = vunpack.c.l.b16 %v1296
        %v5466 = vunpack.c.h.b16 %v1296
        %v5467 = vunpack.c.l.b16 %v1297
        %v5468 = vunpack.c.h.b16 %v1297
        %v5469 = vunpack.c.l.b16 %v1298
        %v5470 = vunpack.c.h.b16 %v1298
        %v5471 = vunpack.c.l.b16 %v1299
        %v5472 = vunpack.c.h.b16 %v1299
        %v5473 = vunpack.c.l.b16 %v1300
        %v5474 = vunpack.c.h.b16 %v1300
        %v5475 = vunpack.c.l.b16 %v1301
        %v5476 = vunpack.c.h.b16 %v1301
        %v5477 = vunpack.c.l.b16 %v1302
        %v5478 = vunpack.c.h.b16 %v1302
        %v5479 = vunpack.c.l.b16 %v1303
        %v5480 = vunpack.c.h.b16 %v1303
        %v5481 = vunpack.c.l.b16 %v1304
        %v5482 = vunpack.c.h.b16 %v1304
        %v5483 = vpack.c.b16 %v5359, %v5355
        %v5484 = vpack.c.b16 %v5360, %v5356
        %v5485 = vpack.c.b16 %v5361, %v5357
        %v5486 = vpack.c.b16 %v5362, %v5358
        %v5487 = vpack.c.b16 %v5367, %v5363
        %v5488 = vpack.c.b16 %v5368, %v5364
        %v5489 = vpack.c.b16 %v5369, %v5365
        %v5490 = vpack.c.b16 %v5370, %v5366
        %v5491 = vpack.c.b16 %v5375, %v5371
        %v5492 = vpack.c.b16 %v5376, %v5372
        %v5493 = vpack.c.b16 %v5377, %v5373
        %v5494 = vpack.c.b16 %v5378, %v5374
        %v5495 = vpack.c.b16 %v5383, %v5379
        %v5496 = vpack.c.b16 %v5384, %v5380
        %v5497 = vpack.c.b16 %v5385, %v5381
        %v5498 = vpack.c.b16 %v5386, %v5382
        %v5499 = vpack.c.b16 %v5391, %v5387
        %v5500 = vpack.c.b16 %v5392, %v5388
        %v5501 = vpack.c.b16 %v5393, %v5389
        %v5502 = vpack.c.b16 %v5394, %v5390
        %v5503 = vpack.c.b16 %v5399, %v5395
        %v5504 = vpack.c.b16 %v5400, %v5396
        %v5505 = vpack.c.b16 %v5401, %v5397
        %v5506 = vpack.c.b16 %v5402, %v5398
        %v5507 = vpack.c.b16 %v5407, %v5403
        %v5508 = vpack.c.b16 %v5408, %v5404
        %v5509 = vpack.c.b16 %v5409, %v5405
        %v5510 = vpack.c.b16 %v5410, %v5406
        %v5511 = vpack.c.b16 %v5415, %v5411
        %v5512 = vpack.c.b16 %v5416, %v5412
        %v5513 = vpack.c.b16 %v5417, %v5413
        %v5514 = vpack.c.b16 %v5418, %v5414
        %v5515 = vpack.c.b16 %v5423, %v5419
        %v5516 = vpack.c.b16 %v5424, %v5420
        %v5517 = vpack.c.b16 %v5425, %v5421
        %v5518 = vpack.c.b16 %v5426, %v5422
        %v5519 = vpack.c.b16 %v5431, %v5427
        %v5520 = vpack.c.b16 %v5432, %v5428
        %v5521 = vpack.c.b16 %v5433, %v5429
        %v5522 = vpack.c.b16 %v5434, %v5430
        %v5523 = vpack.c.b16 %v5439, %v5435
        %v5524 = vpack.c.b16 %v5440, %v5436
        %v5525 = vpack.c.b16 %v5441, %v5437
        %v5526 = vpack.c.b16 %v5442, %v5438
        %v5527 = vpack.c.b16 %v5447, %v5443
        %v5528 = vpack.c.b16 %v5448, %v5444
        %v5529 = vpack.c.b16 %v5449, %v5445
        %v5530 = vpack.c.b16 %v5450, %v5446
        %v5531 = vpack.c.b16 %v5455, %v5451
        %v5532 = vpack.c.b16 %v5456, %v5452
        %v5533 = vpack.c.b16 %v5457, %v5453
        %v5534 = vpack.c.b16 %v5458, %v5454
        %v5535 = vpack.c.b16 %v5463, %v5459
        %v5536 = vpack.c.b16 %v5464, %v5460
        %v5537 = vpack.c.b16 %v5465, %v5461
        %v5538 = vpack.c.b16 %v5466, %v5462
        %v5539 = vpack.c.b16 %v5471, %v5467
        %v5540 = vpack.c.b16 %v5472, %v5468
        %v5541 = vpack.c.b16 %v5473, %v5469
        %v5542 = vpack.c.b16 %v5474, %v5470
        %v5543 = vpack.c.b16 %v5479, %v5475
        %v5544 = vpack.c.b16 %v5480, %v5476
        %v5545 = vpack.c.b16 %v5481, %v5477
        %v5546 = vpack.c.b16 %v5482, %v5478
        %5611 = vmatprep.subr.bf16.mxu0 %v5512
        %5612 = vmatpush1.bf16.msra.mxu0 %v5511
        %5613 = vmatprep.subr.bf16.mxu0 %v5508
        %5614 = vmatpush1.bf16.msra.mxu0 %v5507
        %5615 = vmatprep.subr.bf16.mxu0 %v5504
        %5616 = vmatpush1.bf16.msra.mxu0 %v5503
        %5617 = vmatprep.subr.bf16.mxu0 %v5500
        %5618 = vmatpush1.bf16.msra.mxu0 %v5499
        %5619 = vmatprep.subr.bf16.mxu0 %v5496
        %5620 = vmatpush1.bf16.msra.mxu0 %v5495
        %5621 = vmatprep.subr.bf16.mxu0 %v5492
        %5622 = vmatpush1.bf16.msra.mxu0 %v5491
        %5623 = vmatprep.subr.bf16.mxu0 %v5488
        %5624 = vmatpush1.bf16.msra.mxu0 %v5487
        %5625 = vmatprep.subr.bf16.mxu0 %v5484
        %5626 = vmatpush1.bf16.msra.mxu0 %v5483
        %5627 = vmatprep.subr.bf16.mxu0 %v5544
        %5628 = vmatpush2.bf16.msra.mxu0 %v5543
        %5629 = vmatprep.subr.bf16.mxu0 %v5540
        %5630 = vmatpush2.bf16.msra.mxu0 %v5539
        %5631 = vmatprep.subr.bf16.mxu0 %v5536
        %5632 = vmatpush2.bf16.msra.mxu0 %v5535
        %5633 = vmatprep.subr.bf16.mxu0 %v5532
        %5634 = vmatpush2.bf16.msra.mxu0 %v5531
        %5635 = vmatprep.subr.bf16.mxu0 %v5528
        %5636 = vmatpush2.bf16.msra.mxu0 %v5527
        %5637 = vmatprep.subr.bf16.mxu0 %v5524
        %5638 = vmatpush2.bf16.msra.mxu0 %v5523
        %5639 = vmatprep.subr.bf16.mxu0 %v5520
        %5640 = vmatpush2.bf16.msra.mxu0 %v5519
        %5641 = vmatprep.subr.bf16.mxu0 %v5516
        %5642 = vmatpush2.bf16.msra.mxu0 %v5515
        %5643 = vmatprep.mubr.bf16.mxu0 %v5239
        %5644 = vmatmul.mubr.bf16.gmra.mxu0 %v5238
        %v5645 = vpop.f32.mrf.mxu0
        %v5646 = vadd.f32 %v5274, %v5645
        %v5647 = vpop.f32.mrf.mxu0
        %v5648 = vadd.f32 %v5278, %v5647
        %v5649 = vpop.f32.mrf.mxu0
        %v5650 = vadd.f32 %v5274, %v5649
        %v5651 = vpop.f32.mrf.mxu0
        %v5652 = vadd.f32 %v5278, %v5651
        %5653 = vmatprep.mubr.bf16.mxu0 %v5241
        %5654 = vmatmul.mubr.bf16.gmra.mxu0 %v5240
        %v5655 = vpop.f32.mrf.mxu0
        %v5656 = vadd.f32 %v5274, %v5655
        %v5657 = vpop.f32.mrf.mxu0
        %v5658 = vadd.f32 %v5278, %v5657
        %v5659 = vpop.f32.mrf.mxu0
        %v5660 = vadd.f32 %v5274, %v5659
        %v5661 = vpop.f32.mrf.mxu0
        %v5662 = vadd.f32 %v5278, %v5661
        %5663 = vmatprep.mubr.bf16.mxu0 %v5243
        %5664 = vmatmul.mubr.bf16.gmra.mxu0 %v5242
        %v5665 = vpop.f32.mrf.mxu0
        %v5666 = vadd.f32 %v5274, %v5665
        %v5667 = vpop.f32.mrf.mxu0
        %v5668 = vadd.f32 %v5278, %v5667
        %v5669 = vpop.f32.mrf.mxu0
        %v5670 = vadd.f32 %v5274, %v5669
        %v5671 = vpop.f32.mrf.mxu0
        %v5672 = vadd.f32 %v5278, %v5671
        %5673 = vmatprep.mubr.bf16.mxu0 %v5245
        %5674 = vmatmul.mubr.bf16.gmra.mxu0 %v5244
        %v5675 = vpop.f32.mrf.mxu0
        %v5676 = vadd.f32 %v5274, %v5675
        %v5677 = vpop.f32.mrf.mxu0
        %v5678 = vadd.f32 %v5278, %v5677
        %v5679 = vpop.f32.mrf.mxu0
        %v5680 = vadd.f32 %v5274, %v5679
        %v5681 = vpop.f32.mrf.mxu0
        %v5682 = vadd.f32 %v5278, %v5681
        %5683 = vmatprep.mubr.bf16.mxu0 %v5247
        %5684 = vmatmul.mubr.bf16.gmra.mxu0 %v5246
        %v5685 = vpop.f32.mrf.mxu0
        %v5686 = vadd.f32 %v5274, %v5685
        %v5687 = vpop.f32.mrf.mxu0
        %v5688 = vadd.f32 %v5278, %v5687
        %v5689 = vpop.f32.mrf.mxu0
        %v5690 = vadd.f32 %v5274, %v5689
        %v5691 = vpop.f32.mrf.mxu0
        %v5692 = vadd.f32 %v5278, %v5691
        %5693 = vmatprep.mubr.bf16.mxu0 %v5249
        %5694 = vmatmul.mubr.bf16.gmra.mxu0 %v5248
        %v5695 = vpop.f32.mrf.mxu0
        %v5696 = vadd.f32 %v5274, %v5695
        %v5697 = vpop.f32.mrf.mxu0
        %v5698 = vadd.f32 %v5278, %v5697
        %v5699 = vpop.f32.mrf.mxu0
        %v5700 = vadd.f32 %v5274, %v5699
        %v5701 = vpop.f32.mrf.mxu0
        %v5702 = vadd.f32 %v5278, %v5701
        %5703 = vmatprep.mubr.bf16.mxu0 %v5251
        %5704 = vmatmul.mubr.bf16.gmra.mxu0 %v5250
        %v5705 = vpop.f32.mrf.mxu0
        %v5706 = vadd.f32 %v5274, %v5705
        %v5707 = vpop.f32.mrf.mxu0
        %v5708 = vadd.f32 %v5278, %v5707
        %v5709 = vpop.f32.mrf.mxu0
        %v5710 = vadd.f32 %v5274, %v5709
        %v5711 = vpop.f32.mrf.mxu0
        %v5712 = vadd.f32 %v5278, %v5711
        %5713 = vmatprep.mubr.bf16.mxu0 %v5253
        %5714 = vmatmul.mubr.bf16.gmra.mxu0 %v5252
        %v5715 = vpop.f32.mrf.mxu0
        %v5716 = vadd.f32 %v5274, %v5715
        %v5717 = vpop.f32.mrf.mxu0
        %v5718 = vadd.f32 %v5278, %v5717
        %v5719 = vpop.f32.mrf.mxu0
        %v5720 = vadd.f32 %v5274, %v5719
        %v5721 = vpop.f32.mrf.mxu0
        %v5722 = vadd.f32 %v5278, %v5721
        %5723 = vmatprep.mubr.bf16.mxu0 %v5255
        %5724 = vmatmul.mubr.bf16.gmra.mxu0 %v5254
        %v5725 = vpop.f32.mrf.mxu0
        %v5726 = vadd.f32 %v5274, %v5725
        %v5727 = vpop.f32.mrf.mxu0
        %v5728 = vadd.f32 %v5278, %v5727
        %v5729 = vpop.f32.mrf.mxu0
        %v5730 = vadd.f32 %v5274, %v5729
        %v5731 = vpop.f32.mrf.mxu0
        %v5732 = vadd.f32 %v5278, %v5731
        %5733 = vmatprep.mubr.bf16.mxu0 %v5257
        %5734 = vmatmul.mubr.bf16.gmra.mxu0 %v5256
        %v5735 = vpop.f32.mrf.mxu0
        %v5736 = vadd.f32 %v5274, %v5735
        %v5737 = vpop.f32.mrf.mxu0
        %v5738 = vadd.f32 %v5278, %v5737
        %v5739 = vpop.f32.mrf.mxu0
        %v5740 = vadd.f32 %v5274, %v5739
        %v5741 = vpop.f32.mrf.mxu0
        %v5742 = vadd.f32 %v5278, %v5741
        %5743 = vmatprep.mubr.bf16.mxu0 %v5259
        %5744 = vmatmul.mubr.bf16.gmra.mxu0 %v5258
        %v5745 = vpop.f32.mrf.mxu0
        %v5746 = vadd.f32 %v5274, %v5745
        %v5747 = vpop.f32.mrf.mxu0
        %v5748 = vadd.f32 %v5278, %v5747
        %v5749 = vpop.f32.mrf.mxu0
        %v5750 = vadd.f32 %v5274, %v5749
        %v5751 = vpop.f32.mrf.mxu0
        %v5752 = vadd.f32 %v5278, %v5751
        %5753 = vmatprep.mubr.bf16.mxu0 %v5261
        %5754 = vmatmul.mubr.bf16.gmra.mxu0 %v5260
        %v5755 = vpop.f32.mrf.mxu0
        %v5756 = vadd.f32 %v5274, %v5755
        %v5757 = vpop.f32.mrf.mxu0
        %v5758 = vadd.f32 %v5278, %v5757
        %v5759 = vpop.f32.mrf.mxu0
        %v5760 = vadd.f32 %v5274, %v5759
        %v5761 = vpop.f32.mrf.mxu0
        %v5762 = vadd.f32 %v5278, %v5761
        %5763 = vmatprep.mubr.bf16.mxu0 %v5263
        %5764 = vmatmul.mubr.bf16.gmra.mxu0 %v5262
        %v5765 = vpop.f32.mrf.mxu0
        %v5766 = vadd.f32 %v5274, %v5765
        %v5767 = vpop.f32.mrf.mxu0
        %v5768 = vadd.f32 %v5278, %v5767
        %v5769 = vpop.f32.mrf.mxu0
        %v5770 = vadd.f32 %v5274, %v5769
        %v5771 = vpop.f32.mrf.mxu0
        %v5772 = vadd.f32 %v5278, %v5771
        %5773 = vmatprep.mubr.bf16.mxu0 %v5265
        %5774 = vmatmul.mubr.bf16.gmra.mxu0 %v5264
        %v5775 = vpop.f32.mrf.mxu0
        %v5776 = vadd.f32 %v5274, %v5775
        %v5777 = vpop.f32.mrf.mxu0
        %v5778 = vadd.f32 %v5278, %v5777
        %v5779 = vpop.f32.mrf.mxu0
        %v5780 = vadd.f32 %v5274, %v5779
        %v5781 = vpop.f32.mrf.mxu0
        %v5782 = vadd.f32 %v5278, %v5781
        %5783 = vmatprep.mubr.bf16.mxu0 %v5267
        %5784 = vmatmul.mubr.bf16.gmra.mxu0 %v5266
        %v5785 = vpop.f32.mrf.mxu0
        %v5786 = vadd.f32 %v5274, %v5785
        %v5787 = vpop.f32.mrf.mxu0
        %v5788 = vadd.f32 %v5278, %v5787
        %v5789 = vpop.f32.mrf.mxu0
        %v5790 = vadd.f32 %v5274, %v5789
        %v5791 = vpop.f32.mrf.mxu0
        %v5792 = vadd.f32 %v5278, %v5791
        %5793 = vmatprep.mubr.bf16.mxu0 %v5269
        %5794 = vmatmul.mubr.bf16.gmra.mxu0 %v5268
        %v5795 = vpop.f32.mrf.mxu0
        %v5796 = vadd.f32 %v5274, %v5795
        %v5797 = vpop.f32.mrf.mxu0
        %v5798 = vadd.f32 %v5278, %v5797
        %v5799 = vpop.f32.mrf.mxu0
        %v5800 = vadd.f32 %v5274, %v5799
        %v5801 = vpop.f32.mrf.mxu0
        %v5802 = vadd.f32 %v5278, %v5801
        %5803 = vdwg.mxu0
        %5804 = vmatprep.subr.bf16.mxu0 %v5514
        %5805 = vmatpush1.bf16.msra.mxu0 %v5513
        %5806 = vmatprep.subr.bf16.mxu0 %v5510
        %5807 = vmatpush1.bf16.msra.mxu0 %v5509
        %5808 = vmatprep.subr.bf16.mxu0 %v5506
        %5809 = vmatpush1.bf16.msra.mxu0 %v5505
        %5810 = vmatprep.subr.bf16.mxu0 %v5502
        %5811 = vmatpush1.bf16.msra.mxu0 %v5501
        %5812 = vmatprep.subr.bf16.mxu0 %v5498
        %5813 = vmatpush1.bf16.msra.mxu0 %v5497
        %5814 = vmatprep.subr.bf16.mxu0 %v5494
        %5815 = vmatpush1.bf16.msra.mxu0 %v5493
        %5816 = vmatprep.subr.bf16.mxu0 %v5490
        %5817 = vmatpush1.bf16.msra.mxu0 %v5489
        %5818 = vmatprep.subr.bf16.mxu0 %v5486
        %5819 = vmatpush1.bf16.msra.mxu0 %v5485
        %5820 = vmatprep.subr.bf16.mxu0 %v5546
        %5821 = vmatpush2.bf16.msra.mxu0 %v5545
        %5822 = vmatprep.subr.bf16.mxu0 %v5542
        %5823 = vmatpush2.bf16.msra.mxu0 %v5541
        %5824 = vmatprep.subr.bf16.mxu0 %v5538
        %5825 = vmatpush2.bf16.msra.mxu0 %v5537
        %5826 = vmatprep.subr.bf16.mxu0 %v5534
        %5827 = vmatpush2.bf16.msra.mxu0 %v5533
        %5828 = vmatprep.subr.bf16.mxu0 %v5530
        %5829 = vmatpush2.bf16.msra.mxu0 %v5529
        %5830 = vmatprep.subr.bf16.mxu0 %v5526
        %5831 = vmatpush2.bf16.msra.mxu0 %v5525
        %5832 = vmatprep.subr.bf16.mxu0 %v5522
        %5833 = vmatpush2.bf16.msra.mxu0 %v5521
        %5834 = vmatprep.subr.bf16.mxu0 %v5518
        %5835 = vmatpush2.bf16.msra.mxu0 %v5517
        %5836 = vmatprep.mubr.bf16.mxu0 %v5239
        %5837 = vmatmul.mubr.bf16.gmra.mxu0 %v5238
        %v5838 = vpop.f32.mrf.mxu0
        %v5839 = vadd.f32 %v5282, %v5838
        %v5840 = vpop.f32.mrf.mxu0
        %v5841 = vadd.f32 %v5286, %v5840
        %v5842 = vpop.f32.mrf.mxu0
        %v5843 = vadd.f32 %v5282, %v5842
        %v5844 = vpop.f32.mrf.mxu0
        %v5845 = vadd.f32 %v5286, %v5844
        %5846 = vmatprep.mubr.bf16.mxu0 %v5241
        %5847 = vmatmul.mubr.bf16.gmra.mxu0 %v5240
        %v5848 = vpop.f32.mrf.mxu0
        %v5849 = vadd.f32 %v5282, %v5848
        %v5850 = vpop.f32.mrf.mxu0
        %v5851 = vadd.f32 %v5286, %v5850
        %v5852 = vpop.f32.mrf.mxu0
        %v5853 = vadd.f32 %v5282, %v5852
        %v5854 = vpop.f32.mrf.mxu0
        %v5855 = vadd.f32 %v5286, %v5854
        %5856 = vmatprep.mubr.bf16.mxu0 %v5243
        %5857 = vmatmul.mubr.bf16.gmra.mxu0 %v5242
        %v5858 = vpop.f32.mrf.mxu0
        %v5859 = vadd.f32 %v5282, %v5858
        %v5860 = vpop.f32.mrf.mxu0
        %v5861 = vadd.f32 %v5286, %v5860
        %v5862 = vpop.f32.mrf.mxu0
        %v5863 = vadd.f32 %v5282, %v5862
        %v5864 = vpop.f32.mrf.mxu0
        %v5865 = vadd.f32 %v5286, %v5864
        %5866 = vmatprep.mubr.bf16.mxu0 %v5245
        %5867 = vmatmul.mubr.bf16.gmra.mxu0 %v5244
        %v5868 = vpop.f32.mrf.mxu0
        %v5869 = vadd.f32 %v5282, %v5868
        %v5870 = vpop.f32.mrf.mxu0
        %v5871 = vadd.f32 %v5286, %v5870
        %v5872 = vpop.f32.mrf.mxu0
        %v5873 = vadd.f32 %v5282, %v5872
        %v5874 = vpop.f32.mrf.mxu0
        %v5875 = vadd.f32 %v5286, %v5874
        %5876 = vmatprep.mubr.bf16.mxu0 %v5247
        %5877 = vmatmul.mubr.bf16.gmra.mxu0 %v5246
        %v5878 = vpop.f32.mrf.mxu0
        %v5879 = vadd.f32 %v5282, %v5878
        %v5880 = vpop.f32.mrf.mxu0
        %v5881 = vadd.f32 %v5286, %v5880
        %v5882 = vpop.f32.mrf.mxu0
        %v5883 = vadd.f32 %v5282, %v5882
        %v5884 = vpop.f32.mrf.mxu0
        %v5885 = vadd.f32 %v5286, %v5884
        %5886 = vmatprep.mubr.bf16.mxu0 %v5249
        %5887 = vmatmul.mubr.bf16.gmra.mxu0 %v5248
        %v5888 = vpop.f32.mrf.mxu0
        %v5889 = vadd.f32 %v5282, %v5888
        %v5890 = vpop.f32.mrf.mxu0
        %v5891 = vadd.f32 %v5286, %v5890
        %v5892 = vpop.f32.mrf.mxu0
        %v5893 = vadd.f32 %v5282, %v5892
        %v5894 = vpop.f32.mrf.mxu0
        %v5895 = vadd.f32 %v5286, %v5894
        %5896 = vmatprep.mubr.bf16.mxu0 %v5251
        %5897 = vmatmul.mubr.bf16.gmra.mxu0 %v5250
        %v5898 = vpop.f32.mrf.mxu0
        %v5899 = vadd.f32 %v5282, %v5898
        %v5900 = vpop.f32.mrf.mxu0
        %v5901 = vadd.f32 %v5286, %v5900
        %v5902 = vpop.f32.mrf.mxu0
        %v5903 = vadd.f32 %v5282, %v5902
        %v5904 = vpop.f32.mrf.mxu0
        %v5905 = vadd.f32 %v5286, %v5904
        %5906 = vmatprep.mubr.bf16.mxu0 %v5253
        %5907 = vmatmul.mubr.bf16.gmra.mxu0 %v5252
        %v5908 = vpop.f32.mrf.mxu0
        %v5909 = vadd.f32 %v5282, %v5908
        %v5910 = vpop.f32.mrf.mxu0
        %v5911 = vadd.f32 %v5286, %v5910
        %v5912 = vpop.f32.mrf.mxu0
        %v5913 = vadd.f32 %v5282, %v5912
        %v5914 = vpop.f32.mrf.mxu0
        %v5915 = vadd.f32 %v5286, %v5914
        %5916 = vmatprep.mubr.bf16.mxu0 %v5255
        %5917 = vmatmul.mubr.bf16.gmra.mxu0 %v5254
        %v5918 = vpop.f32.mrf.mxu0
        %v5919 = vadd.f32 %v5282, %v5918
        %v5920 = vpop.f32.mrf.mxu0
        %v5921 = vadd.f32 %v5286, %v5920
        %v5922 = vpop.f32.mrf.mxu0
        %v5923 = vadd.f32 %v5282, %v5922
        %v5924 = vpop.f32.mrf.mxu0
        %v5925 = vadd.f32 %v5286, %v5924
        %5926 = vmatprep.mubr.bf16.mxu0 %v5257
        %5927 = vmatmul.mubr.bf16.gmra.mxu0 %v5256
        %v5928 = vpop.f32.mrf.mxu0
        %v5929 = vadd.f32 %v5282, %v5928
        %v5930 = vpop.f32.mrf.mxu0
        %v5931 = vadd.f32 %v5286, %v5930
        %v5932 = vpop.f32.mrf.mxu0
        %v5933 = vadd.f32 %v5282, %v5932
        %v5934 = vpop.f32.mrf.mxu0
        %v5935 = vadd.f32 %v5286, %v5934
        %5936 = vmatprep.mubr.bf16.mxu0 %v5259
        %5937 = vmatmul.mubr.bf16.gmra.mxu0 %v5258
        %v5938 = vpop.f32.mrf.mxu0
        %v5939 = vadd.f32 %v5282, %v5938
        %v5940 = vpop.f32.mrf.mxu0
        %v5941 = vadd.f32 %v5286, %v5940
        %v5942 = vpop.f32.mrf.mxu0
        %v5943 = vadd.f32 %v5282, %v5942
        %v5944 = vpop.f32.mrf.mxu0
        %v5945 = vadd.f32 %v5286, %v5944
        %5946 = vmatprep.mubr.bf16.mxu0 %v5261
        %5947 = vmatmul.mubr.bf16.gmra.mxu0 %v5260
        %v5948 = vpop.f32.mrf.mxu0
        %v5949 = vadd.f32 %v5282, %v5948
        %v5950 = vpop.f32.mrf.mxu0
        %v5951 = vadd.f32 %v5286, %v5950
        %v5952 = vpop.f32.mrf.mxu0
        %v5953 = vadd.f32 %v5282, %v5952
        %v5954 = vpop.f32.mrf.mxu0
        %v5955 = vadd.f32 %v5286, %v5954
        %5956 = vmatprep.mubr.bf16.mxu0 %v5263
        %5957 = vmatmul.mubr.bf16.gmra.mxu0 %v5262
        %v5958 = vpop.f32.mrf.mxu0
        %v5959 = vadd.f32 %v5282, %v5958
        %v5960 = vpop.f32.mrf.mxu0
        %v5961 = vadd.f32 %v5286, %v5960
        %v5962 = vpop.f32.mrf.mxu0
        %v5963 = vadd.f32 %v5282, %v5962
        %v5964 = vpop.f32.mrf.mxu0
        %v5965 = vadd.f32 %v5286, %v5964
        %5966 = vmatprep.mubr.bf16.mxu0 %v5265
        %5967 = vmatmul.mubr.bf16.gmra.mxu0 %v5264
        %v5968 = vpop.f32.mrf.mxu0
        %v5969 = vadd.f32 %v5282, %v5968
        %v5970 = vpop.f32.mrf.mxu0
        %v5971 = vadd.f32 %v5286, %v5970
        %v5972 = vpop.f32.mrf.mxu0
        %v5973 = vadd.f32 %v5282, %v5972
        %v5974 = vpop.f32.mrf.mxu0
        %v5975 = vadd.f32 %v5286, %v5974
        %5976 = vmatprep.mubr.bf16.mxu0 %v5267
        %5977 = vmatmul.mubr.bf16.gmra.mxu0 %v5266
        %v5978 = vpop.f32.mrf.mxu0
        %v5979 = vadd.f32 %v5282, %v5978
        %v5980 = vpop.f32.mrf.mxu0
        %v5981 = vadd.f32 %v5286, %v5980
        %v5982 = vpop.f32.mrf.mxu0
        %v5983 = vadd.f32 %v5282, %v5982
        %v5984 = vpop.f32.mrf.mxu0
        %v5985 = vadd.f32 %v5286, %v5984
        %5986 = vmatprep.mubr.bf16.mxu0 %v5269
        %5987 = vmatmul.mubr.bf16.gmra.mxu0 %v5268
        %v5988 = vpop.f32.mrf.mxu0
        %v5989 = vadd.f32 %v5282, %v5988
        %v5990 = vpop.f32.mrf.mxu0
        %v5991 = vadd.f32 %v5286, %v5990
        %v5992 = vpop.f32.mrf.mxu0
        %v5993 = vadd.f32 %v5282, %v5992
        %v5994 = vpop.f32.mrf.mxu0
        %v5995 = vadd.f32 %v5286, %v5994
        %5996 = vdwg.mxu0
        %v5997 = vmul.f32 %v5646, 0.5
        %v5998 = vmul.f32 %v5648, 0.5
        %v5999 = vmul.f32 %v5839, 0.5
        %v6000 = vmul.f32 %v5841, 0.5
        %v6001 = vmul.f32 %v5650, 0.5
        %v6002 = vmul.f32 %v5652, 0.5
        %v6003 = vmul.f32 %v5843, 0.5
        %v6004 = vmul.f32 %v5845, 0.5
        %v6005 = vmul.f32 %v5656, 0.5
        %v6006 = vmul.f32 %v5658, 0.5
        %v6007 = vmul.f32 %v5849, 0.5
        %v6008 = vmul.f32 %v5851, 0.5
        %v6009 = vmul.f32 %v5660, 0.5
        %v6010 = vmul.f32 %v5662, 0.5
        %v6011 = vmul.f32 %v5853, 0.5
        %v6012 = vmul.f32 %v5855, 0.5
        %v6013 = vmul.f32 %v5666, 0.5
        %v6014 = vmul.f32 %v5668, 0.5
        %v6015 = vmul.f32 %v5859, 0.5
        %v6016 = vmul.f32 %v5861, 0.5
        %v6017 = vmul.f32 %v5670, 0.5
        %v6018 = vmul.f32 %v5672, 0.5
        %v6019 = vmul.f32 %v5863, 0.5
        %v6020 = vmul.f32 %v5865, 0.5
        %v6021 = vmul.f32 %v5676, 0.5
        %v6022 = vmul.f32 %v5678, 0.5
        %v6023 = vmul.f32 %v5869, 0.5
        %v6024 = vmul.f32 %v5871, 0.5
        %v6025 = vmul.f32 %v5680, 0.5
        %v6026 = vmul.f32 %v5682, 0.5
        %v6027 = vmul.f32 %v5873, 0.5
        %v6028 = vmul.f32 %v5875, 0.5
        %v6029 = vmul.f32 %v5686, 0.5
        %v6030 = vmul.f32 %v5688, 0.5
        %v6031 = vmul.f32 %v5879, 0.5
        %v6032 = vmul.f32 %v5881, 0.5
        %v6033 = vmul.f32 %v5690, 0.5
        %v6034 = vmul.f32 %v5692, 0.5
        %v6035 = vmul.f32 %v5883, 0.5
        %v6036 = vmul.f32 %v5885, 0.5
        %v6037 = vmul.f32 %v5696, 0.5
        %v6038 = vmul.f32 %v5698, 0.5
        %v6039 = vmul.f32 %v5889, 0.5
        %v6040 = vmul.f32 %v5891, 0.5
        %v6041 = vmul.f32 %v5700, 0.5
        %v6042 = vmul.f32 %v5702, 0.5
        %v6043 = vmul.f32 %v5893, 0.5
        %v6044 = vmul.f32 %v5895, 0.5
        %v6045 = vmul.f32 %v5706, 0.5
        %v6046 = vmul.f32 %v5708, 0.5
        %v6047 = vmul.f32 %v5899, 0.5
        %v6048 = vmul.f32 %v5901, 0.5
        %v6049 = vmul.f32 %v5710, 0.5
        %v6050 = vmul.f32 %v5712, 0.5
        %v6051 = vmul.f32 %v5903, 0.5
        %v6052 = vmul.f32 %v5905, 0.5
        %v6053 = vmul.f32 %v5716, 0.5
        %v6054 = vmul.f32 %v5718, 0.5
        %v6055 = vmul.f32 %v5909, 0.5
        %v6056 = vmul.f32 %v5911, 0.5
        %v6057 = vmul.f32 %v5720, 0.5
        %v6058 = vmul.f32 %v5722, 0.5
        %v6059 = vmul.f32 %v5913, 0.5
        %v6060 = vmul.f32 %v5915, 0.5
        %v6061 = vmul.f32 %v5726, 0.5
        %v6062 = vmul.f32 %v5728, 0.5
        %v6063 = vmul.f32 %v5919, 0.5
        %v6064 = vmul.f32 %v5921, 0.5
        %v6065 = vmul.f32 %v5730, 0.5
        %v6066 = vmul.f32 %v5732, 0.5
        %v6067 = vmul.f32 %v5923, 0.5
        %v6068 = vmul.f32 %v5925, 0.5
        %v6069 = vmul.f32 %v5736, 0.5
        %v6070 = vmul.f32 %v5738, 0.5
        %v6071 = vmul.f32 %v5929, 0.5
        %v6072 = vmul.f32 %v5931, 0.5
        %v6073 = vmul.f32 %v5740, 0.5
        %v6074 = vmul.f32 %v5742, 0.5
        %v6075 = vmul.f32 %v5933, 0.5
        %v6076 = vmul.f32 %v5935, 0.5
        %v6077 = vmul.f32 %v5746, 0.5
        %v6078 = vmul.f32 %v5748, 0.5
        %v6079 = vmul.f32 %v5939, 0.5
        %v6080 = vmul.f32 %v5941, 0.5
        %v6081 = vmul.f32 %v5750, 0.5
        %v6082 = vmul.f32 %v5752, 0.5
        %v6083 = vmul.f32 %v5943, 0.5
        %v6084 = vmul.f32 %v5945, 0.5
        %v6085 = vmul.f32 %v5756, 0.5
        %v6086 = vmul.f32 %v5758, 0.5
        %v6087 = vmul.f32 %v5949, 0.5
        %v6088 = vmul.f32 %v5951, 0.5
        %v6089 = vmul.f32 %v5760, 0.5
        %v6090 = vmul.f32 %v5762, 0.5
        %v6091 = vmul.f32 %v5953, 0.5
        %v6092 = vmul.f32 %v5955, 0.5
        %v6093 = vmul.f32 %v5766, 0.5
        %v6094 = vmul.f32 %v5768, 0.5
        %v6095 = vmul.f32 %v5959, 0.5
        %v6096 = vmul.f32 %v5961, 0.5
        %v6097 = vmul.f32 %v5770, 0.5
        %v6098 = vmul.f32 %v5772, 0.5
        %v6099 = vmul.f32 %v5963, 0.5
        %v6100 = vmul.f32 %v5965, 0.5
        %v6101 = vmul.f32 %v5776, 0.5
        %v6102 = vmul.f32 %v5778, 0.5
        %v6103 = vmul.f32 %v5969, 0.5
        %v6104 = vmul.f32 %v5971, 0.5
        %v6105 = vmul.f32 %v5780, 0.5
        %v6106 = vmul.f32 %v5782, 0.5
        %v6107 = vmul.f32 %v5973, 0.5
        %v6108 = vmul.f32 %v5975, 0.5
        %v6109 = vmul.f32 %v5786, 0.5
        %v6110 = vmul.f32 %v5788, 0.5
        %v6111 = vmul.f32 %v5979, 0.5
        %v6112 = vmul.f32 %v5981, 0.5
        %v6113 = vmul.f32 %v5790, 0.5
        %v6114 = vmul.f32 %v5792, 0.5
        %v6115 = vmul.f32 %v5983, 0.5
        %v6116 = vmul.f32 %v5985, 0.5
        %v6117 = vmul.f32 %v5796, 0.5
        %v6118 = vmul.f32 %v5798, 0.5
        %v6119 = vmul.f32 %v5989, 0.5
        %v6120 = vmul.f32 %v5991, 0.5
        %v6121 = vmul.f32 %v5800, 0.5
        %v6122 = vmul.f32 %v5802, 0.5
        %v6123 = vmul.f32 %v5993, 0.5
        %v6124 = vmul.f32 %v5995, 0.5
        %v6125 = vmul.f32 %v5646, 0.044715
        %v6126 = vmul.f32 %v5648, 0.044715
        %v6127 = vmul.f32 %v5839, 0.044715
        %v6128 = vmul.f32 %v5841, 0.044715
        %v6129 = vmul.f32 %v5650, 0.044715
        %v6130 = vmul.f32 %v5652, 0.044715
        %v6131 = vmul.f32 %v5843, 0.044715
        %v6132 = vmul.f32 %v5845, 0.044715
        %v6133 = vmul.f32 %v5656, 0.044715
        %v6134 = vmul.f32 %v5658, 0.044715
        %v6135 = vmul.f32 %v5849, 0.044715
        %v6136 = vmul.f32 %v5851, 0.044715
        %v6137 = vmul.f32 %v5660, 0.044715
        %v6138 = vmul.f32 %v5662, 0.044715
        %v6139 = vmul.f32 %v5853, 0.044715
        %v6140 = vmul.f32 %v5855, 0.044715
        %v6141 = vmul.f32 %v5666, 0.044715
        %v6142 = vmul.f32 %v5668, 0.044715
        %v6143 = vmul.f32 %v5859, 0.044715
        %v6144 = vmul.f32 %v5861, 0.044715
        %v6145 = vmul.f32 %v5670, 0.044715
        %v6146 = vmul.f32 %v5672, 0.044715
        %v6147 = vmul.f32 %v5863, 0.044715
        %v6148 = vmul.f32 %v5865, 0.044715
        %v6149 = vmul.f32 %v5676, 0.044715
        %v6150 = vmul.f32 %v5678, 0.044715
        %v6151 = vmul.f32 %v5869, 0.044715
        %v6152 = vmul.f32 %v5871, 0.044715
        %v6153 = vmul.f32 %v5680, 0.044715
        %v6154 = vmul.f32 %v5682, 0.044715
        %v6155 = vmul.f32 %v5873, 0.044715
        %v6156 = vmul.f32 %v5875, 0.044715
        %v6157 = vmul.f32 %v5686, 0.044715
        %v6158 = vmul.f32 %v5688, 0.044715
        %v6159 = vmul.f32 %v5879, 0.044715
        %v6160 = vmul.f32 %v5881, 0.044715
        %v6161 = vmul.f32 %v5690, 0.044715
        %v6162 = vmul.f32 %v5692, 0.044715
        %v6163 = vmul.f32 %v5883, 0.044715
        %v6164 = vmul.f32 %v5885, 0.044715
        %v6165 = vmul.f32 %v5696, 0.044715
        %v6166 = vmul.f32 %v5698, 0.044715
        %v6167 = vmul.f32 %v5889, 0.044715
        %v6168 = vmul.f32 %v5891, 0.044715
        %v6169 = vmul.f32 %v5700, 0.044715
        %v6170 = vmul.f32 %v5702, 0.044715
        %v6171 = vmul.f32 %v5893, 0.044715
        %v6172 = vmul.f32 %v5895, 0.044715
        %v6173 = vmul.f32 %v5706, 0.044715
        %v6174 = vmul.f32 %v5708, 0.044715
        %v6175 = vmul.f32 %v5899, 0.044715
        %v6176 = vmul.f32 %v5901, 0.044715
        %v6177 = vmul.f32 %v5710, 0.044715
        %v6178 = vmul.f32 %v5712, 0.044715
        %v6179 = vmul.f32 %v5903, 0.044715
        %v6180 = vmul.f32 %v5905, 0.044715
        %v6181 = vmul.f32 %v5716, 0.044715
        %v6182 = vmul.f32 %v5718, 0.044715
        %v6183 = vmul.f32 %v5909, 0.044715
        %v6184 = vmul.f32 %v5911, 0.044715
        %v6185 = vmul.f32 %v5720, 0.044715
        %v6186 = vmul.f32 %v5722, 0.044715
        %v6187 = vmul.f32 %v5913, 0.044715
        %v6188 = vmul.f32 %v5915, 0.044715
        %v6189 = vmul.f32 %v5726, 0.044715
        %v6190 = vmul.f32 %v5728, 0.044715
        %v6191 = vmul.f32 %v5919, 0.044715
        %v6192 = vmul.f32 %v5921, 0.044715
        %v6193 = vmul.f32 %v5730, 0.044715
        %v6194 = vmul.f32 %v5732, 0.044715
        %v6195 = vmul.f32 %v5923, 0.044715
        %v6196 = vmul.f32 %v5925, 0.044715
        %v6197 = vmul.f32 %v5736, 0.044715
        %v6198 = vmul.f32 %v5738, 0.044715
        %v6199 = vmul.f32 %v5929, 0.044715
        %v6200 = vmul.f32 %v5931, 0.044715
        %v6201 = vmul.f32 %v5740, 0.044715
        %v6202 = vmul.f32 %v5742, 0.044715
        %v6203 = vmul.f32 %v5933, 0.044715
        %v6204 = vmul.f32 %v5935, 0.044715
        %v6205 = vmul.f32 %v5746, 0.044715
        %v6206 = vmul.f32 %v5748, 0.044715
        %v6207 = vmul.f32 %v5939, 0.044715
        %v6208 = vmul.f32 %v5941, 0.044715
        %v6209 = vmul.f32 %v5750, 0.044715
        %v6210 = vmul.f32 %v5752, 0.044715
        %v6211 = vmul.f32 %v5943, 0.044715
        %v6212 = vmul.f32 %v5945, 0.044715
        %v6213 = vmul.f32 %v5756, 0.044715
        %v6214 = vmul.f32 %v5758, 0.044715
        %v6215 = vmul.f32 %v5949, 0.044715
        %v6216 = vmul.f32 %v5951, 0.044715
        %v6217 = vmul.f32 %v5760, 0.044715
        %v6218 = vmul.f32 %v5762, 0.044715
        %v6219 = vmul.f32 %v5953, 0.044715
        %v6220 = vmul.f32 %v5955, 0.044715
        %v6221 = vmul.f32 %v5766, 0.044715
        %v6222 = vmul.f32 %v5768, 0.044715
        %v6223 = vmul.f32 %v5959, 0.044715
        %v6224 = vmul.f32 %v5961, 0.044715
        %v6225 = vmul.f32 %v5770, 0.044715
        %v6226 = vmul.f32 %v5772, 0.044715
        %v6227 = vmul.f32 %v5963, 0.044715
        %v6228 = vmul.f32 %v5965, 0.044715
        %v6229 = vmul.f32 %v5776, 0.044715
        %v6230 = vmul.f32 %v5778, 0.044715
        %v6231 = vmul.f32 %v5969, 0.044715
        %v6232 = vmul.f32 %v5971, 0.044715
        %v6233 = vmul.f32 %v5780, 0.044715
        %v6234 = vmul.f32 %v5782, 0.044715
        %v6235 = vmul.f32 %v5973, 0.044715
        %v6236 = vmul.f32 %v5975, 0.044715
        %v6237 = vmul.f32 %v5786, 0.044715
        %v6238 = vmul.f32 %v5788, 0.044715
        %v6239 = vmul.f32 %v5979, 0.044715
        %v6240 = vmul.f32 %v5981, 0.044715
        %v6241 = vmul.f32 %v5790, 0.044715
        %v6242 = vmul.f32 %v5792, 0.044715
        %v6243 = vmul.f32 %v5983, 0.044715
        %v6244 = vmul.f32 %v5985, 0.044715
        %v6245 = vmul.f32 %v5796, 0.044715
        %v6246 = vmul.f32 %v5798, 0.044715
        %v6247 = vmul.f32 %v5989, 0.044715
        %v6248 = vmul.f32 %v5991, 0.044715
        %v6249 = vmul.f32 %v5800, 0.044715
        %v6250 = vmul.f32 %v5802, 0.044715
        %v6251 = vmul.f32 %v5993, 0.044715
        %v6252 = vmul.f32 %v5995, 0.044715
        %v6253 = vmul.f32 %v6125, %v5646
        %v6254 = vmul.f32 %v6126, %v5648
        %v6255 = vmul.f32 %v6127, %v5839
        %v6256 = vmul.f32 %v6128, %v5841
        %v6257 = vmul.f32 %v6129, %v5650
        %v6258 = vmul.f32 %v6130, %v5652
        %v6259 = vmul.f32 %v6131, %v5843
        %v6260 = vmul.f32 %v6132, %v5845
        %v6261 = vmul.f32 %v6133, %v5656
        %v6262 = vmul.f32 %v6134, %v5658
        %v6263 = vmul.f32 %v6135, %v5849
        %v6264 = vmul.f32 %v6136, %v5851
        %v6265 = vmul.f32 %v6137, %v5660
        %v6266 = vmul.f32 %v6138, %v5662
        %v6267 = vmul.f32 %v6139, %v5853
        %v6268 = vmul.f32 %v6140, %v5855
        %v6269 = vmul.f32 %v6141, %v5666
        %v6270 = vmul.f32 %v6142, %v5668
        %v6271 = vmul.f32 %v6143, %v5859
        %v6272 = vmul.f32 %v6144, %v5861
        %v6273 = vmul.f32 %v6145, %v5670
        %v6274 = vmul.f32 %v6146, %v5672
        %v6275 = vmul.f32 %v6147, %v5863
        %v6276 = vmul.f32 %v6148, %v5865
        %v6277 = vmul.f32 %v6149, %v5676
        %v6278 = vmul.f32 %v6150, %v5678
        %v6279 = vmul.f32 %v6151, %v5869
        %v6280 = vmul.f32 %v6152, %v5871
        %v6281 = vmul.f32 %v6153, %v5680
        %v6282 = vmul.f32 %v6154, %v5682
        %v6283 = vmul.f32 %v6155, %v5873
        %v6284 = vmul.f32 %v6156, %v5875
        %v6285 = vmul.f32 %v6157, %v5686
        %v6286 = vmul.f32 %v6158, %v5688
        %v6287 = vmul.f32 %v6159, %v5879
        %v6288 = vmul.f32 %v6160, %v5881
        %v6289 = vmul.f32 %v6161, %v5690
        %v6290 = vmul.f32 %v6162, %v5692
        %v6291 = vmul.f32 %v6163, %v5883
        %v6292 = vmul.f32 %v6164, %v5885
        %v6293 = vmul.f32 %v6165, %v5696
        %v6294 = vmul.f32 %v6166, %v5698
        %v6295 = vmul.f32 %v6167, %v5889
        %v6296 = vmul.f32 %v6168, %v5891
        %v6297 = vmul.f32 %v6169, %v5700
        %v6298 = vmul.f32 %v6170, %v5702
        %v6299 = vmul.f32 %v6171, %v5893
        %v6300 = vmul.f32 %v6172, %v5895
        %v6301 = vmul.f32 %v6173, %v5706
        %v6302 = vmul.f32 %v6174, %v5708
        %v6303 = vmul.f32 %v6175, %v5899
        %v6304 = vmul.f32 %v6176, %v5901
        %v6305 = vmul.f32 %v6177, %v5710
        %v6306 = vmul.f32 %v6178, %v5712
        %v6307 = vmul.f32 %v6179, %v5903
        %v6308 = vmul.f32 %v6180, %v5905
        %v6309 = vmul.f32 %v6181, %v5716
        %v6310 = vmul.f32 %v6182, %v5718
        %v6311 = vmul.f32 %v6183, %v5909
        %v6312 = vmul.f32 %v6184, %v5911
        %v6313 = vmul.f32 %v6185, %v5720
        %v6314 = vmul.f32 %v6186, %v5722
        %v6315 = vmul.f32 %v6187, %v5913
        %v6316 = vmul.f32 %v6188, %v5915
        %v6317 = vmul.f32 %v6189, %v5726
        %v6318 = vmul.f32 %v6190, %v5728
        %v6319 = vmul.f32 %v6191, %v5919
        %v6320 = vmul.f32 %v6192, %v5921
        %v6321 = vmul.f32 %v6193, %v5730
        %v6322 = vmul.f32 %v6194, %v5732
        %v6323 = vmul.f32 %v6195, %v5923
        %v6324 = vmul.f32 %v6196, %v5925
        %v6325 = vmul.f32 %v6197, %v5736
        %v6326 = vmul.f32 %v6198, %v5738
        %v6327 = vmul.f32 %v6199, %v5929
        %v6328 = vmul.f32 %v6200, %v5931
        %v6329 = vmul.f32 %v6201, %v5740
        %v6330 = vmul.f32 %v6202, %v5742
        %v6331 = vmul.f32 %v6203, %v5933
        %v6332 = vmul.f32 %v6204, %v5935
        %v6333 = vmul.f32 %v6205, %v5746
        %v6334 = vmul.f32 %v6206, %v5748
        %v6335 = vmul.f32 %v6207, %v5939
        %v6336 = vmul.f32 %v6208, %v5941
        %v6337 = vmul.f32 %v6209, %v5750
        %v6338 = vmul.f32 %v6210, %v5752
        %v6339 = vmul.f32 %v6211, %v5943
        %v6340 = vmul.f32 %v6212, %v5945
        %v6341 = vmul.f32 %v6213, %v5756
        %v6342 = vmul.f32 %v6214, %v5758
        %v6343 = vmul.f32 %v6215, %v5949
        %v6344 = vmul.f32 %v6216, %v5951
        %v6345 = vmul.f32 %v6217, %v5760
        %v6346 = vmul.f32 %v6218, %v5762
        %v6347 = vmul.f32 %v6219, %v5953
        %v6348 = vmul.f32 %v6220, %v5955
        %v6349 = vmul.f32 %v6221, %v5766
        %v6350 = vmul.f32 %v6222, %v5768
        %v6351 = vmul.f32 %v6223, %v5959
        %v6352 = vmul.f32 %v6224, %v5961
        %v6353 = vmul.f32 %v6225, %v5770
        %v6354 = vmul.f32 %v6226, %v5772
        %v6355 = vmul.f32 %v6227, %v5963
        %v6356 = vmul.f32 %v6228, %v5965
        %v6357 = vmul.f32 %v6229, %v5776
        %v6358 = vmul.f32 %v6230, %v5778
        %v6359 = vmul.f32 %v6231, %v5969
        %v6360 = vmul.f32 %v6232, %v5971
        %v6361 = vmul.f32 %v6233, %v5780
        %v6362 = vmul.f32 %v6234, %v5782
        %v6363 = vmul.f32 %v6235, %v5973
        %v6364 = vmul.f32 %v6236, %v5975
        %v6365 = vmul.f32 %v6237, %v5786
        %v6366 = vmul.f32 %v6238, %v5788
        %v6367 = vmul.f32 %v6239, %v5979
        %v6368 = vmul.f32 %v6240, %v5981
        %v6369 = vmul.f32 %v6241, %v5790
        %v6370 = vmul.f32 %v6242, %v5792
        %v6371 = vmul.f32 %v6243, %v5983
        %v6372 = vmul.f32 %v6244, %v5985
        %v6373 = vmul.f32 %v6245, %v5796
        %v6374 = vmul.f32 %v6246, %v5798
        %v6375 = vmul.f32 %v6247, %v5989
        %v6376 = vmul.f32 %v6248, %v5991
        %v6377 = vmul.f32 %v6249, %v5800
        %v6378 = vmul.f32 %v6250, %v5802
        %v6379 = vmul.f32 %v6251, %v5993
        %v6380 = vmul.f32 %v6252, %v5995
        %v6381 = vmul.f32 %v6253, %v5646
        %v6382 = vmul.f32 %v6254, %v5648
        %v6383 = vmul.f32 %v6255, %v5839
        %v6384 = vmul.f32 %v6256, %v5841
        %v6385 = vmul.f32 %v6257, %v5650
        %v6386 = vmul.f32 %v6258, %v5652
        %v6387 = vmul.f32 %v6259, %v5843
        %v6388 = vmul.f32 %v6260, %v5845
        %v6389 = vmul.f32 %v6261, %v5656
        %v6390 = vmul.f32 %v6262, %v5658
        %v6391 = vmul.f32 %v6263, %v5849
        %v6392 = vmul.f32 %v6264, %v5851
        %v6393 = vmul.f32 %v6265, %v5660
        %v6394 = vmul.f32 %v6266, %v5662
        %v6395 = vmul.f32 %v6267, %v5853
        %v6396 = vmul.f32 %v6268, %v5855
        %v6397 = vmul.f32 %v6269, %v5666
        %v6398 = vmul.f32 %v6270, %v5668
        %v6399 = vmul.f32 %v6271, %v5859
        %v6400 = vmul.f32 %v6272, %v5861
        %v6401 = vmul.f32 %v6273, %v5670
        %v6402 = vmul.f32 %v6274, %v5672
        %v6403 = vmul.f32 %v6275, %v5863
        %v6404 = vmul.f32 %v6276, %v5865
        %v6405 = vmul.f32 %v6277, %v5676
        %v6406 = vmul.f32 %v6278, %v5678
        %v6407 = vmul.f32 %v6279, %v5869
        %v6408 = vmul.f32 %v6280, %v5871
        %v6409 = vmul.f32 %v6281, %v5680
        %v6410 = vmul.f32 %v6282, %v5682
        %v6411 = vmul.f32 %v6283, %v5873
        %v6412 = vmul.f32 %v6284, %v5875
        %v6413 = vmul.f32 %v6285, %v5686
        %v6414 = vmul.f32 %v6286, %v5688
        %v6415 = vmul.f32 %v6287, %v5879
        %v6416 = vmul.f32 %v6288, %v5881
        %v6417 = vmul.f32 %v6289, %v5690
        %v6418 = vmul.f32 %v6290, %v5692
        %v6419 = vmul.f32 %v6291, %v5883
        %v6420 = vmul.f32 %v6292, %v5885
        %v6421 = vmul.f32 %v6293, %v5696
        %v6422 = vmul.f32 %v6294, %v5698
        %v6423 = vmul.f32 %v6295, %v5889
        %v6424 = vmul.f32 %v6296, %v5891
        %v6425 = vmul.f32 %v6297, %v5700
        %v6426 = vmul.f32 %v6298, %v5702
        %v6427 = vmul.f32 %v6299, %v5893
        %v6428 = vmul.f32 %v6300, %v5895
        %v6429 = vmul.f32 %v6301, %v5706
        %v6430 = vmul.f32 %v6302, %v5708
        %v6431 = vmul.f32 %v6303, %v5899
        %v6432 = vmul.f32 %v6304, %v5901
        %v6433 = vmul.f32 %v6305, %v5710
        %v6434 = vmul.f32 %v6306, %v5712
        %v6435 = vmul.f32 %v6307, %v5903
        %v6436 = vmul.f32 %v6308, %v5905
        %v6437 = vmul.f32 %v6309, %v5716
        %v6438 = vmul.f32 %v6310, %v5718
        %v6439 = vmul.f32 %v6311, %v5909
        %v6440 = vmul.f32 %v6312, %v5911
        %v6441 = vmul.f32 %v6313, %v5720
        %v6442 = vmul.f32 %v6314, %v5722
        %v6443 = vmul.f32 %v6315, %v5913
        %v6444 = vmul.f32 %v6316, %v5915
        %v6445 = vmul.f32 %v6317, %v5726
        %v6446 = vmul.f32 %v6318, %v5728
        %v6447 = vmul.f32 %v6319, %v5919
        %v6448 = vmul.f32 %v6320, %v5921
        %v6449 = vmul.f32 %v6321, %v5730
        %v6450 = vmul.f32 %v6322, %v5732
        %v6451 = vmul.f32 %v6323, %v5923
        %v6452 = vmul.f32 %v6324, %v5925
        %v6453 = vmul.f32 %v6325, %v5736
        %v6454 = vmul.f32 %v6326, %v5738
        %v6455 = vmul.f32 %v6327, %v5929
        %v6456 = vmul.f32 %v6328, %v5931
        %v6457 = vmul.f32 %v6329, %v5740
        %v6458 = vmul.f32 %v6330, %v5742
        %v6459 = vmul.f32 %v6331, %v5933
        %v6460 = vmul.f32 %v6332, %v5935
        %v6461 = vmul.f32 %v6333, %v5746
        %v6462 = vmul.f32 %v6334, %v5748
        %v6463 = vmul.f32 %v6335, %v5939
        %v6464 = vmul.f32 %v6336, %v5941
        %v6465 = vmul.f32 %v6337, %v5750
        %v6466 = vmul.f32 %v6338, %v5752
        %v6467 = vmul.f32 %v6339, %v5943
        %v6468 = vmul.f32 %v6340, %v5945
        %v6469 = vmul.f32 %v6341, %v5756
        %v6470 = vmul.f32 %v6342, %v5758
        %v6471 = vmul.f32 %v6343, %v5949
        %v6472 = vmul.f32 %v6344, %v5951
        %v6473 = vmul.f32 %v6345, %v5760
        %v6474 = vmul.f32 %v6346, %v5762
        %v6475 = vmul.f32 %v6347, %v5953
        %v6476 = vmul.f32 %v6348, %v5955
        %v6477 = vmul.f32 %v6349, %v5766
        %v6478 = vmul.f32 %v6350, %v5768
        %v6479 = vmul.f32 %v6351, %v5959
        %v6480 = vmul.f32 %v6352, %v5961
        %v6481 = vmul.f32 %v6353, %v5770
        %v6482 = vmul.f32 %v6354, %v5772
        %v6483 = vmul.f32 %v6355, %v5963
        %v6484 = vmul.f32 %v6356, %v5965
        %v6485 = vmul.f32 %v6357, %v5776
        %v6486 = vmul.f32 %v6358, %v5778
        %v6487 = vmul.f32 %v6359, %v5969
        %v6488 = vmul.f32 %v6360, %v5971
        %v6489 = vmul.f32 %v6361, %v5780
        %v6490 = vmul.f32 %v6362, %v5782
        %v6491 = vmul.f32 %v6363, %v5973
        %v6492 = vmul.f32 %v6364, %v5975
        %v6493 = vmul.f32 %v6365, %v5786
        %v6494 = vmul.f32 %v6366, %v5788
        %v6495 = vmul.f32 %v6367, %v5979
        %v6496 = vmul.f32 %v6368, %v5981
        %v6497 = vmul.f32 %v6369, %v5790
        %v6498 = vmul.f32 %v6370, %v5792
        %v6499 = vmul.f32 %v6371, %v5983
        %v6500 = vmul.f32 %v6372, %v5985
        %v6501 = vmul.f32 %v6373, %v5796
        %v6502 = vmul.f32 %v6374, %v5798
        %v6503 = vmul.f32 %v6375, %v5989
        %v6504 = vmul.f32 %v6376, %v5991
        %v6505 = vmul.f32 %v6377, %v5800
        %v6506 = vmul.f32 %v6378, %v5802
        %v6507 = vmul.f32 %v6379, %v5993
        %v6508 = vmul.f32 %v6380, %v5995
        %v6509 = vadd.f32 %v5646, %v6381
        %v6510 = vadd.f32 %v5648, %v6382
        %v6511 = vadd.f32 %v5839, %v6383
        %v6512 = vadd.f32 %v5841, %v6384
        %v6513 = vadd.f32 %v5650, %v6385
        %v6514 = vadd.f32 %v5652, %v6386
        %v6515 = vadd.f32 %v5843, %v6387
        %v6516 = vadd.f32 %v5845, %v6388
        %v6517 = vadd.f32 %v5656, %v6389
        %v6518 = vadd.f32 %v5658, %v6390
        %v6519 = vadd.f32 %v5849, %v6391
        %v6520 = vadd.f32 %v5851, %v6392
        %v6521 = vadd.f32 %v5660, %v6393
        %v6522 = vadd.f32 %v5662, %v6394
        %v6523 = vadd.f32 %v5853, %v6395
        %v6524 = vadd.f32 %v5855, %v6396
        %v6525 = vadd.f32 %v5666, %v6397
        %v6526 = vadd.f32 %v5668, %v6398
        %v6527 = vadd.f32 %v5859, %v6399
        %v6528 = vadd.f32 %v5861, %v6400
        %v6529 = vadd.f32 %v5670, %v6401
        %v6530 = vadd.f32 %v5672, %v6402
        %v6531 = vadd.f32 %v5863, %v6403
        %v6532 = vadd.f32 %v5865, %v6404
        %v6533 = vadd.f32 %v5676, %v6405
        %v6534 = vadd.f32 %v5678, %v6406
        %v6535 = vadd.f32 %v5869, %v6407
        %v6536 = vadd.f32 %v5871, %v6408
        %v6537 = vadd.f32 %v5680, %v6409
        %v6538 = vadd.f32 %v5682, %v6410
        %v6539 = vadd.f32 %v5873, %v6411
        %v6540 = vadd.f32 %v5875, %v6412
        %v6541 = vadd.f32 %v5686, %v6413
        %v6542 = vadd.f32 %v5688, %v6414
        %v6543 = vadd.f32 %v5879, %v6415
        %v6544 = vadd.f32 %v5881, %v6416
        %v6545 = vadd.f32 %v5690, %v6417
        %v6546 = vadd.f32 %v5692, %v6418
        %v6547 = vadd.f32 %v5883, %v6419
        %v6548 = vadd.f32 %v5885, %v6420
        %v6549 = vadd.f32 %v5696, %v6421
        %v6550 = vadd.f32 %v5698, %v6422
        %v6551 = vadd.f32 %v5889, %v6423
        %v6552 = vadd.f32 %v5891, %v6424
        %v6553 = vadd.f32 %v5700, %v6425
        %v6554 = vadd.f32 %v5702, %v6426
        %v6555 = vadd.f32 %v5893, %v6427
        %v6556 = vadd.f32 %v5895, %v6428
        %v6557 = vadd.f32 %v5706, %v6429
        %v6558 = vadd.f32 %v5708, %v6430
        %v6559 = vadd.f32 %v5899, %v6431
        %v6560 = vadd.f32 %v5901, %v6432
        %v6561 = vadd.f32 %v5710, %v6433
        %v6562 = vadd.f32 %v5712, %v6434
        %v6563 = vadd.f32 %v5903, %v6435
        %v6564 = vadd.f32 %v5905, %v6436
        %v6565 = vadd.f32 %v5716, %v6437
        %v6566 = vadd.f32 %v5718, %v6438
        %v6567 = vadd.f32 %v5909, %v6439
        %v6568 = vadd.f32 %v5911, %v6440
        %v6569 = vadd.f32 %v5720, %v6441
        %v6570 = vadd.f32 %v5722, %v6442
        %v6571 = vadd.f32 %v5913, %v6443
        %v6572 = vadd.f32 %v5915, %v6444
        %v6573 = vadd.f32 %v5726, %v6445
        %v6574 = vadd.f32 %v5728, %v6446
        %v6575 = vadd.f32 %v5919, %v6447
        %v6576 = vadd.f32 %v5921, %v6448
        %v6577 = vadd.f32 %v5730, %v6449
        %v6578 = vadd.f32 %v5732, %v6450
        %v6579 = vadd.f32 %v5923, %v6451
        %v6580 = vadd.f32 %v5925, %v6452
        %v6581 = vadd.f32 %v5736, %v6453
        %v6582 = vadd.f32 %v5738, %v6454
        %v6583 = vadd.f32 %v5929, %v6455
        %v6584 = vadd.f32 %v5931, %v6456
        %v6585 = vadd.f32 %v5740, %v6457
        %v6586 = vadd.f32 %v5742, %v6458
        %v6587 = vadd.f32 %v5933, %v6459
        %v6588 = vadd.f32 %v5935, %v6460
        %v6589 = vadd.f32 %v5746, %v6461
        %v6590 = vadd.f32 %v5748, %v6462
        %v6591 = vadd.f32 %v5939, %v6463
        %v6592 = vadd.f32 %v5941, %v6464
        %v6593 = vadd.f32 %v5750, %v6465
        %v6594 = vadd.f32 %v5752, %v6466
        %v6595 = vadd.f32 %v5943, %v6467
        %v6596 = vadd.f32 %v5945, %v6468
        %v6597 = vadd.f32 %v5756, %v6469
        %v6598 = vadd.f32 %v5758, %v6470
        %v6599 = vadd.f32 %v5949, %v6471
        %v6600 = vadd.f32 %v5951, %v6472
        %v6601 = vadd.f32 %v5760, %v6473
        %v6602 = vadd.f32 %v5762, %v6474
        %v6603 = vadd.f32 %v5953, %v6475
        %v6604 = vadd.f32 %v5955, %v6476
        %v6605 = vadd.f32 %v5766, %v6477
        %v6606 = vadd.f32 %v5768, %v6478
        %v6607 = vadd.f32 %v5959, %v6479
        %v6608 = vadd.f32 %v5961, %v6480
        %v6609 = vadd.f32 %v5770, %v6481
        %v6610 = vadd.f32 %v5772, %v6482
        %v6611 = vadd.f32 %v5963, %v6483
        %v6612 = vadd.f32 %v5965, %v6484
        %v6613 = vadd.f32 %v5776, %v6485
        %v6614 = vadd.f32 %v5778, %v6486
        %v6615 = vadd.f32 %v5969, %v6487
        %v6616 = vadd.f32 %v5971, %v6488
        %v6617 = vadd.f32 %v5780, %v6489
        %v6618 = vadd.f32 %v5782, %v6490
        %v6619 = vadd.f32 %v5973, %v6491
        %v6620 = vadd.f32 %v5975, %v6492
        %v6621 = vadd.f32 %v5786, %v6493
        %v6622 = vadd.f32 %v5788, %v6494
        %v6623 = vadd.f32 %v5979, %v6495
        %v6624 = vadd.f32 %v5981, %v6496
        %v6625 = vadd.f32 %v5790, %v6497
        %v6626 = vadd.f32 %v5792, %v6498
        %v6627 = vadd.f32 %v5983, %v6499
        %v6628 = vadd.f32 %v5985, %v6500
        %v6629 = vadd.f32 %v5796, %v6501
        %v6630 = vadd.f32 %v5798, %v6502
        %v6631 = vadd.f32 %v5989, %v6503
        %v6632 = vadd.f32 %v5991, %v6504
        %v6633 = vadd.f32 %v5800, %v6505
        %v6634 = vadd.f32 %v5802, %v6506
        %v6635 = vadd.f32 %v5993, %v6507
        %v6636 = vadd.f32 %v5995, %v6508
        %v6637 = vmul.f32 %v6509, 0.7978846
        %v6638 = vmul.f32 %v6510, 0.7978846
        %v6639 = vmul.f32 %v6511, 0.7978846
        %v6640 = vmul.f32 %v6512, 0.7978846
        %v6641 = vmul.f32 %v6513, 0.7978846
        %v6642 = vmul.f32 %v6514, 0.7978846
        %v6643 = vmul.f32 %v6515, 0.7978846
        %v6644 = vmul.f32 %v6516, 0.7978846
        %v6645 = vmul.f32 %v6517, 0.7978846
        %v6646 = vmul.f32 %v6518, 0.7978846
        %v6647 = vmul.f32 %v6519, 0.7978846
        %v6648 = vmul.f32 %v6520, 0.7978846
        %v6649 = vmul.f32 %v6521, 0.7978846
        %v6650 = vmul.f32 %v6522, 0.7978846
        %v6651 = vmul.f32 %v6523, 0.7978846
        %v6652 = vmul.f32 %v6524, 0.7978846
        %v6653 = vmul.f32 %v6525, 0.7978846
        %v6654 = vmul.f32 %v6526, 0.7978846
        %v6655 = vmul.f32 %v6527, 0.7978846
        %v6656 = vmul.f32 %v6528, 0.7978846
        %v6657 = vmul.f32 %v6529, 0.7978846
        %v6658 = vmul.f32 %v6530, 0.7978846
        %v6659 = vmul.f32 %v6531, 0.7978846
        %v6660 = vmul.f32 %v6532, 0.7978846
        %v6661 = vmul.f32 %v6533, 0.7978846
        %v6662 = vmul.f32 %v6534, 0.7978846
        %v6663 = vmul.f32 %v6535, 0.7978846
        %v6664 = vmul.f32 %v6536, 0.7978846
        %v6665 = vmul.f32 %v6537, 0.7978846
        %v6666 = vmul.f32 %v6538, 0.7978846
        %v6667 = vmul.f32 %v6539, 0.7978846
        %v6668 = vmul.f32 %v6540, 0.7978846
        %v6669 = vmul.f32 %v6541, 0.7978846
        %v6670 = vmul.f32 %v6542, 0.7978846
        %v6671 = vmul.f32 %v6543, 0.7978846
        %v6672 = vmul.f32 %v6544, 0.7978846
        %v6673 = vmul.f32 %v6545, 0.7978846
        %v6674 = vmul.f32 %v6546, 0.7978846
        %v6675 = vmul.f32 %v6547, 0.7978846
        %v6676 = vmul.f32 %v6548, 0.7978846
        %v6677 = vmul.f32 %v6549, 0.7978846
        %v6678 = vmul.f32 %v6550, 0.7978846
        %v6679 = vmul.f32 %v6551, 0.7978846
        %v6680 = vmul.f32 %v6552, 0.7978846
        %v6681 = vmul.f32 %v6553, 0.7978846
        %v6682 = vmul.f32 %v6554, 0.7978846
        %v6683 = vmul.f32 %v6555, 0.7978846
        %v6684 = vmul.f32 %v6556, 0.7978846
        %v6685 = vmul.f32 %v6557, 0.7978846
        %v6686 = vmul.f32 %v6558, 0.7978846
        %v6687 = vmul.f32 %v6559, 0.7978846
        %v6688 = vmul.f32 %v6560, 0.7978846
        %v6689 = vmul.f32 %v6561, 0.7978846
        %v6690 = vmul.f32 %v6562, 0.7978846
        %v6691 = vmul.f32 %v6563, 0.7978846
        %v6692 = vmul.f32 %v6564, 0.7978846
        %v6693 = vmul.f32 %v6565, 0.7978846
        %v6694 = vmul.f32 %v6566, 0.7978846
        %v6695 = vmul.f32 %v6567, 0.7978846
        %v6696 = vmul.f32 %v6568, 0.7978846
        %v6697 = vmul.f32 %v6569, 0.7978846
        %v6698 = vmul.f32 %v6570, 0.7978846
        %v6699 = vmul.f32 %v6571, 0.7978846
        %v6700 = vmul.f32 %v6572, 0.7978846
        %v6701 = vmul.f32 %v6573, 0.7978846
        %v6702 = vmul.f32 %v6574, 0.7978846
        %v6703 = vmul.f32 %v6575, 0.7978846
        %v6704 = vmul.f32 %v6576, 0.7978846
        %v6705 = vmul.f32 %v6577, 0.7978846
        %v6706 = vmul.f32 %v6578, 0.7978846
        %v6707 = vmul.f32 %v6579, 0.7978846
        %v6708 = vmul.f32 %v6580, 0.7978846
        %v6709 = vmul.f32 %v6581, 0.7978846
        %v6710 = vmul.f32 %v6582, 0.7978846
        %v6711 = vmul.f32 %v6583, 0.7978846
        %v6712 = vmul.f32 %v6584, 0.7978846
        %v6713 = vmul.f32 %v6585, 0.7978846
        %v6714 = vmul.f32 %v6586, 0.7978846
        %v6715 = vmul.f32 %v6587, 0.7978846
        %v6716 = vmul.f32 %v6588, 0.7978846
        %v6717 = vmul.f32 %v6589, 0.7978846
        %v6718 = vmul.f32 %v6590, 0.7978846
        %v6719 = vmul.f32 %v6591, 0.7978846
        %v6720 = vmul.f32 %v6592, 0.7978846
        %v6721 = vmul.f32 %v6593, 0.7978846
        %v6722 = vmul.f32 %v6594, 0.7978846
        %v6723 = vmul.f32 %v6595, 0.7978846
        %v6724 = vmul.f32 %v6596, 0.7978846
        %v6725 = vmul.f32 %v6597, 0.7978846
        %v6726 = vmul.f32 %v6598, 0.7978846
        %v6727 = vmul.f32 %v6599, 0.7978846
        %v6728 = vmul.f32 %v6600, 0.7978846
        %v6729 = vmul.f32 %v6601, 0.7978846
        %v6730 = vmul.f32 %v6602, 0.7978846
        %v6731 = vmul.f32 %v6603, 0.7978846
        %v6732 = vmul.f32 %v6604, 0.7978846
        %v6733 = vmul.f32 %v6605, 0.7978846
        %v6734 = vmul.f32 %v6606, 0.7978846
        %v6735 = vmul.f32 %v6607, 0.7978846
        %v6736 = vmul.f32 %v6608, 0.7978846
        %v6737 = vmul.f32 %v6609, 0.7978846
        %v6738 = vmul.f32 %v6610, 0.7978846
        %v6739 = vmul.f32 %v6611, 0.7978846
        %v6740 = vmul.f32 %v6612, 0.7978846
        %v6741 = vmul.f32 %v6613, 0.7978846
        %v6742 = vmul.f32 %v6614, 0.7978846
        %v6743 = vmul.f32 %v6615, 0.7978846
        %v6744 = vmul.f32 %v6616, 0.7978846
        %v6745 = vmul.f32 %v6617, 0.7978846
        %v6746 = vmul.f32 %v6618, 0.7978846
        %v6747 = vmul.f32 %v6619, 0.7978846
        %v6748 = vmul.f32 %v6620, 0.7978846
        %v6749 = vmul.f32 %v6621, 0.7978846
        %v6750 = vmul.f32 %v6622, 0.7978846
        %v6751 = vmul.f32 %v6623, 0.7978846
        %v6752 = vmul.f32 %v6624, 0.7978846
        %v6753 = vmul.f32 %v6625, 0.7978846
        %v6754 = vmul.f32 %v6626, 0.7978846
        %v6755 = vmul.f32 %v6627, 0.7978846
        %v6756 = vmul.f32 %v6628, 0.7978846
        %v6757 = vmul.f32 %v6629, 0.7978846
        %v6758 = vmul.f32 %v6630, 0.7978846
        %v6759 = vmul.f32 %v6631, 0.7978846
        %v6760 = vmul.f32 %v6632, 0.7978846
        %v6761 = vmul.f32 %v6633, 0.7978846
        %v6762 = vmul.f32 %v6634, 0.7978846
        %v6763 = vmul.f32 %v6635, 0.7978846
        %v6764 = vmul.f32 %v6636, 0.7978846
        %v6765 = vtanh.pop %v6637
        %v6766 = vtanh.pop %v6638
        %v6767 = vtanh.pop %v6639
        %v6768 = vtanh.pop %v6640
        %v6769 = vtanh.pop %v6641
        %v6770 = vtanh.pop %v6642
        %v6771 = vtanh.pop %v6643
        %v6772 = vtanh.pop %v6644
        %v6773 = vtanh.pop %v6645
        %v6774 = vtanh.pop %v6646
        %v6775 = vtanh.pop %v6647
        %v6776 = vtanh.pop %v6648
        %v6777 = vtanh.pop %v6649
        %v6778 = vtanh.pop %v6650
        %v6779 = vtanh.pop %v6651
        %v6780 = vtanh.pop %v6652
        %v6781 = vtanh.pop %v6653
        %v6782 = vtanh.pop %v6654
        %v6783 = vtanh.pop %v6655
        %v6784 = vtanh.pop %v6656
        %v6785 = vtanh.pop %v6657
        %v6786 = vtanh.pop %v6658
        %v6787 = vtanh.pop %v6659
        %v6788 = vtanh.pop %v6660
        %v6789 = vtanh.pop %v6661
        %v6790 = vtanh.pop %v6662
        %v6791 = vtanh.pop %v6663
        %v6792 = vtanh.pop %v6664
        %v6793 = vtanh.pop %v6665
        %v6794 = vtanh.pop %v6666
        %v6795 = vtanh.pop %v6667
        %v6796 = vtanh.pop %v6668
        %v6797 = vtanh.pop %v6669
        %v6798 = vtanh.pop %v6670
        %v6799 = vtanh.pop %v6671
        %v6800 = vtanh.pop %v6672
        %v6801 = vtanh.pop %v6673
        %v6802 = vtanh.pop %v6674
        %v6803 = vtanh.pop %v6675
        %v6804 = vtanh.pop %v6676
        %v6805 = vtanh.pop %v6677
        %v6806 = vtanh.pop %v6678
        %v6807 = vtanh.pop %v6679
        %v6808 = vtanh.pop %v6680
        %v6809 = vtanh.pop %v6681
        %v6810 = vtanh.pop %v6682
        %v6811 = vtanh.pop %v6683
        %v6812 = vtanh.pop %v6684
        %v6813 = vtanh.pop %v6685
        %v6814 = vtanh.pop %v6686
        %v6815 = vtanh.pop %v6687
        %v6816 = vtanh.pop %v6688
        %v6817 = vtanh.pop %v6689
        %v6818 = vtanh.pop %v6690
        %v6819 = vtanh.pop %v6691
        %v6820 = vtanh.pop %v6692
        %v6821 = vtanh.pop %v6693
        %v6822 = vtanh.pop %v6694
        %v6823 = vtanh.pop %v6695
        %v6824 = vtanh.pop %v6696
        %v6825 = vtanh.pop %v6697
        %v6826 = vtanh.pop %v6698
        %v6827 = vtanh.pop %v6699
        %v6828 = vtanh.pop %v6700
        %v6829 = vtanh.pop %v6701
        %v6830 = vtanh.pop %v6702
        %v6831 = vtanh.pop %v6703
        %v6832 = vtanh.pop %v6704
        %v6833 = vtanh.pop %v6705
        %v6834 = vtanh.pop %v6706
        %v6835 = vtanh.pop %v6707
        %v6836 = vtanh.pop %v6708
        %v6837 = vtanh.pop %v6709
        %v6838 = vtanh.pop %v6710
        %v6839 = vtanh.pop %v6711
        %v6840 = vtanh.pop %v6712
        %v6841 = vtanh.pop %v6713
        %v6842 = vtanh.pop %v6714
        %v6843 = vtanh.pop %v6715
        %v6844 = vtanh.pop %v6716
        %v6845 = vtanh.pop %v6717
        %v6846 = vtanh.pop %v6718
        %v6847 = vtanh.pop %v6719
        %v6848 = vtanh.pop %v6720
        %v6849 = vtanh.pop %v6721
        %v6850 = vtanh.pop %v6722
        %v6851 = vtanh.pop %v6723
        %v6852 = vtanh.pop %v6724
        %v6853 = vtanh.pop %v6725
        %v6854 = vtanh.pop %v6726
        %v6855 = vtanh.pop %v6727
        %v6856 = vtanh.pop %v6728
        %v6857 = vtanh.pop %v6729
        %v6858 = vtanh.pop %v6730
        %v6859 = vtanh.pop %v6731
        %v6860 = vtanh.pop %v6732
        %v6861 = vtanh.pop %v6733
        %v6862 = vtanh.pop %v6734
        %v6863 = vtanh.pop %v6735
        %v6864 = vtanh.pop %v6736
        %v6865 = vtanh.pop %v6737
        %v6866 = vtanh.pop %v6738
        %v6867 = vtanh.pop %v6739
        %v6868 = vtanh.pop %v6740
        %v6869 = vtanh.pop %v6741
        %v6870 = vtanh.pop %v6742
        %v6871 = vtanh.pop %v6743
        %v6872 = vtanh.pop %v6744
        %v6873 = vtanh.pop %v6745
        %v6874 = vtanh.pop %v6746
        %v6875 = vtanh.pop %v6747
        %v6876 = vtanh.pop %v6748
        %v6877 = vtanh.pop %v6749
        %v6878 = vtanh.pop %v6750
        %v6879 = vtanh.pop %v6751
        %v6880 = vtanh.pop %v6752
        %v6881 = vtanh.pop %v6753
        %v6882 = vtanh.pop %v6754
        %v6883 = vtanh.pop %v6755
        %v6884 = vtanh.pop %v6756
        %v6885 = vtanh.pop %v6757
        %v6886 = vtanh.pop %v6758
        %v6887 = vtanh.pop %v6759
        %v6888 = vtanh.pop %v6760
        %v6889 = vtanh.pop %v6761
        %v6890 = vtanh.pop %v6762
        %v6891 = vtanh.pop %v6763
        %v6892 = vtanh.pop %v6764
        %v6893 = vadd.f32 %v6765, 1.0
        %v6894 = vadd.f32 %v6766, 1.0
        %v6895 = vadd.f32 %v6767, 1.0
        %v6896 = vadd.f32 %v6768, 1.0
        %v6897 = vadd.f32 %v6769, 1.0
        %v6898 = vadd.f32 %v6770, 1.0
        %v6899 = vadd.f32 %v6771, 1.0
        %v6900 = vadd.f32 %v6772, 1.0
        %v6901 = vadd.f32 %v6773, 1.0
        %v6902 = vadd.f32 %v6774, 1.0
        %v6903 = vadd.f32 %v6775, 1.0
        %v6904 = vadd.f32 %v6776, 1.0
        %v6905 = vadd.f32 %v6777, 1.0
        %v6906 = vadd.f32 %v6778, 1.0
        %v6907 = vadd.f32 %v6779, 1.0
        %v6908 = vadd.f32 %v6780, 1.0
        %v6909 = vadd.f32 %v6781, 1.0
        %v6910 = vadd.f32 %v6782, 1.0
        %v6911 = vadd.f32 %v6783, 1.0
        %v6912 = vadd.f32 %v6784, 1.0
        %v6913 = vadd.f32 %v6785, 1.0
        %v6914 = vadd.f32 %v6786, 1.0
        %v6915 = vadd.f32 %v6787, 1.0
        %v6916 = vadd.f32 %v6788, 1.0
        %v6917 = vadd.f32 %v6789, 1.0
        %v6918 = vadd.f32 %v6790, 1.0
        %v6919 = vadd.f32 %v6791, 1.0
        %v6920 = vadd.f32 %v6792, 1.0
        %v6921 = vadd.f32 %v6793, 1.0
        %v6922 = vadd.f32 %v6794, 1.0
        %v6923 = vadd.f32 %v6795, 1.0
        %v6924 = vadd.f32 %v6796, 1.0
        %v6925 = vadd.f32 %v6797, 1.0
        %v6926 = vadd.f32 %v6798, 1.0
        %v6927 = vadd.f32 %v6799, 1.0
        %v6928 = vadd.f32 %v6800, 1.0
        %v6929 = vadd.f32 %v6801, 1.0
        %v6930 = vadd.f32 %v6802, 1.0
        %v6931 = vadd.f32 %v6803, 1.0
        %v6932 = vadd.f32 %v6804, 1.0
        %v6933 = vadd.f32 %v6805, 1.0
        %v6934 = vadd.f32 %v6806, 1.0
        %v6935 = vadd.f32 %v6807, 1.0
        %v6936 = vadd.f32 %v6808, 1.0
        %v6937 = vadd.f32 %v6809, 1.0
        %v6938 = vadd.f32 %v6810, 1.0
        %v6939 = vadd.f32 %v6811, 1.0
        %v6940 = vadd.f32 %v6812, 1.0
        %v6941 = vadd.f32 %v6813, 1.0
        %v6942 = vadd.f32 %v6814, 1.0
        %v6943 = vadd.f32 %v6815, 1.0
        %v6944 = vadd.f32 %v6816, 1.0
        %v6945 = vadd.f32 %v6817, 1.0
        %v6946 = vadd.f32 %v6818, 1.0
        %v6947 = vadd.f32 %v6819, 1.0
        %v6948 = vadd.f32 %v6820, 1.0
        %v6949 = vadd.f32 %v6821, 1.0
        %v6950 = vadd.f32 %v6822, 1.0
        %v6951 = vadd.f32 %v6823, 1.0
        %v6952 = vadd.f32 %v6824, 1.0
        %v6953 = vadd.f32 %v6825, 1.0
        %v6954 = vadd.f32 %v6826, 1.0
        %v6955 = vadd.f32 %v6827, 1.0
        %v6956 = vadd.f32 %v6828, 1.0
        %v6957 = vadd.f32 %v6829, 1.0
        %v6958 = vadd.f32 %v6830, 1.0
        %v6959 = vadd.f32 %v6831, 1.0
        %v6960 = vadd.f32 %v6832, 1.0
        %v6961 = vadd.f32 %v6833, 1.0
        %v6962 = vadd.f32 %v6834, 1.0
        %v6963 = vadd.f32 %v6835, 1.0
        %v6964 = vadd.f32 %v6836, 1.0
        %v6965 = vadd.f32 %v6837, 1.0
        %v6966 = vadd.f32 %v6838, 1.0
        %v6967 = vadd.f32 %v6839, 1.0
        %v6968 = vadd.f32 %v6840, 1.0
        %v6969 = vadd.f32 %v6841, 1.0
        %v6970 = vadd.f32 %v6842, 1.0
        %v6971 = vadd.f32 %v6843, 1.0
        %v6972 = vadd.f32 %v6844, 1.0
        %v6973 = vadd.f32 %v6845, 1.0
        %v6974 = vadd.f32 %v6846, 1.0
        %v6975 = vadd.f32 %v6847, 1.0
        %v6976 = vadd.f32 %v6848, 1.0
        %v6977 = vadd.f32 %v6849, 1.0
        %v6978 = vadd.f32 %v6850, 1.0
        %v6979 = vadd.f32 %v6851, 1.0
        %v6980 = vadd.f32 %v6852, 1.0
        %v6981 = vadd.f32 %v6853, 1.0
        %v6982 = vadd.f32 %v6854, 1.0
        %v6983 = vadd.f32 %v6855, 1.0
        %v6984 = vadd.f32 %v6856, 1.0
        %v6985 = vadd.f32 %v6857, 1.0
        %v6986 = vadd.f32 %v6858, 1.0
        %v6987 = vadd.f32 %v6859, 1.0
        %v6988 = vadd.f32 %v6860, 1.0
        %v6989 = vadd.f32 %v6861, 1.0
        %v6990 = vadd.f32 %v6862, 1.0
        %v6991 = vadd.f32 %v6863, 1.0
        %v6992 = vadd.f32 %v6864, 1.0
        %v6993 = vadd.f32 %v6865, 1.0
        %v6994 = vadd.f32 %v6866, 1.0
        %v6995 = vadd.f32 %v6867, 1.0
        %v6996 = vadd.f32 %v6868, 1.0
        %v6997 = vadd.f32 %v6869, 1.0
        %v6998 = vadd.f32 %v6870, 1.0
        %v6999 = vadd.f32 %v6871, 1.0
        %v7000 = vadd.f32 %v6872, 1.0
        %v7001 = vadd.f32 %v6873, 1.0
        %v7002 = vadd.f32 %v6874, 1.0
        %v7003 = vadd.f32 %v6875, 1.0
        %v7004 = vadd.f32 %v6876, 1.0
        %v7005 = vadd.f32 %v6877, 1.0
        %v7006 = vadd.f32 %v6878, 1.0
        %v7007 = vadd.f32 %v6879, 1.0
        %v7008 = vadd.f32 %v6880, 1.0
        %v7009 = vadd.f32 %v6881, 1.0
        %v7010 = vadd.f32 %v6882, 1.0
        %v7011 = vadd.f32 %v6883, 1.0
        %v7012 = vadd.f32 %v6884, 1.0
        %v7013 = vadd.f32 %v6885, 1.0
        %v7014 = vadd.f32 %v6886, 1.0
        %v7015 = vadd.f32 %v6887, 1.0
        %v7016 = vadd.f32 %v6888, 1.0
        %v7017 = vadd.f32 %v6889, 1.0
        %v7018 = vadd.f32 %v6890, 1.0
        %v7019 = vadd.f32 %v6891, 1.0
        %v7020 = vadd.f32 %v6892, 1.0
        %v7021 = vmul.f32 %v5997, %v6893
        %v7022 = vmul.f32 %v5998, %v6894
        %v7023 = vmul.f32 %v5999, %v6895
        %v7024 = vmul.f32 %v6000, %v6896
        %v7025 = vmul.f32 %v6001, %v6897
        %v7026 = vmul.f32 %v6002, %v6898
        %v7027 = vmul.f32 %v6003, %v6899
        %v7028 = vmul.f32 %v6004, %v6900
        %v7029 = vmul.f32 %v6005, %v6901
        %v7030 = vmul.f32 %v6006, %v6902
        %v7031 = vmul.f32 %v6007, %v6903
        %v7032 = vmul.f32 %v6008, %v6904
        %v7033 = vmul.f32 %v6009, %v6905
        %v7034 = vmul.f32 %v6010, %v6906
        %v7035 = vmul.f32 %v6011, %v6907
        %v7036 = vmul.f32 %v6012, %v6908
        %v7037 = vmul.f32 %v6013, %v6909
        %v7038 = vmul.f32 %v6014, %v6910
        %v7039 = vmul.f32 %v6015, %v6911
        %v7040 = vmul.f32 %v6016, %v6912
        %v7041 = vmul.f32 %v6017, %v6913
        %v7042 = vmul.f32 %v6018, %v6914
        %v7043 = vmul.f32 %v6019, %v6915
        %v7044 = vmul.f32 %v6020, %v6916
        %v7045 = vmul.f32 %v6021, %v6917
        %v7046 = vmul.f32 %v6022, %v6918
        %v7047 = vmul.f32 %v6023, %v6919
        %v7048 = vmul.f32 %v6024, %v6920
        %v7049 = vmul.f32 %v6025, %v6921
        %v7050 = vmul.f32 %v6026, %v6922
        %v7051 = vmul.f32 %v6027, %v6923
        %v7052 = vmul.f32 %v6028, %v6924
        %v7053 = vmul.f32 %v6029, %v6925
        %v7054 = vmul.f32 %v6030, %v6926
        %v7055 = vmul.f32 %v6031, %v6927
        %v7056 = vmul.f32 %v6032, %v6928
        %v7057 = vmul.f32 %v6033, %v6929
        %v7058 = vmul.f32 %v6034, %v6930
        %v7059 = vmul.f32 %v6035, %v6931
        %v7060 = vmul.f32 %v6036, %v6932
        %v7061 = vmul.f32 %v6037, %v6933
        %v7062 = vmul.f32 %v6038, %v6934
        %v7063 = vmul.f32 %v6039, %v6935
        %v7064 = vmul.f32 %v6040, %v6936
        %v7065 = vmul.f32 %v6041, %v6937
        %v7066 = vmul.f32 %v6042, %v6938
        %v7067 = vmul.f32 %v6043, %v6939
        %v7068 = vmul.f32 %v6044, %v6940
        %v7069 = vmul.f32 %v6045, %v6941
        %v7070 = vmul.f32 %v6046, %v6942
        %v7071 = vmul.f32 %v6047, %v6943
        %v7072 = vmul.f32 %v6048, %v6944
        %v7073 = vmul.f32 %v6049, %v6945
        %v7074 = vmul.f32 %v6050, %v6946
        %v7075 = vmul.f32 %v6051, %v6947
        %v7076 = vmul.f32 %v6052, %v6948
        %v7077 = vmul.f32 %v6053, %v6949
        %v7078 = vmul.f32 %v6054, %v6950
        %v7079 = vmul.f32 %v6055, %v6951
        %v7080 = vmul.f32 %v6056, %v6952
        %v7081 = vmul.f32 %v6057, %v6953
        %v7082 = vmul.f32 %v6058, %v6954
        %v7083 = vmul.f32 %v6059, %v6955
        %v7084 = vmul.f32 %v6060, %v6956
        %v7085 = vmul.f32 %v6061, %v6957
        %v7086 = vmul.f32 %v6062, %v6958
        %v7087 = vmul.f32 %v6063, %v6959
        %v7088 = vmul.f32 %v6064, %v6960
        %v7089 = vmul.f32 %v6065, %v6961
        %v7090 = vmul.f32 %v6066, %v6962
        %v7091 = vmul.f32 %v6067, %v6963
        %v7092 = vmul.f32 %v6068, %v6964
        %v7093 = vmul.f32 %v6069, %v6965
        %v7094 = vmul.f32 %v6070, %v6966
        %v7095 = vmul.f32 %v6071, %v6967
        %v7096 = vmul.f32 %v6072, %v6968
        %v7097 = vmul.f32 %v6073, %v6969
        %v7098 = vmul.f32 %v6074, %v6970
        %v7099 = vmul.f32 %v6075, %v6971
        %v7100 = vmul.f32 %v6076, %v6972
        %v7101 = vmul.f32 %v6077, %v6973
        %v7102 = vmul.f32 %v6078, %v6974
        %v7103 = vmul.f32 %v6079, %v6975
        %v7104 = vmul.f32 %v6080, %v6976
        %v7105 = vmul.f32 %v6081, %v6977
        %v7106 = vmul.f32 %v6082, %v6978
        %v7107 = vmul.f32 %v6083, %v6979
        %v7108 = vmul.f32 %v6084, %v6980
        %v7109 = vmul.f32 %v6085, %v6981
        %v7110 = vmul.f32 %v6086, %v6982
        %v7111 = vmul.f32 %v6087, %v6983
        %v7112 = vmul.f32 %v6088, %v6984
        %v7113 = vmul.f32 %v6089, %v6985
        %v7114 = vmul.f32 %v6090, %v6986
        %v7115 = vmul.f32 %v6091, %v6987
        %v7116 = vmul.f32 %v6092, %v6988
        %v7117 = vmul.f32 %v6093, %v6989
        %v7118 = vmul.f32 %v6094, %v6990
        %v7119 = vmul.f32 %v6095, %v6991
        %v7120 = vmul.f32 %v6096, %v6992
        %v7121 = vmul.f32 %v6097, %v6993
        %v7122 = vmul.f32 %v6098, %v6994
        %v7123 = vmul.f32 %v6099, %v6995
        %v7124 = vmul.f32 %v6100, %v6996
        %v7125 = vmul.f32 %v6101, %v6997
        %v7126 = vmul.f32 %v6102, %v6998
        %v7127 = vmul.f32 %v6103, %v6999
        %v7128 = vmul.f32 %v6104, %v7000
        %v7129 = vmul.f32 %v6105, %v7001
        %v7130 = vmul.f32 %v6106, %v7002
        %v7131 = vmul.f32 %v6107, %v7003
        %v7132 = vmul.f32 %v6108, %v7004
        %v7133 = vmul.f32 %v6109, %v7005
        %v7134 = vmul.f32 %v6110, %v7006
        %v7135 = vmul.f32 %v6111, %v7007
        %v7136 = vmul.f32 %v6112, %v7008
        %v7137 = vmul.f32 %v6113, %v7009
        %v7138 = vmul.f32 %v6114, %v7010
        %v7139 = vmul.f32 %v6115, %v7011
        %v7140 = vmul.f32 %v6116, %v7012
        %v7141 = vmul.f32 %v6117, %v7013
        %v7142 = vmul.f32 %v6118, %v7014
        %v7143 = vmul.f32 %v6119, %v7015
        %v7144 = vmul.f32 %v6120, %v7016
        %v7145 = vmul.f32 %v6121, %v7017
        %v7146 = vmul.f32 %v6122, %v7018
        %v7147 = vmul.f32 %v6123, %v7019
        %v7148 = vmul.f32 %v6124, %v7020
        %v7149 = vpack.c.bf16 %v7025, %v7021
        %v7150 = vpack.c.bf16 %v7026, %v7022
        %v7151 = vpack.c.bf16 %v7027, %v7023
        %v7152 = vpack.c.bf16 %v7028, %v7024
        %v7153 = vpack.c.bf16 %v7033, %v7029
        %v7154 = vpack.c.bf16 %v7034, %v7030
        %v7155 = vpack.c.bf16 %v7035, %v7031
        %v7156 = vpack.c.bf16 %v7036, %v7032
        %v7157 = vpack.c.bf16 %v7041, %v7037
        %v7158 = vpack.c.bf16 %v7042, %v7038
        %v7159 = vpack.c.bf16 %v7043, %v7039
        %v7160 = vpack.c.bf16 %v7044, %v7040
        %v7161 = vpack.c.bf16 %v7049, %v7045
        %v7162 = vpack.c.bf16 %v7050, %v7046
        %v7163 = vpack.c.bf16 %v7051, %v7047
        %v7164 = vpack.c.bf16 %v7052, %v7048
        %v7165 = vpack.c.bf16 %v7057, %v7053
        %v7166 = vpack.c.bf16 %v7058, %v7054
        %v7167 = vpack.c.bf16 %v7059, %v7055
        %v7168 = vpack.c.bf16 %v7060, %v7056
        %v7169 = vpack.c.bf16 %v7065, %v7061
        %v7170 = vpack.c.bf16 %v7066, %v7062
        %v7171 = vpack.c.bf16 %v7067, %v7063
        %v7172 = vpack.c.bf16 %v7068, %v7064
        %v7173 = vpack.c.bf16 %v7073, %v7069
        %v7174 = vpack.c.bf16 %v7074, %v7070
        %v7175 = vpack.c.bf16 %v7075, %v7071
        %v7176 = vpack.c.bf16 %v7076, %v7072
        %v7177 = vpack.c.bf16 %v7081, %v7077
        %v7178 = vpack.c.bf16 %v7082, %v7078
        %v7179 = vpack.c.bf16 %v7083, %v7079
        %v7180 = vpack.c.bf16 %v7084, %v7080
        %v7181 = vpack.c.bf16 %v7089, %v7085
        %v7182 = vpack.c.bf16 %v7090, %v7086
        %v7183 = vpack.c.bf16 %v7091, %v7087
        %v7184 = vpack.c.bf16 %v7092, %v7088
        %v7185 = vpack.c.bf16 %v7097, %v7093
        %v7186 = vpack.c.bf16 %v7098, %v7094
        %v7187 = vpack.c.bf16 %v7099, %v7095
        %v7188 = vpack.c.bf16 %v7100, %v7096
        %v7189 = vpack.c.bf16 %v7105, %v7101
        %v7190 = vpack.c.bf16 %v7106, %v7102
        %v7191 = vpack.c.bf16 %v7107, %v7103
        %v7192 = vpack.c.bf16 %v7108, %v7104
        %v7193 = vpack.c.bf16 %v7113, %v7109
        %v7194 = vpack.c.bf16 %v7114, %v7110
        %v7195 = vpack.c.bf16 %v7115, %v7111
        %v7196 = vpack.c.bf16 %v7116, %v7112
        %v7197 = vpack.c.bf16 %v7121, %v7117
        %v7198 = vpack.c.bf16 %v7122, %v7118
        %v7199 = vpack.c.bf16 %v7123, %v7119
        %v7200 = vpack.c.bf16 %v7124, %v7120
        %v7201 = vpack.c.bf16 %v7129, %v7125
        %v7202 = vpack.c.bf16 %v7130, %v7126
        %v7203 = vpack.c.bf16 %v7131, %v7127
        %v7204 = vpack.c.bf16 %v7132, %v7128
        %v7205 = vpack.c.bf16 %v7137, %v7133
        %v7206 = vpack.c.bf16 %v7138, %v7134
        %v7207 = vpack.c.bf16 %v7139, %v7135
        %v7208 = vpack.c.bf16 %v7140, %v7136
        %v7209 = vpack.c.bf16 %v7145, %v7141
        %v7210 = vpack.c.bf16 %v7146, %v7142
        %v7211 = vpack.c.bf16 %v7147, %v7143
        %v7212 = vpack.c.bf16 %v7148, %v7144
        %v7214 = vlaneseq
        %v7215 = vshrl.u32 %v7214, 7
        %v7216 = vsub.s32 0, %v7215
        %v7217 = vrot.slane %v1370, %v7216
        %v7218 = vlaneseq
        %v7219 = vshrl.u32 %v7218, 7
        %v7220 = vsub.s32 1, %v7219
        %v7221 = vrot.slane %v1370, %v7220
        %v7288 = vunpack.c.l.b16 %v1306
        %v7289 = vunpack.c.h.b16 %v1306
        %v7290 = vunpack.c.l.b16 %v1307
        %v7291 = vunpack.c.h.b16 %v1307
        %v7292 = vunpack.c.l.b16 %v1308
        %v7293 = vunpack.c.h.b16 %v1308
        %v7294 = vunpack.c.l.b16 %v1309
        %v7295 = vunpack.c.h.b16 %v1309
        %v7296 = vunpack.c.l.b16 %v1310
        %v7297 = vunpack.c.h.b16 %v1310
        %v7298 = vunpack.c.l.b16 %v1311
        %v7299 = vunpack.c.h.b16 %v1311
        %v7300 = vunpack.c.l.b16 %v1312
        %v7301 = vunpack.c.h.b16 %v1312
        %v7302 = vunpack.c.l.b16 %v1313
        %v7303 = vunpack.c.h.b16 %v1313
        %v7304 = vunpack.c.l.b16 %v1314
        %v7305 = vunpack.c.h.b16 %v1314
        %v7306 = vunpack.c.l.b16 %v1315
        %v7307 = vunpack.c.h.b16 %v1315
        %v7308 = vunpack.c.l.b16 %v1316
        %v7309 = vunpack.c.h.b16 %v1316
        %v7310 = vunpack.c.l.b16 %v1317
        %v7311 = vunpack.c.h.b16 %v1317
        %v7312 = vunpack.c.l.b16 %v1318
        %v7313 = vunpack.c.h.b16 %v1318
        %v7314 = vunpack.c.l.b16 %v1319
        %v7315 = vunpack.c.h.b16 %v1319
        %v7316 = vunpack.c.l.b16 %v1320
        %v7317 = vunpack.c.h.b16 %v1320
        %v7318 = vunpack.c.l.b16 %v1321
        %v7319 = vunpack.c.h.b16 %v1321
        %v7320 = vunpack.c.l.b16 %v1322
        %v7321 = vunpack.c.h.b16 %v1322
        %v7322 = vunpack.c.l.b16 %v1323
        %v7323 = vunpack.c.h.b16 %v1323
        %v7324 = vunpack.c.l.b16 %v1324
        %v7325 = vunpack.c.h.b16 %v1324
        %v7326 = vunpack.c.l.b16 %v1325
        %v7327 = vunpack.c.h.b16 %v1325
        %v7328 = vunpack.c.l.b16 %v1326
        %v7329 = vunpack.c.h.b16 %v1326
        %v7330 = vunpack.c.l.b16 %v1327
        %v7331 = vunpack.c.h.b16 %v1327
        %v7332 = vunpack.c.l.b16 %v1328
        %v7333 = vunpack.c.h.b16 %v1328
        %v7334 = vunpack.c.l.b16 %v1329
        %v7335 = vunpack.c.h.b16 %v1329
        %v7336 = vunpack.c.l.b16 %v1330
        %v7337 = vunpack.c.h.b16 %v1330
        %v7338 = vunpack.c.l.b16 %v1331
        %v7339 = vunpack.c.h.b16 %v1331
        %v7340 = vunpack.c.l.b16 %v1332
        %v7341 = vunpack.c.h.b16 %v1332
        %v7342 = vunpack.c.l.b16 %v1333
        %v7343 = vunpack.c.h.b16 %v1333
        %v7344 = vunpack.c.l.b16 %v1334
        %v7345 = vunpack.c.h.b16 %v1334
        %v7346 = vunpack.c.l.b16 %v1335
        %v7347 = vunpack.c.h.b16 %v1335
        %v7348 = vunpack.c.l.b16 %v1336
        %v7349 = vunpack.c.h.b16 %v1336
        %v7350 = vunpack.c.l.b16 %v1337
        %v7351 = vunpack.c.h.b16 %v1337
        %v7352 = vunpack.c.l.b16 %v1338
        %v7353 = vunpack.c.h.b16 %v1338
        %v7354 = vunpack.c.l.b16 %v1339
        %v7355 = vunpack.c.h.b16 %v1339
        %v7356 = vunpack.c.l.b16 %v1340
        %v7357 = vunpack.c.h.b16 %v1340
        %v7358 = vunpack.c.l.b16 %v1341
        %v7359 = vunpack.c.h.b16 %v1341
        %v7360 = vunpack.c.l.b16 %v1342
        %v7361 = vunpack.c.h.b16 %v1342
        %v7362 = vunpack.c.l.b16 %v1343
        %v7363 = vunpack.c.h.b16 %v1343
        %v7364 = vunpack.c.l.b16 %v1344
        %v7365 = vunpack.c.h.b16 %v1344
        %v7366 = vunpack.c.l.b16 %v1345
        %v7367 = vunpack.c.h.b16 %v1345
        %v7368 = vunpack.c.l.b16 %v1346
        %v7369 = vunpack.c.h.b16 %v1346
        %v7370 = vunpack.c.l.b16 %v1347
        %v7371 = vunpack.c.h.b16 %v1347
        %v7372 = vunpack.c.l.b16 %v1348
        %v7373 = vunpack.c.h.b16 %v1348
        %v7374 = vunpack.c.l.b16 %v1349
        %v7375 = vunpack.c.h.b16 %v1349
        %v7376 = vunpack.c.l.b16 %v1350
        %v7377 = vunpack.c.h.b16 %v1350
        %v7378 = vunpack.c.l.b16 %v1351
        %v7379 = vunpack.c.h.b16 %v1351
        %v7380 = vunpack.c.l.b16 %v1352
        %v7381 = vunpack.c.h.b16 %v1352
        %v7382 = vunpack.c.l.b16 %v1353
        %v7383 = vunpack.c.h.b16 %v1353
        %v7384 = vunpack.c.l.b16 %v1354
        %v7385 = vunpack.c.h.b16 %v1354
        %v7386 = vunpack.c.l.b16 %v1355
        %v7387 = vunpack.c.h.b16 %v1355
        %v7388 = vunpack.c.l.b16 %v1356
        %v7389 = vunpack.c.h.b16 %v1356
        %v7390 = vunpack.c.l.b16 %v1357
        %v7391 = vunpack.c.h.b16 %v1357
        %v7392 = vunpack.c.l.b16 %v1358
        %v7393 = vunpack.c.h.b16 %v1358
        %v7394 = vunpack.c.l.b16 %v1359
        %v7395 = vunpack.c.h.b16 %v1359
        %v7396 = vunpack.c.l.b16 %v1360
        %v7397 = vunpack.c.h.b16 %v1360
        %v7398 = vunpack.c.l.b16 %v1361
        %v7399 = vunpack.c.h.b16 %v1361
        %v7400 = vunpack.c.l.b16 %v1362
        %v7401 = vunpack.c.h.b16 %v1362
        %v7402 = vunpack.c.l.b16 %v1363
        %v7403 = vunpack.c.h.b16 %v1363
        %v7404 = vunpack.c.l.b16 %v1364
        %v7405 = vunpack.c.h.b16 %v1364
        %v7406 = vunpack.c.l.b16 %v1365
        %v7407 = vunpack.c.h.b16 %v1365
        %v7408 = vunpack.c.l.b16 %v1366
        %v7409 = vunpack.c.h.b16 %v1366
        %v7410 = vunpack.c.l.b16 %v1367
        %v7411 = vunpack.c.h.b16 %v1367
        %v7412 = vunpack.c.l.b16 %v1368
        %v7413 = vunpack.c.h.b16 %v1368
        %v7414 = vunpack.c.l.b16 %v1369
        %v7415 = vunpack.c.h.b16 %v1369
        %v7416 = vpack.c.b16 %v7290, %v7288
        %v7417 = vpack.c.b16 %v7291, %v7289
        %v7418 = vpack.c.b16 %v7294, %v7292
        %v7419 = vpack.c.b16 %v7295, %v7293
        %v7420 = vpack.c.b16 %v7298, %v7296
        %v7421 = vpack.c.b16 %v7299, %v7297
        %v7422 = vpack.c.b16 %v7302, %v7300
        %v7423 = vpack.c.b16 %v7303, %v7301
        %v7424 = vpack.c.b16 %v7306, %v7304
        %v7425 = vpack.c.b16 %v7307, %v7305
        %v7426 = vpack.c.b16 %v7310, %v7308
        %v7427 = vpack.c.b16 %v7311, %v7309
        %v7428 = vpack.c.b16 %v7314, %v7312
        %v7429 = vpack.c.b16 %v7315, %v7313
        %v7430 = vpack.c.b16 %v7318, %v7316
        %v7431 = vpack.c.b16 %v7319, %v7317
        %v7432 = vpack.c.b16 %v7322, %v7320
        %v7433 = vpack.c.b16 %v7323, %v7321
        %v7434 = vpack.c.b16 %v7326, %v7324
        %v7435 = vpack.c.b16 %v7327, %v7325
        %v7436 = vpack.c.b16 %v7330, %v7328
        %v7437 = vpack.c.b16 %v7331, %v7329
        %v7438 = vpack.c.b16 %v7334, %v7332
        %v7439 = vpack.c.b16 %v7335, %v7333
        %v7440 = vpack.c.b16 %v7338, %v7336
        %v7441 = vpack.c.b16 %v7339, %v7337
        %v7442 = vpack.c.b16 %v7342, %v7340
        %v7443 = vpack.c.b16 %v7343, %v7341
        %v7444 = vpack.c.b16 %v7346, %v7344
        %v7445 = vpack.c.b16 %v7347, %v7345
        %v7446 = vpack.c.b16 %v7350, %v7348
        %v7447 = vpack.c.b16 %v7351, %v7349
        %v7448 = vpack.c.b16 %v7354, %v7352
        %v7449 = vpack.c.b16 %v7355, %v7353
        %v7450 = vpack.c.b16 %v7358, %v7356
        %v7451 = vpack.c.b16 %v7359, %v7357
        %v7452 = vpack.c.b16 %v7362, %v7360
        %v7453 = vpack.c.b16 %v7363, %v7361
        %v7454 = vpack.c.b16 %v7366, %v7364
        %v7455 = vpack.c.b16 %v7367, %v7365
        %v7456 = vpack.c.b16 %v7370, %v7368
        %v7457 = vpack.c.b16 %v7371, %v7369
        %v7458 = vpack.c.b16 %v7374, %v7372
        %v7459 = vpack.c.b16 %v7375, %v7373
        %v7460 = vpack.c.b16 %v7378, %v7376
        %v7461 = vpack.c.b16 %v7379, %v7377
        %v7462 = vpack.c.b16 %v7382, %v7380
        %v7463 = vpack.c.b16 %v7383, %v7381
        %v7464 = vpack.c.b16 %v7386, %v7384
        %v7465 = vpack.c.b16 %v7387, %v7385
        %v7466 = vpack.c.b16 %v7390, %v7388
        %v7467 = vpack.c.b16 %v7391, %v7389
        %v7468 = vpack.c.b16 %v7394, %v7392
        %v7469 = vpack.c.b16 %v7395, %v7393
        %v7470 = vpack.c.b16 %v7398, %v7396
        %v7471 = vpack.c.b16 %v7399, %v7397
        %v7472 = vpack.c.b16 %v7402, %v7400
        %v7473 = vpack.c.b16 %v7403, %v7401
        %v7474 = vpack.c.b16 %v7406, %v7404
        %v7475 = vpack.c.b16 %v7407, %v7405
        %v7476 = vpack.c.b16 %v7410, %v7408
        %v7477 = vpack.c.b16 %v7411, %v7409
        %v7478 = vpack.c.b16 %v7414, %v7412
        %v7479 = vpack.c.b16 %v7415, %v7413
        %7544 = vmatprep.subr.bf16.mxu0 %v7431
        %7545 = vmatpush1.bf16.msra.mxu0 %v7430
        %7546 = vmatprep.subr.bf16.mxu0 %v7429
        %7547 = vmatpush1.bf16.msra.mxu0 %v7428
        %7548 = vmatprep.subr.bf16.mxu0 %v7427
        %7549 = vmatpush1.bf16.msra.mxu0 %v7426
        %7550 = vmatprep.subr.bf16.mxu0 %v7425
        %7551 = vmatpush1.bf16.msra.mxu0 %v7424
        %7552 = vmatprep.subr.bf16.mxu0 %v7423
        %7553 = vmatpush1.bf16.msra.mxu0 %v7422
        %7554 = vmatprep.subr.bf16.mxu0 %v7421
        %7555 = vmatpush1.bf16.msra.mxu0 %v7420
        %7556 = vmatprep.subr.bf16.mxu0 %v7419
        %7557 = vmatpush1.bf16.msra.mxu0 %v7418
        %7558 = vmatprep.subr.bf16.mxu0 %v7417
        %7559 = vmatpush1.bf16.msra.mxu0 %v7416
        %7560 = vmatprep.subr.bf16.mxu0 %v7447
        %7561 = vmatpush2.bf16.msra.mxu0 %v7446
        %7562 = vmatprep.subr.bf16.mxu0 %v7445
        %7563 = vmatpush2.bf16.msra.mxu0 %v7444
        %7564 = vmatprep.subr.bf16.mxu0 %v7443
        %7565 = vmatpush2.bf16.msra.mxu0 %v7442
        %7566 = vmatprep.subr.bf16.mxu0 %v7441
        %7567 = vmatpush2.bf16.msra.mxu0 %v7440
        %7568 = vmatprep.subr.bf16.mxu0 %v7439
        %7569 = vmatpush2.bf16.msra.mxu0 %v7438
        %7570 = vmatprep.subr.bf16.mxu0 %v7437
        %7571 = vmatpush2.bf16.msra.mxu0 %v7436
        %7572 = vmatprep.subr.bf16.mxu0 %v7435
        %7573 = vmatpush2.bf16.msra.mxu0 %v7434
        %7574 = vmatprep.subr.bf16.mxu0 %v7433
        %7575 = vmatpush2.bf16.msra.mxu0 %v7432
        %7576 = vmatprep.mubr.bf16.mxu0 %v7150
        %7577 = vmatmul.mubr.bf16.gmra.mxu0 %v7149
        %v7578 = vpop.f32.mrf.mxu0
        %v7579 = vadd.f32 %v7217, %v7578
        %v7580 = vpop.f32.mrf.mxu0
        %v7581 = vadd.f32 %v7221, %v7580
        %v7582 = vpop.f32.mrf.mxu0
        %v7583 = vadd.f32 %v7217, %v7582
        %v7584 = vpop.f32.mrf.mxu0
        %v7585 = vadd.f32 %v7221, %v7584
        %7586 = vmatprep.mubr.bf16.mxu0 %v7154
        %7587 = vmatmul.mubr.bf16.gmra.mxu0 %v7153
        %v7588 = vpop.f32.mrf.mxu0
        %v7589 = vadd.f32 %v7217, %v7588
        %v7590 = vpop.f32.mrf.mxu0
        %v7591 = vadd.f32 %v7221, %v7590
        %v7592 = vpop.f32.mrf.mxu0
        %v7593 = vadd.f32 %v7217, %v7592
        %v7594 = vpop.f32.mrf.mxu0
        %v7595 = vadd.f32 %v7221, %v7594
        %7596 = vmatprep.mubr.bf16.mxu0 %v7158
        %7597 = vmatmul.mubr.bf16.gmra.mxu0 %v7157
        %v7598 = vpop.f32.mrf.mxu0
        %v7599 = vadd.f32 %v7217, %v7598
        %v7600 = vpop.f32.mrf.mxu0
        %v7601 = vadd.f32 %v7221, %v7600
        %v7602 = vpop.f32.mrf.mxu0
        %v7603 = vadd.f32 %v7217, %v7602
        %v7604 = vpop.f32.mrf.mxu0
        %v7605 = vadd.f32 %v7221, %v7604
        %7606 = vmatprep.mubr.bf16.mxu0 %v7162
        %7607 = vmatmul.mubr.bf16.gmra.mxu0 %v7161
        %v7608 = vpop.f32.mrf.mxu0
        %v7609 = vadd.f32 %v7217, %v7608
        %v7610 = vpop.f32.mrf.mxu0
        %v7611 = vadd.f32 %v7221, %v7610
        %v7612 = vpop.f32.mrf.mxu0
        %v7613 = vadd.f32 %v7217, %v7612
        %v7614 = vpop.f32.mrf.mxu0
        %v7615 = vadd.f32 %v7221, %v7614
        %7616 = vmatprep.mubr.bf16.mxu0 %v7166
        %7617 = vmatmul.mubr.bf16.gmra.mxu0 %v7165
        %v7618 = vpop.f32.mrf.mxu0
        %v7619 = vadd.f32 %v7217, %v7618
        %v7620 = vpop.f32.mrf.mxu0
        %v7621 = vadd.f32 %v7221, %v7620
        %v7622 = vpop.f32.mrf.mxu0
        %v7623 = vadd.f32 %v7217, %v7622
        %v7624 = vpop.f32.mrf.mxu0
        %v7625 = vadd.f32 %v7221, %v7624
        %7626 = vmatprep.mubr.bf16.mxu0 %v7170
        %7627 = vmatmul.mubr.bf16.gmra.mxu0 %v7169
        %v7628 = vpop.f32.mrf.mxu0
        %v7629 = vadd.f32 %v7217, %v7628
        %v7630 = vpop.f32.mrf.mxu0
        %v7631 = vadd.f32 %v7221, %v7630
        %v7632 = vpop.f32.mrf.mxu0
        %v7633 = vadd.f32 %v7217, %v7632
        %v7634 = vpop.f32.mrf.mxu0
        %v7635 = vadd.f32 %v7221, %v7634
        %7636 = vmatprep.mubr.bf16.mxu0 %v7174
        %7637 = vmatmul.mubr.bf16.gmra.mxu0 %v7173
        %v7638 = vpop.f32.mrf.mxu0
        %v7639 = vadd.f32 %v7217, %v7638
        %v7640 = vpop.f32.mrf.mxu0
        %v7641 = vadd.f32 %v7221, %v7640
        %v7642 = vpop.f32.mrf.mxu0
        %v7643 = vadd.f32 %v7217, %v7642
        %v7644 = vpop.f32.mrf.mxu0
        %v7645 = vadd.f32 %v7221, %v7644
        %7646 = vmatprep.mubr.bf16.mxu0 %v7178
        %7647 = vmatmul.mubr.bf16.gmra.mxu0 %v7177
        %v7648 = vpop.f32.mrf.mxu0
        %v7649 = vadd.f32 %v7217, %v7648
        %v7650 = vpop.f32.mrf.mxu0
        %v7651 = vadd.f32 %v7221, %v7650
        %v7652 = vpop.f32.mrf.mxu0
        %v7653 = vadd.f32 %v7217, %v7652
        %v7654 = vpop.f32.mrf.mxu0
        %v7655 = vadd.f32 %v7221, %v7654
        %7656 = vmatprep.mubr.bf16.mxu0 %v7182
        %7657 = vmatmul.mubr.bf16.gmra.mxu0 %v7181
        %v7658 = vpop.f32.mrf.mxu0
        %v7659 = vadd.f32 %v7217, %v7658
        %v7660 = vpop.f32.mrf.mxu0
        %v7661 = vadd.f32 %v7221, %v7660
        %v7662 = vpop.f32.mrf.mxu0
        %v7663 = vadd.f32 %v7217, %v7662
        %v7664 = vpop.f32.mrf.mxu0
        %v7665 = vadd.f32 %v7221, %v7664
        %7666 = vmatprep.mubr.bf16.mxu0 %v7186
        %7667 = vmatmul.mubr.bf16.gmra.mxu0 %v7185
        %v7668 = vpop.f32.mrf.mxu0
        %v7669 = vadd.f32 %v7217, %v7668
        %v7670 = vpop.f32.mrf.mxu0
        %v7671 = vadd.f32 %v7221, %v7670
        %v7672 = vpop.f32.mrf.mxu0
        %v7673 = vadd.f32 %v7217, %v7672
        %v7674 = vpop.f32.mrf.mxu0
        %v7675 = vadd.f32 %v7221, %v7674
        %7676 = vmatprep.mubr.bf16.mxu0 %v7190
        %7677 = vmatmul.mubr.bf16.gmra.mxu0 %v7189
        %v7678 = vpop.f32.mrf.mxu0
        %v7679 = vadd.f32 %v7217, %v7678
        %v7680 = vpop.f32.mrf.mxu0
        %v7681 = vadd.f32 %v7221, %v7680
        %v7682 = vpop.f32.mrf.mxu0
        %v7683 = vadd.f32 %v7217, %v7682
        %v7684 = vpop.f32.mrf.mxu0
        %v7685 = vadd.f32 %v7221, %v7684
        %7686 = vmatprep.mubr.bf16.mxu0 %v7194
        %7687 = vmatmul.mubr.bf16.gmra.mxu0 %v7193
        %v7688 = vpop.f32.mrf.mxu0
        %v7689 = vadd.f32 %v7217, %v7688
        %v7690 = vpop.f32.mrf.mxu0
        %v7691 = vadd.f32 %v7221, %v7690
        %v7692 = vpop.f32.mrf.mxu0
        %v7693 = vadd.f32 %v7217, %v7692
        %v7694 = vpop.f32.mrf.mxu0
        %v7695 = vadd.f32 %v7221, %v7694
        %7696 = vmatprep.mubr.bf16.mxu0 %v7198
        %7697 = vmatmul.mubr.bf16.gmra.mxu0 %v7197
        %v7698 = vpop.f32.mrf.mxu0
        %v7699 = vadd.f32 %v7217, %v7698
        %v7700 = vpop.f32.mrf.mxu0
        %v7701 = vadd.f32 %v7221, %v7700
        %v7702 = vpop.f32.mrf.mxu0
        %v7703 = vadd.f32 %v7217, %v7702
        %v7704 = vpop.f32.mrf.mxu0
        %v7705 = vadd.f32 %v7221, %v7704
        %7706 = vmatprep.mubr.bf16.mxu0 %v7202
        %7707 = vmatmul.mubr.bf16.gmra.mxu0 %v7201
        %v7708 = vpop.f32.mrf.mxu0
        %v7709 = vadd.f32 %v7217, %v7708
        %v7710 = vpop.f32.mrf.mxu0
        %v7711 = vadd.f32 %v7221, %v7710
        %v7712 = vpop.f32.mrf.mxu0
        %v7713 = vadd.f32 %v7217, %v7712
        %v7714 = vpop.f32.mrf.mxu0
        %v7715 = vadd.f32 %v7221, %v7714
        %7716 = vmatprep.mubr.bf16.mxu0 %v7206
        %7717 = vmatmul.mubr.bf16.gmra.mxu0 %v7205
        %v7718 = vpop.f32.mrf.mxu0
        %v7719 = vadd.f32 %v7217, %v7718
        %v7720 = vpop.f32.mrf.mxu0
        %v7721 = vadd.f32 %v7221, %v7720
        %v7722 = vpop.f32.mrf.mxu0
        %v7723 = vadd.f32 %v7217, %v7722
        %v7724 = vpop.f32.mrf.mxu0
        %v7725 = vadd.f32 %v7221, %v7724
        %7726 = vmatprep.mubr.bf16.mxu0 %v7210
        %7727 = vmatmul.mubr.bf16.gmra.mxu0 %v7209
        %v7728 = vpop.f32.mrf.mxu0
        %v7729 = vadd.f32 %v7217, %v7728
        %v7730 = vpop.f32.mrf.mxu0
        %v7731 = vadd.f32 %v7221, %v7730
        %v7732 = vpop.f32.mrf.mxu0
        %v7733 = vadd.f32 %v7217, %v7732
        %v7734 = vpop.f32.mrf.mxu0
        %v7735 = vadd.f32 %v7221, %v7734
        %7736 = vdwg.mxu0
        %7737 = vmatprep.subr.bf16.mxu0 %v7463
        %7738 = vmatpush1.bf16.msra.mxu0 %v7462
        %7739 = vmatprep.subr.bf16.mxu0 %v7461
        %7740 = vmatpush1.bf16.msra.mxu0 %v7460
        %7741 = vmatprep.subr.bf16.mxu0 %v7459
        %7742 = vmatpush1.bf16.msra.mxu0 %v7458
        %7743 = vmatprep.subr.bf16.mxu0 %v7457
        %7744 = vmatpush1.bf16.msra.mxu0 %v7456
        %7745 = vmatprep.subr.bf16.mxu0 %v7455
        %7746 = vmatpush1.bf16.msra.mxu0 %v7454
        %7747 = vmatprep.subr.bf16.mxu0 %v7453
        %7748 = vmatpush1.bf16.msra.mxu0 %v7452
        %7749 = vmatprep.subr.bf16.mxu0 %v7451
        %7750 = vmatpush1.bf16.msra.mxu0 %v7450
        %7751 = vmatprep.subr.bf16.mxu0 %v7449
        %7752 = vmatpush1.bf16.msra.mxu0 %v7448
        %7753 = vmatprep.subr.bf16.mxu0 %v7479
        %7754 = vmatpush2.bf16.msra.mxu0 %v7478
        %7755 = vmatprep.subr.bf16.mxu0 %v7477
        %7756 = vmatpush2.bf16.msra.mxu0 %v7476
        %7757 = vmatprep.subr.bf16.mxu0 %v7475
        %7758 = vmatpush2.bf16.msra.mxu0 %v7474
        %7759 = vmatprep.subr.bf16.mxu0 %v7473
        %7760 = vmatpush2.bf16.msra.mxu0 %v7472
        %7761 = vmatprep.subr.bf16.mxu0 %v7471
        %7762 = vmatpush2.bf16.msra.mxu0 %v7470
        %7763 = vmatprep.subr.bf16.mxu0 %v7469
        %7764 = vmatpush2.bf16.msra.mxu0 %v7468
        %7765 = vmatprep.subr.bf16.mxu0 %v7467
        %7766 = vmatpush2.bf16.msra.mxu0 %v7466
        %7767 = vmatprep.subr.bf16.mxu0 %v7465
        %7768 = vmatpush2.bf16.msra.mxu0 %v7464
        %7769 = vmatprep.mubr.bf16.mxu0 %v7152
        %7770 = vmatmul.mubr.bf16.gmra.mxu0 %v7151
        %v7771 = vpop.f32.mrf.mxu0
        %v7772 = vadd.f32 %v7579, %v7771
        %v7773 = vpop.f32.mrf.mxu0
        %v7774 = vadd.f32 %v7581, %v7773
        %v7775 = vpop.f32.mrf.mxu0
        %v7776 = vadd.f32 %v7583, %v7775
        %v7777 = vpop.f32.mrf.mxu0
        %v7778 = vadd.f32 %v7585, %v7777
        %7779 = vmatprep.mubr.bf16.mxu0 %v7156
        %7780 = vmatmul.mubr.bf16.gmra.mxu0 %v7155
        %v7781 = vpop.f32.mrf.mxu0
        %v7782 = vadd.f32 %v7589, %v7781
        %v7783 = vpop.f32.mrf.mxu0
        %v7784 = vadd.f32 %v7591, %v7783
        %v7785 = vpop.f32.mrf.mxu0
        %v7786 = vadd.f32 %v7593, %v7785
        %v7787 = vpop.f32.mrf.mxu0
        %v7788 = vadd.f32 %v7595, %v7787
        %7789 = vmatprep.mubr.bf16.mxu0 %v7160
        %7790 = vmatmul.mubr.bf16.gmra.mxu0 %v7159
        %v7791 = vpop.f32.mrf.mxu0
        %v7792 = vadd.f32 %v7599, %v7791
        %v7793 = vpop.f32.mrf.mxu0
        %v7794 = vadd.f32 %v7601, %v7793
        %v7795 = vpop.f32.mrf.mxu0
        %v7796 = vadd.f32 %v7603, %v7795
        %v7797 = vpop.f32.mrf.mxu0
        %v7798 = vadd.f32 %v7605, %v7797
        %7799 = vmatprep.mubr.bf16.mxu0 %v7164
        %7800 = vmatmul.mubr.bf16.gmra.mxu0 %v7163
        %v7801 = vpop.f32.mrf.mxu0
        %v7802 = vadd.f32 %v7609, %v7801
        %v7803 = vpop.f32.mrf.mxu0
        %v7804 = vadd.f32 %v7611, %v7803
        %v7805 = vpop.f32.mrf.mxu0
        %v7806 = vadd.f32 %v7613, %v7805
        %v7807 = vpop.f32.mrf.mxu0
        %v7808 = vadd.f32 %v7615, %v7807
        %7809 = vmatprep.mubr.bf16.mxu0 %v7168
        %7810 = vmatmul.mubr.bf16.gmra.mxu0 %v7167
        %v7811 = vpop.f32.mrf.mxu0
        %v7812 = vadd.f32 %v7619, %v7811
        %v7813 = vpop.f32.mrf.mxu0
        %v7814 = vadd.f32 %v7621, %v7813
        %v7815 = vpop.f32.mrf.mxu0
        %v7816 = vadd.f32 %v7623, %v7815
        %v7817 = vpop.f32.mrf.mxu0
        %v7818 = vadd.f32 %v7625, %v7817
        %7819 = vmatprep.mubr.bf16.mxu0 %v7172
        %7820 = vmatmul.mubr.bf16.gmra.mxu0 %v7171
        %v7821 = vpop.f32.mrf.mxu0
        %v7822 = vadd.f32 %v7629, %v7821
        %v7823 = vpop.f32.mrf.mxu0
        %v7824 = vadd.f32 %v7631, %v7823
        %v7825 = vpop.f32.mrf.mxu0
        %v7826 = vadd.f32 %v7633, %v7825
        %v7827 = vpop.f32.mrf.mxu0
        %v7828 = vadd.f32 %v7635, %v7827
        %7829 = vmatprep.mubr.bf16.mxu0 %v7176
        %7830 = vmatmul.mubr.bf16.gmra.mxu0 %v7175
        %v7831 = vpop.f32.mrf.mxu0
        %v7832 = vadd.f32 %v7639, %v7831
        %v7833 = vpop.f32.mrf.mxu0
        %v7834 = vadd.f32 %v7641, %v7833
        %v7835 = vpop.f32.mrf.mxu0
        %v7836 = vadd.f32 %v7643, %v7835
        %v7837 = vpop.f32.mrf.mxu0
        %v7838 = vadd.f32 %v7645, %v7837
        %7839 = vmatprep.mubr.bf16.mxu0 %v7180
        %7840 = vmatmul.mubr.bf16.gmra.mxu0 %v7179
        %v7841 = vpop.f32.mrf.mxu0
        %v7842 = vadd.f32 %v7649, %v7841
        %v7843 = vpop.f32.mrf.mxu0
        %v7844 = vadd.f32 %v7651, %v7843
        %v7845 = vpop.f32.mrf.mxu0
        %v7846 = vadd.f32 %v7653, %v7845
        %v7847 = vpop.f32.mrf.mxu0
        %v7848 = vadd.f32 %v7655, %v7847
        %7849 = vmatprep.mubr.bf16.mxu0 %v7184
        %7850 = vmatmul.mubr.bf16.gmra.mxu0 %v7183
        %v7851 = vpop.f32.mrf.mxu0
        %v7852 = vadd.f32 %v7659, %v7851
        %v7853 = vpop.f32.mrf.mxu0
        %v7854 = vadd.f32 %v7661, %v7853
        %v7855 = vpop.f32.mrf.mxu0
        %v7856 = vadd.f32 %v7663, %v7855
        %v7857 = vpop.f32.mrf.mxu0
        %v7858 = vadd.f32 %v7665, %v7857
        %7859 = vmatprep.mubr.bf16.mxu0 %v7188
        %7860 = vmatmul.mubr.bf16.gmra.mxu0 %v7187
        %v7861 = vpop.f32.mrf.mxu0
        %v7862 = vadd.f32 %v7669, %v7861
        %v7863 = vpop.f32.mrf.mxu0
        %v7864 = vadd.f32 %v7671, %v7863
        %v7865 = vpop.f32.mrf.mxu0
        %v7866 = vadd.f32 %v7673, %v7865
        %v7867 = vpop.f32.mrf.mxu0
        %v7868 = vadd.f32 %v7675, %v7867
        %7869 = vmatprep.mubr.bf16.mxu0 %v7192
        %7870 = vmatmul.mubr.bf16.gmra.mxu0 %v7191
        %v7871 = vpop.f32.mrf.mxu0
        %v7872 = vadd.f32 %v7679, %v7871
        %v7873 = vpop.f32.mrf.mxu0
        %v7874 = vadd.f32 %v7681, %v7873
        %v7875 = vpop.f32.mrf.mxu0
        %v7876 = vadd.f32 %v7683, %v7875
        %v7877 = vpop.f32.mrf.mxu0
        %v7878 = vadd.f32 %v7685, %v7877
        %7879 = vmatprep.mubr.bf16.mxu0 %v7196
        %7880 = vmatmul.mubr.bf16.gmra.mxu0 %v7195
        %v7881 = vpop.f32.mrf.mxu0
        %v7882 = vadd.f32 %v7689, %v7881
        %v7883 = vpop.f32.mrf.mxu0
        %v7884 = vadd.f32 %v7691, %v7883
        %v7885 = vpop.f32.mrf.mxu0
        %v7886 = vadd.f32 %v7693, %v7885
        %v7887 = vpop.f32.mrf.mxu0
        %v7888 = vadd.f32 %v7695, %v7887
        %7889 = vmatprep.mubr.bf16.mxu0 %v7200
        %7890 = vmatmul.mubr.bf16.gmra.mxu0 %v7199
        %v7891 = vpop.f32.mrf.mxu0
        %v7892 = vadd.f32 %v7699, %v7891
        %v7893 = vpop.f32.mrf.mxu0
        %v7894 = vadd.f32 %v7701, %v7893
        %v7895 = vpop.f32.mrf.mxu0
        %v7896 = vadd.f32 %v7703, %v7895
        %v7897 = vpop.f32.mrf.mxu0
        %v7898 = vadd.f32 %v7705, %v7897
        %7899 = vmatprep.mubr.bf16.mxu0 %v7204
        %7900 = vmatmul.mubr.bf16.gmra.mxu0 %v7203
        %v7901 = vpop.f32.mrf.mxu0
        %v7902 = vadd.f32 %v7709, %v7901
        %v7903 = vpop.f32.mrf.mxu0
        %v7904 = vadd.f32 %v7711, %v7903
        %v7905 = vpop.f32.mrf.mxu0
        %v7906 = vadd.f32 %v7713, %v7905
        %v7907 = vpop.f32.mrf.mxu0
        %v7908 = vadd.f32 %v7715, %v7907
        %7909 = vmatprep.mubr.bf16.mxu0 %v7208
        %7910 = vmatmul.mubr.bf16.gmra.mxu0 %v7207
        %v7911 = vpop.f32.mrf.mxu0
        %v7912 = vadd.f32 %v7719, %v7911
        %v7913 = vpop.f32.mrf.mxu0
        %v7914 = vadd.f32 %v7721, %v7913
        %v7915 = vpop.f32.mrf.mxu0
        %v7916 = vadd.f32 %v7723, %v7915
        %v7917 = vpop.f32.mrf.mxu0
        %v7918 = vadd.f32 %v7725, %v7917
        %7919 = vmatprep.mubr.bf16.mxu0 %v7212
        %7920 = vmatmul.mubr.bf16.gmra.mxu0 %v7211
        %v7921 = vpop.f32.mrf.mxu0
        %v7922 = vadd.f32 %v7729, %v7921
        %v7923 = vpop.f32.mrf.mxu0
        %v7924 = vadd.f32 %v7731, %v7923
        %v7925 = vpop.f32.mrf.mxu0
        %v7926 = vadd.f32 %v7733, %v7925
        %v7927 = vpop.f32.mrf.mxu0
        %v7928 = vadd.f32 %v7735, %v7927
        %7929 = vdwg.mxu0
        %v7930 = vadd.f32 %v5174, %v7772
        %v7931 = vadd.f32 %v5175, %v7774
        %v7932 = vadd.f32 %v5176, %v7776
        %v7933 = vadd.f32 %v5177, %v7778
        %v7934 = vadd.f32 %v5178, %v7782
        %v7935 = vadd.f32 %v5179, %v7784
        %v7936 = vadd.f32 %v5180, %v7786
        %v7937 = vadd.f32 %v5181, %v7788
        %v7938 = vadd.f32 %v5182, %v7792
        %v7939 = vadd.f32 %v5183, %v7794
        %v7940 = vadd.f32 %v5184, %v7796
        %v7941 = vadd.f32 %v5185, %v7798
        %v7942 = vadd.f32 %v5186, %v7802
        %v7943 = vadd.f32 %v5187, %v7804
        %v7944 = vadd.f32 %v5188, %v7806
        %v7945 = vadd.f32 %v5189, %v7808
        %v7946 = vadd.f32 %v5190, %v7812
        %v7947 = vadd.f32 %v5191, %v7814
        %v7948 = vadd.f32 %v5192, %v7816
        %v7949 = vadd.f32 %v5193, %v7818
        %v7950 = vadd.f32 %v5194, %v7822
        %v7951 = vadd.f32 %v5195, %v7824
        %v7952 = vadd.f32 %v5196, %v7826
        %v7953 = vadd.f32 %v5197, %v7828
        %v7954 = vadd.f32 %v5198, %v7832
        %v7955 = vadd.f32 %v5199, %v7834
        %v7956 = vadd.f32 %v5200, %v7836
        %v7957 = vadd.f32 %v5201, %v7838
        %v7958 = vadd.f32 %v5202, %v7842
        %v7959 = vadd.f32 %v5203, %v7844
        %v7960 = vadd.f32 %v5204, %v7846
        %v7961 = vadd.f32 %v5205, %v7848
        %v7962 = vadd.f32 %v5206, %v7852
        %v7963 = vadd.f32 %v5207, %v7854
        %v7964 = vadd.f32 %v5208, %v7856
        %v7965 = vadd.f32 %v5209, %v7858
        %v7966 = vadd.f32 %v5210, %v7862
        %v7967 = vadd.f32 %v5211, %v7864
        %v7968 = vadd.f32 %v5212, %v7866
        %v7969 = vadd.f32 %v5213, %v7868
        %v7970 = vadd.f32 %v5214, %v7872
        %v7971 = vadd.f32 %v5215, %v7874
        %v7972 = vadd.f32 %v5216, %v7876
        %v7973 = vadd.f32 %v5217, %v7878
        %v7974 = vadd.f32 %v5218, %v7882
        %v7975 = vadd.f32 %v5219, %v7884
        %v7976 = vadd.f32 %v5220, %v7886
        %v7977 = vadd.f32 %v5221, %v7888
        %v7978 = vadd.f32 %v5222, %v7892
        %v7979 = vadd.f32 %v5223, %v7894
        %v7980 = vadd.f32 %v5224, %v7896
        %v7981 = vadd.f32 %v5225, %v7898
        %v7982 = vadd.f32 %v5226, %v7902
        %v7983 = vadd.f32 %v5227, %v7904
        %v7984 = vadd.f32 %v5228, %v7906
        %v7985 = vadd.f32 %v5229, %v7908
        %v7986 = vadd.f32 %v5230, %v7912
        %v7987 = vadd.f32 %v5231, %v7914
        %v7988 = vadd.f32 %v5232, %v7916
        %v7989 = vadd.f32 %v5233, %v7918
        %v7990 = vadd.f32 %v5234, %v7922
        %v7991 = vadd.f32 %v5235, %v7924
        %v7992 = vadd.f32 %v5236, %v7926
        %v7993 = vadd.f32 %v5237, %v7928
        %v7994 = vadd.f32 %v7930, %v7931
        %7995 = vadd.xlane.f32.xlu0 %v7994
        %v7996 = vpop.xlane.xlu0 %7995
        %v7997 = vadd.f32 %v7932, %v7933
        %7998 = vadd.xlane.f32.xlu0 %v7997
        %v7999 = vpop.xlane.xlu0 %7998
        %v8000 = vadd.f32 %v7934, %v7935
        %8001 = vadd.xlane.f32.xlu0 %v8000
        %v8002 = vpop.xlane.xlu0 %8001
        %v8003 = vadd.f32 %v7936, %v7937
        %8004 = vadd.xlane.f32.xlu0 %v8003
        %v8005 = vpop.xlane.xlu0 %8004
        %v8006 = vadd.f32 %v7938, %v7939
        %8007 = vadd.xlane.f32.xlu0 %v8006
        %v8008 = vpop.xlane.xlu0 %8007
        %v8009 = vadd.f32 %v7940, %v7941
        %8010 = vadd.xlane.f32.xlu0 %v8009
        %v8011 = vpop.xlane.xlu0 %8010
        %v8012 = vadd.f32 %v7942, %v7943
        %8013 = vadd.xlane.f32.xlu0 %v8012
        %v8014 = vpop.xlane.xlu0 %8013
        %v8015 = vadd.f32 %v7944, %v7945
        %8016 = vadd.xlane.f32.xlu0 %v8015
        %v8017 = vpop.xlane.xlu0 %8016
        %v8018 = vadd.f32 %v7946, %v7947
        %8019 = vadd.xlane.f32.xlu0 %v8018
        %v8020 = vpop.xlane.xlu0 %8019
        %v8021 = vadd.f32 %v7948, %v7949
        %8022 = vadd.xlane.f32.xlu0 %v8021
        %v8023 = vpop.xlane.xlu0 %8022
        %v8024 = vadd.f32 %v7950, %v7951
        %8025 = vadd.xlane.f32.xlu0 %v8024
        %v8026 = vpop.xlane.xlu0 %8025
        %v8027 = vadd.f32 %v7952, %v7953
        %8028 = vadd.xlane.f32.xlu0 %v8027
        %v8029 = vpop.xlane.xlu0 %8028
        %v8030 = vadd.f32 %v7954, %v7955
        %8031 = vadd.xlane.f32.xlu0 %v8030
        %v8032 = vpop.xlane.xlu0 %8031
        %v8033 = vadd.f32 %v7956, %v7957
        %8034 = vadd.xlane.f32.xlu0 %v8033
        %v8035 = vpop.xlane.xlu0 %8034
        %v8036 = vadd.f32 %v7958, %v7959
        %8037 = vadd.xlane.f32.xlu0 %v8036
        %v8038 = vpop.xlane.xlu0 %8037
        %v8039 = vadd.f32 %v7960, %v7961
        %8040 = vadd.xlane.f32.xlu0 %v8039
        %v8041 = vpop.xlane.xlu0 %8040
        %v8042 = vadd.f32 %v7962, %v7963
        %8043 = vadd.xlane.f32.xlu0 %v8042
        %v8044 = vpop.xlane.xlu0 %8043
        %v8045 = vadd.f32 %v7964, %v7965
        %8046 = vadd.xlane.f32.xlu0 %v8045
        %v8047 = vpop.xlane.xlu0 %8046
        %v8048 = vadd.f32 %v7966, %v7967
        %8049 = vadd.xlane.f32.xlu0 %v8048
        %v8050 = vpop.xlane.xlu0 %8049
        %v8051 = vadd.f32 %v7968, %v7969
        %8052 = vadd.xlane.f32.xlu0 %v8051
        %v8053 = vpop.xlane.xlu0 %8052
        %v8054 = vadd.f32 %v7970, %v7971
        %8055 = vadd.xlane.f32.xlu0 %v8054
        %v8056 = vpop.xlane.xlu0 %8055
        %v8057 = vadd.f32 %v7972, %v7973
        %8058 = vadd.xlane.f32.xlu0 %v8057
        %v8059 = vpop.xlane.xlu0 %8058
        %v8060 = vadd.f32 %v7974, %v7975
        %8061 = vadd.xlane.f32.xlu0 %v8060
        %v8062 = vpop.xlane.xlu0 %8061
        %v8063 = vadd.f32 %v7976, %v7977
        %8064 = vadd.xlane.f32.xlu0 %v8063
        %v8065 = vpop.xlane.xlu0 %8064
        %v8066 = vadd.f32 %v7978, %v7979
        %8067 = vadd.xlane.f32.xlu0 %v8066
        %v8068 = vpop.xlane.xlu0 %8067
        %v8069 = vadd.f32 %v7980, %v7981
        %8070 = vadd.xlane.f32.xlu0 %v8069
        %v8071 = vpop.xlane.xlu0 %8070
        %v8072 = vadd.f32 %v7982, %v7983
        %8073 = vadd.xlane.f32.xlu0 %v8072
        %v8074 = vpop.xlane.xlu0 %8073
        %v8075 = vadd.f32 %v7984, %v7985
        %8076 = vadd.xlane.f32.xlu0 %v8075
        %v8077 = vpop.xlane.xlu0 %8076
        %v8078 = vadd.f32 %v7986, %v7987
        %8079 = vadd.xlane.f32.xlu0 %v8078
        %v8080 = vpop.xlane.xlu0 %8079
        %v8081 = vadd.f32 %v7988, %v7989
        %8082 = vadd.xlane.f32.xlu0 %v8081
        %v8083 = vpop.xlane.xlu0 %8082
        %v8084 = vadd.f32 %v7990, %v7991
        %8085 = vadd.xlane.f32.xlu0 %v8084
        %v8086 = vpop.xlane.xlu0 %8085
        %v8087 = vadd.f32 %v7992, %v7993
        %8088 = vadd.xlane.f32.xlu0 %v8087
        %v8089 = vpop.xlane.xlu0 %8088
        %v8090 = vmul.f32 %v7996, %v4671
        %v8091 = vmul.f32 %v7999, %v4671
        %v8092 = vmul.f32 %v8002, %v4671
        %v8093 = vmul.f32 %v8005, %v4671
        %v8094 = vmul.f32 %v8008, %v4671
        %v8095 = vmul.f32 %v8011, %v4671
        %v8096 = vmul.f32 %v8014, %v4671
        %v8097 = vmul.f32 %v8017, %v4671
        %v8098 = vmul.f32 %v8020, %v4671
        %v8099 = vmul.f32 %v8023, %v4671
        %v8100 = vmul.f32 %v8026, %v4671
        %v8101 = vmul.f32 %v8029, %v4671
        %v8102 = vmul.f32 %v8032, %v4671
        %v8103 = vmul.f32 %v8035, %v4671
        %v8104 = vmul.f32 %v8038, %v4671
        %v8105 = vmul.f32 %v8041, %v4671
        %v8106 = vmul.f32 %v8044, %v4671
        %v8107 = vmul.f32 %v8047, %v4671
        %v8108 = vmul.f32 %v8050, %v4671
        %v8109 = vmul.f32 %v8053, %v4671
        %v8110 = vmul.f32 %v8056, %v4671
        %v8111 = vmul.f32 %v8059, %v4671
        %v8112 = vmul.f32 %v8062, %v4671
        %v8113 = vmul.f32 %v8065, %v4671
        %v8114 = vmul.f32 %v8068, %v4671
        %v8115 = vmul.f32 %v8071, %v4671
        %v8116 = vmul.f32 %v8074, %v4671
        %v8117 = vmul.f32 %v8077, %v4671
        %v8118 = vmul.f32 %v8080, %v4671
        %v8119 = vmul.f32 %v8083, %v4671
        %v8120 = vmul.f32 %v8086, %v4671
        %v8121 = vmul.f32 %v8089, %v4671
        %v8122 = vsub.f32 %v7930, %v8090
        %v8123 = vsub.f32 %v7931, %v8090
        %v8124 = vsub.f32 %v7932, %v8091
        %v8125 = vsub.f32 %v7933, %v8091
        %v8126 = vsub.f32 %v7934, %v8092
        %v8127 = vsub.f32 %v7935, %v8092
        %v8128 = vsub.f32 %v7936, %v8093
        %v8129 = vsub.f32 %v7937, %v8093
        %v8130 = vsub.f32 %v7938, %v8094
        %v8131 = vsub.f32 %v7939, %v8094
        %v8132 = vsub.f32 %v7940, %v8095
        %v8133 = vsub.f32 %v7941, %v8095
        %v8134 = vsub.f32 %v7942, %v8096
        %v8135 = vsub.f32 %v7943, %v8096
        %v8136 = vsub.f32 %v7944, %v8097
        %v8137 = vsub.f32 %v7945, %v8097
        %v8138 = vsub.f32 %v7946, %v8098
        %v8139 = vsub.f32 %v7947, %v8098
        %v8140 = vsub.f32 %v7948, %v8099
        %v8141 = vsub.f32 %v7949, %v8099
        %v8142 = vsub.f32 %v7950, %v8100
        %v8143 = vsub.f32 %v7951, %v8100
        %v8144 = vsub.f32 %v7952, %v8101
        %v8145 = vsub.f32 %v7953, %v8101
        %v8146 = vsub.f32 %v7954, %v8102
        %v8147 = vsub.f32 %v7955, %v8102
        %v8148 = vsub.f32 %v7956, %v8103
        %v8149 = vsub.f32 %v7957, %v8103
        %v8150 = vsub.f32 %v7958, %v8104
        %v8151 = vsub.f32 %v7959, %v8104
        %v8152 = vsub.f32 %v7960, %v8105
        %v8153 = vsub.f32 %v7961, %v8105
        %v8154 = vsub.f32 %v7962, %v8106
        %v8155 = vsub.f32 %v7963, %v8106
        %v8156 = vsub.f32 %v7964, %v8107
        %v8157 = vsub.f32 %v7965, %v8107
        %v8158 = vsub.f32 %v7966, %v8108
        %v8159 = vsub.f32 %v7967, %v8108
        %v8160 = vsub.f32 %v7968, %v8109
        %v8161 = vsub.f32 %v7969, %v8109
        %v8162 = vsub.f32 %v7970, %v8110
        %v8163 = vsub.f32 %v7971, %v8110
        %v8164 = vsub.f32 %v7972, %v8111
        %v8165 = vsub.f32 %v7973, %v8111
        %v8166 = vsub.f32 %v7974, %v8112
        %v8167 = vsub.f32 %v7975, %v8112
        %v8168 = vsub.f32 %v7976, %v8113
        %v8169 = vsub.f32 %v7977, %v8113
        %v8170 = vsub.f32 %v7978, %v8114
        %v8171 = vsub.f32 %v7979, %v8114
        %v8172 = vsub.f32 %v7980, %v8115
        %v8173 = vsub.f32 %v7981, %v8115
        %v8174 = vsub.f32 %v7982, %v8116
        %v8175 = vsub.f32 %v7983, %v8116
        %v8176 = vsub.f32 %v7984, %v8117
        %v8177 = vsub.f32 %v7985, %v8117
        %v8178 = vsub.f32 %v7986, %v8118
        %v8179 = vsub.f32 %v7987, %v8118
        %v8180 = vsub.f32 %v7988, %v8119
        %v8181 = vsub.f32 %v7989, %v8119
        %v8182 = vsub.f32 %v7990, %v8120
        %v8183 = vsub.f32 %v7991, %v8120
        %v8184 = vsub.f32 %v7992, %v8121
        %v8185 = vsub.f32 %v7993, %v8121
        %v8186 = vmul.f32 %v8122, %v8122
        %v8187 = vmul.f32 %v8123, %v8123
        %v8188 = vmul.f32 %v8124, %v8124
        %v8189 = vmul.f32 %v8125, %v8125
        %v8190 = vmul.f32 %v8126, %v8126
        %v8191 = vmul.f32 %v8127, %v8127
        %v8192 = vmul.f32 %v8128, %v8128
        %v8193 = vmul.f32 %v8129, %v8129
        %v8194 = vmul.f32 %v8130, %v8130
        %v8195 = vmul.f32 %v8131, %v8131
        %v8196 = vmul.f32 %v8132, %v8132
        %v8197 = vmul.f32 %v8133, %v8133
        %v8198 = vmul.f32 %v8134, %v8134
        %v8199 = vmul.f32 %v8135, %v8135
        %v8200 = vmul.f32 %v8136, %v8136
        %v8201 = vmul.f32 %v8137, %v8137
        %v8202 = vmul.f32 %v8138, %v8138
        %v8203 = vmul.f32 %v8139, %v8139
        %v8204 = vmul.f32 %v8140, %v8140
        %v8205 = vmul.f32 %v8141, %v8141
        %v8206 = vmul.f32 %v8142, %v8142
        %v8207 = vmul.f32 %v8143, %v8143
        %v8208 = vmul.f32 %v8144, %v8144
        %v8209 = vmul.f32 %v8145, %v8145
        %v8210 = vmul.f32 %v8146, %v8146
        %v8211 = vmul.f32 %v8147, %v8147
        %v8212 = vmul.f32 %v8148, %v8148
        %v8213 = vmul.f32 %v8149, %v8149
        %v8214 = vmul.f32 %v8150, %v8150
        %v8215 = vmul.f32 %v8151, %v8151
        %v8216 = vmul.f32 %v8152, %v8152
        %v8217 = vmul.f32 %v8153, %v8153
        %v8218 = vmul.f32 %v8154, %v8154
        %v8219 = vmul.f32 %v8155, %v8155
        %v8220 = vmul.f32 %v8156, %v8156
        %v8221 = vmul.f32 %v8157, %v8157
        %v8222 = vmul.f32 %v8158, %v8158
        %v8223 = vmul.f32 %v8159, %v8159
        %v8224 = vmul.f32 %v8160, %v8160
        %v8225 = vmul.f32 %v8161, %v8161
        %v8226 = vmul.f32 %v8162, %v8162
        %v8227 = vmul.f32 %v8163, %v8163
        %v8228 = vmul.f32 %v8164, %v8164
        %v8229 = vmul.f32 %v8165, %v8165
        %v8230 = vmul.f32 %v8166, %v8166
        %v8231 = vmul.f32 %v8167, %v8167
        %v8232 = vmul.f32 %v8168, %v8168
        %v8233 = vmul.f32 %v8169, %v8169
        %v8234 = vmul.f32 %v8170, %v8170
        %v8235 = vmul.f32 %v8171, %v8171
        %v8236 = vmul.f32 %v8172, %v8172
        %v8237 = vmul.f32 %v8173, %v8173
        %v8238 = vmul.f32 %v8174, %v8174
        %v8239 = vmul.f32 %v8175, %v8175
        %v8240 = vmul.f32 %v8176, %v8176
        %v8241 = vmul.f32 %v8177, %v8177
        %v8242 = vmul.f32 %v8178, %v8178
        %v8243 = vmul.f32 %v8179, %v8179
        %v8244 = vmul.f32 %v8180, %v8180
        %v8245 = vmul.f32 %v8181, %v8181
        %v8246 = vmul.f32 %v8182, %v8182
        %v8247 = vmul.f32 %v8183, %v8183
        %v8248 = vmul.f32 %v8184, %v8184
        %v8249 = vmul.f32 %v8185, %v8185
        %v8250 = vadd.f32 %v8186, %v8187
        %8251 = vadd.xlane.f32.xlu0 %v8250
        %v8252 = vpop.xlane.xlu0 %8251
        %v8253 = vadd.f32 %v8188, %v8189
        %8254 = vadd.xlane.f32.xlu0 %v8253
        %v8255 = vpop.xlane.xlu0 %8254
        %v8256 = vadd.f32 %v8190, %v8191
        %8257 = vadd.xlane.f32.xlu0 %v8256
        %v8258 = vpop.xlane.xlu0 %8257
        %v8259 = vadd.f32 %v8192, %v8193
        %8260 = vadd.xlane.f32.xlu0 %v8259
        %v8261 = vpop.xlane.xlu0 %8260
        %v8262 = vadd.f32 %v8194, %v8195
        %8263 = vadd.xlane.f32.xlu0 %v8262
        %v8264 = vpop.xlane.xlu0 %8263
        %v8265 = vadd.f32 %v8196, %v8197
        %8266 = vadd.xlane.f32.xlu0 %v8265
        %v8267 = vpop.xlane.xlu0 %8266
        %v8268 = vadd.f32 %v8198, %v8199
        %8269 = vadd.xlane.f32.xlu0 %v8268
        %v8270 = vpop.xlane.xlu0 %8269
        %v8271 = vadd.f32 %v8200, %v8201
        %8272 = vadd.xlane.f32.xlu0 %v8271
        %v8273 = vpop.xlane.xlu0 %8272
        %v8274 = vadd.f32 %v8202, %v8203
        %8275 = vadd.xlane.f32.xlu0 %v8274
        %v8276 = vpop.xlane.xlu0 %8275
        %v8277 = vadd.f32 %v8204, %v8205
        %8278 = vadd.xlane.f32.xlu0 %v8277
        %v8279 = vpop.xlane.xlu0 %8278
        %v8280 = vadd.f32 %v8206, %v8207
        %8281 = vadd.xlane.f32.xlu0 %v8280
        %v8282 = vpop.xlane.xlu0 %8281
        %v8283 = vadd.f32 %v8208, %v8209
        %8284 = vadd.xlane.f32.xlu0 %v8283
        %v8285 = vpop.xlane.xlu0 %8284
        %v8286 = vadd.f32 %v8210, %v8211
        %8287 = vadd.xlane.f32.xlu0 %v8286
        %v8288 = vpop.xlane.xlu0 %8287
        %v8289 = vadd.f32 %v8212, %v8213
        %8290 = vadd.xlane.f32.xlu0 %v8289
        %v8291 = vpop.xlane.xlu0 %8290
        %v8292 = vadd.f32 %v8214, %v8215
        %8293 = vadd.xlane.f32.xlu0 %v8292
        %v8294 = vpop.xlane.xlu0 %8293
        %v8295 = vadd.f32 %v8216, %v8217
        %8296 = vadd.xlane.f32.xlu0 %v8295
        %v8297 = vpop.xlane.xlu0 %8296
        %v8298 = vadd.f32 %v8218, %v8219
        %8299 = vadd.xlane.f32.xlu0 %v8298
        %v8300 = vpop.xlane.xlu0 %8299
        %v8301 = vadd.f32 %v8220, %v8221
        %8302 = vadd.xlane.f32.xlu0 %v8301
        %v8303 = vpop.xlane.xlu0 %8302
        %v8304 = vadd.f32 %v8222, %v8223
        %8305 = vadd.xlane.f32.xlu0 %v8304
        %v8306 = vpop.xlane.xlu0 %8305
        %v8307 = vadd.f32 %v8224, %v8225
        %8308 = vadd.xlane.f32.xlu0 %v8307
        %v8309 = vpop.xlane.xlu0 %8308
        %v8310 = vadd.f32 %v8226, %v8227
        %8311 = vadd.xlane.f32.xlu0 %v8310
        %v8312 = vpop.xlane.xlu0 %8311
        %v8313 = vadd.f32 %v8228, %v8229
        %8314 = vadd.xlane.f32.xlu0 %v8313
        %v8315 = vpop.xlane.xlu0 %8314
        %v8316 = vadd.f32 %v8230, %v8231
        %8317 = vadd.xlane.f32.xlu0 %v8316
        %v8318 = vpop.xlane.xlu0 %8317
        %v8319 = vadd.f32 %v8232, %v8233
        %8320 = vadd.xlane.f32.xlu0 %v8319
        %v8321 = vpop.xlane.xlu0 %8320
        %v8322 = vadd.f32 %v8234, %v8235
        %8323 = vadd.xlane.f32.xlu0 %v8322
        %v8324 = vpop.xlane.xlu0 %8323
        %v8325 = vadd.f32 %v8236, %v8237
        %8326 = vadd.xlane.f32.xlu0 %v8325
        %v8327 = vpop.xlane.xlu0 %8326
        %v8328 = vadd.f32 %v8238, %v8239
        %8329 = vadd.xlane.f32.xlu0 %v8328
        %v8330 = vpop.xlane.xlu0 %8329
        %v8331 = vadd.f32 %v8240, %v8241
        %8332 = vadd.xlane.f32.xlu0 %v8331
        %v8333 = vpop.xlane.xlu0 %8332
        %v8334 = vadd.f32 %v8242, %v8243
        %8335 = vadd.xlane.f32.xlu0 %v8334
        %v8336 = vpop.xlane.xlu0 %8335
        %v8337 = vadd.f32 %v8244, %v8245
        %8338 = vadd.xlane.f32.xlu0 %v8337
        %v8339 = vpop.xlane.xlu0 %8338
        %v8340 = vadd.f32 %v8246, %v8247
        %8341 = vadd.xlane.f32.xlu0 %v8340
        %v8342 = vpop.xlane.xlu0 %8341
        %v8343 = vadd.f32 %v8248, %v8249
        %8344 = vadd.xlane.f32.xlu0 %v8343
        %v8345 = vpop.xlane.xlu0 %8344
        %v8346 = vmul.f32 %v8252, %v4671
        %v8347 = vmul.f32 %v8255, %v4671
        %v8348 = vmul.f32 %v8258, %v4671
        %v8349 = vmul.f32 %v8261, %v4671
        %v8350 = vmul.f32 %v8264, %v4671
        %v8351 = vmul.f32 %v8267, %v4671
        %v8352 = vmul.f32 %v8270, %v4671
        %v8353 = vmul.f32 %v8273, %v4671
        %v8354 = vmul.f32 %v8276, %v4671
        %v8355 = vmul.f32 %v8279, %v4671
        %v8356 = vmul.f32 %v8282, %v4671
        %v8357 = vmul.f32 %v8285, %v4671
        %v8358 = vmul.f32 %v8288, %v4671
        %v8359 = vmul.f32 %v8291, %v4671
        %v8360 = vmul.f32 %v8294, %v4671
        %v8361 = vmul.f32 %v8297, %v4671
        %v8362 = vmul.f32 %v8300, %v4671
        %v8363 = vmul.f32 %v8303, %v4671
        %v8364 = vmul.f32 %v8306, %v4671
        %v8365 = vmul.f32 %v8309, %v4671
        %v8366 = vmul.f32 %v8312, %v4671
        %v8367 = vmul.f32 %v8315, %v4671
        %v8368 = vmul.f32 %v8318, %v4671
        %v8369 = vmul.f32 %v8321, %v4671
        %v8370 = vmul.f32 %v8324, %v4671
        %v8371 = vmul.f32 %v8327, %v4671
        %v8372 = vmul.f32 %v8330, %v4671
        %v8373 = vmul.f32 %v8333, %v4671
        %v8374 = vmul.f32 %v8336, %v4671
        %v8375 = vmul.f32 %v8339, %v4671
        %v8376 = vmul.f32 %v8342, %v4671
        %v8377 = vmul.f32 %v8345, %v4671
        %v8378 = vadd.f32 %v8346, 1e-12
        %v8379 = vadd.f32 %v8347, 1e-12
        %v8380 = vadd.f32 %v8348, 1e-12
        %v8381 = vadd.f32 %v8349, 1e-12
        %v8382 = vadd.f32 %v8350, 1e-12
        %v8383 = vadd.f32 %v8351, 1e-12
        %v8384 = vadd.f32 %v8352, 1e-12
        %v8385 = vadd.f32 %v8353, 1e-12
        %v8386 = vadd.f32 %v8354, 1e-12
        %v8387 = vadd.f32 %v8355, 1e-12
        %v8388 = vadd.f32 %v8356, 1e-12
        %v8389 = vadd.f32 %v8357, 1e-12
        %v8390 = vadd.f32 %v8358, 1e-12
        %v8391 = vadd.f32 %v8359, 1e-12
        %v8392 = vadd.f32 %v8360, 1e-12
        %v8393 = vadd.f32 %v8361, 1e-12
        %v8394 = vadd.f32 %v8362, 1e-12
        %v8395 = vadd.f32 %v8363, 1e-12
        %v8396 = vadd.f32 %v8364, 1e-12
        %v8397 = vadd.f32 %v8365, 1e-12
        %v8398 = vadd.f32 %v8366, 1e-12
        %v8399 = vadd.f32 %v8367, 1e-12
        %v8400 = vadd.f32 %v8368, 1e-12
        %v8401 = vadd.f32 %v8369, 1e-12
        %v8402 = vadd.f32 %v8370, 1e-12
        %v8403 = vadd.f32 %v8371, 1e-12
        %v8404 = vadd.f32 %v8372, 1e-12
        %v8405 = vadd.f32 %v8373, 1e-12
        %v8406 = vadd.f32 %v8374, 1e-12
        %v8407 = vadd.f32 %v8375, 1e-12
        %v8408 = vadd.f32 %v8376, 1e-12
        %v8409 = vadd.f32 %v8377, 1e-12
        %v8410 = vrsqrt.pop %v8378
        %v8411 = vrsqrt.pop %v8379
        %v8412 = vrsqrt.pop %v8380
        %v8413 = vrsqrt.pop %v8381
        %v8414 = vrsqrt.pop %v8382
        %v8415 = vrsqrt.pop %v8383
        %v8416 = vrsqrt.pop %v8384
        %v8417 = vrsqrt.pop %v8385
        %v8418 = vrsqrt.pop %v8386
        %v8419 = vrsqrt.pop %v8387
        %v8420 = vrsqrt.pop %v8388
        %v8421 = vrsqrt.pop %v8389
        %v8422 = vrsqrt.pop %v8390
        %v8423 = vrsqrt.pop %v8391
        %v8424 = vrsqrt.pop %v8392
        %v8425 = vrsqrt.pop %v8393
        %v8426 = vrsqrt.pop %v8394
        %v8427 = vrsqrt.pop %v8395
        %v8428 = vrsqrt.pop %v8396
        %v8429 = vrsqrt.pop %v8397
        %v8430 = vrsqrt.pop %v8398
        %v8431 = vrsqrt.pop %v8399
        %v8432 = vrsqrt.pop %v8400
        %v8433 = vrsqrt.pop %v8401
        %v8434 = vrsqrt.pop %v8402
        %v8435 = vrsqrt.pop %v8403
        %v8436 = vrsqrt.pop %v8404
        %v8437 = vrsqrt.pop %v8405
        %v8438 = vrsqrt.pop %v8406
        %v8439 = vrsqrt.pop %v8407
        %v8440 = vrsqrt.pop %v8408
        %v8441 = vrsqrt.pop %v8409
        %v8442 = vmul.f32 %v8122, %v8410
        %v8443 = vmul.f32 %v8123, %v8410
        %v8444 = vmul.f32 %v8124, %v8411
        %v8445 = vmul.f32 %v8125, %v8411
        %v8446 = vmul.f32 %v8126, %v8412
        %v8447 = vmul.f32 %v8127, %v8412
        %v8448 = vmul.f32 %v8128, %v8413
        %v8449 = vmul.f32 %v8129, %v8413
        %v8450 = vmul.f32 %v8130, %v8414
        %v8451 = vmul.f32 %v8131, %v8414
        %v8452 = vmul.f32 %v8132, %v8415
        %v8453 = vmul.f32 %v8133, %v8415
        %v8454 = vmul.f32 %v8134, %v8416
        %v8455 = vmul.f32 %v8135, %v8416
        %v8456 = vmul.f32 %v8136, %v8417
        %v8457 = vmul.f32 %v8137, %v8417
        %v8458 = vmul.f32 %v8138, %v8418
        %v8459 = vmul.f32 %v8139, %v8418
        %v8460 = vmul.f32 %v8140, %v8419
        %v8461 = vmul.f32 %v8141, %v8419
        %v8462 = vmul.f32 %v8142, %v8420
        %v8463 = vmul.f32 %v8143, %v8420
        %v8464 = vmul.f32 %v8144, %v8421
        %v8465 = vmul.f32 %v8145, %v8421
        %v8466 = vmul.f32 %v8146, %v8422
        %v8467 = vmul.f32 %v8147, %v8422
        %v8468 = vmul.f32 %v8148, %v8423
        %v8469 = vmul.f32 %v8149, %v8423
        %v8470 = vmul.f32 %v8150, %v8424
        %v8471 = vmul.f32 %v8151, %v8424
        %v8472 = vmul.f32 %v8152, %v8425
        %v8473 = vmul.f32 %v8153, %v8425
        %v8474 = vmul.f32 %v8154, %v8426
        %v8475 = vmul.f32 %v8155, %v8426
        %v8476 = vmul.f32 %v8156, %v8427
        %v8477 = vmul.f32 %v8157, %v8427
        %v8478 = vmul.f32 %v8158, %v8428
        %v8479 = vmul.f32 %v8159, %v8428
        %v8480 = vmul.f32 %v8160, %v8429
        %v8481 = vmul.f32 %v8161, %v8429
        %v8482 = vmul.f32 %v8162, %v8430
        %v8483 = vmul.f32 %v8163, %v8430
        %v8484 = vmul.f32 %v8164, %v8431
        %v8485 = vmul.f32 %v8165, %v8431
        %v8486 = vmul.f32 %v8166, %v8432
        %v8487 = vmul.f32 %v8167, %v8432
        %v8488 = vmul.f32 %v8168, %v8433
        %v8489 = vmul.f32 %v8169, %v8433
        %v8490 = vmul.f32 %v8170, %v8434
        %v8491 = vmul.f32 %v8171, %v8434
        %v8492 = vmul.f32 %v8172, %v8435
        %v8493 = vmul.f32 %v8173, %v8435
        %v8494 = vmul.f32 %v8174, %v8436
        %v8495 = vmul.f32 %v8175, %v8436
        %v8496 = vmul.f32 %v8176, %v8437
        %v8497 = vmul.f32 %v8177, %v8437
        %v8498 = vmul.f32 %v8178, %v8438
        %v8499 = vmul.f32 %v8179, %v8438
        %v8500 = vmul.f32 %v8180, %v8439
        %v8501 = vmul.f32 %v8181, %v8439
        %v8502 = vmul.f32 %v8182, %v8440
        %v8503 = vmul.f32 %v8183, %v8440
        %v8504 = vmul.f32 %v8184, %v8441
        %v8505 = vmul.f32 %v8185, %v8441
        %v8507 = vlaneseq
        %v8508 = vshrl.u32 %v8507, 7
        %v8509 = vsub.s32 0, %v8508
        %v8510 = vrot.slane %v1371, %v8509
        %v8511 = vlaneseq
        %v8512 = vshrl.u32 %v8511, 7
        %v8513 = vsub.s32 1, %v8512
        %v8514 = vrot.slane %v1371, %v8513
        %v8517 = vmul.f32 %v8442, %v8510
        %v8518 = vmul.f32 %v8443, %v8514
        %v8519 = vmul.f32 %v8444, %v8510
        %v8520 = vmul.f32 %v8445, %v8514
        %v8521 = vmul.f32 %v8446, %v8510
        %v8522 = vmul.f32 %v8447, %v8514
        %v8523 = vmul.f32 %v8448, %v8510
        %v8524 = vmul.f32 %v8449, %v8514
        %v8525 = vmul.f32 %v8450, %v8510
        %v8526 = vmul.f32 %v8451, %v8514
        %v8527 = vmul.f32 %v8452, %v8510
        %v8528 = vmul.f32 %v8453, %v8514
        %v8529 = vmul.f32 %v8454, %v8510
        %v8530 = vmul.f32 %v8455, %v8514
        %v8531 = vmul.f32 %v8456, %v8510
        %v8532 = vmul.f32 %v8457, %v8514
        %v8533 = vmul.f32 %v8458, %v8510
        %v8534 = vmul.f32 %v8459, %v8514
        %v8535 = vmul.f32 %v8460, %v8510
        %v8536 = vmul.f32 %v8461, %v8514
        %v8537 = vmul.f32 %v8462, %v8510
        %v8538 = vmul.f32 %v8463, %v8514
        %v8539 = vmul.f32 %v8464, %v8510
        %v8540 = vmul.f32 %v8465, %v8514
        %v8541 = vmul.f32 %v8466, %v8510
        %v8542 = vmul.f32 %v8467, %v8514
        %v8543 = vmul.f32 %v8468, %v8510
        %v8544 = vmul.f32 %v8469, %v8514
        %v8545 = vmul.f32 %v8470, %v8510
        %v8546 = vmul.f32 %v8471, %v8514
        %v8547 = vmul.f32 %v8472, %v8510
        %v8548 = vmul.f32 %v8473, %v8514
        %v8549 = vmul.f32 %v8474, %v8510
        %v8550 = vmul.f32 %v8475, %v8514
        %v8551 = vmul.f32 %v8476, %v8510
        %v8552 = vmul.f32 %v8477, %v8514
        %v8553 = vmul.f32 %v8478, %v8510
        %v8554 = vmul.f32 %v8479, %v8514
        %v8555 = vmul.f32 %v8480, %v8510
        %v8556 = vmul.f32 %v8481, %v8514
        %v8557 = vmul.f32 %v8482, %v8510
        %v8558 = vmul.f32 %v8483, %v8514
        %v8559 = vmul.f32 %v8484, %v8510
        %v8560 = vmul.f32 %v8485, %v8514
        %v8561 = vmul.f32 %v8486, %v8510
        %v8562 = vmul.f32 %v8487, %v8514
        %v8563 = vmul.f32 %v8488, %v8510
        %v8564 = vmul.f32 %v8489, %v8514
        %v8565 = vmul.f32 %v8490, %v8510
        %v8566 = vmul.f32 %v8491, %v8514
        %v8567 = vmul.f32 %v8492, %v8510
        %v8568 = vmul.f32 %v8493, %v8514
        %v8569 = vmul.f32 %v8494, %v8510
        %v8570 = vmul.f32 %v8495, %v8514
        %v8571 = vmul.f32 %v8496, %v8510
        %v8572 = vmul.f32 %v8497, %v8514
        %v8573 = vmul.f32 %v8498, %v8510
        %v8574 = vmul.f32 %v8499, %v8514
        %v8575 = vmul.f32 %v8500, %v8510
        %v8576 = vmul.f32 %v8501, %v8514
        %v8577 = vmul.f32 %v8502, %v8510
        %v8578 = vmul.f32 %v8503, %v8514
        %v8579 = vmul.f32 %v8504, %v8510
        %v8580 = vmul.f32 %v8505, %v8514
        %v8582 = vlaneseq
        %v8583 = vshrl.u32 %v8582, 7
        %v8584 = vsub.s32 0, %v8583
        %v8585 = vrot.slane %v1372, %v8584
        %v8586 = vlaneseq
        %v8587 = vshrl.u32 %v8586, 7
        %v8588 = vsub.s32 1, %v8587
        %v8589 = vrot.slane %v1372, %v8588
        %v8592 = vadd.f32 %v8517, %v8585
        %v8593 = vadd.f32 %v8518, %v8589
        %v8594 = vadd.f32 %v8519, %v8585
        %v8595 = vadd.f32 %v8520, %v8589
        %v8596 = vadd.f32 %v8521, %v8585
        %v8597 = vadd.f32 %v8522, %v8589
        %v8598 = vadd.f32 %v8523, %v8585
        %v8599 = vadd.f32 %v8524, %v8589
        %v8600 = vadd.f32 %v8525, %v8585
        %v8601 = vadd.f32 %v8526, %v8589
        %v8602 = vadd.f32 %v8527, %v8585
        %v8603 = vadd.f32 %v8528, %v8589
        %v8604 = vadd.f32 %v8529, %v8585
        %v8605 = vadd.f32 %v8530, %v8589
        %v8606 = vadd.f32 %v8531, %v8585
        %v8607 = vadd.f32 %v8532, %v8589
        %v8608 = vadd.f32 %v8533, %v8585
        %v8609 = vadd.f32 %v8534, %v8589
        %v8610 = vadd.f32 %v8535, %v8585
        %v8611 = vadd.f32 %v8536, %v8589
        %v8612 = vadd.f32 %v8537, %v8585
        %v8613 = vadd.f32 %v8538, %v8589
        %v8614 = vadd.f32 %v8539, %v8585
        %v8615 = vadd.f32 %v8540, %v8589
        %v8616 = vadd.f32 %v8541, %v8585
        %v8617 = vadd.f32 %v8542, %v8589
        %v8618 = vadd.f32 %v8543, %v8585
        %v8619 = vadd.f32 %v8544, %v8589
        %v8620 = vadd.f32 %v8545, %v8585
        %v8621 = vadd.f32 %v8546, %v8589
        %v8622 = vadd.f32 %v8547, %v8585
        %v8623 = vadd.f32 %v8548, %v8589
        %v8624 = vadd.f32 %v8549, %v8585
        %v8625 = vadd.f32 %v8550, %v8589
        %v8626 = vadd.f32 %v8551, %v8585
        %v8627 = vadd.f32 %v8552, %v8589
        %v8628 = vadd.f32 %v8553, %v8585
        %v8629 = vadd.f32 %v8554, %v8589
        %v8630 = vadd.f32 %v8555, %v8585
        %v8631 = vadd.f32 %v8556, %v8589
        %v8632 = vadd.f32 %v8557, %v8585
        %v8633 = vadd.f32 %v8558, %v8589
        %v8634 = vadd.f32 %v8559, %v8585
        %v8635 = vadd.f32 %v8560, %v8589
        %v8636 = vadd.f32 %v8561, %v8585
        %v8637 = vadd.f32 %v8562, %v8589
        %v8638 = vadd.f32 %v8563, %v8585
        %v8639 = vadd.f32 %v8564, %v8589
        %v8640 = vadd.f32 %v8565, %v8585
        %v8641 = vadd.f32 %v8566, %v8589
        %v8642 = vadd.f32 %v8567, %v8585
        %v8643 = vadd.f32 %v8568, %v8589
        %v8644 = vadd.f32 %v8569, %v8585
        %v8645 = vadd.f32 %v8570, %v8589
        %v8646 = vadd.f32 %v8571, %v8585
        %v8647 = vadd.f32 %v8572, %v8589
        %v8648 = vadd.f32 %v8573, %v8585
        %v8649 = vadd.f32 %v8574, %v8589
        %v8650 = vadd.f32 %v8575, %v8585
        %v8651 = vadd.f32 %v8576, %v8589
        %v8652 = vadd.f32 %v8577, %v8585
        %v8653 = vadd.f32 %v8578, %v8589
        %v8654 = vadd.f32 %v8579, %v8585
        %v8655 = vadd.f32 %v8580, %v8589
        %8656 = vst [vmem:[#allocation2] sm:$0xff] %v8592
        %8657 = vst [vmem:[#allocation2 + $0x8] sm:$0xff] %v8593
        %8658 = vst [vmem:[#allocation2 + $0x10] sm:$0xff] %v8594
        %8659 = vst [vmem:[#allocation2 + $0x18] sm:$0xff] %v8595
        %8660 = vst [vmem:[#allocation2 + $0x20] sm:$0xff] %v8596
        %8661 = vst [vmem:[#allocation2 + $0x28] sm:$0xff] %v8597
        %8662 = vst [vmem:[#allocation2 + $0x30] sm:$0xff] %v8598
        %8663 = vst [vmem:[#allocation2 + $0x38] sm:$0xff] %v8599
        %8664 = vst [vmem:[#allocation2 + $0x40] sm:$0xff] %v8600
        %8665 = vst [vmem:[#allocation2 + $0x48] sm:$0xff] %v8601
        %8666 = vst [vmem:[#allocation2 + $0x50] sm:$0xff] %v8602
        %8667 = vst [vmem:[#allocation2 + $0x58] sm:$0xff] %v8603
        %8668 = vst [vmem:[#allocation2 + $0x60] sm:$0xff] %v8604
        %8669 = vst [vmem:[#allocation2 + $0x68] sm:$0xff] %v8605
        %8670 = vst [vmem:[#allocation2 + $0x70] sm:$0xff] %v8606
        %8671 = vst [vmem:[#allocation2 + $0x78] sm:$0xff] %v8607
        %8672 = vst [vmem:[#allocation2 + $0x80] sm:$0xff] %v8608
        %8673 = vst [vmem:[#allocation2 + $0x88] sm:$0xff] %v8609
        %8674 = vst [vmem:[#allocation2 + $0x90] sm:$0xff] %v8610
        %8675 = vst [vmem:[#allocation2 + $0x98] sm:$0xff] %v8611
        %8676 = vst [vmem:[#allocation2 + $0xa0] sm:$0xff] %v8612
        %8677 = vst [vmem:[#allocation2 + $0xa8] sm:$0xff] %v8613
        %8678 = vst [vmem:[#allocation2 + $0xb0] sm:$0xff] %v8614
        %8679 = vst [vmem:[#allocation2 + $0xb8] sm:$0xff] %v8615
        %8680 = vst [vmem:[#allocation2 + $0xc0] sm:$0xff] %v8616
        %8681 = vst [vmem:[#allocation2 + $0xc8] sm:$0xff] %v8617
        %8682 = vst [vmem:[#allocation2 + $0xd0] sm:$0xff] %v8618
        %8683 = vst [vmem:[#allocation2 + $0xd8] sm:$0xff] %v8619
        %8684 = vst [vmem:[#allocation2 + $0xe0] sm:$0xff] %v8620
        %8685 = vst [vmem:[#allocation2 + $0xe8] sm:$0xff] %v8621
        %8686 = vst [vmem:[#allocation2 + $0xf0] sm:$0xff] %v8622
        %8687 = vst [vmem:[#allocation2 + $0xf8] sm:$0xff] %v8623
        %8688 = vst [vmem:[#allocation2 + $0x100] sm:$0xff] %v8624
        %8689 = vst [vmem:[#allocation2 + $0x108] sm:$0xff] %v8625
        %8690 = vst [vmem:[#allocation2 + $0x110] sm:$0xff] %v8626
        %8691 = vst [vmem:[#allocation2 + $0x118] sm:$0xff] %v8627
        %8692 = vst [vmem:[#allocation2 + $0x120] sm:$0xff] %v8628
        %8693 = vst [vmem:[#allocation2 + $0x128] sm:$0xff] %v8629
        %8694 = vst [vmem:[#allocation2 + $0x130] sm:$0xff] %v8630
        %8695 = vst [vmem:[#allocation2 + $0x138] sm:$0xff] %v8631
        %8696 = vst [vmem:[#allocation2 + $0x140] sm:$0xff] %v8632
        %8697 = vst [vmem:[#allocation2 + $0x148] sm:$0xff] %v8633
        %8698 = vst [vmem:[#allocation2 + $0x150] sm:$0xff] %v8634
        %8699 = vst [vmem:[#allocation2 + $0x158] sm:$0xff] %v8635
        %8700 = vst [vmem:[#allocation2 + $0x160] sm:$0xff] %v8636
        %8701 = vst [vmem:[#allocation2 + $0x168] sm:$0xff] %v8637
        %8702 = vst [vmem:[#allocation2 + $0x170] sm:$0xff] %v8638
        %8703 = vst [vmem:[#allocation2 + $0x178] sm:$0xff] %v8639
        %8704 = vst [vmem:[#allocation2 + $0x180] sm:$0xff] %v8640
        %8705 = vst [vmem:[#allocation2 + $0x188] sm:$0xff] %v8641
        %8706 = vst [vmem:[#allocation2 + $0x190] sm:$0xff] %v8642
        %8707 = vst [vmem:[#allocation2 + $0x198] sm:$0xff] %v8643
        %8708 = vst [vmem:[#allocation2 + $0x1a0] sm:$0xff] %v8644
        %8709 = vst [vmem:[#allocation2 + $0x1a8] sm:$0xff] %v8645
        %8710 = vst [vmem:[#allocation2 + $0x1b0] sm:$0xff] %v8646
        %8711 = vst [vmem:[#allocation2 + $0x1b8] sm:$0xff] %v8647
        %8712 = vst [vmem:[#allocation2 + $0x1c0] sm:$0xff] %v8648
        %8713 = vst [vmem:[#allocation2 + $0x1c8] sm:$0xff] %v8649
        %8714 = vst [vmem:[#allocation2 + $0x1d0] sm:$0xff] %v8650
        %8715 = vst [vmem:[#allocation2 + $0x1d8] sm:$0xff] %v8651
        %8716 = vst [vmem:[#allocation2 + $0x1e0] sm:$0xff] %v8652
        %8717 = vst [vmem:[#allocation2 + $0x1e8] sm:$0xff] %v8653
        %8718 = vst [vmem:[#allocation2 + $0x1f0] sm:$0xff] %v8654
        %8719 = vst [vmem:[#allocation2 + $0x1f8] sm:$0xff] %v8655
        %p8720 = scmp.eq.s32.totalorder %s51, 1
        // Predicated region
        $region121: #{tpu_custom_call.1} parent=75 // pred_check
          %p8721 = pneg %p8720
        $region122: #{tpu_custom_call.1} parent=75 // pred_check_branch
          %8723 = sbr.rel (%p8721) target = $region124
        $region123: #{tpu_custom_call.1} parent=75 // pred_region
          %v8728 = vcombine.low %v8592, %v8593
          %v8730 = vunpack.c.l.s4 1966171168
          %v8731 = vunpack.c.0.s8 %v8730
          %v8732 = vlaneseq
          %v8733 = vshrl.u32 %v8732, 7
          %v8734 = vsub.s32 %v8731, %v8733
          %v8735 = vrot.slane %v8728, %v8734
          %v8737 = vunpack.c.l.s4 1966171168
          %v8738 = vunpack.c.0.s8 %v8737
          %v8739 = vlaneseq
          %v8740 = vshrl.u32 %v8739, 7
          %v8741 = vsub.s32 %v8738, %v8740
          %v8742 = vrot.slane %v8735, %v8741
          %v8743 = vcombine.low %v8624, %v8625
          %v8745 = vunpack.c.l.s4 1966171168
          %v8746 = vunpack.c.0.s8 %v8745
          %v8747 = vlaneseq
          %v8748 = vshrl.u32 %v8747, 7
          %v8749 = vsub.s32 %v8746, %v8748
          %v8750 = vrot.slane %v8743, %v8749
          %v8752 = vunpack.c.l.s4 1966171168
          %v8753 = vunpack.c.0.s8 %v8752
          %v8754 = vlaneseq
          %v8755 = vshrl.u32 %v8754, 7
          %v8756 = vsub.s32 %v8753, %v8755
          %v8757 = vrot.slane %v8750, %v8756
          %v8760 = vlaneseq
          %vm8761 = vcmp.ge.s32.totalorder %v8760, 0
          %vm8762 = vcmp.lt.s32.totalorder %v8760, 256
          %vm8763 = vmand %vm8761, %vm8762
          %8764 = vst.msk [vmem:[%s890] sm:$0x3] %vm8763, %v8742
          %8765 = vst.msk [vmem:[%s890 + $0x2] sm:$0x3] %vm8763, %v8757
        $region124: #{tpu_custom_call.1} parent=75 // pred_fallthru
          _
        %s8766 = sand.u32 %s430, 1
        %s8767 = scalar_lea.sflag [#allocation5], %s8766
        %s8768 = sand.u32 %s430, 1
        %s8769 = smul.addr %s8768, 4
        %s8770 = scalar_lea.vmem [#allocation20], %s8769
        // Predicated region
        $region125: #{tpu_custom_call.1} parent=75 // pred_check
          %p8771 = pneg %p440
        $region126: #{tpu_custom_call.1} parent=75 // pred_check_branch
          %8773 = sbr.rel (%p8771) target = $region128
        $region127: #{tpu_custom_call.1} parent=75 // pred_region
          %s8774 = smul.u32 2, %s50
          %s8776 = ssub.s32 64, 64
          %8777 = vsyncadd %s8767, %s8776
          %s8778 = smul.addr %s8774, 2
          %s8779 = smul.addr %s8778, 16
          %s8780 = scalar_lea.hbm %s14, %s8779
          %s8781 = sshll.u32 %s8770, 4
          %s8782 = int_to_ptr.vmem [resolvable:$true] %s8781
          %8787 = dma.vmem_to_hbm [thread:$0]  %s8782, 64, %s8780, %s8767, 32, 32, 2
        $region128: #{tpu_custom_call.1} parent=75 // pred_fallthru
          _
      $region76: #{tpu_custom_call.1} parent=5 // pred_fallthru
        _
      %p8788 = scmp.le.s32.totalorder 2, %s41
      // Predicated region
      $region129: #{tpu_custom_call.1} parent=5 // pred_check
        %p8789 = pneg %p8788
      $region130: #{tpu_custom_call.1} parent=5 // pred_check_branch
        %8791 = sbr.rel (%p8789) target = $region132
      $region131: #{tpu_custom_call.1} parent=5 // pred_region
        %s8792 = ssub.s32 %s41, 2
        // Predicated region
        $region133: #{tpu_custom_call.1} parent=131 // pred_check
          %p8793 = pneg %p446
        $region134: #{tpu_custom_call.1} parent=131 // pred_check_branch
          %8795 = sbr.rel (%p8793) target = $region136
        $region135: #{tpu_custom_call.1} parent=131 // pred_region
          %s8796 = sand.u32 %s431, 1
          %s8797 = scalar_lea.sflag [#allocation5], %s8796
          %s8798 = sand.u32 %s431, 1
          %s8799 = smul.addr %s8798, 4
          %s8800 = scalar_lea.vmem [#allocation20], %s8799
          %8801 = dma.done %s8797, 64
        $region136: #{tpu_custom_call.1} parent=131 // pred_fallthru
          _
      $region132: #{tpu_custom_call.1} parent=5 // pred_fallthru
        _
    $region6: #{tpu_custom_call.1} parent=1 // loop_footer
      %s45 = sadd.s32 1, %s41
    $region7: #{tpu_custom_call.1} parent=1 // loop_footer_branch
      %40 = sbr.rel target = $region3
    $region8: #{tpu_custom_call.1} parent=1 // loop_exit
      _
    %8802 = vsyncpa [#allocation4], 1
    %s8803 = scalar_lea.sflag [#allocation4], 1
    %8804 = vsyncpa %s8803, 1
    %8805 = vsyncpa [#allocation7], 1
    %s8806 = scalar_lea.sflag [#allocation7], 1
    %8807 = vsyncpa %s8806, 1
    %8808 = vsyncpa [#allocation10], 1
    %s8809 = scalar_lea.sflag [#allocation10], 1
    %8810 = vsyncpa %s8809, 1
    %8811 = vsyncpa [#allocation13], 1
    %s8812 = scalar_lea.sflag [#allocation13], 1
    %8813 = vsyncpa %s8812, 1
    %8814 = vsyncpa [#allocation16], 1
    %s8815 = scalar_lea.sflag [#allocation16], 1
    %8816 = vsyncpa %s8815, 1
    %8817 = vsyncpa [#allocation19], 1
    %s8818 = scalar_lea.sflag [#allocation19], 1
    %8819 = vsyncpa %s8818, 1
    %8820 = vsyncpa [#allocation5], 1
    %s8821 = scalar_lea.sflag [#allocation5], 1
    %8822 = vsyncpa %s8821, 1

</llo_original>
